<compile_context>
chip_gen: v7x
topology: tpu7x:2x2x1
jax: 0.10.0
libtpu: 0.0.40
codegen_flags: <defaults>
</compile_context>

<pallas_src>
import functools

import jax
import jax.numpy as jnp
from jax import lax
from jax.experimental import pallas as pl
from jax.experimental.pallas import tpu as pltpu

LANE = 128                           # channel padding granularity (lane width)
TM = 1024                            # row tile for the 1x1x1 convs
_VMEM_LIMIT_BYTES = 48 * 1024 * 1024 # < v7x 64 MiB physical, > 32 MiB default
_W_RESIDENT_BYTES = 8 * 1024 * 1024  # keep 27-tap weights resident below this


def _round_up(x, m):
    return (x + m - 1) // m * m


# --------------------------------------------------------------------------- #
# Fused 1x1x1 conv:
#   [optional BN+ReLU prologue of the previous stage] -> bf16 MXU matmul
#   -> write pre-BN output + per-tile partial BN statistics (sum / sum-of-sq).
# --------------------------------------------------------------------------- #
def _conv1x1_kernel(scale_ref, bias_ref, a_ref, w_ref,
                    y_ref, sum_ref, ssq_ref,
                    *, apply_prologue, m_true, tm):
    i = pl.program_id(0)

    a = a_ref[...]                                            # (tm, K) bf16
    if apply_prologue:
        a = jnp.maximum(
            a.astype(jnp.float32) * scale_ref[...] + bias_ref[...],
            0.0).astype(jnp.bfloat16)

    y = jnp.dot(a, w_ref[...], preferred_element_type=jnp.float32)  # (tm, Cp)
    y_ref[...] = y.astype(y_ref.dtype)

    # Per-tile partial stats (reduced in XLA) -> grid axis can be "parallel".
    def _emit(yv):
        sum_ref[...] = jnp.sum(yv, axis=0, keepdims=True)
        ssq_ref[...] = jnp.sum(yv * yv, axis=0, keepdims=True)

    if (m_true % tm) != 0:
        # Only the last tile can contain padded rows; gate the mask there.
        last = pl.num_programs(0) - 1

        @pl.when(i != last)
        def _():
            _emit(y)

        @pl.when(i == last)
        def _():
            row = i * tm + lax.broadcasted_iota(jnp.int32, (tm, 1), 0)
            _emit(jnp.where(row < m_true, y, 0.0))
    else:
        _emit(y)


def conv1x1_fused(a2d, w, scale_in, bias_in, *, apply_prologue, out_dtype,
                  m_true, tm=TM):
    """a2d: (Mpad, K) bf16, w: (K, Cp) bf16, scale/bias: (1, K) f32."""
    mpad, k = a2d.shape
    cp = w.shape[1]
    ntiles = mpad // tm
    kernel = functools.partial(_conv1x1_kernel, apply_prologue=apply_prologue,
                               m_true=m_true, tm=tm)
    return pl.pallas_call(
        kernel,
        out_shape=(jax.ShapeDtypeStruct((mpad, cp), out_dtype),
                   jax.ShapeDtypeStruct((ntiles, 1, cp), jnp.float32),
                   jax.ShapeDtypeStruct((ntiles, 1, cp), jnp.float32)),
        grid_spec=pltpu.PrefetchScalarGridSpec(
            num_scalar_prefetch=0,
            grid=(ntiles,),
            in_specs=[pl.BlockSpec((1, k), lambda i: (0, 0)),
                      pl.BlockSpec((1, k), lambda i: (0, 0)),
                      pl.BlockSpec((tm, k), lambda i: (i, 0)),
                      pl.BlockSpec((k, cp), lambda i: (0, 0))],
            out_specs=(pl.BlockSpec((tm, cp), lambda i: (i, 0)),
                       pl.BlockSpec((None, 1, cp), lambda i: (i, 0, 0)),
                       pl.BlockSpec((None, 1, cp), lambda i: (i, 0, 0)))),
        compiler_params=pltpu.CompilerParams(
            dimension_semantics=("parallel",),
            vmem_limit_bytes=_VMEM_LIMIT_BYTES),
    )(scale_in, bias_in, a2d, w)


# --------------------------------------------------------------------------- #
# Fused 3x3x3 conv (padding=1, stride=1), im2col-free and HBM-pad-free:
#   grid = (N, D, kd); the UNPADDED previous-stage plane at clamped depth
#   d+kd-1 is fetched, BN+ReLU applied (scale/bias zeroed for the depth halo),
#   the H/W halo is built in a small VMEM scratch, and the 9 in-plane taps are
#   computed as 3 K-filled (K = 3*Cp) MXU matmuls accumulated into f32 scratch
#   with one RMW per kd step.  Per-plane BN stats are written as outputs.
# --------------------------------------------------------------------------- #
def _conv3x3x3_kernel(scale_ref, bias_ref, a_ref, w_ref,
                      y_ref, sum_ref, ssq_ref,
                      acc_sc, pad_sc,
                      *, D, H, W, w_resident):
    d = pl.program_id(1)
    kd = pl.program_id(2)
    cp = a_ref.shape[-1]

    # Depth halo: this tap reads depth d+kd-1; the index_map clamped the DMA,
    # so zero the folded BN scale/bias -> relu(0*x+0) == 0 == zero padding of
    # the post-activation tensor.  (1, Cp) ops, not a full-plane select.
    di = d + kd - 1
    dvalid = jnp.logical_and(di >= 0, di <= D - 1).astype(jnp.float32)
    scale = scale_ref[...] * dvalid
    bias = bias_ref[...] * dvalid

    act = jnp.maximum(a_ref[...].astype(jnp.float32) * scale + bias,
                      0.0).astype(jnp.bfloat16)                  # (H, W, Cp)

    @pl.when(kd == 0)
    def _():
        pad_sc[...] = jnp.zeros_like(pad_sc)   # halo stays zero for kd = 1, 2
        acc_sc[...] = jnp.zeros_like(acc_sc)

    # H/W zero halo built in VMEM (replaces the old full-tensor HBM pad copy).
    pad_sc[1:H + 1, 1:W + 1, :] = act

    # 9 in-plane taps as 3 K-filled matmuls; single accumulator RMW per step.
    acc = acc_sc[...]
    for kh in range(3):
        a_cat = jnp.concatenate(
            [pad_sc[kh:kh + H, kw:kw + W, :] for kw in range(3)], axis=-1)
        wt = w_ref[kd * 3 + kh] if w_resident else w_ref[kh]     # (3*Cp, Cp)
        acc = acc + jnp.dot(a_cat.reshape(H * W, 3 * cp), wt,
                            preferred_element_type=jnp.float32)

    @pl.when(kd < 2)
    def _():
        acc_sc[...] = acc

    @pl.when(kd == 2)
    def _():
        y_ref[...] = acc.reshape(H, W, cp).astype(y_ref.dtype)
        sum_ref[...] = jnp.sum(acc, axis=0, keepdims=True)
        ssq_ref[...] = jnp.sum(acc * acc, axis=0, keepdims=True)


def conv3x3x3_fused(y_prev, w9, scale_in, bias_in, *, D, H, W, out_dtype):
    """y_prev: (N, D, H, W, Cp) bf16 pre-BN; w9: (9, 3*Cp, Cp) bf16 (kd*3+kh)."""
    n = y_prev.shape[0]
    cp = y_prev.shape[-1]
    do, ho, wo = D, H, W                                # stride=1, padding=1

    w_resident = (w9.size * w9.dtype.itemsize) <= _W_RESIDENT_BYTES
    if w_resident:
        w_spec = pl.BlockSpec((9, 3 * cp, cp), lambda i, j, k: (0, 0, 0))
    else:  # bound VMEM residency at large Cp (v7x): fetch one kd slab per step
        w_spec = pl.BlockSpec((3, 3 * cp, cp), lambda i, j, k: (k, 0, 0))

    def a_map(i, j, k):
        return (i, jnp.minimum(jnp.maximum(j + k - 1, 0), D - 1), 0, 0, 0)

    kernel = functools.partial(_conv3x3x3_kernel, D=D, H=H, W=W,
                               w_resident=w_resident)
    # TODO(synk): for very large H*W / Cp the (H*W, Cp) accumulator and K=3*Cp
    # operand should be row-tiled over the output plane.
    return pl.pallas_call(
        kernel,
        out_shape=(jax.ShapeDtypeStruct((n, do, ho, wo, cp), out_dtype),
                   jax.ShapeDtypeStruct((n, do, 1, cp), jnp.float32),
                   jax.ShapeDtypeStruct((n, do, 1, cp), jnp.float32)),
        grid_spec=pltpu.PrefetchScalarGridSpec(
            num_scalar_prefetch=0,
            grid=(n, do, 3),
            in_specs=[pl.BlockSpec((1, cp), lambda i, j, k: (0, 0)),
                      pl.BlockSpec((1, cp), lambda i, j, k: (0, 0)),
                      pl.BlockSpec((None, None, H, W, cp), a_map),
                      w_spec],
            out_specs=(pl.BlockSpec((None, None, ho, wo, cp),
                                    lambda i, j, k: (i, j, 0, 0, 0)),
                       pl.BlockSpec((None, None, 1, cp),
                                    lambda i, j, k: (i, j, 0, 0)),
                       pl.BlockSpec((None, None, 1, cp),
                                    lambda i, j, k: (i, j, 0, 0))),
            scratch_shapes=[pltpu.VMEM((ho * wo, cp), jnp.float32),
                            pltpu.VMEM((H + 2, W + 2, cp), jnp.bfloat16)]),
        compiler_params=pltpu.CompilerParams(
            dimension_semantics=("parallel", "parallel", "arbitrary"),
            vmem_limit_bytes=_VMEM_LIMIT_BYTES),
    )(scale_in, bias_in, y_prev, w9)


# ------------------------------- glue / driver ------------------------------ #
def _fold_bn(col_sum, col_ssq, count, gamma, beta, eps):
    mean = col_sum / count
    var = jnp.maximum(col_ssq / count - mean * mean, 0.0)   # biased variance
    scale = gamma / jnp.sqrt(var + eps)
    bias = beta - mean * scale
    return scale.reshape(1, -1), bias.reshape(1, -1)        # (1, Cp) each


def downscale_forward(x_ncdhw, params, stride=1, eps=1e-5):
    """Pallas implementation of DownScale.forward (training-mode BN)."""
    if stride != 1:
        # TODO(synk): strided 3x3x3 path not implemented (module default is 1).
        raise NotImplementedError("stride != 1 not supported by the Pallas path")

    n, cin, d, h, w = x_ncdhw.shape
    planes = params["w1"].shape[1]
    cp = _round_up(planes, LANE)

    # Pack weights / BN params into channel-padded bf16 matmul layout.
    w1 = jnp.zeros((cin, cp), jnp.float32).at[:, :planes].set(
        params["w1"]).astype(jnp.bfloat16)
    # 3x3x3 weights repacked for K-fill: rows ordered (kw, cin) -> K = 3*Cp.
    w2p = jnp.zeros((3, 3, 3, cp, cp), jnp.float32).at[
        :, :, :, :planes, :planes].set(params["w2"])
    w2p = w2p.reshape(9, 3 * cp, cp).astype(jnp.bfloat16)        # [kd*3+kh]
    w3 = jnp.zeros((cp, cp), jnp.float32).at[:planes, :planes].set(
        params["w3"]).astype(jnp.bfloat16)

    def padc(v):
        return jnp.zeros((cp,), jnp.float32).at[:planes].set(v)

    g1, b1 = padc(params["g1"]), padc(params["b1"])
    g2, b2 = padc(params["g2"]), padc(params["b2"])
    g3, b3 = padc(params["g3"]), padc(params["b3"])

    # NCDHW -> NDHWC rows for the first matmul.
    x_flat = jnp.transpose(x_ncdhw, (0, 2, 3, 4, 1)).astype(
        jnp.bfloat16).reshape(-1, cin)
    m1 = n * d * h * w

    # -- stage 1: conv1 (1x1x1) + BN1 statistics ------------------------------
    if cin >= LANE:
        mp1 = _round_up(m1, TM)
        a1 = jnp.pad(x_flat, ((0, mp1 - m1), (0, 0)))
        dummy = jnp.zeros((1, cin), jnp.float32)
        y1f, s1p, q1p = conv1x1_fused(a1, w1, dummy, dummy,
                                      apply_prologue=False,
                                      out_dtype=jnp.bfloat16, m_true=m1)
        s1 = jnp.sum(s1p, axis=(0, 1))
        q1 = jnp.sum(q1p, axis=(0, 1))
        # TODO(synk): when m1 % TM != 0 this slice+reshape is one extra copy; a
        # plane-tiled stage-1 grid would write the 5-D layout directly.
        y1 = y1f[:m1].reshape(n, d, h, w, cp)
    else:
        # Tiny Cin: the (M, Cin) input is lane-sparse and the MXU nearly idle;
        # a plain XLA matmul fuses with the layout transpose and lands directly
        # in the channel-padded (N, D, H, W, Cp) layout conv2 reads.
        y1_f32 = jnp.dot(x_flat, w1, preferred_element_type=jnp.float32)
        s1 = jnp.sum(y1_f32, axis=0)
        q1 = jnp.sum(y1_f32 * y1_f32, axis=0)
        y1 = y1_f32.astype(jnp.bfloat16).reshape(n, d, h, w, cp)

    scale1, bias1 = _fold_bn(s1, q1, m1, g1, b1, eps)

    # -- stage 2: conv2 (3x3x3, pad=1) with BN1+ReLU fused as its prologue ----
    y2, s2p, q2p = conv3x3x3_fused(y1, w2p, scale1, bias1, D=d, H=h, W=w,
                                   out_dtype=jnp.bfloat16)
    _, do, ho, wo, _ = y2.shape
    m2 = n * do * ho * wo
    s2 = jnp.sum(s2p, axis=(0, 1, 2))
    q2 = jnp.sum(q2p, axis=(0, 1, 2))
    scale2, bias2 = _fold_bn(s2, q2, m2, g2, b2, eps)

    # -- stage 3: conv3 (1x1x1) with BN2+ReLU fused as its prologue -----------
    mp2 = _round_up(m2, TM)
    a3 = jnp.pad(y2.reshape(m2, cp), ((0, mp2 - m2), (0, 0)))
    y3, s3p, q3p = conv1x1_fused(a3, w3, scale2, bias2, apply_prologue=True,
                                 out_dtype=jnp.bfloat16, m_true=m2)
    s3 = jnp.sum(s3p, axis=(0, 1))
    q3 = jnp.sum(q3p, axis=(0, 1))
    scale3, bias3 = _fold_bn(s3, q3, m2, g3, b3, eps)

    # -- final BN3 + ReLU + channel un-pad, fused by XLA into the NCDHW
    #    transpose pass (y3 is bf16, so this tail reads/writes half the bytes).
    y3u = y3[:m2, :planes].reshape(n, do, ho, wo, planes)
    out = jnp.maximum(
        y3u.astype(jnp.float32) * scale3[0, :planes] + bias3[0, :planes], 0.0)
    return jnp.transpose(out, (0, 4, 1, 2, 3))               # back to NCDHW


def ref_forward(x_ncdhw, params, stride=1, eps=1e-5):
    """Pure-JAX reference with matching numerics (bf16 MXU operands, f32
    accumulation, bf16 intermediate storage, biased batch-norm variance)."""
    f32, bf16 = jnp.float32, jnp.bfloat16
    n, cin, d, h, w = x_ncdhw.shape
    planes = params["w1"].shape[1]

    def dot16(a, b):
        return jnp.dot(a.astype(bf16), b.astype(bf16),
                       preferred_element_type=f32)

    def fold(y2d, g, b):
        cnt = y2d.shape[0]
        s = jnp.sum(y2d, axis=0)
        q = jnp.sum(y2d * y2d, axis=0)
        mean = s / cnt
        var = jnp.maximum(q / cnt - mean * mean, 0.0)
        scale = g / jnp.sqrt(var + eps)
        return scale, b - mean * scale

    x = jnp.transpose(x_ncdhw, (0, 2, 3, 4, 1)).astype(bf16)

    # stage 1
    y1 = dot16(x.reshape(-1, cin), params["w1"])
    sc1, bi1 = fold(y1, params["g1"], params["b1"])
    a1 = jnp.maximum(y1.astype(bf16).astype(f32) * sc1 + bi1, 0.0)
    a1 = a1.astype(bf16).reshape(n, d, h, w, planes)

    # stage 2: 3x3x3 conv, padding=1
    a1p = jnp.pad(a1, ((0, 0), (1, 1), (1, 1), (1, 1), (0, 0)))
    do = (d + 2 - 3) // stride + 1
    ho = (h + 2 - 3) // stride + 1
    wo = (w + 2 - 3) // stride + 1
    y2 = jnp.zeros((n * do * ho * wo, planes), f32)
    for kd in range(3):
        for kh in range(3):
            for kw in range(3):
                win = a1p[:, kd:kd + (do - 1) * stride + 1:stride,
                          kh:kh + (ho - 1) * stride + 1:stride,
                          kw:kw + (wo - 1) * stride + 1:stride, :]
                y2 = y2 + dot16(win.reshape(-1, planes),
                                params["w2"][kd, kh, kw])
    sc2, bi2 = fold(y2, params["g2"], params["b2"])
    a2 = jnp.maximum(y2.astype(bf16).astype(f32) * sc2 + bi2, 0.0).astype(bf16)

    # stage 3 (y3 stored bf16, matching the kernel's stage-3 output dtype)
    y3 = dot16(a2, params["w3"])
    sc3, bi3 = fold(y3, params["g3"], params["b3"])
    out = jnp.maximum(y3.astype(bf16).astype(f32) * sc3 + bi3, 0.0)
    return jnp.transpose(out.reshape(n, do, ho, wo, planes), (0, 4, 1, 2, 3))


def init_params(key, in_planes, planes):
    ks = jax.random.split(key, 9)
    # Weights stored directly in matmul form:
    #   w1: (Cin, planes)                <- torch (planes, Cin, 1, 1, 1)
    #   w2: (3, 3, 3, planes, planes)    <- torch (planes, planes, 3, 3, 3)
    #   w3: (planes, planes)             <- torch (planes, planes, 1, 1, 1)
    return {
        "w1": jax.random.normal(ks[0], (in_planes, planes), jnp.float32) * 0.2,
        "w2": jax.random.normal(ks[1], (3, 3, 3, planes, planes),
                                jnp.float32) * 0.08,
        "w3": jax.random.normal(ks[2], (planes, planes), jnp.float32) * 0.2,
        "g1": 1.0 + 0.1 * jax.random.normal(ks[3], (planes,), jnp.float32),
        "b1": 0.1 * jax.random.normal(ks[4], (planes,), jnp.float32),
        "g2": 1.0 + 0.1 * jax.random.normal(ks[5], (planes,), jnp.float32),
        "b2": 0.1 * jax.random.normal(ks[6], (planes,), jnp.float32),
        "g3": 1.0 + 0.1 * jax.random.normal(ks[7], (planes,), jnp.float32),
        "b3": 0.1 * jax.random.normal(ks[8], (planes,), jnp.float32),
    }


if __name__ == "__main__":
    key = jax.random.PRNGKey(0)
    kx, kp = jax.random.split(key)

    in_planes, planes, stride = 4, 8, 1
    n, d, h, w = 2, 8, 6, 6                       # M = 576 -> ragged M tiles
    x = jax.random.normal(kx, (n, in_planes, d, h, w), jnp.float32)  # NCDHW
    params = init_params(kp, in_planes, planes)

    fwd = jax.jit(functools.partial(downscale_forward, stride=stride))
    out = jax.block_until_ready(fwd(x, params))
    ref = jax.block_until_ready(ref_forward(x, params, stride=stride))

    assert out.shape == (n, planes, d, h, w), out.shape
    max_err = float(jnp.max(jnp.abs(out - ref)))
    assert jnp.allclose(out, ref, atol=2e-3, rtol=2e-3), max_err
    print("KERNEL_OK")
</pallas_src>

<mosaic_0001>
module attributes {stable_mosaic.version = 11 : i64} {
  func.func @_conv3x3x3_kernel(%arg0: i32, %arg1: i32, %arg2: i32, %arg3: memref<1x128xf32, #tpu.memory_space<vmem>>, %arg4: memref<1x128xf32, #tpu.memory_space<vmem>>, %arg5: memref<1x1x6x6x128xbf16, #tpu.memory_space<vmem>>, %arg6: memref<9x384x128xbf16, #tpu.memory_space<vmem>>, %arg7: memref<1x1x6x6x128xbf16, #tpu.memory_space<vmem>>, %arg8: memref<1x1x1x128xf32, #tpu.memory_space<vmem>>, %arg9: memref<1x1x1x128xf32, #tpu.memory_space<vmem>>, %arg10: memref<36x128xf32, #tpu.memory_space<vmem>>, %arg11: memref<8x8x128xbf16, #tpu.memory_space<vmem>>) attributes {dimension_semantics = [#tpu.dimension_semantics<parallel>, #tpu.dimension_semantics<parallel>, #tpu.dimension_semantics<arbitrary>], iteration_bounds = array<i64: 2, 8, 3>, scalar_prefetch = 0 : i64, scratch_operands = 2 : i64, tpu.core_type = #tpu.core_type<tc>, window_params = [{pipeline_mode = #tpu.pipeline_mode<synchronous>, transform_indices = @transform_0, window_bounds = array<i64: 1, 128>}, {pipeline_mode = #tpu.pipeline_mode<synchronous>, transform_indices = @transform_1, window_bounds = array<i64: 1, 128>}, {transform_indices = @transform_2, window_bounds = array<i64: 1, 1, 6, 6, 128>}, {pipeline_mode = #tpu.pipeline_mode<synchronous>, transform_indices = @transform_3, window_bounds = array<i64: 9, 384, 128>}, {transform_indices = @transform_4, window_bounds = array<i64: 1, 1, 6, 6, 128>}, {transform_indices = @transform_5, window_bounds = array<i64: 1, 1, 1, 128>}, {transform_indices = @transform_6, window_bounds = array<i64: 1, 1, 1, 128>}]} {
    %0 = arith.addi %arg1, %arg2 : i32
    %c1_i32 = arith.constant 1 : i32
    %1 = arith.subi %0, %c1_i32 : i32
    %c0_i32 = arith.constant 0 : i32
    %2 = arith.cmpi sge, %1, %c0_i32 : i32
    %c7_i32 = arith.constant 7 : i32
    %3 = arith.cmpi sle, %1, %c7_i32 : i32
    %4 = arith.andi %2, %3 : i1
    %5 = arith.extui %4 : i1 to i32
    %6 = arith.sitofp %5 : i32 to f32
    %c0 = arith.constant 0 : index
    %c0_0 = arith.constant 0 : index
    %7 = vector.load %arg3[%c0, %c0_0] : memref<1x128xf32, #tpu.memory_space<vmem>>, vector<1x128xf32>
    %8 = vector.broadcast %6 : f32 to vector<1x128xf32>
    %9 = arith.mulf %7, %8 : vector<1x128xf32>
    %c0_1 = arith.constant 0 : index
    %c0_2 = arith.constant 0 : index
    %10 = vector.load %arg4[%c0_1, %c0_2] : memref<1x128xf32, #tpu.memory_space<vmem>>, vector<1x128xf32>
    %11 = vector.broadcast %6 : f32 to vector<1x128xf32>
    %12 = arith.mulf %10, %11 : vector<1x128xf32>
    %c0_3 = arith.constant 0 : index
    %c0_4 = arith.constant 0 : index
    %c0_5 = arith.constant 0 : index
    %c0_6 = arith.constant 0 : index
    %c0_7 = arith.constant 0 : index
    %13 = vector.load %arg5[%c0_3, %c0_4, %c0_5, %c0_6, %c0_7] : memref<1x1x6x6x128xbf16, #tpu.memory_space<vmem>>, vector<1x1x6x6x128xbf16>
    %14 = vector.shape_cast %13 : vector<1x1x6x6x128xbf16> to vector<6x6x128xbf16>
    %15 = arith.extf %14 : vector<6x6x128xbf16> to vector<6x6x128xf32>
    %16 = vector.shape_cast %9 : vector<1x128xf32> to vector<1x1x128xf32>
    %17 = vector.broadcast %16 : vector<1x1x128xf32> to vector<6x6x128xf32>
    %18 = arith.mulf %15, %17 : vector<6x6x128xf32>
    %19 = vector.shape_cast %12 : vector<1x128xf32> to vector<1x1x128xf32>
    %20 = vector.broadcast %19 : vector<1x1x128xf32> to vector<6x6x128xf32>
    %21 = arith.addf %18, %20 : vector<6x6x128xf32>
    %cst = arith.constant 0.000000e+00 : f32
    %22 = vector.broadcast %cst : f32 to vector<6x6x128xf32>
    %23 = arith.maximumf %21, %22 : vector<6x6x128xf32>
    %24 = arith.truncf %23 : vector<6x6x128xf32> to vector<6x6x128xbf16>
    %c0_i32_8 = arith.constant 0 : i32
    %25 = arith.cmpi eq, %arg2, %c0_i32_8 : i32
    %26 = arith.extui %25 : i1 to i32
    %c0_i32_9 = arith.constant 0 : i32
    %27 = arith.cmpi ne, %26, %c0_i32_9 : i32
    scf.if %27 {
      %cst_57 = arith.constant 0.000000e+00 : bf16
      %72 = vector.broadcast %cst_57 : bf16 to vector<8x8x128xbf16>
      %c0_58 = arith.constant 0 : index
      %c0_59 = arith.constant 0 : index
      %c0_60 = arith.constant 0 : index
      %73 = vector.load %arg11[%c0_58, %c0_59, %c0_60] : memref<8x8x128xbf16, #tpu.memory_space<vmem>>, vector<8x8x128xbf16>
      tpu.vector_store %arg11[%c0_58, %c0_59, %c0_60], %72 {strides = array<i32>} : memref<8x8x128xbf16, #tpu.memory_space<vmem>>, vector<8x8x128xbf16>,
      %cst_61 = arith.constant 0.000000e+00 : f32
      %74 = vector.broadcast %cst_61 : f32 to vector<36x128xf32>
      %c0_62 = arith.constant 0 : index
      %c0_63 = arith.constant 0 : index
      %75 = vector.load %arg10[%c0_62, %c0_63] : memref<36x128xf32, #tpu.memory_space<vmem>>, vector<36x128xf32>
      tpu.vector_store %arg10[%c0_62, %c0_63], %74 {strides = array<i32>} : memref<36x128xf32, #tpu.memory_space<vmem>>, vector<36x128xf32>,
    } else {
    }
    %c1 = arith.constant 1 : index
    %c1_10 = arith.constant 1 : index
    %c0_11 = arith.constant 0 : index
    %28 = vector.load %arg11[%c1, %c1_10, %c0_11] : memref<8x8x128xbf16, #tpu.memory_space<vmem>>, vector<6x6x128xbf16>
    tpu.vector_store %arg11[%c1, %c1_10, %c0_11], %24 {strides = array<i32>} : memref<8x8x128xbf16, #tpu.memory_space<vmem>>, vector<6x6x128xbf16>,
    %c0_12 = arith.constant 0 : index
    %c0_13 = arith.constant 0 : index
    %29 = vector.load %arg10[%c0_12, %c0_13] : memref<36x128xf32, #tpu.memory_space<vmem>>, vector<36x128xf32>
    %c0_14 = arith.constant 0 : index
    %c0_15 = arith.constant 0 : index
    %c0_16 = arith.constant 0 : index
    %30 = vector.load %arg11[%c0_14, %c0_15, %c0_16] : memref<8x8x128xbf16, #tpu.memory_space<vmem>>, vector<6x6x128xbf16>
    %c0_17 = arith.constant 0 : index
    %c1_18 = arith.constant 1 : index
    %c0_19 = arith.constant 0 : index
    %31 = vector.load %arg11[%c0_17, %c1_18, %c0_19] : memref<8x8x128xbf16, #tpu.memory_space<vmem>>, vector<6x6x128xbf16>
    %c0_20 = arith.constant 0 : index
    %c2 = arith.constant 2 : index
    %c0_21 = arith.constant 0 : index
    %32 = vector.load %arg11[%c0_20, %c2, %c0_21] : memref<8x8x128xbf16, #tpu.memory_space<vmem>>, vector<6x6x128xbf16>
    %33 = tpu.concatenate %30, %31, %32 in 2 : vector<6x6x128xbf16>, vector<6x6x128xbf16>, vector<6x6x128xbf16> -> vector<6x6x384xbf16>
    %c3_i32 = arith.constant 3 : i32
    %34 = arith.muli %arg2, %c3_i32 : i32
    %c0_i32_22 = arith.constant 0 : i32
    %35 = arith.addi %34, %c0_i32_22 : i32
    %36 = arith.index_cast %35 : i32 to index
    %c0_23 = arith.constant 0 : index
    %c0_24 = arith.constant 0 : index
    %37 = vector.load %arg6[%36, %c0_23, %c0_24] : memref<9x384x128xbf16, #tpu.memory_space<vmem>>, vector<1x384x128xbf16>
    %38 = vector.shape_cast %37 : vector<1x384x128xbf16> to vector<384x128xbf16>
    %39 = vector.shape_cast %33 : vector<6x6x384xbf16> to vector<36x384xbf16>
    %cst_25 = arith.constant dense<0.000000e+00> : vector<36x128xf32>
    %40 = tpu.matmul %39, %38, %cst_25 {dimension_numbers = #tpu.dot_dimension_numbers<[1], [0], [0], [1], [0, 0, 1, 1], [], []>} : vector<36x384xbf16>, vector<384x128xbf16>, vector<36x128xf32> -> vector<36x128xf32>
    %41 = arith.addf %29, %40 : vector<36x128xf32>
    %c1_26 = arith.constant 1 : index
    %c0_27 = arith.constant 0 : index
    %c0_28 = arith.constant 0 : index
    %42 = vector.load %arg11[%c1_26, %c0_27, %c0_28] : memref<8x8x128xbf16, #tpu.memory_space<vmem>>, vector<6x6x128xbf16>
    %c1_29 = arith.constant 1 : index
    %c1_30 = arith.constant 1 : index
    %c0_31 = arith.constant 0 : index
    %43 = vector.load %arg11[%c1_29, %c1_30, %c0_31] : memref<8x8x128xbf16, #tpu.memory_space<vmem>>, vector<6x6x128xbf16>
    %c1_32 = arith.constant 1 : index
    %c2_33 = arith.constant 2 : index
    %c0_34 = arith.constant 0 : index
    %44 = vector.load %arg11[%c1_32, %c2_33, %c0_34] : memref<8x8x128xbf16, #tpu.memory_space<vmem>>, vector<6x6x128xbf16>
    %45 = tpu.concatenate %42, %43, %44 in 2 : vector<6x6x128xbf16>, vector<6x6x128xbf16>, vector<6x6x128xbf16> -> vector<6x6x384xbf16>
    %c3_i32_35 = arith.constant 3 : i32
    %46 = arith.muli %arg2, %c3_i32_35 : i32
    %c1_i32_36 = arith.constant 1 : i32
    %47 = arith.addi %46, %c1_i32_36 : i32
    %48 = arith.index_cast %47 : i32 to index
    %c0_37 = arith.constant 0 : index
    %c0_38 = arith.constant 0 : index
    %49 = vector.load %arg6[%48, %c0_37, %c0_38] : memref<9x384x128xbf16, #tpu.memory_space<vmem>>, vector<1x384x128xbf16>
    %50 = vector.shape_cast %49 : vector<1x384x128xbf16> to vector<384x128xbf16>
    %51 = vector.shape_cast %45 : vector<6x6x384xbf16> to vector<36x384xbf16>
    %cst_39 = arith.constant dense<0.000000e+00> : vector<36x128xf32>
    %52 = tpu.matmul %51, %50, %cst_39 {dimension_numbers = #tpu.dot_dimension_numbers<[1], [0], [0], [1], [0, 0, 1, 1], [], []>} : vector<36x384xbf16>, vector<384x128xbf16>, vector<36x128xf32> -> vector<36x128xf32>
    %53 = arith.addf %41, %52 : vector<36x128xf32>
    %c2_40 = arith.constant 2 : index
    %c0_41 = arith.constant 0 : index
    %c0_42 = arith.constant 0 : index
    %54 = vector.load %arg11[%c2_40, %c0_41, %c0_42] : memref<8x8x128xbf16, #tpu.memory_space<vmem>>, vector<6x6x128xbf16>
    %c2_43 = arith.constant 2 : index
    %c1_44 = arith.constant 1 : index
    %c0_45 = arith.constant 0 : index
    %55 = vector.load %arg11[%c2_43, %c1_44, %c0_45] : memref<8x8x128xbf16, #tpu.memory_space<vmem>>, vector<6x6x128xbf16>
    %c2_46 = arith.constant 2 : index
    %c2_47 = arith.constant 2 : index
    %c0_48 = arith.constant 0 : index
    %56 = vector.load %arg11[%c2_46, %c2_47, %c0_48] : memref<8x8x128xbf16, #tpu.memory_space<vmem>>, vector<6x6x128xbf16>
    %57 = tpu.concatenate %54, %55, %56 in 2 : vector<6x6x128xbf16>, vector<6x6x128xbf16>, vector<6x6x128xbf16> -> vector<6x6x384xbf16>
    %c3_i32_49 = arith.constant 3 : i32
    %58 = arith.muli %arg2, %c3_i32_49 : i32
    %c2_i32 = arith.constant 2 : i32
    %59 = arith.addi %58, %c2_i32 : i32
    %60 = arith.index_cast %59 : i32 to index
    %c0_50 = arith.constant 0 : index
    %c0_51 = arith.constant 0 : index
    %61 = vector.load %arg6[%60, %c0_50, %c0_51] : memref<9x384x128xbf16, #tpu.memory_space<vmem>>, vector<1x384x128xbf16>
    %62 = vector.shape_cast %61 : vector<1x384x128xbf16> to vector<384x128xbf16>
    %63 = vector.shape_cast %57 : vector<6x6x384xbf16> to vector<36x384xbf16>
    %cst_52 = arith.constant dense<0.000000e+00> : vector<36x128xf32>
    %64 = tpu.matmul %63, %62, %cst_52 {dimension_numbers = #tpu.dot_dimension_numbers<[1], [0], [0], [1], [0, 0, 1, 1], [], []>} : vector<36x384xbf16>, vector<384x128xbf16>, vector<36x128xf32> -> vector<36x128xf32>
    %65 = arith.addf %53, %64 : vector<36x128xf32>
    %c2_i32_53 = arith.constant 2 : i32
    %66 = arith.cmpi slt, %arg2, %c2_i32_53 : i32
    %67 = arith.extui %66 : i1 to i32
    %c0_i32_54 = arith.constant 0 : i32
    %68 = arith.cmpi ne, %67, %c0_i32_54 : i32
    scf.if %68 {
      %c0_57 = arith.constant 0 : index
      %c0_58 = arith.constant 0 : index
      %72 = vector.load %arg10[%c0_57, %c0_58] : memref<36x128xf32, #tpu.memory_space<vmem>>, vector<36x128xf32>
      tpu.vector_store %arg10[%c0_57, %c0_58], %65 {strides = array<i32>} : memref<36x128xf32, #tpu.memory_space<vmem>>, vector<36x128xf32>,
    } else {
    }
    %c2_i32_55 = arith.constant 2 : i32
    %69 = arith.cmpi eq, %arg2, %c2_i32_55 : i32
    %70 = arith.extui %69 : i1 to i32
    %c0_i32_56 = arith.constant 0 : i32
    %71 = arith.cmpi ne, %70, %c0_i32_56 : i32
    scf.if %71 {
      %72 = vector.shape_cast %65 : vector<36x128xf32> to vector<6x6x128xf32>
      %73 = arith.truncf %72 : vector<6x6x128xf32> to vector<6x6x128xbf16>
      %c0_57 = arith.constant 0 : index
      %c0_58 = arith.constant 0 : index
      %c0_59 = arith.constant 0 : index
      %c0_60 = arith.constant 0 : index
      %c0_61 = arith.constant 0 : index
      %74 = vector.load %arg7[%c0_57, %c0_58, %c0_59, %c0_60, %c0_61] : memref<1x1x6x6x128xbf16, #tpu.memory_space<vmem>>, vector<1x1x6x6x128xbf16>
      %75 = vector.shape_cast %74 : vector<1x1x6x6x128xbf16> to vector<6x6x128xbf16>
      %76 = vector.shape_cast %73 : vector<6x6x128xbf16> to vector<1x1x6x6x128xbf16>
      tpu.vector_store %arg7[%c0_57, %c0_58, %c0_59, %c0_60, %c0_61], %76 {strides = array<i32>} : memref<1x1x6x6x128xbf16, #tpu.memory_space<vmem>>, vector<1x1x6x6x128xbf16>,
      %cst_62 = arith.constant dense<0.000000e+00> : vector<128xf32>
      %77 = vector.multi_reduction <add>, %65, %cst_62 [0] : vector<36x128xf32> to vector<128xf32>
      %78 = vector.shape_cast %77 : vector<128xf32> to vector<1x128xf32>
      %c0_63 = arith.constant 0 : index
      %c0_64 = arith.constant 0 : index
      %c0_65 = arith.constant 0 : index
      %c0_66 = arith.constant 0 : index
      %79 = vector.load %arg8[%c0_63, %c0_64, %c0_65, %c0_66] : memref<1x1x1x128xf32, #tpu.memory_space<vmem>>, vector<1x1x1x128xf32>
      %80 = vector.shape_cast %79 : vector<1x1x1x128xf32> to vector<1x128xf32>
      %81 = vector.shape_cast %78 : vector<1x128xf32> to vector<1x1x1x128xf32>
      tpu.vector_store %arg8[%c0_63, %c0_64, %c0_65, %c0_66], %81 {strides = array<i32>} : memref<1x1x1x128xf32, #tpu.memory_space<vmem>>, vector<1x1x1x128xf32>,
      %82 = arith.mulf %65, %65 : vector<36x128xf32>
      %cst_67 = arith.constant dense<0.000000e+00> : vector<128xf32>
      %83 = vector.multi_reduction <add>, %82, %cst_67 [0] : vector<36x128xf32> to vector<128xf32>
      %84 = vector.shape_cast %83 : vector<128xf32> to vector<1x128xf32>
      %c0_68 = arith.constant 0 : index
      %c0_69 = arith.constant 0 : index
      %c0_70 = arith.constant 0 : index
      %c0_71 = arith.constant 0 : index
      %85 = vector.load %arg9[%c0_68, %c0_69, %c0_70, %c0_71] : memref<1x1x1x128xf32, #tpu.memory_space<vmem>>, vector<1x1x1x128xf32>
      %86 = vector.shape_cast %85 : vector<1x1x1x128xf32> to vector<1x128xf32>
      %87 = vector.shape_cast %84 : vector<1x128xf32> to vector<1x1x1x128xf32>
      tpu.vector_store %arg9[%c0_68, %c0_69, %c0_70, %c0_71], %87 {strides = array<i32>} : memref<1x1x1x128xf32, #tpu.memory_space<vmem>>, vector<1x1x1x128xf32>,
    } else {
    }
    return
  }
  func.func @transform_0(%arg0: i32, %arg1: i32, %arg2: i32) -> (i32, i32) {
    %c0_i32 = arith.constant 0 : i32
    %c0_i32_0 = arith.constant 0 : i32
    %c0_i32_1 = arith.constant 0 : i32
    return %c0_i32, %c0_i32_0 : i32, i32
  }
  func.func @transform_1(%arg0: i32, %arg1: i32, %arg2: i32) -> (i32, i32) {
    %c0_i32 = arith.constant 0 : i32
    %c0_i32_0 = arith.constant 0 : i32
    %c0_i32_1 = arith.constant 0 : i32
    return %c0_i32, %c0_i32_0 : i32, i32
  }
  func.func @transform_2(%arg0: i32, %arg1: i32, %arg2: i32) -> (i32, i32, i32, i32, i32) {
    %0 = arith.addi %arg1, %arg2 : i32
    %c1_i32 = arith.constant 1 : i32
    %1 = arith.subi %0, %c1_i32 : i32
    %c0_i32 = arith.constant 0 : i32
    %2 = arith.maxsi %1, %c0_i32 : i32
    %c7_i32 = arith.constant 7 : i32
    %3 = arith.minsi %2, %c7_i32 : i32
    %c0_i32_0 = arith.constant 0 : i32
    %c0_i32_1 = arith.constant 0 : i32
    %c0_i32_2 = arith.constant 0 : i32
    %c0_i32_3 = arith.constant 0 : i32
    return %arg0, %3, %c0_i32_0, %c0_i32_1, %c0_i32_2 : i32, i32, i32, i32, i32
  }
  func.func @transform_3(%arg0: i32, %arg1: i32, %arg2: i32) -> (i32, i32, i32) {
    %c0_i32 = arith.constant 0 : i32
    %c0_i32_0 = arith.constant 0 : i32
    %c0_i32_1 = arith.constant 0 : i32
    %c0_i32_2 = arith.constant 0 : i32
    return %c0_i32, %c0_i32_0, %c0_i32_1 : i32, i32, i32
  }
  func.func @transform_4(%arg0: i32, %arg1: i32, %arg2: i32) -> (i32, i32, i32, i32, i32) {
    %c0_i32 = arith.constant 0 : i32
    %c0_i32_0 = arith.constant 0 : i32
    %c0_i32_1 = arith.constant 0 : i32
    %c0_i32_2 = arith.constant 0 : i32
    return %arg0, %arg1, %c0_i32, %c0_i32_0, %c0_i32_1 : i32, i32, i32, i32, i32
  }
  func.func @transform_5(%arg0: i32, %arg1: i32, %arg2: i32) -> (i32, i32, i32, i32) {
    %c0_i32 = arith.constant 0 : i32
    %c0_i32_0 = arith.constant 0 : i32
    %c0_i32_1 = arith.constant 0 : i32
    return %arg0, %arg1, %c0_i32, %c0_i32_0 : i32, i32, i32, i32
  }
  func.func @transform_6(%arg0: i32, %arg1: i32, %arg2: i32) -> (i32, i32, i32, i32) {
    %c0_i32 = arith.constant 0 : i32
    %c0_i32_0 = arith.constant 0 : i32
    %c0_i32_1 = arith.constant 0 : i32
    return %arg0, %arg1, %c0_i32, %c0_i32_0 : i32, i32, i32, i32
  }
}

module attributes {stable_mosaic.version = 11 : i64} {
  func.func @_conv1x1_kernel(%arg0: i32, %arg1: memref<1x128xf32, #tpu.memory_space<vmem>>, %arg2: memref<1x128xf32, #tpu.memory_space<vmem>>, %arg3: memref<1024x128xbf16, #tpu.memory_space<vmem>>, %arg4: memref<128x128xbf16, #tpu.memory_space<vmem>>, %arg5: memref<1024x128xbf16, #tpu.memory_space<vmem>>, %arg6: memref<1x1x128xf32, #tpu.memory_space<vmem>>, %arg7: memref<1x1x128xf32, #tpu.memory_space<vmem>>) attributes {dimension_semantics = [#tpu.dimension_semantics<parallel>], iteration_bounds = array<i64: 1>, scalar_prefetch = 0 : i64, scratch_operands = 0 : i64, tpu.core_type = #tpu.core_type<tc>, window_params = [{pipeline_mode = #tpu.pipeline_mode<synchronous>, transform_indices = @transform_0, window_bounds = array<i64: 1, 128>}, {pipeline_mode = #tpu.pipeline_mode<synchronous>, transform_indices = @transform_1, window_bounds = array<i64: 1, 128>}, {transform_indices = @transform_2, window_bounds = array<i64: 1024, 128>}, {pipeline_mode = #tpu.pipeline_mode<synchronous>, transform_indices = @transform_3, window_bounds = array<i64: 128, 128>}, {transform_indices = @transform_4, window_bounds = array<i64: 1024, 128>}, {transform_indices = @transform_5, window_bounds = array<i64: 1, 1, 128>}, {transform_indices = @transform_6, window_bounds = array<i64: 1, 1, 128>}]} {
    %c0 = arith.constant 0 : index
    %c0_0 = arith.constant 0 : index
    %0 = vector.load %arg3[%c0, %c0_0] : memref<1024x128xbf16, #tpu.memory_space<vmem>>, vector<1024x128xbf16>
    %1 = arith.extf %0 : vector<1024x128xbf16> to vector<1024x128xf32>
    %c0_1 = arith.constant 0 : index
    %c0_2 = arith.constant 0 : index
    %2 = vector.load %arg1[%c0_1, %c0_2] : memref<1x128xf32, #tpu.memory_space<vmem>>, vector<1x128xf32>
    %3 = vector.broadcast %2 : vector<1x128xf32> to vector<1024x128xf32>
    %4 = arith.mulf %1, %3 : vector<1024x128xf32>
    %c0_3 = arith.constant 0 : index
    %c0_4 = arith.constant 0 : index
    %5 = vector.load %arg2[%c0_3, %c0_4] : memref<1x128xf32, #tpu.memory_space<vmem>>, vector<1x128xf32>
    %6 = vector.broadcast %5 : vector<1x128xf32> to vector<1024x128xf32>
    %7 = arith.addf %4, %6 : vector<1024x128xf32>
    %cst = arith.constant 0.000000e+00 : f32
    %8 = vector.broadcast %cst : f32 to vector<1024x128xf32>
    %9 = arith.maximumf %7, %8 : vector<1024x128xf32>
    %10 = arith.truncf %9 : vector<1024x128xf32> to vector<1024x128xbf16>
    %c0_5 = arith.constant 0 : index
    %c0_6 = arith.constant 0 : index
    %11 = vector.load %arg4[%c0_5, %c0_6] : memref<128x128xbf16, #tpu.memory_space<vmem>>, vector<128x128xbf16>
    %cst_7 = arith.constant dense<0.000000e+00> : vector<1024x128xf32>
    %12 = tpu.matmul %10, %11, %cst_7 {dimension_numbers = #tpu.dot_dimension_numbers<[1], [0], [0], [1], [0, 0, 1, 1], [], []>} : vector<1024x128xbf16>, vector<128x128xbf16>, vector<1024x128xf32> -> vector<1024x128xf32>
    %13 = arith.truncf %12 : vector<1024x128xf32> to vector<1024x128xbf16>
    %c0_8 = arith.constant 0 : index
    %c0_9 = arith.constant 0 : index
    %14 = vector.load %arg5[%c0_8, %c0_9] : memref<1024x128xbf16, #tpu.memory_space<vmem>>, vector<1024x128xbf16>
    tpu.vector_store %arg5[%c0_8, %c0_9], %13 {strides = array<i32>} : memref<1024x128xbf16, #tpu.memory_space<vmem>>, vector<1024x128xbf16>,
    %c0_i32 = arith.constant 0 : i32
    %15 = arith.cmpi ne, %arg0, %c0_i32 : i32
    %16 = arith.extui %15 : i1 to i32
    %c0_i32_10 = arith.constant 0 : i32
    %17 = arith.cmpi ne, %16, %c0_i32_10 : i32
    scf.if %17 {
      %cst_13 = arith.constant dense<0.000000e+00> : vector<128xf32>
      %21 = vector.multi_reduction <add>, %12, %cst_13 [0] : vector<1024x128xf32> to vector<128xf32>
      %22 = vector.shape_cast %21 : vector<128xf32> to vector<1x128xf32>
      %c0_14 = arith.constant 0 : index
      %c0_15 = arith.constant 0 : index
      %c0_16 = arith.constant 0 : index
      %23 = vector.load %arg6[%c0_14, %c0_15, %c0_16] : memref<1x1x128xf32, #tpu.memory_space<vmem>>, vector<1x1x128xf32>
      %24 = vector.shape_cast %23 : vector<1x1x128xf32> to vector<1x128xf32>
      %25 = vector.shape_cast %22 : vector<1x128xf32> to vector<1x1x128xf32>
      tpu.vector_store %arg6[%c0_14, %c0_15, %c0_16], %25 {strides = array<i32>} : memref<1x1x128xf32, #tpu.memory_space<vmem>>, vector<1x1x128xf32>,
      %26 = arith.mulf %12, %12 : vector<1024x128xf32>
      %cst_17 = arith.constant dense<0.000000e+00> : vector<128xf32>
      %27 = vector.multi_reduction <add>, %26, %cst_17 [0] : vector<1024x128xf32> to vector<128xf32>
      %28 = vector.shape_cast %27 : vector<128xf32> to vector<1x128xf32>
      %c0_18 = arith.constant 0 : index
      %c0_19 = arith.constant 0 : index
      %c0_20 = arith.constant 0 : index
      %29 = vector.load %arg7[%c0_18, %c0_19, %c0_20] : memref<1x1x128xf32, #tpu.memory_space<vmem>>, vector<1x1x128xf32>
      %30 = vector.shape_cast %29 : vector<1x1x128xf32> to vector<1x128xf32>
      %31 = vector.shape_cast %28 : vector<1x128xf32> to vector<1x1x128xf32>
      tpu.vector_store %arg7[%c0_18, %c0_19, %c0_20], %31 {strides = array<i32>} : memref<1x1x128xf32, #tpu.memory_space<vmem>>, vector<1x1x128xf32>,
    } else {
    }
    %c0_i32_11 = arith.constant 0 : i32
    %18 = arith.cmpi eq, %arg0, %c0_i32_11 : i32
    %19 = arith.extui %18 : i1 to i32
    %c0_i32_12 = arith.constant 0 : i32
    %20 = arith.cmpi ne, %19, %c0_i32_12 : i32
    scf.if %20 {
      %c1024_i32 = arith.constant 1024 : i32
      %21 = arith.muli %arg0, %c1024_i32 : i32
      %22 = tpu.iota {dimensions = array<i32: 0>} : vector<1024x1xi32>
      %23 = vector.broadcast %21 : i32 to vector<1024x1xi32>
      %24 = arith.addi %23, %22 : vector<1024x1xi32>
      %c576_i32 = arith.constant 576 : i32
      %25 = vector.broadcast %c576_i32 : i32 to vector<1024x1xi32>
      %26 = arith.cmpi slt, %24, %25 : vector<1024x1xi32>
      %cst_13 = arith.constant 0.000000e+00 : f32
      %27 = vector.shape_cast %26 : vector<1024x1xi1> to vector<1024x1xi1>
      %28 = vector.broadcast %27 : vector<1024x1xi1> to vector<1024x128xi1>
      %29 = vector.broadcast %cst_13 : f32 to vector<1024x128xf32>
      %30 = arith.select %28, %12, %29 : vector<1024x128xi1>, vector<1024x128xf32>
      %cst_14 = arith.constant dense<0.000000e+00> : vector<128xf32>
      %31 = vector.multi_reduction <add>, %30, %cst_14 [0] : vector<1024x128xf32> to vector<128xf32>
      %32 = vector.shape_cast %31 : vector<128xf32> to vector<1x128xf32>
      %c0_15 = arith.constant 0 : index
      %c0_16 = arith.constant 0 : index
      %c0_17 = arith.constant 0 : index
      %33 = vector.load %arg6[%c0_15, %c0_16, %c0_17] : memref<1x1x128xf32, #tpu.memory_space<vmem>>, vector<1x1x128xf32>
      %34 = vector.shape_cast %33 : vector<1x1x128xf32> to vector<1x128xf32>
      %35 = vector.shape_cast %32 : vector<1x128xf32> to vector<1x1x128xf32>
      tpu.vector_store %arg6[%c0_15, %c0_16, %c0_17], %35 {strides = array<i32>} : memref<1x1x128xf32, #tpu.memory_space<vmem>>, vector<1x1x128xf32>,
      %36 = arith.mulf %30, %30 : vector<1024x128xf32>
      %cst_18 = arith.constant dense<0.000000e+00> : vector<128xf32>
      %37 = vector.multi_reduction <add>, %36, %cst_18 [0] : vector<1024x128xf32> to vector<128xf32>
      %38 = vector.shape_cast %37 : vector<128xf32> to vector<1x128xf32>
      %c0_19 = arith.constant 0 : index
      %c0_20 = arith.constant 0 : index
      %c0_21 = arith.constant 0 : index
      %39 = vector.load %arg7[%c0_19, %c0_20, %c0_21] : memref<1x1x128xf32, #tpu.memory_space<vmem>>, vector<1x1x128xf32>
      %40 = vector.shape_cast %39 : vector<1x1x128xf32> to vector<1x128xf32>
      %41 = vector.shape_cast %38 : vector<1x128xf32> to vector<1x1x128xf32>
      tpu.vector_store %arg7[%c0_19, %c0_20, %c0_21], %41 {strides = array<i32>} : memref<1x1x128xf32, #tpu.memory_space<vmem>>, vector<1x1x128xf32>,
    } else {
    }
    return
  }
  func.func @transform_0(%arg0: i32) -> (i32, i32) {
    %c0_i32 = arith.constant 0 : i32
    %c0_i32_0 = arith.constant 0 : i32
    %c0_i32_1 = arith.constant 0 : i32
    return %c0_i32, %c0_i32_0 : i32, i32
  }
  func.func @transform_1(%arg0: i32) -> (i32, i32) {
    %c0_i32 = arith.constant 0 : i32
    %c0_i32_0 = arith.constant 0 : i32
    %c0_i32_1 = arith.constant 0 : i32
    return %c0_i32, %c0_i32_0 : i32, i32
  }
  func.func @transform_2(%arg0: i32) -> (i32, i32) {
    %c0_i32 = arith.constant 0 : i32
    %c0_i32_0 = arith.constant 0 : i32
    return %arg0, %c0_i32 : i32, i32
  }
  func.func @transform_3(%arg0: i32) -> (i32, i32) {
    %c0_i32 = arith.constant 0 : i32
    %c0_i32_0 = arith.constant 0 : i32
    %c0_i32_1 = arith.constant 0 : i32
    return %c0_i32, %c0_i32_0 : i32, i32
  }
  func.func @transform_4(%arg0: i32) -> (i32, i32) {
    %c0_i32 = arith.constant 0 : i32
    %c0_i32_0 = arith.constant 0 : i32
    return %arg0, %c0_i32 : i32, i32
  }
  func.func @transform_5(%arg0: i32) -> (i32, i32, i32) {
    %c0_i32 = arith.constant 0 : i32
    %c0_i32_0 = arith.constant 0 : i32
    %c0_i32_1 = arith.constant 0 : i32
    return %arg0, %c0_i32, %c0_i32_0 : i32, i32, i32
  }
  func.func @transform_6(%arg0: i32) -> (i32, i32, i32) {
    %c0_i32 = arith.constant 0 : i32
    %c0_i32_0 = arith.constant 0 : i32
    %c0_i32_1 = arith.constant 0 : i32
    return %arg0, %c0_i32, %c0_i32_0 : i32, i32, i32
  }
}

</mosaic_0001>

<llo_original>
// kernel: downscale_forward.2
$region0: #{downscale_forward.2}
  #allocation0 [shape = 'u32[]', space=smem, size = 0x4, offset = 0x4, fixed_abs, tag = 'smem constant byte address 0x4 - core index']
  #allocation1 [shape = 'u32[144,128]{1,0:T(1,128)}', space=vmem, size = 0x12000, scoped, tag = 'internal scratch']
  #allocation2 [shape = 'f32[36,128]{1,0:T(8,128)}', space=vmem, size = 0x5000, scoped, tag = 'scratch operand']
  #allocation3 [shape = 'bf16[8,8,128]{2,1,0:T(8,128)(2,1)}', space=vmem, size = 0x4000, scoped, tag = 'scratch operand']
  %s0 = inlined_call_operand.vmem [shape: f32[1,128], index: 0, kind: input, shape index: {}]
  %s1 = inlined_call_operand.vmem [shape: f32[1,128], index: 1, kind: input, shape index: {}]
  %s2 = inlined_call_operand.vmem [shape: bf16[2,8,6,6,128], index: 2, kind: input, shape index: {}]
  %s3 = inlined_call_operand.vmem [shape: bf16[9,384,128], index: 3, kind: input, shape index: {}]
  %s4 = inlined_call_operand.vmem [shape: bf16[2,8,6,6,128], index: 4, kind: output, shape index: {0}]
  %s5 = inlined_call_operand.vmem [shape: f32[2,8,1,128], index: 5, kind: output, shape index: {1}]
  %s6 = inlined_call_operand.vmem [shape: f32[2,8,1,128], index: 6, kind: output, shape index: {2}]
  %7 = xla_tuple %s4, %s5, %s6
  %s8 = sld [smem:[#allocation0]]
  $region77: #{downscale_forward.2} parent=0
    _
  %s10 = ssub.s32 1, %s8
  %s11 = scalar_select 0, %s10, %s8
  loop: start=0, step=1, limit=50
  $region2: #{downscale_forward.2} parent=0 // loop_pre_header
    _
  $region3: #{downscale_forward.2} parent=0 // loop_header
    %s13 = sphi 0, %s17
    %p14 = scmp.ge.s32.totalorder %s13, 50
    %s20 = sphi 0, %s39
    %s21 = sphi 0, %s35
    %s22 = sphi 0, %s31
    %s23 = sphi 0, %s20
    %s24 = sphi 0, %s21
    %s25 = sphi 0, %s22
    %s26 = sphi 0, %s23
    %s27 = sphi 0, %s24
    %s28 = sphi 0, %s25
    %s40 = sphi 0, %s40
    %s42 = sphi 0, %s40
    %s43 = sphi 0, %s42
    %s57 = sphi 0, %s43
    %s61 = sphi 0, %s61
    %s63 = sphi 0, %s61
    %s64 = sphi 0, %s63
    %s78 = sphi 0, %s64
    %s98 = sphi 0, %s100
    %s101 = sphi 0, %s98
    %s102 = sphi 0, %s101
    %s118 = sphi 0, %s102
    %s122 = sphi 0, %s122
    %s124 = sphi 0, %s122
    %s125 = sphi 0, %s124
    %s139 = sphi 0, %s125
    %s147 = sphi 0, %s149
    %s150 = sphi 0, %s147
    %s151 = sphi 0, %s150
    %s167 = sphi 0, %s151
    %s175 = sphi 0, %s177
    %s178 = sphi 0, %s175
    %s179 = sphi 0, %s178
    %s195 = sphi 0, %s179
    %s203 = sphi 0, %s205
    %s206 = sphi 0, %s203
    %s207 = sphi 0, %s206
    %s223 = sphi 0, %s207
  $region4: #{downscale_forward.2} parent=0 // loop_header_branch
    %16 = sbr.rel (%p14) target = $region8
  $region5: #{downscale_forward.2} parent=0 // loop_body
    %s18 = ssub.s32 %s13, 1
    %s19 = ssub.s32 %s13, 2
    %s29 = sadd.s32 1, %s22
    %p30 = scmp.ge.s32.totalorder %s29, 3
    %s31 = scalar_select %p30, 0, %s29
    %s32 = sadd.s32 1, %s21
    %s33 = scalar_select %p30, %s32, %s21
    %p34 = scmp.ge.s32.totalorder %s33, 8
    %s35 = scalar_select %p34, 0, %s33
    %s36 = sadd.s32 1, %s20
    %s37 = scalar_select %p34, %s36, %s20
    %p38 = scmp.ge.s32.totalorder %s37, 2
    %s39 = scalar_select %p38, 0, %s37
    %s41 = sadd.s32 %s40, 1
    %p44 = scmp.eq.s32.totalorder %s13, 47
    %p45 = scmp.ne.s32.totalorder %s40, %s42
    %p46 = scmp.eq.s32.totalorder %s13, 0
    %p47 = por %p45, %p46
    %p48 = scmp.ne.s32.totalorder %s40, %s42
    %p49 = scmp.eq.s32.totalorder %s18, 47
    %p50 = por %p48, %p49
    %p51 = scmp.ne.s32.totalorder %s42, %s43
    %p52 = scmp.eq.s32.totalorder %s18, 0
    %p53 = por %p51, %p52
    %p54 = scmp.ne.s32.totalorder %s42, %s43
    %p55 = scmp.eq.s32.totalorder %s19, 47
    %p56 = por %p54, %p55
    %p58 = scmp.ne.s32.totalorder %s43, %s57
    %p59 = scmp.eq.s32.totalorder %s19, 0
    %p60 = por %p58, %p59
    %s62 = sadd.s32 %s61, 1
    %p65 = scmp.eq.s32.totalorder %s13, 47
    %p66 = scmp.ne.s32.totalorder %s61, %s63
    %p67 = scmp.eq.s32.totalorder %s13, 0
    %p68 = por %p66, %p67
    %p69 = scmp.ne.s32.totalorder %s61, %s63
    %p70 = scmp.eq.s32.totalorder %s18, 47
    %p71 = por %p69, %p70
    %p72 = scmp.ne.s32.totalorder %s63, %s64
    %p73 = scmp.eq.s32.totalorder %s18, 0
    %p74 = por %p72, %p73
    %p75 = scmp.ne.s32.totalorder %s63, %s64
    %p76 = scmp.eq.s32.totalorder %s19, 47
    %p77 = por %p75, %p76
    %p79 = scmp.ne.s32.totalorder %s64, %s78
    %p80 = scmp.eq.s32.totalorder %s19, 0
    %p81 = por %p79, %p80
    %s82 = sadd.s32 %s21, %s22
    %s83 = ssub.s32 %s82, 1
    %p84 = scmp.gt.s32.totalorder %s83, 0
    %s85 = scalar_select %p84, %s83, 0
    %p86 = scmp.lt.s32.totalorder %s85, 7
    %s87 = scalar_select %p86, %s85, 7
    %s88 = sadd.s32 %s35, %s31
    %s89 = ssub.s32 %s88, 1
    %p90 = scmp.gt.s32.totalorder %s89, 0
    %s91 = scalar_select %p90, %s89, 0
    %p92 = scmp.lt.s32.totalorder %s91, 7
    %s93 = scalar_select %p92, %s91, 7
    %s94 = ssub.s32 %s20, %s39
    %s95 = ssub.s32 %s87, %s93
    %s96 = sor.u32 %s94, %s95
    %p97 = scmp.eq.s32.totalorder %s96, 0
    %s99 = sadd.s32 %s98, 1
    %s100 = scalar_select %p97, %s98, %s99
    %p103 = pneg %p97
    %p104 = scmp.eq.s32.totalorder %s13, 47
    %p105 = por %p103, %p104
    %p106 = scmp.ne.s32.totalorder %s98, %s101
    %p107 = scmp.eq.s32.totalorder %s13, 0
    %p108 = por %p106, %p107
    %p109 = scmp.ne.s32.totalorder %s98, %s101
    %p110 = scmp.eq.s32.totalorder %s18, 47
    %p111 = por %p109, %p110
    %p112 = scmp.ne.s32.totalorder %s101, %s102
    %p113 = scmp.eq.s32.totalorder %s18, 0
    %p114 = por %p112, %p113
    %p115 = scmp.ne.s32.totalorder %s101, %s102
    %p116 = scmp.eq.s32.totalorder %s19, 47
    %p117 = por %p115, %p116
    %p119 = scmp.ne.s32.totalorder %s102, %s118
    %p120 = scmp.eq.s32.totalorder %s19, 0
    %p121 = por %p119, %p120
    %s123 = sadd.s32 %s122, 1
    %p126 = scmp.eq.s32.totalorder %s13, 47
    %p127 = scmp.ne.s32.totalorder %s122, %s124
    %p128 = scmp.eq.s32.totalorder %s13, 0
    %p129 = por %p127, %p128
    %p130 = scmp.ne.s32.totalorder %s122, %s124
    %p131 = scmp.eq.s32.totalorder %s18, 47
    %p132 = por %p130, %p131
    %p133 = scmp.ne.s32.totalorder %s124, %s125
    %p134 = scmp.eq.s32.totalorder %s18, 0
    %p135 = por %p133, %p134
    %p136 = scmp.ne.s32.totalorder %s124, %s125
    %p137 = scmp.eq.s32.totalorder %s19, 47
    %p138 = por %p136, %p137
    %p140 = scmp.ne.s32.totalorder %s125, %s139
    %p141 = scmp.eq.s32.totalorder %s19, 0
    %p142 = por %p140, %p141
    %s143 = ssub.s32 %s20, %s39
    %s144 = ssub.s32 %s21, %s35
    %s145 = sor.u32 %s143, %s144
    %p146 = scmp.eq.s32.totalorder %s145, 0
    %s148 = sadd.s32 %s147, 1
    %s149 = scalar_select %p146, %s147, %s148
    %p152 = pneg %p146
    %p153 = scmp.eq.s32.totalorder %s13, 47
    %p154 = por %p152, %p153
    %p155 = scmp.ne.s32.totalorder %s147, %s150
    %p156 = scmp.eq.s32.totalorder %s13, 0
    %p157 = por %p155, %p156
    %p158 = scmp.ne.s32.totalorder %s147, %s150
    %p159 = scmp.eq.s32.totalorder %s18, 47
    %p160 = por %p158, %p159
    %p161 = scmp.ne.s32.totalorder %s150, %s151
    %p162 = scmp.eq.s32.totalorder %s18, 0
    %p163 = por %p161, %p162
    %p164 = scmp.ne.s32.totalorder %s150, %s151
    %p165 = scmp.eq.s32.totalorder %s19, 47
    %p166 = por %p164, %p165
    %p168 = scmp.ne.s32.totalorder %s151, %s167
    %p169 = scmp.eq.s32.totalorder %s19, 0
    %p170 = por %p168, %p169
    %s171 = ssub.s32 %s20, %s39
    %s172 = ssub.s32 %s21, %s35
    %s173 = sor.u32 %s171, %s172
    %p174 = scmp.eq.s32.totalorder %s173, 0
    %s176 = sadd.s32 %s175, 1
    %s177 = scalar_select %p174, %s175, %s176
    %p180 = pneg %p174
    %p181 = scmp.eq.s32.totalorder %s13, 47
    %p182 = por %p180, %p181
    %p183 = scmp.ne.s32.totalorder %s175, %s178
    %p184 = scmp.eq.s32.totalorder %s13, 0
    %p185 = por %p183, %p184
    %p186 = scmp.ne.s32.totalorder %s175, %s178
    %p187 = scmp.eq.s32.totalorder %s18, 47
    %p188 = por %p186, %p187
    %p189 = scmp.ne.s32.totalorder %s178, %s179
    %p190 = scmp.eq.s32.totalorder %s18, 0
    %p191 = por %p189, %p190
    %p192 = scmp.ne.s32.totalorder %s178, %s179
    %p193 = scmp.eq.s32.totalorder %s19, 47
    %p194 = por %p192, %p193
    %p196 = scmp.ne.s32.totalorder %s179, %s195
    %p197 = scmp.eq.s32.totalorder %s19, 0
    %p198 = por %p196, %p197
    %s199 = ssub.s32 %s20, %s39
    %s200 = ssub.s32 %s21, %s35
    %s201 = sor.u32 %s199, %s200
    %p202 = scmp.eq.s32.totalorder %s201, 0
    %s204 = sadd.s32 %s203, 1
    %s205 = scalar_select %p202, %s203, %s204
    %p208 = pneg %p202
    %p209 = scmp.eq.s32.totalorder %s13, 47
    %p210 = por %p208, %p209
    %p211 = scmp.ne.s32.totalorder %s203, %s206
    %p212 = scmp.eq.s32.totalorder %s13, 0
    %p213 = por %p211, %p212
    %p214 = scmp.ne.s32.totalorder %s203, %s206
    %p215 = scmp.eq.s32.totalorder %s18, 47
    %p216 = por %p214, %p215
    %p217 = scmp.ne.s32.totalorder %s206, %s207
    %p218 = scmp.eq.s32.totalorder %s18, 0
    %p219 = por %p217, %p218
    %p220 = scmp.ne.s32.totalorder %s206, %s207
    %p221 = scmp.eq.s32.totalorder %s19, 47
    %p222 = por %p220, %p221
    %p224 = scmp.ne.s32.totalorder %s207, %s223
    %p225 = scmp.eq.s32.totalorder %s19, 0
    %p226 = por %p224, %p225
    %p227 = scmp.le.s32.totalorder 1, %s13
    %p228 = scmp.lt.s32.totalorder %s13, 49
    %p229 = pnand %p227, %p228
    %p230 = pneg %p229
    // Predicated region
    $region9: #{downscale_forward.2} parent=5 // pred_check
      _
    $region10: #{downscale_forward.2} parent=5 // pred_check_branch
      %232 = sbr.rel (%p229) target = $region12
    $region11: #{downscale_forward.2} parent=5 // pred_region
      %s233 = ssub.s32 %s13, 1
      // Predicated region
      $region13: #{downscale_forward.2} parent=11 // pred_check
        %p234 = pneg %p53
      $region14: #{downscale_forward.2} parent=11 // pred_check_branch
        %236 = sbr.rel (%p234) target = $region16
      $region15: #{downscale_forward.2} parent=11 // pred_region
        _
      $region16: #{downscale_forward.2} parent=11 // pred_fallthru
        _
      // Predicated region
      $region17: #{downscale_forward.2} parent=11 // pred_check
        %p237 = pneg %p74
      $region18: #{downscale_forward.2} parent=11 // pred_check_branch
        %239 = sbr.rel (%p237) target = $region20
      $region19: #{downscale_forward.2} parent=11 // pred_region
        _
      $region20: #{downscale_forward.2} parent=11 // pred_fallthru
        _
      // Predicated region
      $region21: #{downscale_forward.2} parent=11 // pred_check
        %p240 = pneg %p135
      $region22: #{downscale_forward.2} parent=11 // pred_check_branch
        %242 = sbr.rel (%p240) target = $region24
      $region23: #{downscale_forward.2} parent=11 // pred_region
        _
      $region24: #{downscale_forward.2} parent=11 // pred_fallthru
        _
    $region12: #{downscale_forward.2} parent=5 // pred_fallthru
      _
    %p243 = scmp.lt.s32.totalorder %s13, 48
    // Predicated region
    $region25: #{downscale_forward.2} parent=5 // pred_check
      %p244 = pneg %p243
    $region26: #{downscale_forward.2} parent=5 // pred_check_branch
      %246 = sbr.rel (%p244) target = $region28
    $region27: #{downscale_forward.2} parent=5 // pred_region
      // Predicated region
      $region29: #{downscale_forward.2} parent=27 // pred_check
        %p247 = pneg %p108
      $region30: #{downscale_forward.2} parent=27 // pred_check_branch
        %249 = sbr.rel (%p247) target = $region32
      $region31: #{downscale_forward.2} parent=27 // pred_region
        %s250 = sadd.s32 %s21, %s22
        %s251 = ssub.s32 %s250, 1
        %p252 = scmp.gt.s32.totalorder %s251, 0
        %s253 = scalar_select %p252, %s251, 0
        %p254 = scmp.lt.s32.totalorder %s253, 7
        %s255 = scalar_select %p254, %s253, 7
        %p256 = scmp.lt.s32.totalorder %s20, 1
        %s257 = scalar_select %p256, %s20, 1
        %p258 = scmp.lt.s32.totalorder %s255, 7
        %s259 = scalar_select %p258, %s255, 7
        %s260 = smul.addr %s259, 6
        %s261 = smul.addr %s257, 48
        %s262 = sadd.s32 %s260, %s261
        %s263 = smul.addr %s262, 4
        %s264 = scalar_lea.vmem %s2, %s263
        %s265 = sadd.s32 %s21, %s22
        %s266 = ssub.s32 %s265, 1
        %p267 = scmp.gt.s32.totalorder %s266, 0
        %s268 = scalar_select %p267, %s266, 0
        %p269 = scmp.lt.s32.totalorder %s268, 7
        %s270 = scalar_select %p269, %s268, 7
      $region32: #{downscale_forward.2} parent=27 // pred_fallthru
        _
    $region28: #{downscale_forward.2} parent=5 // pred_fallthru
      _
    %p271 = scmp.le.s32.totalorder 1, %s13
    %p272 = scmp.lt.s32.totalorder %s13, 49
    %p273 = pnand %p271, %p272
    %p274 = pneg %p273
    // Predicated region
    $region33: #{downscale_forward.2} parent=5 // pred_check
      _
    $region34: #{downscale_forward.2} parent=5 // pred_check_branch
      %276 = sbr.rel (%p273) target = $region36
    $region35: #{downscale_forward.2} parent=5 // pred_region
      %s277 = ssub.s32 %s13, 1
      %p278 = pneg %p53
      %p279 = pneg %p50
      %p280 = pneg %p74
      %p281 = pneg %p71
      %s282 = sadd.s32 %s24, %s25
      %s283 = ssub.s32 %s282, 1
      %p284 = scmp.gt.s32.totalorder %s283, 0
      %s285 = scalar_select %p284, %s283, 0
      %p286 = scmp.lt.s32.totalorder %s285, 7
      %s287 = scalar_select %p286, %s285, 7
      %p288 = scmp.lt.s32.totalorder %s23, 1
      %s289 = scalar_select %p288, %s23, 1
      %p290 = scmp.lt.s32.totalorder %s287, 7
      %s291 = scalar_select %p290, %s287, 7
      %s292 = smul.addr %s291, 6
      %s293 = smul.addr %s289, 48
      %s294 = sadd.s32 %s292, %s293
      %s295 = smul.addr %s294, 4
      %s296 = scalar_lea.vmem %s2, %s295
      %p297 = pneg %p114
      %p298 = pneg %p111
      %p299 = pneg %p135
      %p300 = pneg %p132
      %p301 = pneg %p163
      %p302 = pneg %p160
      %p303 = scmp.lt.s32.totalorder %s23, 1
      %s304 = scalar_select %p303, %s23, 1
      %p305 = scmp.lt.s32.totalorder %s24, 7
      %s306 = scalar_select %p305, %s24, 7
      %s307 = smul.addr %s306, 6
      %s308 = smul.addr %s304, 48
      %s309 = sadd.s32 %s307, %s308
      %s310 = smul.addr %s309, 4
      %s311 = scalar_lea.vmem %s4, %s310
      %p312 = pneg %p191
      %p313 = pneg %p188
      %p314 = scmp.lt.s32.totalorder %s23, 1
      %s315 = scalar_select %p314, %s23, 1
      %p316 = scmp.lt.s32.totalorder %s24, 7
      %s317 = scalar_select %p316, %s24, 7
      %s318 = smul.addr %s315, 8
      %s319 = sadd.s32 %s317, %s318
      %s320 = scalar_lea.vmem %s5, %s319
      %p321 = pneg %p219
      %p322 = pneg %p216
      %p323 = scmp.lt.s32.totalorder %s23, 1
      %s324 = scalar_select %p323, %s23, 1
      %p325 = scmp.lt.s32.totalorder %s24, 7
      %s326 = scalar_select %p325, %s24, 7
      %s327 = smul.addr %s324, 8
      %s328 = sadd.s32 %s326, %s327
      %s329 = scalar_lea.vmem %s6, %s328
      %s330 = sadd.s32 %s24, %s25
      %s331 = ssub.s32 %s330, 1
      %p332 = scmp.gt.s32.totalorder %s331, 0
      %s333 = scalar_select %p332, %s331, 0
      %p334 = scmp.lt.s32.totalorder %s333, 7
      %s335 = scalar_select %p334, %s333, 7
      %p336 = scmp.lt.s32.totalorder %s23, 1
      %s337 = scalar_select %p336, %s23, 1
      %p338 = scmp.lt.s32.totalorder %s335, 7
      %s339 = scalar_select %p338, %s335, 7
      %s340 = smul.addr %s339, 6
      %s341 = smul.addr %s337, 48
      %s342 = sadd.s32 %s340, %s341
      %s343 = smul.addr %s342, 4
      %s344 = scalar_lea.vmem %s2, %s343
      %s345 = sadd.s32 %s24, %s25
      %s346 = ssub.s32 %s345, 1
      %p347 = scmp.gt.s32.totalorder %s346, 0
      %s348 = scalar_select %p347, %s346, 0
      %p349 = scmp.lt.s32.totalorder %s348, 7
      %s350 = scalar_select %p349, %s348, 7
      %p351 = scmp.lt.s32.totalorder %s23, 1
      %s352 = scalar_select %p351, %s23, 1
      %p353 = scmp.lt.s32.totalorder %s24, 7
      %s354 = scalar_select %p353, %s24, 7
      %s355 = smul.addr %s354, 6
      %s356 = smul.addr %s352, 48
      %s357 = sadd.s32 %s355, %s356
      %s358 = smul.addr %s357, 4
      %s359 = scalar_lea.vmem %s4, %s358
      %p360 = scmp.lt.s32.totalorder %s23, 1
      %s361 = scalar_select %p360, %s23, 1
      %p362 = scmp.lt.s32.totalorder %s24, 7
      %s363 = scalar_select %p362, %s24, 7
      %s364 = smul.addr %s361, 8
      %s365 = sadd.s32 %s363, %s364
      %s366 = scalar_lea.vmem %s5, %s365
      %p367 = scmp.lt.s32.totalorder %s23, 1
      %s368 = scalar_select %p367, %s23, 1
      %p369 = scmp.lt.s32.totalorder %s24, 7
      %s370 = scalar_select %p369, %s24, 7
      %s371 = smul.addr %s368, 8
      %s372 = sadd.s32 %s370, %s371
      %s373 = scalar_lea.vmem %s6, %s372
      %s375 = sadd.s32 %s24, %s25
      %s376 = ssub.s32 %s375, 1
      %p377 = scmp.ge.s32.totalorder %s376, 0
      %p378 = scmp.le.s32.totalorder %s376, 7
      %p379 = pnand %p377, %p378
      %p380 = pneg %p379
      %s381 = scalar_select %p380, 1, 0
      %s382 = scvt.s32.f32 %s381
      %v383 = vld [vmem:[%s0] sm:$0x1]
      %v384 = vstv %s382
      %v385 = vmul.f32 %v383, %v384
      %v386 = vld [vmem:[%s1] sm:$0x1]
      %v387 = vmul.f32 %v386, %v384
      %v388 = vld [vmem:[%s344] sm:$0x7]
      %v389 = vld [vmem:[%s344 + $0x4] sm:$0x7]
      %v390 = vld [vmem:[%s344 + $0x8] sm:$0x7]
      %v391 = vld [vmem:[%s344 + $0xc] sm:$0x7]
      %v392 = vld [vmem:[%s344 + $0x10] sm:$0x7]
      %v393 = vld [vmem:[%s344 + $0x14] sm:$0x7]
      %v394 = vunpack.c.l.bf16 %v388
      %v395 = vunpack.c.l.bf16 %v389
      %v396 = vunpack.c.l.bf16 %v390
      %v397 = vunpack.c.l.bf16 %v391
      %v398 = vunpack.c.l.bf16 %v392
      %v399 = vunpack.c.l.bf16 %v393
      %v401 = vlaneseq
      %v402 = vshrl.u32 %v401, 7
      %v403 = vsub.s32 0, %v402
      %v404 = vrot.slane %v385, %v403
      %v406 = vmul.f32 %v394, %v404
      %v407 = vmul.f32 %v395, %v404
      %v408 = vmul.f32 %v396, %v404
      %v409 = vmul.f32 %v397, %v404
      %v410 = vmul.f32 %v398, %v404
      %v411 = vmul.f32 %v399, %v404
      %v413 = vlaneseq
      %v414 = vshrl.u32 %v413, 7
      %v415 = vsub.s32 0, %v414
      %v416 = vrot.slane %v387, %v415
      %v418 = vadd.f32 %v406, %v416
      %v419 = vadd.f32 %v407, %v416
      %v420 = vadd.f32 %v408, %v416
      %v421 = vadd.f32 %v409, %v416
      %v422 = vadd.f32 %v410, %v416
      %v423 = vadd.f32 %v411, %v416
      %v424 = vmax.f32 %v418, 0.0
      %v425 = vmax.f32 %v419, 0.0
      %v426 = vmax.f32 %v420, 0.0
      %v427 = vmax.f32 %v421, 0.0
      %v428 = vmax.f32 %v422, 0.0
      %v429 = vmax.f32 %v423, 0.0
      %v430 = vpack.c.bf16 %v424, %v424
      %v431 = vpack.c.bf16 %v425, %v425
      %v432 = vpack.c.bf16 %v426, %v426
      %v433 = vpack.c.bf16 %v427, %v427
      %v434 = vpack.c.bf16 %v428, %v428
      %v435 = vpack.c.bf16 %v429, %v429
      %p436 = scmp.eq.s32.totalorder %s25, 0
      // Predicated region
      $region37: #{downscale_forward.2} parent=35 // pred_check
        %p437 = pneg %p436
      $region38: #{downscale_forward.2} parent=35 // pred_check_branch
        %439 = sbr.rel (%p437) target = $region40
      $region39: #{downscale_forward.2} parent=35 // pred_region
        %440 = vst [vmem:[#allocation3] sm:$0xf] 0
        %441 = vst [vmem:[#allocation3 + $0x4] sm:$0xf] 0
        %442 = vst [vmem:[#allocation3 + $0x8] sm:$0xf] 0
        %443 = vst [vmem:[#allocation3 + $0xc] sm:$0xf] 0
        %444 = vst [vmem:[#allocation3 + $0x10] sm:$0xf] 0
        %445 = vst [vmem:[#allocation3 + $0x14] sm:$0xf] 0
        %446 = vst [vmem:[#allocation3 + $0x18] sm:$0xf] 0
        %447 = vst [vmem:[#allocation3 + $0x1c] sm:$0xf] 0
        %448 = vst [vmem:[#allocation2] sm:$0xff] 0.0
        %449 = vst [vmem:[#allocation2 + $0x8] sm:$0xff] 0.0
        %450 = vst [vmem:[#allocation2 + $0x10] sm:$0xff] 0.0
        %451 = vst [vmem:[#allocation2 + $0x18] sm:$0xff] 0.0
        %452 = vst [vmem:[#allocation2 + $0x20] sm:$0xf] 0.0
      $region40: #{downscale_forward.2} parent=35 // pred_fallthru
        _
      %v459 = vunpack.c.l.b16 %v430
      %v460 = vunpack.c.l.b16 %v431
      %v461 = vunpack.c.l.b16 %v432
      %v462 = vunpack.c.l.b16 %v433
      %v463 = vunpack.c.l.b16 %v434
      %v464 = vunpack.c.l.b16 %v435
      %v465 = vpack.c.b16 %v459, %v459
      %v466 = vpack.c.b16 %v460, %v460
      %v467 = vpack.c.b16 %v461, %v461
      %v468 = vpack.c.b16 %v462, %v462
      %v469 = vpack.c.b16 %v463, %v463
      %v470 = vpack.c.b16 %v464, %v464
      %v472 = vshrl.u32 %v465, 16
      %v474 = vrot.slane %v472, 7
      %v475 = vshll.u32 %v465, 16
      %v477 = vor.u32 %v474, %v475
      %v479 = vshrl.u32 %v466, 16
      %v481 = vrot.slane %v479, 7
      %v482 = vshll.u32 %v466, 16
      %v484 = vor.u32 %v481, %v482
      %v486 = vshrl.u32 %v467, 16
      %v488 = vrot.slane %v486, 7
      %v489 = vshll.u32 %v467, 16
      %v491 = vor.u32 %v488, %v489
      %v493 = vshrl.u32 %v468, 16
      %v495 = vrot.slane %v493, 7
      %v496 = vshll.u32 %v468, 16
      %v498 = vor.u32 %v495, %v496
      %v500 = vshrl.u32 %v469, 16
      %v502 = vrot.slane %v500, 7
      %v503 = vshll.u32 %v469, 16
      %v505 = vor.u32 %v502, %v503
      %v507 = vshrl.u32 %v470, 16
      %v509 = vrot.slane %v507, 7
      %v510 = vshll.u32 %v470, 16
      %v512 = vor.u32 %v509, %v510
      %s519 = scalar_lea.vmem [#allocation3], 4
      %vm520 = vcmask 1043456
      %vm521 = vsmask.f32 3330
      %vm522 = vmand %vm520, %vm521
      %v523 = vld [vmem:[%s519] sm:$0xf]
      %v524 = vsel %vm522, %v477, %v523
      %525 = vst [vmem:[%s519] sm:$0xf] %v524
      %v526 = vld [vmem:[%s519 + $0x4] sm:$0xf]
      %v527 = vsel %vm522, %v484, %v526
      %528 = vst [vmem:[%s519 + $0x4] sm:$0xf] %v527
      %v529 = vld [vmem:[%s519 + $0x8] sm:$0xf]
      %v530 = vsel %vm522, %v491, %v529
      %531 = vst [vmem:[%s519 + $0x8] sm:$0xf] %v530
      %v532 = vld [vmem:[%s519 + $0xc] sm:$0xf]
      %v533 = vsel %vm522, %v498, %v532
      %534 = vst [vmem:[%s519 + $0xc] sm:$0xf] %v533
      %v535 = vld [vmem:[%s519 + $0x10] sm:$0xf]
      %v536 = vsel %vm522, %v505, %v535
      %537 = vst [vmem:[%s519 + $0x10] sm:$0xf] %v536
      %v538 = vld [vmem:[%s519 + $0x14] sm:$0xf]
      %v539 = vsel %vm522, %v512, %v538
      %540 = vst [vmem:[%s519 + $0x14] sm:$0xf] %v539
      %v541 = vld [vmem:[#allocation2] sm:$0xff]
      %v542 = vld [vmem:[#allocation2 + $0x8] sm:$0xff]
      %v543 = vld [vmem:[#allocation2 + $0x10] sm:$0xff]
      %v544 = vld [vmem:[#allocation2 + $0x18] sm:$0xff]
      %v545 = vld [vmem:[#allocation2 + $0x20] sm:$0xf]
      %v546 = vld [vmem:[#allocation3] sm:$0x7]
      %v547 = vld [vmem:[#allocation3 + $0x4] sm:$0x7]
      %v548 = vld [vmem:[#allocation3 + $0x8] sm:$0x7]
      %v549 = vld [vmem:[#allocation3 + $0xc] sm:$0x7]
      %v550 = vld [vmem:[#allocation3 + $0x10] sm:$0x7]
      %v551 = vld [vmem:[#allocation3 + $0x14] sm:$0x7]
      %v552 = vld [vmem:[#allocation3] sm:$0xf]
      %v553 = vld [vmem:[#allocation3 + $0x4] sm:$0xf]
      %v554 = vld [vmem:[#allocation3 + $0x8] sm:$0xf]
      %v555 = vld [vmem:[#allocation3 + $0xc] sm:$0xf]
      %v556 = vld [vmem:[#allocation3 + $0x10] sm:$0xf]
      %v557 = vld [vmem:[#allocation3 + $0x14] sm:$0xf]
      %v558 = vld [vmem:[#allocation3] sm:$0xe]
      %v559 = vld [vmem:[#allocation3 + $0x4] sm:$0xe]
      %v560 = vld [vmem:[#allocation3 + $0x8] sm:$0xe]
      %v561 = vld [vmem:[#allocation3 + $0xc] sm:$0xe]
      %v562 = vld [vmem:[#allocation3 + $0x10] sm:$0xe]
      %v563 = vld [vmem:[#allocation3 + $0x14] sm:$0xe]
      %v570 = vunpack.c.l.b16 %v552
      %v571 = vunpack.c.l.b16 %v553
      %v572 = vunpack.c.l.b16 %v554
      %v573 = vunpack.c.l.b16 %v555
      %v574 = vunpack.c.l.b16 %v556
      %v575 = vunpack.c.l.b16 %v557
      %v576 = vpack.c.b16 %v570, %v570
      %v577 = vpack.c.b16 %v571, %v571
      %v578 = vpack.c.b16 %v572, %v572
      %v579 = vpack.c.b16 %v573, %v573
      %v580 = vpack.c.b16 %v574, %v574
      %v581 = vpack.c.b16 %v575, %v575
      %v583 = vshrl.u32 %v576, 16
      %v585 = vshll.u32 %v576, 16
      %v587 = vrot.slane %v585, 1
      %v588 = vor.u32 %v583, %v587
      %v590 = vshrl.u32 %v577, 16
      %v592 = vshll.u32 %v577, 16
      %v594 = vrot.slane %v592, 1
      %v595 = vor.u32 %v590, %v594
      %v597 = vshrl.u32 %v578, 16
      %v599 = vshll.u32 %v578, 16
      %v601 = vrot.slane %v599, 1
      %v602 = vor.u32 %v597, %v601
      %v604 = vshrl.u32 %v579, 16
      %v606 = vshll.u32 %v579, 16
      %v608 = vrot.slane %v606, 1
      %v609 = vor.u32 %v604, %v608
      %v611 = vshrl.u32 %v580, 16
      %v613 = vshll.u32 %v580, 16
      %v615 = vrot.slane %v613, 1
      %v616 = vor.u32 %v611, %v615
      %v618 = vshrl.u32 %v581, 16
      %v620 = vshll.u32 %v581, 16
      %v622 = vrot.slane %v620, 1
      %v623 = vor.u32 %v618, %v622
      %v630 = vunpack.c.l.b16 %v558
      %v631 = vunpack.c.l.b16 %v559
      %v632 = vunpack.c.l.b16 %v560
      %v633 = vunpack.c.l.b16 %v561
      %v634 = vunpack.c.l.b16 %v562
      %v635 = vunpack.c.l.b16 %v563
      %v636 = vpack.c.b16 %v630, %v630
      %v637 = vpack.c.b16 %v631, %v631
      %v638 = vpack.c.b16 %v632, %v632
      %v639 = vpack.c.b16 %v633, %v633
      %v640 = vpack.c.b16 %v634, %v634
      %v641 = vpack.c.b16 %v635, %v635
      %v642 = vrot.slane %v636, 1
      %v643 = vrot.slane %v637, 1
      %v644 = vrot.slane %v638, 1
      %v645 = vrot.slane %v639, 1
      %v646 = vrot.slane %v640, 1
      %v647 = vrot.slane %v641, 1
      %s648 = smul.u32 %s25, 3
      %s649 = smul.u32 %s648, 48
      %s650 = smul.addr %s649, 4
      %s651 = scalar_lea.vmem %s3, %s650
      %v652 = vld [vmem:[%s651] sm:$0xf]
      %v653 = vld [vmem:[%s651 + $0x4] sm:$0xf]
      %v654 = vld [vmem:[%s651 + $0x8] sm:$0xf]
      %v655 = vld [vmem:[%s651 + $0xc] sm:$0xf]
      %v656 = vld [vmem:[%s651 + $0x10] sm:$0xf]
      %v657 = vld [vmem:[%s651 + $0x14] sm:$0xf]
      %v658 = vld [vmem:[%s651 + $0x18] sm:$0xf]
      %v659 = vld [vmem:[%s651 + $0x1c] sm:$0xf]
      %v660 = vld [vmem:[%s651 + $0x20] sm:$0xf]
      %v661 = vld [vmem:[%s651 + $0x24] sm:$0xf]
      %v662 = vld [vmem:[%s651 + $0x28] sm:$0xf]
      %v663 = vld [vmem:[%s651 + $0x2c] sm:$0xf]
      %v664 = vld [vmem:[%s651 + $0x30] sm:$0xf]
      %v665 = vld [vmem:[%s651 + $0x34] sm:$0xf]
      %v666 = vld [vmem:[%s651 + $0x38] sm:$0xf]
      %v667 = vld [vmem:[%s651 + $0x3c] sm:$0xf]
      %v668 = vld [vmem:[%s651 + $0x40] sm:$0xf]
      %v669 = vld [vmem:[%s651 + $0x44] sm:$0xf]
      %v670 = vld [vmem:[%s651 + $0x48] sm:$0xf]
      %v671 = vld [vmem:[%s651 + $0x4c] sm:$0xf]
      %v672 = vld [vmem:[%s651 + $0x50] sm:$0xf]
      %v673 = vld [vmem:[%s651 + $0x54] sm:$0xf]
      %v674 = vld [vmem:[%s651 + $0x58] sm:$0xf]
      %v675 = vld [vmem:[%s651 + $0x5c] sm:$0xf]
      %v676 = vld [vmem:[%s651 + $0x60] sm:$0xf]
      %v677 = vld [vmem:[%s651 + $0x64] sm:$0xf]
      %v678 = vld [vmem:[%s651 + $0x68] sm:$0xf]
      %v679 = vld [vmem:[%s651 + $0x6c] sm:$0xf]
      %v680 = vld [vmem:[%s651 + $0x70] sm:$0xf]
      %v681 = vld [vmem:[%s651 + $0x74] sm:$0xf]
      %v682 = vld [vmem:[%s651 + $0x78] sm:$0xf]
      %v683 = vld [vmem:[%s651 + $0x7c] sm:$0xf]
      %v684 = vld [vmem:[%s651 + $0x80] sm:$0xf]
      %v685 = vld [vmem:[%s651 + $0x84] sm:$0xf]
      %v686 = vld [vmem:[%s651 + $0x88] sm:$0xf]
      %v687 = vld [vmem:[%s651 + $0x8c] sm:$0xf]
      %v688 = vld [vmem:[%s651 + $0x90] sm:$0xf]
      %v689 = vld [vmem:[%s651 + $0x94] sm:$0xf]
      %v690 = vld [vmem:[%s651 + $0x98] sm:$0xf]
      %v691 = vld [vmem:[%s651 + $0x9c] sm:$0xf]
      %v692 = vld [vmem:[%s651 + $0xa0] sm:$0xf]
      %v693 = vld [vmem:[%s651 + $0xa4] sm:$0xf]
      %v694 = vld [vmem:[%s651 + $0xa8] sm:$0xf]
      %v695 = vld [vmem:[%s651 + $0xac] sm:$0xf]
      %v696 = vld [vmem:[%s651 + $0xb0] sm:$0xf]
      %v697 = vld [vmem:[%s651 + $0xb4] sm:$0xf]
      %v698 = vld [vmem:[%s651 + $0xb8] sm:$0xf]
      %v699 = vld [vmem:[%s651 + $0xbc] sm:$0xf]
      %v706 = vcombine.low %v546, %v588
      %v708 = vunpack.c.l.s4 1966171168
      %v709 = vunpack.c.0.s8 %v708
      %v710 = vlaneseq
      %v711 = vshrl.u32 %v710, 7
      %v712 = vsub.s32 %v709, %v711
      %v713 = vrot.slane %v706, %v712
      %v715 = vunpack.c.l.s4 1966171168
      %v716 = vunpack.c.0.s8 %v715
      %v717 = vlaneseq
      %v718 = vshrl.u32 %v717, 7
      %v719 = vsub.s32 %v716, %v718
      %v720 = vrot.slane %v642, %v719
      %v721 = vcombine.low %v713, %v720
      %v722 = vcombine.high %v713, %v720
      %v724 = vunpack.c.l.s4 1966171168
      %v725 = vunpack.c.0.s8 %v724
      %v726 = vlaneseq
      %v727 = vshrl.u32 %v726, 7
      %v728 = vsub.s32 %v725, %v727
      %v729 = vrot.slane %v721, %v728
      %v731 = vunpack.c.l.s4 1966171168
      %v732 = vunpack.c.0.s8 %v731
      %v733 = vlaneseq
      %v734 = vshrl.u32 %v733, 7
      %v735 = vsub.s32 %v732, %v734
      %v736 = vrot.slane %v722, %v735
      %v737 = vcombine.high %v729, %v729
      %v738 = vcombine.low %v547, %v595
      %v740 = vunpack.c.l.s4 1966171168
      %v741 = vunpack.c.0.s8 %v740
      %v742 = vlaneseq
      %v743 = vshrl.u32 %v742, 7
      %v744 = vsub.s32 %v741, %v743
      %v745 = vrot.slane %v738, %v744
      %v747 = vunpack.c.l.s4 1966171168
      %v748 = vunpack.c.0.s8 %v747
      %v749 = vlaneseq
      %v750 = vshrl.u32 %v749, 7
      %v751 = vsub.s32 %v748, %v750
      %v752 = vrot.slane %v643, %v751
      %v753 = vcombine.low %v745, %v752
      %v754 = vcombine.high %v745, %v752
      %v756 = vunpack.c.l.s4 1966171168
      %v757 = vunpack.c.0.s8 %v756
      %v758 = vlaneseq
      %v759 = vshrl.u32 %v758, 7
      %v760 = vsub.s32 %v757, %v759
      %v761 = vrot.slane %v753, %v760
      %v763 = vunpack.c.l.s4 1966171168
      %v764 = vunpack.c.0.s8 %v763
      %v765 = vlaneseq
      %v766 = vshrl.u32 %v765, 7
      %v767 = vsub.s32 %v764, %v766
      %v768 = vrot.slane %v754, %v767
      %v769 = vcombine.high %v761, %v761
      %v770 = vcombine.low %v548, %v602
      %v772 = vunpack.c.l.s4 1966171168
      %v773 = vunpack.c.0.s8 %v772
      %v774 = vlaneseq
      %v775 = vshrl.u32 %v774, 7
      %v776 = vsub.s32 %v773, %v775
      %v777 = vrot.slane %v770, %v776
      %v779 = vunpack.c.l.s4 1966171168
      %v780 = vunpack.c.0.s8 %v779
      %v781 = vlaneseq
      %v782 = vshrl.u32 %v781, 7
      %v783 = vsub.s32 %v780, %v782
      %v784 = vrot.slane %v644, %v783
      %v785 = vcombine.low %v777, %v784
      %v786 = vcombine.high %v777, %v784
      %v788 = vunpack.c.l.s4 1966171168
      %v789 = vunpack.c.0.s8 %v788
      %v790 = vlaneseq
      %v791 = vshrl.u32 %v790, 7
      %v792 = vsub.s32 %v789, %v791
      %v793 = vrot.slane %v785, %v792
      %v795 = vunpack.c.l.s4 1966171168
      %v796 = vunpack.c.0.s8 %v795
      %v797 = vlaneseq
      %v798 = vshrl.u32 %v797, 7
      %v799 = vsub.s32 %v796, %v798
      %v800 = vrot.slane %v786, %v799
      %v801 = vcombine.high %v793, %v793
      %v802 = vcombine.low %v549, %v609
      %v804 = vunpack.c.l.s4 1966171168
      %v805 = vunpack.c.0.s8 %v804
      %v806 = vlaneseq
      %v807 = vshrl.u32 %v806, 7
      %v808 = vsub.s32 %v805, %v807
      %v809 = vrot.slane %v802, %v808
      %v811 = vunpack.c.l.s4 1966171168
      %v812 = vunpack.c.0.s8 %v811
      %v813 = vlaneseq
      %v814 = vshrl.u32 %v813, 7
      %v815 = vsub.s32 %v812, %v814
      %v816 = vrot.slane %v645, %v815
      %v817 = vcombine.low %v809, %v816
      %v818 = vcombine.high %v809, %v816
      %v820 = vunpack.c.l.s4 1966171168
      %v821 = vunpack.c.0.s8 %v820
      %v822 = vlaneseq
      %v823 = vshrl.u32 %v822, 7
      %v824 = vsub.s32 %v821, %v823
      %v825 = vrot.slane %v817, %v824
      %v827 = vunpack.c.l.s4 1966171168
      %v828 = vunpack.c.0.s8 %v827
      %v829 = vlaneseq
      %v830 = vshrl.u32 %v829, 7
      %v831 = vsub.s32 %v828, %v830
      %v832 = vrot.slane %v818, %v831
      %v833 = vcombine.high %v825, %v825
      %v834 = vcombine.low %v550, %v616
      %v836 = vunpack.c.l.s4 1966171168
      %v837 = vunpack.c.0.s8 %v836
      %v838 = vlaneseq
      %v839 = vshrl.u32 %v838, 7
      %v840 = vsub.s32 %v837, %v839
      %v841 = vrot.slane %v834, %v840
      %v843 = vunpack.c.l.s4 1966171168
      %v844 = vunpack.c.0.s8 %v843
      %v845 = vlaneseq
      %v846 = vshrl.u32 %v845, 7
      %v847 = vsub.s32 %v844, %v846
      %v848 = vrot.slane %v646, %v847
      %v849 = vcombine.low %v841, %v848
      %v850 = vcombine.high %v841, %v848
      %v852 = vunpack.c.l.s4 1966171168
      %v853 = vunpack.c.0.s8 %v852
      %v854 = vlaneseq
      %v855 = vshrl.u32 %v854, 7
      %v856 = vsub.s32 %v853, %v855
      %v857 = vrot.slane %v849, %v856
      %v859 = vunpack.c.l.s4 1966171168
      %v860 = vunpack.c.0.s8 %v859
      %v861 = vlaneseq
      %v862 = vshrl.u32 %v861, 7
      %v863 = vsub.s32 %v860, %v862
      %v864 = vrot.slane %v850, %v863
      %v865 = vcombine.high %v857, %v857
      %v866 = vcombine.low %v551, %v623
      %v868 = vunpack.c.l.s4 1966171168
      %v869 = vunpack.c.0.s8 %v868
      %v870 = vlaneseq
      %v871 = vshrl.u32 %v870, 7
      %v872 = vsub.s32 %v869, %v871
      %v873 = vrot.slane %v866, %v872
      %v875 = vunpack.c.l.s4 1966171168
      %v876 = vunpack.c.0.s8 %v875
      %v877 = vlaneseq
      %v878 = vshrl.u32 %v877, 7
      %v879 = vsub.s32 %v876, %v878
      %v880 = vrot.slane %v647, %v879
      %v881 = vcombine.low %v873, %v880
      %v882 = vcombine.high %v873, %v880
      %v884 = vunpack.c.l.s4 1966171168
      %v885 = vunpack.c.0.s8 %v884
      %v886 = vlaneseq
      %v887 = vshrl.u32 %v886, 7
      %v888 = vsub.s32 %v885, %v887
      %v889 = vrot.slane %v881, %v888
      %v891 = vunpack.c.l.s4 1966171168
      %v892 = vunpack.c.0.s8 %v891
      %v893 = vlaneseq
      %v894 = vshrl.u32 %v893, 7
      %v895 = vsub.s32 %v892, %v894
      %v896 = vrot.slane %v882, %v895
      %v897 = vcombine.high %v889, %v889
      %v898 = vcombine.low %v729, %v736
      %v899 = vcombine.low %v737, %v761
      %v900 = vcombine.low %v768, %v769
      %v901 = vcombine.low %v793, %v800
      %v903 = vunpack.c.l.s4 1966171168
      %v904 = vunpack.c.0.s8 %v903
      %v905 = vlaneseq
      %v906 = vshrl.u32 %v905, 7
      %v907 = vsub.s32 %v904, %v906
      %v908 = vrot.slane %v898, %v907
      %v910 = vunpack.c.l.s4 1966171168
      %v911 = vunpack.c.0.s8 %v910
      %v912 = vlaneseq
      %v913 = vshrl.u32 %v912, 7
      %v914 = vsub.s32 %v911, %v913
      %v915 = vrot.slane %v899, %v914
      %v917 = vunpack.c.l.s4 1966171168
      %v918 = vunpack.c.0.s8 %v917
      %v919 = vlaneseq
      %v920 = vshrl.u32 %v919, 7
      %v921 = vsub.s32 %v918, %v920
      %v922 = vrot.slane %v900, %v921
      %v924 = vunpack.c.l.s4 1966171168
      %v925 = vunpack.c.0.s8 %v924
      %v926 = vlaneseq
      %v927 = vshrl.u32 %v926, 7
      %v928 = vsub.s32 %v925, %v927
      %v929 = vrot.slane %v901, %v928
      %v930 = vcombine.low %v908, %v915
      %v931 = vcombine.high %v908, %v915
      %v932 = vcombine.low %v922, %v929
      %v933 = vcombine.high %v922, %v929
      %v935 = vunpack.c.l.s4 1966171168
      %v936 = vunpack.c.0.s8 %v935
      %v937 = vlaneseq
      %v938 = vshrl.u32 %v937, 7
      %v939 = vsub.s32 %v936, %v938
      %v940 = vrot.slane %v930, %v939
      %v942 = vunpack.c.l.s4 1966171168
      %v943 = vunpack.c.0.s8 %v942
      %v944 = vlaneseq
      %v945 = vshrl.u32 %v944, 7
      %v946 = vsub.s32 %v943, %v945
      %v947 = vrot.slane %v931, %v946
      %v949 = vunpack.c.l.s4 1966171168
      %v950 = vunpack.c.0.s8 %v949
      %v951 = vlaneseq
      %v952 = vshrl.u32 %v951, 7
      %v953 = vsub.s32 %v950, %v952
      %v954 = vrot.slane %v932, %v953
      %v956 = vunpack.c.l.s4 1966171168
      %v957 = vunpack.c.0.s8 %v956
      %v958 = vlaneseq
      %v959 = vshrl.u32 %v958, 7
      %v960 = vsub.s32 %v957, %v959
      %v961 = vrot.slane %v933, %v960
      %v962 = vcombine.low %v940, %v954
      %v963 = vcombine.high %v940, %v954
      %v964 = vcombine.low %v947, %v961
      %v965 = vcombine.low %v801, %v825
      %v966 = vcombine.low %v832, %v833
      %v967 = vcombine.low %v857, %v864
      %v968 = vcombine.low %v865, %v889
      %v970 = vunpack.c.l.s4 1966171168
      %v971 = vunpack.c.0.s8 %v970
      %v972 = vlaneseq
      %v973 = vshrl.u32 %v972, 7
      %v974 = vsub.s32 %v971, %v973
      %v975 = vrot.slane %v965, %v974
      %v977 = vunpack.c.l.s4 1966171168
      %v978 = vunpack.c.0.s8 %v977
      %v979 = vlaneseq
      %v980 = vshrl.u32 %v979, 7
      %v981 = vsub.s32 %v978, %v980
      %v982 = vrot.slane %v966, %v981
      %v984 = vunpack.c.l.s4 1966171168
      %v985 = vunpack.c.0.s8 %v984
      %v986 = vlaneseq
      %v987 = vshrl.u32 %v986, 7
      %v988 = vsub.s32 %v985, %v987
      %v989 = vrot.slane %v967, %v988
      %v991 = vunpack.c.l.s4 1966171168
      %v992 = vunpack.c.0.s8 %v991
      %v993 = vlaneseq
      %v994 = vshrl.u32 %v993, 7
      %v995 = vsub.s32 %v992, %v994
      %v996 = vrot.slane %v968, %v995
      %v997 = vcombine.low %v975, %v982
      %v998 = vcombine.high %v975, %v982
      %v999 = vcombine.low %v989, %v996
      %v1000 = vcombine.high %v989, %v996
      %v1002 = vunpack.c.l.s4 1966171168
      %v1003 = vunpack.c.0.s8 %v1002
      %v1004 = vlaneseq
      %v1005 = vshrl.u32 %v1004, 7
      %v1006 = vsub.s32 %v1003, %v1005
      %v1007 = vrot.slane %v997, %v1006
      %v1009 = vunpack.c.l.s4 1966171168
      %v1010 = vunpack.c.0.s8 %v1009
      %v1011 = vlaneseq
      %v1012 = vshrl.u32 %v1011, 7
      %v1013 = vsub.s32 %v1010, %v1012
      %v1014 = vrot.slane %v998, %v1013
      %v1016 = vunpack.c.l.s4 1966171168
      %v1017 = vunpack.c.0.s8 %v1016
      %v1018 = vlaneseq
      %v1019 = vshrl.u32 %v1018, 7
      %v1020 = vsub.s32 %v1017, %v1019
      %v1021 = vrot.slane %v999, %v1020
      %v1023 = vunpack.c.l.s4 1966171168
      %v1024 = vunpack.c.0.s8 %v1023
      %v1025 = vlaneseq
      %v1026 = vshrl.u32 %v1025, 7
      %v1027 = vsub.s32 %v1024, %v1026
      %v1028 = vrot.slane %v1000, %v1027
      %v1029 = vcombine.low %v1007, %v1021
      %v1030 = vcombine.high %v1007, %v1021
      %v1031 = vcombine.low %v1014, %v1028
      %v1032 = vcombine.low %v896, %v897
      %v1034 = vunpack.c.l.s4 1966171168
      %v1035 = vunpack.c.0.s8 %v1034
      %v1036 = vlaneseq
      %v1037 = vshrl.u32 %v1036, 7
      %v1038 = vsub.s32 %v1035, %v1037
      %v1039 = vrot.slane %v1032, %v1038
      %v1040 = vcombine.high %v1039, %v1039
      %v1042 = vunpack.c.l.s4 1966171168
      %v1043 = vunpack.c.0.s8 %v1042
      %v1044 = vlaneseq
      %v1045 = vshrl.u32 %v1044, 7
      %v1046 = vsub.s32 %v1043, %v1045
      %v1047 = vrot.slane %v1039, %v1046
      %v1049 = vunpack.c.l.s4 1966171168
      %v1050 = vunpack.c.0.s8 %v1049
      %v1051 = vlaneseq
      %v1052 = vshrl.u32 %v1051, 7
      %v1053 = vsub.s32 %v1050, %v1052
      %v1054 = vrot.slane %v1040, %v1053
      %v1055 = vcombine.high %v1047, %v1047
      %v1113 = vunpack.c.l.b16 %v652
      %v1114 = vunpack.c.l.b16 %v653
      %v1115 = vunpack.c.l.b16 %v654
      %v1116 = vunpack.c.l.b16 %v655
      %v1117 = vunpack.c.l.b16 %v656
      %v1118 = vunpack.c.l.b16 %v657
      %v1119 = vunpack.c.l.b16 %v658
      %v1120 = vunpack.c.l.b16 %v659
      %v1121 = vunpack.c.l.b16 %v660
      %v1122 = vunpack.c.l.b16 %v661
      %v1123 = vunpack.c.l.b16 %v662
      %v1124 = vunpack.c.l.b16 %v663
      %v1125 = vunpack.c.l.b16 %v664
      %v1126 = vunpack.c.l.b16 %v665
      %v1127 = vunpack.c.l.b16 %v666
      %v1128 = vunpack.c.l.b16 %v667
      %v1129 = vunpack.c.l.b16 %v668
      %v1130 = vunpack.c.l.b16 %v669
      %v1131 = vunpack.c.l.b16 %v670
      %v1132 = vunpack.c.l.b16 %v671
      %v1133 = vunpack.c.l.b16 %v672
      %v1134 = vunpack.c.l.b16 %v673
      %v1135 = vunpack.c.l.b16 %v674
      %v1136 = vunpack.c.l.b16 %v675
      %v1137 = vunpack.c.l.b16 %v676
      %v1138 = vunpack.c.l.b16 %v677
      %v1139 = vunpack.c.l.b16 %v678
      %v1140 = vunpack.c.l.b16 %v679
      %v1141 = vunpack.c.l.b16 %v680
      %v1142 = vunpack.c.l.b16 %v681
      %v1143 = vunpack.c.l.b16 %v682
      %v1144 = vunpack.c.l.b16 %v683
      %v1145 = vunpack.c.l.b16 %v684
      %v1146 = vunpack.c.l.b16 %v685
      %v1147 = vunpack.c.l.b16 %v686
      %v1148 = vunpack.c.l.b16 %v687
      %v1149 = vunpack.c.l.b16 %v688
      %v1150 = vunpack.c.l.b16 %v689
      %v1151 = vunpack.c.l.b16 %v690
      %v1152 = vunpack.c.l.b16 %v691
      %v1153 = vunpack.c.l.b16 %v692
      %v1154 = vunpack.c.l.b16 %v693
      %v1155 = vunpack.c.l.b16 %v694
      %v1156 = vunpack.c.l.b16 %v695
      %v1157 = vunpack.c.l.b16 %v696
      %v1158 = vunpack.c.l.b16 %v697
      %v1159 = vunpack.c.l.b16 %v698
      %v1160 = vunpack.c.l.b16 %v699
      %v1161 = vpack.c.b16 %v1114, %v1113
      %v1162 = vpack.c.b16 %v1116, %v1115
      %v1163 = vpack.c.b16 %v1118, %v1117
      %v1164 = vpack.c.b16 %v1120, %v1119
      %v1165 = vpack.c.b16 %v1122, %v1121
      %v1166 = vpack.c.b16 %v1124, %v1123
      %v1167 = vpack.c.b16 %v1126, %v1125
      %v1168 = vpack.c.b16 %v1128, %v1127
      %v1169 = vpack.c.b16 %v1130, %v1129
      %v1170 = vpack.c.b16 %v1132, %v1131
      %v1171 = vpack.c.b16 %v1134, %v1133
      %v1172 = vpack.c.b16 %v1136, %v1135
      %v1173 = vpack.c.b16 %v1138, %v1137
      %v1174 = vpack.c.b16 %v1140, %v1139
      %v1175 = vpack.c.b16 %v1142, %v1141
      %v1176 = vpack.c.b16 %v1144, %v1143
      %v1177 = vpack.c.b16 %v1146, %v1145
      %v1178 = vpack.c.b16 %v1148, %v1147
      %v1179 = vpack.c.b16 %v1150, %v1149
      %v1180 = vpack.c.b16 %v1152, %v1151
      %v1181 = vpack.c.b16 %v1154, %v1153
      %v1182 = vpack.c.b16 %v1156, %v1155
      %v1183 = vpack.c.b16 %v1158, %v1157
      %v1184 = vpack.c.b16 %v1160, %v1159
      %1209 = vmatprep.subr.bf16.mxu0 0
      %1210 = vmatpush1.bf16.msra.mxu0 %v1161
      %1211 = vmatprep.subr.bf16.mxu0 0
      %1212 = vmatpush1.bf16.msra.mxu0 %v1162
      %1213 = vmatprep.subr.bf16.mxu0 0
      %1214 = vmatpush1.bf16.msra.mxu0 %v1163
      %1215 = vmatprep.subr.bf16.mxu0 0
      %1216 = vmatpush1.bf16.msra.mxu0 %v1164
      %1217 = vmatprep.subr.bf16.mxu0 0
      %1218 = vmatpush1.bf16.msra.mxu0 %v1165
      %1219 = vmatprep.subr.bf16.mxu0 0
      %1220 = vmatpush1.bf16.msra.mxu0 %v1166
      %1221 = vmatprep.subr.bf16.mxu0 0
      %1222 = vmatpush1.bf16.msra.mxu0 %v1167
      %1223 = vmatprep.subr.bf16.mxu0 0
      %1224 = vmatpush1.bf16.msra.mxu0 %v1168
      %1225 = vmatprep.subr.bf16.mxu0 0
      %1226 = vmatpush1.bf16.msra.mxu0 %v1169
      %1227 = vmatprep.subr.bf16.mxu0 0
      %1228 = vmatpush1.bf16.msra.mxu0 %v1170
      %1229 = vmatprep.subr.bf16.mxu0 0
      %1230 = vmatpush1.bf16.msra.mxu0 %v1171
      %1231 = vmatprep.subr.bf16.mxu0 0
      %1232 = vmatpush1.bf16.msra.mxu0 %v1172
      %1233 = vmatprep.subr.bf16.mxu0 0
      %1234 = vmatpush1.bf16.msra.mxu0 %v1173
      %1235 = vmatprep.subr.bf16.mxu0 0
      %1236 = vmatpush1.bf16.msra.mxu0 %v1174
      %1237 = vmatprep.subr.bf16.mxu0 0
      %1238 = vmatpush1.bf16.msra.mxu0 %v1175
      %1239 = vmatprep.subr.bf16.mxu0 0
      %1240 = vmatpush1.bf16.msra.mxu0 %v1176
      %1241 = vmatprep.mubr.bf16.mxu0 %v964
      %1242 = vmatmul.mubr.bf16.gmra.mrb[0].mxu0 %v962
      %v1243 = vpop.f32.mrb[0].mxu0
      %v1244 = vadd.f32 0.0, %v1243
      %v1245 = vpop.f32.mrb[0].mxu0
      %v1246 = vpop.f32.mrb[0].mxu0
      %v1247 = vadd.f32 0.0, %v1246
      %v1248 = vpop.f32.mrb[0].mxu0
      %1249 = vmatprep.mubr.bf16.mxu0 %v1031
      %1250 = vmatmul.mubr.bf16.gmra.mrb[0].mxu0 %v1029
      %v1251 = vpop.f32.mrb[0].mxu0
      %v1252 = vadd.f32 0.0, %v1251
      %v1253 = vpop.f32.mrb[0].mxu0
      %v1254 = vpop.f32.mrb[0].mxu0
      %v1255 = vadd.f32 0.0, %v1254
      %v1256 = vpop.f32.mrb[0].mxu0
      %1257 = vmatprep.mubr.bf16.mxu0 %v1054
      %1258 = vmatmul.mubr.bf16.gmra.mrb[0].mxu0 %v1047
      %v1259 = vpop.f32.mrb[0].mxu0
      %v1260 = vadd.f32 0.0, %v1259
      %v1261 = vpop.f32.mrb[0].mxu0
      %v1262 = vpop.f32.mrb[0].mxu0
      %v1263 = vpop.f32.mrb[0].mxu0
      %1264 = vdwg.mxu0
      %1265 = vmatprep.subr.bf16.mxu0 0
      %1266 = vmatpush1.bf16.msra.mxu0 %v1177
      %1267 = vmatprep.subr.bf16.mxu0 0
      %1268 = vmatpush1.bf16.msra.mxu0 %v1178
      %1269 = vmatprep.subr.bf16.mxu0 0
      %1270 = vmatpush1.bf16.msra.mxu0 %v1179
      %1271 = vmatprep.subr.bf16.mxu0 0
      %1272 = vmatpush1.bf16.msra.mxu0 %v1180
      %1273 = vmatprep.subr.bf16.mxu0 0
      %1274 = vmatpush1.bf16.msra.mxu0 %v1181
      %1275 = vmatprep.subr.bf16.mxu0 0
      %1276 = vmatpush1.bf16.msra.mxu0 %v1182
      %1277 = vmatprep.subr.bf16.mxu0 0
      %1278 = vmatpush1.bf16.msra.mxu0 %v1183
      %1279 = vmatprep.subr.bf16.mxu0 0
      %1280 = vmatpush1.bf16.msra.mxu0 %v1184
      %1281 = vmatprep.subr.bf16.mxu0 0
      %1282 = vmatpush1.bf16.msra.mxu0 0
      %1283 = vmatprep.subr.bf16.mxu0 0
      %1284 = vmatpush1.bf16.msra.mxu0 0
      %1285 = vmatprep.subr.bf16.mxu0 0
      %1286 = vmatpush1.bf16.msra.mxu0 0
      %1287 = vmatprep.subr.bf16.mxu0 0
      %1288 = vmatpush1.bf16.msra.mxu0 0
      %1289 = vmatprep.subr.bf16.mxu0 0
      %1290 = vmatpush1.bf16.msra.mxu0 0
      %1291 = vmatprep.subr.bf16.mxu0 0
      %1292 = vmatpush1.bf16.msra.mxu0 0
      %1293 = vmatprep.subr.bf16.mxu0 0
      %1294 = vmatpush1.bf16.msra.mxu0 0
      %1295 = vmatprep.subr.bf16.mxu0 0
      %1296 = vmatpush1.bf16.msra.mxu0 0
      %1297 = vmatprep.mubr.bf16.mxu0 0
      %1298 = vmatmul.mubr.bf16.gmra.mrb[0].mxu0 %v963
      %v1299 = vpop.f32.mrb[0].mxu0
      %v1300 = vadd.f32 %v1244, %v1299
      %v1301 = vpop.f32.mrb[0].mxu0
      %v1302 = vpop.f32.mrb[0].mxu0
      %v1303 = vadd.f32 %v1247, %v1302
      %v1304 = vpop.f32.mrb[0].mxu0
      %1305 = vmatprep.mubr.bf16.mxu0 0
      %1306 = vmatmul.mubr.bf16.gmra.mrb[0].mxu0 %v1030
      %v1307 = vpop.f32.mrb[0].mxu0
      %v1308 = vadd.f32 %v1252, %v1307
      %v1309 = vpop.f32.mrb[0].mxu0
      %v1310 = vpop.f32.mrb[0].mxu0
      %v1311 = vadd.f32 %v1255, %v1310
      %v1312 = vpop.f32.mrb[0].mxu0
      %1313 = vmatprep.mubr.bf16.mxu0 0
      %1314 = vmatmul.mubr.bf16.gmra.mrb[0].mxu0 %v1055
      %v1315 = vpop.f32.mrb[0].mxu0
      %v1316 = vadd.f32 %v1260, %v1315
      %v1317 = vpop.f32.mrb[0].mxu0
      %v1318 = vpop.f32.mrb[0].mxu0
      %v1319 = vpop.f32.mrb[0].mxu0
      %1320 = vdwg.mxu0
      %v1321 = vadd.f32 %v541, %v1300
      %v1322 = vadd.f32 %v542, %v1303
      %v1323 = vadd.f32 %v543, %v1308
      %v1324 = vadd.f32 %v544, %v1311
      %v1325 = vadd.f32 %v545, %v1316
      %v1326 = vld [vmem:[%s519] sm:$0x7]
      %v1327 = vld [vmem:[%s519 + $0x4] sm:$0x7]
      %v1328 = vld [vmem:[%s519 + $0x8] sm:$0x7]
      %v1329 = vld [vmem:[%s519 + $0xc] sm:$0x7]
      %v1330 = vld [vmem:[%s519 + $0x10] sm:$0x7]
      %v1331 = vld [vmem:[%s519 + $0x14] sm:$0x7]
      %v1332 = vld [vmem:[%s519] sm:$0xf]
      %v1333 = vld [vmem:[%s519 + $0x4] sm:$0xf]
      %v1334 = vld [vmem:[%s519 + $0x8] sm:$0xf]
      %v1335 = vld [vmem:[%s519 + $0xc] sm:$0xf]
      %v1336 = vld [vmem:[%s519 + $0x10] sm:$0xf]
      %v1337 = vld [vmem:[%s519 + $0x14] sm:$0xf]
      %v1338 = vld [vmem:[%s519] sm:$0xe]
      %v1339 = vld [vmem:[%s519 + $0x4] sm:$0xe]
      %v1340 = vld [vmem:[%s519 + $0x8] sm:$0xe]
      %v1341 = vld [vmem:[%s519 + $0xc] sm:$0xe]
      %v1342 = vld [vmem:[%s519 + $0x10] sm:$0xe]
      %v1343 = vld [vmem:[%s519 + $0x14] sm:$0xe]
      %v1350 = vunpack.c.l.b16 %v1332
      %v1351 = vunpack.c.l.b16 %v1333
      %v1352 = vunpack.c.l.b16 %v1334
      %v1353 = vunpack.c.l.b16 %v1335
      %v1354 = vunpack.c.l.b16 %v1336
      %v1355 = vunpack.c.l.b16 %v1337
      %v1356 = vpack.c.b16 %v1350, %v1350
      %v1357 = vpack.c.b16 %v1351, %v1351
      %v1358 = vpack.c.b16 %v1352, %v1352
      %v1359 = vpack.c.b16 %v1353, %v1353
      %v1360 = vpack.c.b16 %v1354, %v1354
      %v1361 = vpack.c.b16 %v1355, %v1355
      %v1363 = vshrl.u32 %v1356, 16
      %v1365 = vshll.u32 %v1356, 16
      %v1367 = vrot.slane %v1365, 1
      %v1368 = vor.u32 %v1363, %v1367
      %v1370 = vshrl.u32 %v1357, 16
      %v1372 = vshll.u32 %v1357, 16
      %v1374 = vrot.slane %v1372, 1
      %v1375 = vor.u32 %v1370, %v1374
      %v1377 = vshrl.u32 %v1358, 16
      %v1379 = vshll.u32 %v1358, 16
      %v1381 = vrot.slane %v1379, 1
      %v1382 = vor.u32 %v1377, %v1381
      %v1384 = vshrl.u32 %v1359, 16
      %v1386 = vshll.u32 %v1359, 16
      %v1388 = vrot.slane %v1386, 1
      %v1389 = vor.u32 %v1384, %v1388
      %v1391 = vshrl.u32 %v1360, 16
      %v1393 = vshll.u32 %v1360, 16
      %v1395 = vrot.slane %v1393, 1
      %v1396 = vor.u32 %v1391, %v1395
      %v1398 = vshrl.u32 %v1361, 16
      %v1400 = vshll.u32 %v1361, 16
      %v1402 = vrot.slane %v1400, 1
      %v1403 = vor.u32 %v1398, %v1402
      %v1410 = vunpack.c.l.b16 %v1338
      %v1411 = vunpack.c.l.b16 %v1339
      %v1412 = vunpack.c.l.b16 %v1340
      %v1413 = vunpack.c.l.b16 %v1341
      %v1414 = vunpack.c.l.b16 %v1342
      %v1415 = vunpack.c.l.b16 %v1343
      %v1416 = vpack.c.b16 %v1410, %v1410
      %v1417 = vpack.c.b16 %v1411, %v1411
      %v1418 = vpack.c.b16 %v1412, %v1412
      %v1419 = vpack.c.b16 %v1413, %v1413
      %v1420 = vpack.c.b16 %v1414, %v1414
      %v1421 = vpack.c.b16 %v1415, %v1415
      %v1422 = vrot.slane %v1416, 1
      %v1423 = vrot.slane %v1417, 1
      %v1424 = vrot.slane %v1418, 1
      %v1425 = vrot.slane %v1419, 1
      %v1426 = vrot.slane %v1420, 1
      %v1427 = vrot.slane %v1421, 1
      %s1428 = sadd.s32 %s648, 1
      %s1429 = smul.u32 %s1428, 48
      %s1430 = smul.addr %s1429, 4
      %s1431 = scalar_lea.vmem %s3, %s1430
      %v1432 = vld [vmem:[%s1431] sm:$0xf]
      %v1433 = vld [vmem:[%s1431 + $0x4] sm:$0xf]
      %v1434 = vld [vmem:[%s1431 + $0x8] sm:$0xf]
      %v1435 = vld [vmem:[%s1431 + $0xc] sm:$0xf]
      %v1436 = vld [vmem:[%s1431 + $0x10] sm:$0xf]
      %v1437 = vld [vmem:[%s1431 + $0x14] sm:$0xf]
      %v1438 = vld [vmem:[%s1431 + $0x18] sm:$0xf]
      %v1439 = vld [vmem:[%s1431 + $0x1c] sm:$0xf]
      %v1440 = vld [vmem:[%s1431 + $0x20] sm:$0xf]
      %v1441 = vld [vmem:[%s1431 + $0x24] sm:$0xf]
      %v1442 = vld [vmem:[%s1431 + $0x28] sm:$0xf]
      %v1443 = vld [vmem:[%s1431 + $0x2c] sm:$0xf]
      %v1444 = vld [vmem:[%s1431 + $0x30] sm:$0xf]
      %v1445 = vld [vmem:[%s1431 + $0x34] sm:$0xf]
      %v1446 = vld [vmem:[%s1431 + $0x38] sm:$0xf]
      %v1447 = vld [vmem:[%s1431 + $0x3c] sm:$0xf]
      %v1448 = vld [vmem:[%s1431 + $0x40] sm:$0xf]
      %v1449 = vld [vmem:[%s1431 + $0x44] sm:$0xf]
      %v1450 = vld [vmem:[%s1431 + $0x48] sm:$0xf]
      %v1451 = vld [vmem:[%s1431 + $0x4c] sm:$0xf]
      %v1452 = vld [vmem:[%s1431 + $0x50] sm:$0xf]
      %v1453 = vld [vmem:[%s1431 + $0x54] sm:$0xf]
      %v1454 = vld [vmem:[%s1431 + $0x58] sm:$0xf]
      %v1455 = vld [vmem:[%s1431 + $0x5c] sm:$0xf]
      %v1456 = vld [vmem:[%s1431 + $0x60] sm:$0xf]
      %v1457 = vld [vmem:[%s1431 + $0x64] sm:$0xf]
      %v1458 = vld [vmem:[%s1431 + $0x68] sm:$0xf]
      %v1459 = vld [vmem:[%s1431 + $0x6c] sm:$0xf]
      %v1460 = vld [vmem:[%s1431 + $0x70] sm:$0xf]
      %v1461 = vld [vmem:[%s1431 + $0x74] sm:$0xf]
      %v1462 = vld [vmem:[%s1431 + $0x78] sm:$0xf]
      %v1463 = vld [vmem:[%s1431 + $0x7c] sm:$0xf]
      %v1464 = vld [vmem:[%s1431 + $0x80] sm:$0xf]
      %v1465 = vld [vmem:[%s1431 + $0x84] sm:$0xf]
      %v1466 = vld [vmem:[%s1431 + $0x88] sm:$0xf]
      %v1467 = vld [vmem:[%s1431 + $0x8c] sm:$0xf]
      %v1468 = vld [vmem:[%s1431 + $0x90] sm:$0xf]
      %v1469 = vld [vmem:[%s1431 + $0x94] sm:$0xf]
      %v1470 = vld [vmem:[%s1431 + $0x98] sm:$0xf]
      %v1471 = vld [vmem:[%s1431 + $0x9c] sm:$0xf]
      %v1472 = vld [vmem:[%s1431 + $0xa0] sm:$0xf]
      %v1473 = vld [vmem:[%s1431 + $0xa4] sm:$0xf]
      %v1474 = vld [vmem:[%s1431 + $0xa8] sm:$0xf]
      %v1475 = vld [vmem:[%s1431 + $0xac] sm:$0xf]
      %v1476 = vld [vmem:[%s1431 + $0xb0] sm:$0xf]
      %v1477 = vld [vmem:[%s1431 + $0xb4] sm:$0xf]
      %v1478 = vld [vmem:[%s1431 + $0xb8] sm:$0xf]
      %v1479 = vld [vmem:[%s1431 + $0xbc] sm:$0xf]
      %v1486 = vcombine.low %v1326, %v1368
      %v1488 = vunpack.c.l.s4 1966171168
      %v1489 = vunpack.c.0.s8 %v1488
      %v1490 = vlaneseq
      %v1491 = vshrl.u32 %v1490, 7
      %v1492 = vsub.s32 %v1489, %v1491
      %v1493 = vrot.slane %v1486, %v1492
      %v1495 = vunpack.c.l.s4 1966171168
      %v1496 = vunpack.c.0.s8 %v1495
      %v1497 = vlaneseq
      %v1498 = vshrl.u32 %v1497, 7
      %v1499 = vsub.s32 %v1496, %v1498
      %v1500 = vrot.slane %v1422, %v1499
      %v1501 = vcombine.low %v1493, %v1500
      %v1502 = vcombine.high %v1493, %v1500
      %v1504 = vunpack.c.l.s4 1966171168
      %v1505 = vunpack.c.0.s8 %v1504
      %v1506 = vlaneseq
      %v1507 = vshrl.u32 %v1506, 7
      %v1508 = vsub.s32 %v1505, %v1507
      %v1509 = vrot.slane %v1501, %v1508
      %v1511 = vunpack.c.l.s4 1966171168
      %v1512 = vunpack.c.0.s8 %v1511
      %v1513 = vlaneseq
      %v1514 = vshrl.u32 %v1513, 7
      %v1515 = vsub.s32 %v1512, %v1514
      %v1516 = vrot.slane %v1502, %v1515
      %v1517 = vcombine.high %v1509, %v1509
      %v1518 = vcombine.low %v1327, %v1375
      %v1520 = vunpack.c.l.s4 1966171168
      %v1521 = vunpack.c.0.s8 %v1520
      %v1522 = vlaneseq
      %v1523 = vshrl.u32 %v1522, 7
      %v1524 = vsub.s32 %v1521, %v1523
      %v1525 = vrot.slane %v1518, %v1524
      %v1527 = vunpack.c.l.s4 1966171168
      %v1528 = vunpack.c.0.s8 %v1527
      %v1529 = vlaneseq
      %v1530 = vshrl.u32 %v1529, 7
      %v1531 = vsub.s32 %v1528, %v1530
      %v1532 = vrot.slane %v1423, %v1531
      %v1533 = vcombine.low %v1525, %v1532
      %v1534 = vcombine.high %v1525, %v1532
      %v1536 = vunpack.c.l.s4 1966171168
      %v1537 = vunpack.c.0.s8 %v1536
      %v1538 = vlaneseq
      %v1539 = vshrl.u32 %v1538, 7
      %v1540 = vsub.s32 %v1537, %v1539
      %v1541 = vrot.slane %v1533, %v1540
      %v1543 = vunpack.c.l.s4 1966171168
      %v1544 = vunpack.c.0.s8 %v1543
      %v1545 = vlaneseq
      %v1546 = vshrl.u32 %v1545, 7
      %v1547 = vsub.s32 %v1544, %v1546
      %v1548 = vrot.slane %v1534, %v1547
      %v1549 = vcombine.high %v1541, %v1541
      %v1550 = vcombine.low %v1328, %v1382
      %v1552 = vunpack.c.l.s4 1966171168
      %v1553 = vunpack.c.0.s8 %v1552
      %v1554 = vlaneseq
      %v1555 = vshrl.u32 %v1554, 7
      %v1556 = vsub.s32 %v1553, %v1555
      %v1557 = vrot.slane %v1550, %v1556
      %v1559 = vunpack.c.l.s4 1966171168
      %v1560 = vunpack.c.0.s8 %v1559
      %v1561 = vlaneseq
      %v1562 = vshrl.u32 %v1561, 7
      %v1563 = vsub.s32 %v1560, %v1562
      %v1564 = vrot.slane %v1424, %v1563
      %v1565 = vcombine.low %v1557, %v1564
      %v1566 = vcombine.high %v1557, %v1564
      %v1568 = vunpack.c.l.s4 1966171168
      %v1569 = vunpack.c.0.s8 %v1568
      %v1570 = vlaneseq
      %v1571 = vshrl.u32 %v1570, 7
      %v1572 = vsub.s32 %v1569, %v1571
      %v1573 = vrot.slane %v1565, %v1572
      %v1575 = vunpack.c.l.s4 1966171168
      %v1576 = vunpack.c.0.s8 %v1575
      %v1577 = vlaneseq
      %v1578 = vshrl.u32 %v1577, 7
      %v1579 = vsub.s32 %v1576, %v1578
      %v1580 = vrot.slane %v1566, %v1579
      %v1581 = vcombine.high %v1573, %v1573
      %v1582 = vcombine.low %v1329, %v1389
      %v1584 = vunpack.c.l.s4 1966171168
      %v1585 = vunpack.c.0.s8 %v1584
      %v1586 = vlaneseq
      %v1587 = vshrl.u32 %v1586, 7
      %v1588 = vsub.s32 %v1585, %v1587
      %v1589 = vrot.slane %v1582, %v1588
      %v1591 = vunpack.c.l.s4 1966171168
      %v1592 = vunpack.c.0.s8 %v1591
      %v1593 = vlaneseq
      %v1594 = vshrl.u32 %v1593, 7
      %v1595 = vsub.s32 %v1592, %v1594
      %v1596 = vrot.slane %v1425, %v1595
      %v1597 = vcombine.low %v1589, %v1596
      %v1598 = vcombine.high %v1589, %v1596
      %v1600 = vunpack.c.l.s4 1966171168
      %v1601 = vunpack.c.0.s8 %v1600
      %v1602 = vlaneseq
      %v1603 = vshrl.u32 %v1602, 7
      %v1604 = vsub.s32 %v1601, %v1603
      %v1605 = vrot.slane %v1597, %v1604
      %v1607 = vunpack.c.l.s4 1966171168
      %v1608 = vunpack.c.0.s8 %v1607
      %v1609 = vlaneseq
      %v1610 = vshrl.u32 %v1609, 7
      %v1611 = vsub.s32 %v1608, %v1610
      %v1612 = vrot.slane %v1598, %v1611
      %v1613 = vcombine.high %v1605, %v1605
      %v1614 = vcombine.low %v1330, %v1396
      %v1616 = vunpack.c.l.s4 1966171168
      %v1617 = vunpack.c.0.s8 %v1616
      %v1618 = vlaneseq
      %v1619 = vshrl.u32 %v1618, 7
      %v1620 = vsub.s32 %v1617, %v1619
      %v1621 = vrot.slane %v1614, %v1620
      %v1623 = vunpack.c.l.s4 1966171168
      %v1624 = vunpack.c.0.s8 %v1623
      %v1625 = vlaneseq
      %v1626 = vshrl.u32 %v1625, 7
      %v1627 = vsub.s32 %v1624, %v1626
      %v1628 = vrot.slane %v1426, %v1627
      %v1629 = vcombine.low %v1621, %v1628
      %v1630 = vcombine.high %v1621, %v1628
      %v1632 = vunpack.c.l.s4 1966171168
      %v1633 = vunpack.c.0.s8 %v1632
      %v1634 = vlaneseq
      %v1635 = vshrl.u32 %v1634, 7
      %v1636 = vsub.s32 %v1633, %v1635
      %v1637 = vrot.slane %v1629, %v1636
      %v1639 = vunpack.c.l.s4 1966171168
      %v1640 = vunpack.c.0.s8 %v1639
      %v1641 = vlaneseq
      %v1642 = vshrl.u32 %v1641, 7
      %v1643 = vsub.s32 %v1640, %v1642
      %v1644 = vrot.slane %v1630, %v1643
      %v1645 = vcombine.high %v1637, %v1637
      %v1646 = vcombine.low %v1331, %v1403
      %v1648 = vunpack.c.l.s4 1966171168
      %v1649 = vunpack.c.0.s8 %v1648
      %v1650 = vlaneseq
      %v1651 = vshrl.u32 %v1650, 7
      %v1652 = vsub.s32 %v1649, %v1651
      %v1653 = vrot.slane %v1646, %v1652
      %v1655 = vunpack.c.l.s4 1966171168
      %v1656 = vunpack.c.0.s8 %v1655
      %v1657 = vlaneseq
      %v1658 = vshrl.u32 %v1657, 7
      %v1659 = vsub.s32 %v1656, %v1658
      %v1660 = vrot.slane %v1427, %v1659
      %v1661 = vcombine.low %v1653, %v1660
      %v1662 = vcombine.high %v1653, %v1660
      %v1664 = vunpack.c.l.s4 1966171168
      %v1665 = vunpack.c.0.s8 %v1664
      %v1666 = vlaneseq
      %v1667 = vshrl.u32 %v1666, 7
      %v1668 = vsub.s32 %v1665, %v1667
      %v1669 = vrot.slane %v1661, %v1668
      %v1671 = vunpack.c.l.s4 1966171168
      %v1672 = vunpack.c.0.s8 %v1671
      %v1673 = vlaneseq
      %v1674 = vshrl.u32 %v1673, 7
      %v1675 = vsub.s32 %v1672, %v1674
      %v1676 = vrot.slane %v1662, %v1675
      %v1677 = vcombine.high %v1669, %v1669
      %v1678 = vcombine.low %v1509, %v1516
      %v1679 = vcombine.low %v1517, %v1541
      %v1680 = vcombine.low %v1548, %v1549
      %v1681 = vcombine.low %v1573, %v1580
      %v1683 = vunpack.c.l.s4 1966171168
      %v1684 = vunpack.c.0.s8 %v1683
      %v1685 = vlaneseq
      %v1686 = vshrl.u32 %v1685, 7
      %v1687 = vsub.s32 %v1684, %v1686
      %v1688 = vrot.slane %v1678, %v1687
      %v1690 = vunpack.c.l.s4 1966171168
      %v1691 = vunpack.c.0.s8 %v1690
      %v1692 = vlaneseq
      %v1693 = vshrl.u32 %v1692, 7
      %v1694 = vsub.s32 %v1691, %v1693
      %v1695 = vrot.slane %v1679, %v1694
      %v1697 = vunpack.c.l.s4 1966171168
      %v1698 = vunpack.c.0.s8 %v1697
      %v1699 = vlaneseq
      %v1700 = vshrl.u32 %v1699, 7
      %v1701 = vsub.s32 %v1698, %v1700
      %v1702 = vrot.slane %v1680, %v1701
      %v1704 = vunpack.c.l.s4 1966171168
      %v1705 = vunpack.c.0.s8 %v1704
      %v1706 = vlaneseq
      %v1707 = vshrl.u32 %v1706, 7
      %v1708 = vsub.s32 %v1705, %v1707
      %v1709 = vrot.slane %v1681, %v1708
      %v1710 = vcombine.low %v1688, %v1695
      %v1711 = vcombine.high %v1688, %v1695
      %v1712 = vcombine.low %v1702, %v1709
      %v1713 = vcombine.high %v1702, %v1709
      %v1715 = vunpack.c.l.s4 1966171168
      %v1716 = vunpack.c.0.s8 %v1715
      %v1717 = vlaneseq
      %v1718 = vshrl.u32 %v1717, 7
      %v1719 = vsub.s32 %v1716, %v1718
      %v1720 = vrot.slane %v1710, %v1719
      %v1722 = vunpack.c.l.s4 1966171168
      %v1723 = vunpack.c.0.s8 %v1722
      %v1724 = vlaneseq
      %v1725 = vshrl.u32 %v1724, 7
      %v1726 = vsub.s32 %v1723, %v1725
      %v1727 = vrot.slane %v1711, %v1726
      %v1729 = vunpack.c.l.s4 1966171168
      %v1730 = vunpack.c.0.s8 %v1729
      %v1731 = vlaneseq
      %v1732 = vshrl.u32 %v1731, 7
      %v1733 = vsub.s32 %v1730, %v1732
      %v1734 = vrot.slane %v1712, %v1733
      %v1736 = vunpack.c.l.s4 1966171168
      %v1737 = vunpack.c.0.s8 %v1736
      %v1738 = vlaneseq
      %v1739 = vshrl.u32 %v1738, 7
      %v1740 = vsub.s32 %v1737, %v1739
      %v1741 = vrot.slane %v1713, %v1740
      %v1742 = vcombine.low %v1720, %v1734
      %v1743 = vcombine.high %v1720, %v1734
      %v1744 = vcombine.low %v1727, %v1741
      %v1745 = vcombine.low %v1581, %v1605
      %v1746 = vcombine.low %v1612, %v1613
      %v1747 = vcombine.low %v1637, %v1644
      %v1748 = vcombine.low %v1645, %v1669
      %v1750 = vunpack.c.l.s4 1966171168
      %v1751 = vunpack.c.0.s8 %v1750
      %v1752 = vlaneseq
      %v1753 = vshrl.u32 %v1752, 7
      %v1754 = vsub.s32 %v1751, %v1753
      %v1755 = vrot.slane %v1745, %v1754
      %v1757 = vunpack.c.l.s4 1966171168
      %v1758 = vunpack.c.0.s8 %v1757
      %v1759 = vlaneseq
      %v1760 = vshrl.u32 %v1759, 7
      %v1761 = vsub.s32 %v1758, %v1760
      %v1762 = vrot.slane %v1746, %v1761
      %v1764 = vunpack.c.l.s4 1966171168
      %v1765 = vunpack.c.0.s8 %v1764
      %v1766 = vlaneseq
      %v1767 = vshrl.u32 %v1766, 7
      %v1768 = vsub.s32 %v1765, %v1767
      %v1769 = vrot.slane %v1747, %v1768
      %v1771 = vunpack.c.l.s4 1966171168
      %v1772 = vunpack.c.0.s8 %v1771
      %v1773 = vlaneseq
      %v1774 = vshrl.u32 %v1773, 7
      %v1775 = vsub.s32 %v1772, %v1774
      %v1776 = vrot.slane %v1748, %v1775
      %v1777 = vcombine.low %v1755, %v1762
      %v1778 = vcombine.high %v1755, %v1762
      %v1779 = vcombine.low %v1769, %v1776
      %v1780 = vcombine.high %v1769, %v1776
      %v1782 = vunpack.c.l.s4 1966171168
      %v1783 = vunpack.c.0.s8 %v1782
      %v1784 = vlaneseq
      %v1785 = vshrl.u32 %v1784, 7
      %v1786 = vsub.s32 %v1783, %v1785
      %v1787 = vrot.slane %v1777, %v1786
      %v1789 = vunpack.c.l.s4 1966171168
      %v1790 = vunpack.c.0.s8 %v1789
      %v1791 = vlaneseq
      %v1792 = vshrl.u32 %v1791, 7
      %v1793 = vsub.s32 %v1790, %v1792
      %v1794 = vrot.slane %v1778, %v1793
      %v1796 = vunpack.c.l.s4 1966171168
      %v1797 = vunpack.c.0.s8 %v1796
      %v1798 = vlaneseq
      %v1799 = vshrl.u32 %v1798, 7
      %v1800 = vsub.s32 %v1797, %v1799
      %v1801 = vrot.slane %v1779, %v1800
      %v1803 = vunpack.c.l.s4 1966171168
      %v1804 = vunpack.c.0.s8 %v1803
      %v1805 = vlaneseq
      %v1806 = vshrl.u32 %v1805, 7
      %v1807 = vsub.s32 %v1804, %v1806
      %v1808 = vrot.slane %v1780, %v1807
      %v1809 = vcombine.low %v1787, %v1801
      %v1810 = vcombine.high %v1787, %v1801
      %v1811 = vcombine.low %v1794, %v1808
      %v1812 = vcombine.low %v1676, %v1677
      %v1814 = vunpack.c.l.s4 1966171168
      %v1815 = vunpack.c.0.s8 %v1814
      %v1816 = vlaneseq
      %v1817 = vshrl.u32 %v1816, 7
      %v1818 = vsub.s32 %v1815, %v1817
      %v1819 = vrot.slane %v1812, %v1818
      %v1820 = vcombine.high %v1819, %v1819
      %v1822 = vunpack.c.l.s4 1966171168
      %v1823 = vunpack.c.0.s8 %v1822
      %v1824 = vlaneseq
      %v1825 = vshrl.u32 %v1824, 7
      %v1826 = vsub.s32 %v1823, %v1825
      %v1827 = vrot.slane %v1819, %v1826
      %v1829 = vunpack.c.l.s4 1966171168
      %v1830 = vunpack.c.0.s8 %v1829
      %v1831 = vlaneseq
      %v1832 = vshrl.u32 %v1831, 7
      %v1833 = vsub.s32 %v1830, %v1832
      %v1834 = vrot.slane %v1820, %v1833
      %v1835 = vcombine.high %v1827, %v1827
      %v1893 = vunpack.c.l.b16 %v1432
      %v1894 = vunpack.c.l.b16 %v1433
      %v1895 = vunpack.c.l.b16 %v1434
      %v1896 = vunpack.c.l.b16 %v1435
      %v1897 = vunpack.c.l.b16 %v1436
      %v1898 = vunpack.c.l.b16 %v1437
      %v1899 = vunpack.c.l.b16 %v1438
      %v1900 = vunpack.c.l.b16 %v1439
      %v1901 = vunpack.c.l.b16 %v1440
      %v1902 = vunpack.c.l.b16 %v1441
      %v1903 = vunpack.c.l.b16 %v1442
      %v1904 = vunpack.c.l.b16 %v1443
      %v1905 = vunpack.c.l.b16 %v1444
      %v1906 = vunpack.c.l.b16 %v1445
      %v1907 = vunpack.c.l.b16 %v1446
      %v1908 = vunpack.c.l.b16 %v1447
      %v1909 = vunpack.c.l.b16 %v1448
      %v1910 = vunpack.c.l.b16 %v1449
      %v1911 = vunpack.c.l.b16 %v1450
      %v1912 = vunpack.c.l.b16 %v1451
      %v1913 = vunpack.c.l.b16 %v1452
      %v1914 = vunpack.c.l.b16 %v1453
      %v1915 = vunpack.c.l.b16 %v1454
      %v1916 = vunpack.c.l.b16 %v1455
      %v1917 = vunpack.c.l.b16 %v1456
      %v1918 = vunpack.c.l.b16 %v1457
      %v1919 = vunpack.c.l.b16 %v1458
      %v1920 = vunpack.c.l.b16 %v1459
      %v1921 = vunpack.c.l.b16 %v1460
      %v1922 = vunpack.c.l.b16 %v1461
      %v1923 = vunpack.c.l.b16 %v1462
      %v1924 = vunpack.c.l.b16 %v1463
      %v1925 = vunpack.c.l.b16 %v1464
      %v1926 = vunpack.c.l.b16 %v1465
      %v1927 = vunpack.c.l.b16 %v1466
      %v1928 = vunpack.c.l.b16 %v1467
      %v1929 = vunpack.c.l.b16 %v1468
      %v1930 = vunpack.c.l.b16 %v1469
      %v1931 = vunpack.c.l.b16 %v1470
      %v1932 = vunpack.c.l.b16 %v1471
      %v1933 = vunpack.c.l.b16 %v1472
      %v1934 = vunpack.c.l.b16 %v1473
      %v1935 = vunpack.c.l.b16 %v1474
      %v1936 = vunpack.c.l.b16 %v1475
      %v1937 = vunpack.c.l.b16 %v1476
      %v1938 = vunpack.c.l.b16 %v1477
      %v1939 = vunpack.c.l.b16 %v1478
      %v1940 = vunpack.c.l.b16 %v1479
      %v1941 = vpack.c.b16 %v1894, %v1893
      %v1942 = vpack.c.b16 %v1896, %v1895
      %v1943 = vpack.c.b16 %v1898, %v1897
      %v1944 = vpack.c.b16 %v1900, %v1899
      %v1945 = vpack.c.b16 %v1902, %v1901
      %v1946 = vpack.c.b16 %v1904, %v1903
      %v1947 = vpack.c.b16 %v1906, %v1905
      %v1948 = vpack.c.b16 %v1908, %v1907
      %v1949 = vpack.c.b16 %v1910, %v1909
      %v1950 = vpack.c.b16 %v1912, %v1911
      %v1951 = vpack.c.b16 %v1914, %v1913
      %v1952 = vpack.c.b16 %v1916, %v1915
      %v1953 = vpack.c.b16 %v1918, %v1917
      %v1954 = vpack.c.b16 %v1920, %v1919
      %v1955 = vpack.c.b16 %v1922, %v1921
      %v1956 = vpack.c.b16 %v1924, %v1923
      %v1957 = vpack.c.b16 %v1926, %v1925
      %v1958 = vpack.c.b16 %v1928, %v1927
      %v1959 = vpack.c.b16 %v1930, %v1929
      %v1960 = vpack.c.b16 %v1932, %v1931
      %v1961 = vpack.c.b16 %v1934, %v1933
      %v1962 = vpack.c.b16 %v1936, %v1935
      %v1963 = vpack.c.b16 %v1938, %v1937
      %v1964 = vpack.c.b16 %v1940, %v1939
      %1989 = vmatprep.subr.bf16.mxu0 0
      %1990 = vmatpush1.bf16.msra.mxu0 %v1941
      %1991 = vmatprep.subr.bf16.mxu0 0
      %1992 = vmatpush1.bf16.msra.mxu0 %v1942
      %1993 = vmatprep.subr.bf16.mxu0 0
      %1994 = vmatpush1.bf16.msra.mxu0 %v1943
      %1995 = vmatprep.subr.bf16.mxu0 0
      %1996 = vmatpush1.bf16.msra.mxu0 %v1944
      %1997 = vmatprep.subr.bf16.mxu0 0
      %1998 = vmatpush1.bf16.msra.mxu0 %v1945
      %1999 = vmatprep.subr.bf16.mxu0 0
      %2000 = vmatpush1.bf16.msra.mxu0 %v1946
      %2001 = vmatprep.subr.bf16.mxu0 0
      %2002 = vmatpush1.bf16.msra.mxu0 %v1947
      %2003 = vmatprep.subr.bf16.mxu0 0
      %2004 = vmatpush1.bf16.msra.mxu0 %v1948
      %2005 = vmatprep.subr.bf16.mxu0 0
      %2006 = vmatpush1.bf16.msra.mxu0 %v1949
      %2007 = vmatprep.subr.bf16.mxu0 0
      %2008 = vmatpush1.bf16.msra.mxu0 %v1950
      %2009 = vmatprep.subr.bf16.mxu0 0
      %2010 = vmatpush1.bf16.msra.mxu0 %v1951
      %2011 = vmatprep.subr.bf16.mxu0 0
      %2012 = vmatpush1.bf16.msra.mxu0 %v1952
      %2013 = vmatprep.subr.bf16.mxu0 0
      %2014 = vmatpush1.bf16.msra.mxu0 %v1953
      %2015 = vmatprep.subr.bf16.mxu0 0
      %2016 = vmatpush1.bf16.msra.mxu0 %v1954
      %2017 = vmatprep.subr.bf16.mxu0 0
      %2018 = vmatpush1.bf16.msra.mxu0 %v1955
      %2019 = vmatprep.subr.bf16.mxu0 0
      %2020 = vmatpush1.bf16.msra.mxu0 %v1956
      %2021 = vmatprep.mubr.bf16.mxu0 %v1744
      %2022 = vmatmul.mubr.bf16.gmra.mrb[0].mxu0 %v1742
      %v2023 = vpop.f32.mrb[0].mxu0
      %v2024 = vadd.f32 0.0, %v2023
      %v2025 = vpop.f32.mrb[0].mxu0
      %v2026 = vpop.f32.mrb[0].mxu0
      %v2027 = vadd.f32 0.0, %v2026
      %v2028 = vpop.f32.mrb[0].mxu0
      %2029 = vmatprep.mubr.bf16.mxu0 %v1811
      %2030 = vmatmul.mubr.bf16.gmra.mrb[0].mxu0 %v1809
      %v2031 = vpop.f32.mrb[0].mxu0
      %v2032 = vadd.f32 0.0, %v2031
      %v2033 = vpop.f32.mrb[0].mxu0
      %v2034 = vpop.f32.mrb[0].mxu0
      %v2035 = vadd.f32 0.0, %v2034
      %v2036 = vpop.f32.mrb[0].mxu0
      %2037 = vmatprep.mubr.bf16.mxu0 %v1834
      %2038 = vmatmul.mubr.bf16.gmra.mrb[0].mxu0 %v1827
      %v2039 = vpop.f32.mrb[0].mxu0
      %v2040 = vadd.f32 0.0, %v2039
      %v2041 = vpop.f32.mrb[0].mxu0
      %v2042 = vpop.f32.mrb[0].mxu0
      %v2043 = vpop.f32.mrb[0].mxu0
      %2044 = vdwg.mxu0
      %2045 = vmatprep.subr.bf16.mxu0 0
      %2046 = vmatpush1.bf16.msra.mxu0 %v1957
      %2047 = vmatprep.subr.bf16.mxu0 0
      %2048 = vmatpush1.bf16.msra.mxu0 %v1958
      %2049 = vmatprep.subr.bf16.mxu0 0
      %2050 = vmatpush1.bf16.msra.mxu0 %v1959
      %2051 = vmatprep.subr.bf16.mxu0 0
      %2052 = vmatpush1.bf16.msra.mxu0 %v1960
      %2053 = vmatprep.subr.bf16.mxu0 0
      %2054 = vmatpush1.bf16.msra.mxu0 %v1961
      %2055 = vmatprep.subr.bf16.mxu0 0
      %2056 = vmatpush1.bf16.msra.mxu0 %v1962
      %2057 = vmatprep.subr.bf16.mxu0 0
      %2058 = vmatpush1.bf16.msra.mxu0 %v1963
      %2059 = vmatprep.subr.bf16.mxu0 0
      %2060 = vmatpush1.bf16.msra.mxu0 %v1964
      %2061 = vmatprep.subr.bf16.mxu0 0
      %2062 = vmatpush1.bf16.msra.mxu0 0
      %2063 = vmatprep.subr.bf16.mxu0 0
      %2064 = vmatpush1.bf16.msra.mxu0 0
      %2065 = vmatprep.subr.bf16.mxu0 0
      %2066 = vmatpush1.bf16.msra.mxu0 0
      %2067 = vmatprep.subr.bf16.mxu0 0
      %2068 = vmatpush1.bf16.msra.mxu0 0
      %2069 = vmatprep.subr.bf16.mxu0 0
      %2070 = vmatpush1.bf16.msra.mxu0 0
      %2071 = vmatprep.subr.bf16.mxu0 0
      %2072 = vmatpush1.bf16.msra.mxu0 0
      %2073 = vmatprep.subr.bf16.mxu0 0
      %2074 = vmatpush1.bf16.msra.mxu0 0
      %2075 = vmatprep.subr.bf16.mxu0 0
      %2076 = vmatpush1.bf16.msra.mxu0 0
      %2077 = vmatprep.mubr.bf16.mxu0 0
      %2078 = vmatmul.mubr.bf16.gmra.mrb[0].mxu0 %v1743
      %v2079 = vpop.f32.mrb[0].mxu0
      %v2080 = vadd.f32 %v2024, %v2079
      %v2081 = vpop.f32.mrb[0].mxu0
      %v2082 = vpop.f32.mrb[0].mxu0
      %v2083 = vadd.f32 %v2027, %v2082
      %v2084 = vpop.f32.mrb[0].mxu0
      %2085 = vmatprep.mubr.bf16.mxu0 0
      %2086 = vmatmul.mubr.bf16.gmra.mrb[0].mxu0 %v1810
      %v2087 = vpop.f32.mrb[0].mxu0
      %v2088 = vadd.f32 %v2032, %v2087
      %v2089 = vpop.f32.mrb[0].mxu0
      %v2090 = vpop.f32.mrb[0].mxu0
      %v2091 = vadd.f32 %v2035, %v2090
      %v2092 = vpop.f32.mrb[0].mxu0
      %2093 = vmatprep.mubr.bf16.mxu0 0
      %2094 = vmatmul.mubr.bf16.gmra.mrb[0].mxu0 %v1835
      %v2095 = vpop.f32.mrb[0].mxu0
      %v2096 = vadd.f32 %v2040, %v2095
      %v2097 = vpop.f32.mrb[0].mxu0
      %v2098 = vpop.f32.mrb[0].mxu0
      %v2099 = vpop.f32.mrb[0].mxu0
      %2100 = vdwg.mxu0
      %v2101 = vadd.f32 %v1321, %v2080
      %v2102 = vadd.f32 %v1322, %v2083
      %v2103 = vadd.f32 %v1323, %v2088
      %v2104 = vadd.f32 %v1324, %v2091
      %v2105 = vadd.f32 %v1325, %v2096
      %s2106 = scalar_lea.vmem [#allocation3], 8
      %v2107 = vld [vmem:[%s2106] sm:$0x7]
      %v2108 = vld [vmem:[%s2106 + $0x4] sm:$0x7]
      %v2109 = vld [vmem:[%s2106 + $0x8] sm:$0x7]
      %v2110 = vld [vmem:[%s2106 + $0xc] sm:$0x7]
      %v2111 = vld [vmem:[%s2106 + $0x10] sm:$0x7]
      %v2112 = vld [vmem:[%s2106 + $0x14] sm:$0x7]
      %v2113 = vld [vmem:[%s2106] sm:$0xf]
      %v2114 = vld [vmem:[%s2106 + $0x4] sm:$0xf]
      %v2115 = vld [vmem:[%s2106 + $0x8] sm:$0xf]
      %v2116 = vld [vmem:[%s2106 + $0xc] sm:$0xf]
      %v2117 = vld [vmem:[%s2106 + $0x10] sm:$0xf]
      %v2118 = vld [vmem:[%s2106 + $0x14] sm:$0xf]
      %v2119 = vld [vmem:[%s2106] sm:$0xe]
      %v2120 = vld [vmem:[%s2106 + $0x4] sm:$0xe]
      %v2121 = vld [vmem:[%s2106 + $0x8] sm:$0xe]
      %v2122 = vld [vmem:[%s2106 + $0xc] sm:$0xe]
      %v2123 = vld [vmem:[%s2106 + $0x10] sm:$0xe]
      %v2124 = vld [vmem:[%s2106 + $0x14] sm:$0xe]
      %v2131 = vunpack.c.l.b16 %v2113
      %v2132 = vunpack.c.l.b16 %v2114
      %v2133 = vunpack.c.l.b16 %v2115
      %v2134 = vunpack.c.l.b16 %v2116
      %v2135 = vunpack.c.l.b16 %v2117
      %v2136 = vunpack.c.l.b16 %v2118
      %v2137 = vpack.c.b16 %v2131, %v2131
      %v2138 = vpack.c.b16 %v2132, %v2132
      %v2139 = vpack.c.b16 %v2133, %v2133
      %v2140 = vpack.c.b16 %v2134, %v2134
      %v2141 = vpack.c.b16 %v2135, %v2135
      %v2142 = vpack.c.b16 %v2136, %v2136
      %v2144 = vshrl.u32 %v2137, 16
      %v2146 = vshll.u32 %v2137, 16
      %v2148 = vrot.slane %v2146, 1
      %v2149 = vor.u32 %v2144, %v2148
      %v2151 = vshrl.u32 %v2138, 16
      %v2153 = vshll.u32 %v2138, 16
      %v2155 = vrot.slane %v2153, 1
      %v2156 = vor.u32 %v2151, %v2155
      %v2158 = vshrl.u32 %v2139, 16
      %v2160 = vshll.u32 %v2139, 16
      %v2162 = vrot.slane %v2160, 1
      %v2163 = vor.u32 %v2158, %v2162
      %v2165 = vshrl.u32 %v2140, 16
      %v2167 = vshll.u32 %v2140, 16
      %v2169 = vrot.slane %v2167, 1
      %v2170 = vor.u32 %v2165, %v2169
      %v2172 = vshrl.u32 %v2141, 16
      %v2174 = vshll.u32 %v2141, 16
      %v2176 = vrot.slane %v2174, 1
      %v2177 = vor.u32 %v2172, %v2176
      %v2179 = vshrl.u32 %v2142, 16
      %v2181 = vshll.u32 %v2142, 16
      %v2183 = vrot.slane %v2181, 1
      %v2184 = vor.u32 %v2179, %v2183
      %v2191 = vunpack.c.l.b16 %v2119
      %v2192 = vunpack.c.l.b16 %v2120
      %v2193 = vunpack.c.l.b16 %v2121
      %v2194 = vunpack.c.l.b16 %v2122
      %v2195 = vunpack.c.l.b16 %v2123
      %v2196 = vunpack.c.l.b16 %v2124
      %v2197 = vpack.c.b16 %v2191, %v2191
      %v2198 = vpack.c.b16 %v2192, %v2192
      %v2199 = vpack.c.b16 %v2193, %v2193
      %v2200 = vpack.c.b16 %v2194, %v2194
      %v2201 = vpack.c.b16 %v2195, %v2195
      %v2202 = vpack.c.b16 %v2196, %v2196
      %v2203 = vrot.slane %v2197, 1
      %v2204 = vrot.slane %v2198, 1
      %v2205 = vrot.slane %v2199, 1
      %v2206 = vrot.slane %v2200, 1
      %v2207 = vrot.slane %v2201, 1
      %v2208 = vrot.slane %v2202, 1
      %s2209 = sadd.s32 %s648, 2
      %s2210 = smul.u32 %s2209, 48
      %s2211 = smul.addr %s2210, 4
      %s2212 = scalar_lea.vmem %s3, %s2211
      %v2213 = vld [vmem:[%s2212] sm:$0xf]
      %v2214 = vld [vmem:[%s2212 + $0x4] sm:$0xf]
      %v2215 = vld [vmem:[%s2212 + $0x8] sm:$0xf]
      %v2216 = vld [vmem:[%s2212 + $0xc] sm:$0xf]
      %v2217 = vld [vmem:[%s2212 + $0x10] sm:$0xf]
      %v2218 = vld [vmem:[%s2212 + $0x14] sm:$0xf]
      %v2219 = vld [vmem:[%s2212 + $0x18] sm:$0xf]
      %v2220 = vld [vmem:[%s2212 + $0x1c] sm:$0xf]
      %v2221 = vld [vmem:[%s2212 + $0x20] sm:$0xf]
      %v2222 = vld [vmem:[%s2212 + $0x24] sm:$0xf]
      %v2223 = vld [vmem:[%s2212 + $0x28] sm:$0xf]
      %v2224 = vld [vmem:[%s2212 + $0x2c] sm:$0xf]
      %v2225 = vld [vmem:[%s2212 + $0x30] sm:$0xf]
      %v2226 = vld [vmem:[%s2212 + $0x34] sm:$0xf]
      %v2227 = vld [vmem:[%s2212 + $0x38] sm:$0xf]
      %v2228 = vld [vmem:[%s2212 + $0x3c] sm:$0xf]
      %v2229 = vld [vmem:[%s2212 + $0x40] sm:$0xf]
      %v2230 = vld [vmem:[%s2212 + $0x44] sm:$0xf]
      %v2231 = vld [vmem:[%s2212 + $0x48] sm:$0xf]
      %v2232 = vld [vmem:[%s2212 + $0x4c] sm:$0xf]
      %v2233 = vld [vmem:[%s2212 + $0x50] sm:$0xf]
      %v2234 = vld [vmem:[%s2212 + $0x54] sm:$0xf]
      %v2235 = vld [vmem:[%s2212 + $0x58] sm:$0xf]
      %v2236 = vld [vmem:[%s2212 + $0x5c] sm:$0xf]
      %v2237 = vld [vmem:[%s2212 + $0x60] sm:$0xf]
      %v2238 = vld [vmem:[%s2212 + $0x64] sm:$0xf]
      %v2239 = vld [vmem:[%s2212 + $0x68] sm:$0xf]
      %v2240 = vld [vmem:[%s2212 + $0x6c] sm:$0xf]
      %v2241 = vld [vmem:[%s2212 + $0x70] sm:$0xf]
      %v2242 = vld [vmem:[%s2212 + $0x74] sm:$0xf]
      %v2243 = vld [vmem:[%s2212 + $0x78] sm:$0xf]
      %v2244 = vld [vmem:[%s2212 + $0x7c] sm:$0xf]
      %v2245 = vld [vmem:[%s2212 + $0x80] sm:$0xf]
      %v2246 = vld [vmem:[%s2212 + $0x84] sm:$0xf]
      %v2247 = vld [vmem:[%s2212 + $0x88] sm:$0xf]
      %v2248 = vld [vmem:[%s2212 + $0x8c] sm:$0xf]
      %v2249 = vld [vmem:[%s2212 + $0x90] sm:$0xf]
      %v2250 = vld [vmem:[%s2212 + $0x94] sm:$0xf]
      %v2251 = vld [vmem:[%s2212 + $0x98] sm:$0xf]
      %v2252 = vld [vmem:[%s2212 + $0x9c] sm:$0xf]
      %v2253 = vld [vmem:[%s2212 + $0xa0] sm:$0xf]
      %v2254 = vld [vmem:[%s2212 + $0xa4] sm:$0xf]
      %v2255 = vld [vmem:[%s2212 + $0xa8] sm:$0xf]
      %v2256 = vld [vmem:[%s2212 + $0xac] sm:$0xf]
      %v2257 = vld [vmem:[%s2212 + $0xb0] sm:$0xf]
      %v2258 = vld [vmem:[%s2212 + $0xb4] sm:$0xf]
      %v2259 = vld [vmem:[%s2212 + $0xb8] sm:$0xf]
      %v2260 = vld [vmem:[%s2212 + $0xbc] sm:$0xf]
      %v2267 = vcombine.low %v2107, %v2149
      %v2269 = vunpack.c.l.s4 1966171168
      %v2270 = vunpack.c.0.s8 %v2269
      %v2271 = vlaneseq
      %v2272 = vshrl.u32 %v2271, 7
      %v2273 = vsub.s32 %v2270, %v2272
      %v2274 = vrot.slane %v2267, %v2273
      %v2276 = vunpack.c.l.s4 1966171168
      %v2277 = vunpack.c.0.s8 %v2276
      %v2278 = vlaneseq
      %v2279 = vshrl.u32 %v2278, 7
      %v2280 = vsub.s32 %v2277, %v2279
      %v2281 = vrot.slane %v2203, %v2280
      %v2282 = vcombine.low %v2274, %v2281
      %v2283 = vcombine.high %v2274, %v2281
      %v2285 = vunpack.c.l.s4 1966171168
      %v2286 = vunpack.c.0.s8 %v2285
      %v2287 = vlaneseq
      %v2288 = vshrl.u32 %v2287, 7
      %v2289 = vsub.s32 %v2286, %v2288
      %v2290 = vrot.slane %v2282, %v2289
      %v2292 = vunpack.c.l.s4 1966171168
      %v2293 = vunpack.c.0.s8 %v2292
      %v2294 = vlaneseq
      %v2295 = vshrl.u32 %v2294, 7
      %v2296 = vsub.s32 %v2293, %v2295
      %v2297 = vrot.slane %v2283, %v2296
      %v2298 = vcombine.high %v2290, %v2290
      %v2299 = vcombine.low %v2108, %v2156
      %v2301 = vunpack.c.l.s4 1966171168
      %v2302 = vunpack.c.0.s8 %v2301
      %v2303 = vlaneseq
      %v2304 = vshrl.u32 %v2303, 7
      %v2305 = vsub.s32 %v2302, %v2304
      %v2306 = vrot.slane %v2299, %v2305
      %v2308 = vunpack.c.l.s4 1966171168
      %v2309 = vunpack.c.0.s8 %v2308
      %v2310 = vlaneseq
      %v2311 = vshrl.u32 %v2310, 7
      %v2312 = vsub.s32 %v2309, %v2311
      %v2313 = vrot.slane %v2204, %v2312
      %v2314 = vcombine.low %v2306, %v2313
      %v2315 = vcombine.high %v2306, %v2313
      %v2317 = vunpack.c.l.s4 1966171168
      %v2318 = vunpack.c.0.s8 %v2317
      %v2319 = vlaneseq
      %v2320 = vshrl.u32 %v2319, 7
      %v2321 = vsub.s32 %v2318, %v2320
      %v2322 = vrot.slane %v2314, %v2321
      %v2324 = vunpack.c.l.s4 1966171168
      %v2325 = vunpack.c.0.s8 %v2324
      %v2326 = vlaneseq
      %v2327 = vshrl.u32 %v2326, 7
      %v2328 = vsub.s32 %v2325, %v2327
      %v2329 = vrot.slane %v2315, %v2328
      %v2330 = vcombine.high %v2322, %v2322
      %v2331 = vcombine.low %v2109, %v2163
      %v2333 = vunpack.c.l.s4 1966171168
      %v2334 = vunpack.c.0.s8 %v2333
      %v2335 = vlaneseq
      %v2336 = vshrl.u32 %v2335, 7
      %v2337 = vsub.s32 %v2334, %v2336
      %v2338 = vrot.slane %v2331, %v2337
      %v2340 = vunpack.c.l.s4 1966171168
      %v2341 = vunpack.c.0.s8 %v2340
      %v2342 = vlaneseq
      %v2343 = vshrl.u32 %v2342, 7
      %v2344 = vsub.s32 %v2341, %v2343
      %v2345 = vrot.slane %v2205, %v2344
      %v2346 = vcombine.low %v2338, %v2345
      %v2347 = vcombine.high %v2338, %v2345
      %v2349 = vunpack.c.l.s4 1966171168
      %v2350 = vunpack.c.0.s8 %v2349
      %v2351 = vlaneseq
      %v2352 = vshrl.u32 %v2351, 7
      %v2353 = vsub.s32 %v2350, %v2352
      %v2354 = vrot.slane %v2346, %v2353
      %v2356 = vunpack.c.l.s4 1966171168
      %v2357 = vunpack.c.0.s8 %v2356
      %v2358 = vlaneseq
      %v2359 = vshrl.u32 %v2358, 7
      %v2360 = vsub.s32 %v2357, %v2359
      %v2361 = vrot.slane %v2347, %v2360
      %v2362 = vcombine.high %v2354, %v2354
      %v2363 = vcombine.low %v2110, %v2170
      %v2365 = vunpack.c.l.s4 1966171168
      %v2366 = vunpack.c.0.s8 %v2365
      %v2367 = vlaneseq
      %v2368 = vshrl.u32 %v2367, 7
      %v2369 = vsub.s32 %v2366, %v2368
      %v2370 = vrot.slane %v2363, %v2369
      %v2372 = vunpack.c.l.s4 1966171168
      %v2373 = vunpack.c.0.s8 %v2372
      %v2374 = vlaneseq
      %v2375 = vshrl.u32 %v2374, 7
      %v2376 = vsub.s32 %v2373, %v2375
      %v2377 = vrot.slane %v2206, %v2376
      %v2378 = vcombine.low %v2370, %v2377
      %v2379 = vcombine.high %v2370, %v2377
      %v2381 = vunpack.c.l.s4 1966171168
      %v2382 = vunpack.c.0.s8 %v2381
      %v2383 = vlaneseq
      %v2384 = vshrl.u32 %v2383, 7
      %v2385 = vsub.s32 %v2382, %v2384
      %v2386 = vrot.slane %v2378, %v2385
      %v2388 = vunpack.c.l.s4 1966171168
      %v2389 = vunpack.c.0.s8 %v2388
      %v2390 = vlaneseq
      %v2391 = vshrl.u32 %v2390, 7
      %v2392 = vsub.s32 %v2389, %v2391
      %v2393 = vrot.slane %v2379, %v2392
      %v2394 = vcombine.high %v2386, %v2386
      %v2395 = vcombine.low %v2111, %v2177
      %v2397 = vunpack.c.l.s4 1966171168
      %v2398 = vunpack.c.0.s8 %v2397
      %v2399 = vlaneseq
      %v2400 = vshrl.u32 %v2399, 7
      %v2401 = vsub.s32 %v2398, %v2400
      %v2402 = vrot.slane %v2395, %v2401
      %v2404 = vunpack.c.l.s4 1966171168
      %v2405 = vunpack.c.0.s8 %v2404
      %v2406 = vlaneseq
      %v2407 = vshrl.u32 %v2406, 7
      %v2408 = vsub.s32 %v2405, %v2407
      %v2409 = vrot.slane %v2207, %v2408
      %v2410 = vcombine.low %v2402, %v2409
      %v2411 = vcombine.high %v2402, %v2409
      %v2413 = vunpack.c.l.s4 1966171168
      %v2414 = vunpack.c.0.s8 %v2413
      %v2415 = vlaneseq
      %v2416 = vshrl.u32 %v2415, 7
      %v2417 = vsub.s32 %v2414, %v2416
      %v2418 = vrot.slane %v2410, %v2417
      %v2420 = vunpack.c.l.s4 1966171168
      %v2421 = vunpack.c.0.s8 %v2420
      %v2422 = vlaneseq
      %v2423 = vshrl.u32 %v2422, 7
      %v2424 = vsub.s32 %v2421, %v2423
      %v2425 = vrot.slane %v2411, %v2424
      %v2426 = vcombine.high %v2418, %v2418
      %v2427 = vcombine.low %v2112, %v2184
      %v2429 = vunpack.c.l.s4 1966171168
      %v2430 = vunpack.c.0.s8 %v2429
      %v2431 = vlaneseq
      %v2432 = vshrl.u32 %v2431, 7
      %v2433 = vsub.s32 %v2430, %v2432
      %v2434 = vrot.slane %v2427, %v2433
      %v2436 = vunpack.c.l.s4 1966171168
      %v2437 = vunpack.c.0.s8 %v2436
      %v2438 = vlaneseq
      %v2439 = vshrl.u32 %v2438, 7
      %v2440 = vsub.s32 %v2437, %v2439
      %v2441 = vrot.slane %v2208, %v2440
      %v2442 = vcombine.low %v2434, %v2441
      %v2443 = vcombine.high %v2434, %v2441
      %v2445 = vunpack.c.l.s4 1966171168
      %v2446 = vunpack.c.0.s8 %v2445
      %v2447 = vlaneseq
      %v2448 = vshrl.u32 %v2447, 7
      %v2449 = vsub.s32 %v2446, %v2448
      %v2450 = vrot.slane %v2442, %v2449
      %v2452 = vunpack.c.l.s4 1966171168
      %v2453 = vunpack.c.0.s8 %v2452
      %v2454 = vlaneseq
      %v2455 = vshrl.u32 %v2454, 7
      %v2456 = vsub.s32 %v2453, %v2455
      %v2457 = vrot.slane %v2443, %v2456
      %v2458 = vcombine.high %v2450, %v2450
      %v2459 = vcombine.low %v2290, %v2297
      %v2460 = vcombine.low %v2298, %v2322
      %v2461 = vcombine.low %v2329, %v2330
      %v2462 = vcombine.low %v2354, %v2361
      %v2464 = vunpack.c.l.s4 1966171168
      %v2465 = vunpack.c.0.s8 %v2464
      %v2466 = vlaneseq
      %v2467 = vshrl.u32 %v2466, 7
      %v2468 = vsub.s32 %v2465, %v2467
      %v2469 = vrot.slane %v2459, %v2468
      %v2471 = vunpack.c.l.s4 1966171168
      %v2472 = vunpack.c.0.s8 %v2471
      %v2473 = vlaneseq
      %v2474 = vshrl.u32 %v2473, 7
      %v2475 = vsub.s32 %v2472, %v2474
      %v2476 = vrot.slane %v2460, %v2475
      %v2478 = vunpack.c.l.s4 1966171168
      %v2479 = vunpack.c.0.s8 %v2478
      %v2480 = vlaneseq
      %v2481 = vshrl.u32 %v2480, 7
      %v2482 = vsub.s32 %v2479, %v2481
      %v2483 = vrot.slane %v2461, %v2482
      %v2485 = vunpack.c.l.s4 1966171168
      %v2486 = vunpack.c.0.s8 %v2485
      %v2487 = vlaneseq
      %v2488 = vshrl.u32 %v2487, 7
      %v2489 = vsub.s32 %v2486, %v2488
      %v2490 = vrot.slane %v2462, %v2489
      %v2491 = vcombine.low %v2469, %v2476
      %v2492 = vcombine.high %v2469, %v2476
      %v2493 = vcombine.low %v2483, %v2490
      %v2494 = vcombine.high %v2483, %v2490
      %v2496 = vunpack.c.l.s4 1966171168
      %v2497 = vunpack.c.0.s8 %v2496
      %v2498 = vlaneseq
      %v2499 = vshrl.u32 %v2498, 7
      %v2500 = vsub.s32 %v2497, %v2499
      %v2501 = vrot.slane %v2491, %v2500
      %v2503 = vunpack.c.l.s4 1966171168
      %v2504 = vunpack.c.0.s8 %v2503
      %v2505 = vlaneseq
      %v2506 = vshrl.u32 %v2505, 7
      %v2507 = vsub.s32 %v2504, %v2506
      %v2508 = vrot.slane %v2492, %v2507
      %v2510 = vunpack.c.l.s4 1966171168
      %v2511 = vunpack.c.0.s8 %v2510
      %v2512 = vlaneseq
      %v2513 = vshrl.u32 %v2512, 7
      %v2514 = vsub.s32 %v2511, %v2513
      %v2515 = vrot.slane %v2493, %v2514
      %v2517 = vunpack.c.l.s4 1966171168
      %v2518 = vunpack.c.0.s8 %v2517
      %v2519 = vlaneseq
      %v2520 = vshrl.u32 %v2519, 7
      %v2521 = vsub.s32 %v2518, %v2520
      %v2522 = vrot.slane %v2494, %v2521
      %v2523 = vcombine.low %v2501, %v2515
      %v2524 = vcombine.high %v2501, %v2515
      %v2525 = vcombine.low %v2508, %v2522
      %v2526 = vcombine.low %v2362, %v2386
      %v2527 = vcombine.low %v2393, %v2394
      %v2528 = vcombine.low %v2418, %v2425
      %v2529 = vcombine.low %v2426, %v2450
      %v2531 = vunpack.c.l.s4 1966171168
      %v2532 = vunpack.c.0.s8 %v2531
      %v2533 = vlaneseq
      %v2534 = vshrl.u32 %v2533, 7
      %v2535 = vsub.s32 %v2532, %v2534
      %v2536 = vrot.slane %v2526, %v2535
      %v2538 = vunpack.c.l.s4 1966171168
      %v2539 = vunpack.c.0.s8 %v2538
      %v2540 = vlaneseq
      %v2541 = vshrl.u32 %v2540, 7
      %v2542 = vsub.s32 %v2539, %v2541
      %v2543 = vrot.slane %v2527, %v2542
      %v2545 = vunpack.c.l.s4 1966171168
      %v2546 = vunpack.c.0.s8 %v2545
      %v2547 = vlaneseq
      %v2548 = vshrl.u32 %v2547, 7
      %v2549 = vsub.s32 %v2546, %v2548
      %v2550 = vrot.slane %v2528, %v2549
      %v2552 = vunpack.c.l.s4 1966171168
      %v2553 = vunpack.c.0.s8 %v2552
      %v2554 = vlaneseq
      %v2555 = vshrl.u32 %v2554, 7
      %v2556 = vsub.s32 %v2553, %v2555
      %v2557 = vrot.slane %v2529, %v2556
      %v2558 = vcombine.low %v2536, %v2543
      %v2559 = vcombine.high %v2536, %v2543
      %v2560 = vcombine.low %v2550, %v2557
      %v2561 = vcombine.high %v2550, %v2557
      %v2563 = vunpack.c.l.s4 1966171168
      %v2564 = vunpack.c.0.s8 %v2563
      %v2565 = vlaneseq
      %v2566 = vshrl.u32 %v2565, 7
      %v2567 = vsub.s32 %v2564, %v2566
      %v2568 = vrot.slane %v2558, %v2567
      %v2570 = vunpack.c.l.s4 1966171168
      %v2571 = vunpack.c.0.s8 %v2570
      %v2572 = vlaneseq
      %v2573 = vshrl.u32 %v2572, 7
      %v2574 = vsub.s32 %v2571, %v2573
      %v2575 = vrot.slane %v2559, %v2574
      %v2577 = vunpack.c.l.s4 1966171168
      %v2578 = vunpack.c.0.s8 %v2577
      %v2579 = vlaneseq
      %v2580 = vshrl.u32 %v2579, 7
      %v2581 = vsub.s32 %v2578, %v2580
      %v2582 = vrot.slane %v2560, %v2581
      %v2584 = vunpack.c.l.s4 1966171168
      %v2585 = vunpack.c.0.s8 %v2584
      %v2586 = vlaneseq
      %v2587 = vshrl.u32 %v2586, 7
      %v2588 = vsub.s32 %v2585, %v2587
      %v2589 = vrot.slane %v2561, %v2588
      %v2590 = vcombine.low %v2568, %v2582
      %v2591 = vcombine.high %v2568, %v2582
      %v2592 = vcombine.low %v2575, %v2589
      %v2593 = vcombine.low %v2457, %v2458
      %v2595 = vunpack.c.l.s4 1966171168
      %v2596 = vunpack.c.0.s8 %v2595
      %v2597 = vlaneseq
      %v2598 = vshrl.u32 %v2597, 7
      %v2599 = vsub.s32 %v2596, %v2598
      %v2600 = vrot.slane %v2593, %v2599
      %v2601 = vcombine.high %v2600, %v2600
      %v2603 = vunpack.c.l.s4 1966171168
      %v2604 = vunpack.c.0.s8 %v2603
      %v2605 = vlaneseq
      %v2606 = vshrl.u32 %v2605, 7
      %v2607 = vsub.s32 %v2604, %v2606
      %v2608 = vrot.slane %v2600, %v2607
      %v2610 = vunpack.c.l.s4 1966171168
      %v2611 = vunpack.c.0.s8 %v2610
      %v2612 = vlaneseq
      %v2613 = vshrl.u32 %v2612, 7
      %v2614 = vsub.s32 %v2611, %v2613
      %v2615 = vrot.slane %v2601, %v2614
      %v2616 = vcombine.high %v2608, %v2608
      %v2674 = vunpack.c.l.b16 %v2213
      %v2675 = vunpack.c.l.b16 %v2214
      %v2676 = vunpack.c.l.b16 %v2215
      %v2677 = vunpack.c.l.b16 %v2216
      %v2678 = vunpack.c.l.b16 %v2217
      %v2679 = vunpack.c.l.b16 %v2218
      %v2680 = vunpack.c.l.b16 %v2219
      %v2681 = vunpack.c.l.b16 %v2220
      %v2682 = vunpack.c.l.b16 %v2221
      %v2683 = vunpack.c.l.b16 %v2222
      %v2684 = vunpack.c.l.b16 %v2223
      %v2685 = vunpack.c.l.b16 %v2224
      %v2686 = vunpack.c.l.b16 %v2225
      %v2687 = vunpack.c.l.b16 %v2226
      %v2688 = vunpack.c.l.b16 %v2227
      %v2689 = vunpack.c.l.b16 %v2228
      %v2690 = vunpack.c.l.b16 %v2229
      %v2691 = vunpack.c.l.b16 %v2230
      %v2692 = vunpack.c.l.b16 %v2231
      %v2693 = vunpack.c.l.b16 %v2232
      %v2694 = vunpack.c.l.b16 %v2233
      %v2695 = vunpack.c.l.b16 %v2234
      %v2696 = vunpack.c.l.b16 %v2235
      %v2697 = vunpack.c.l.b16 %v2236
      %v2698 = vunpack.c.l.b16 %v2237
      %v2699 = vunpack.c.l.b16 %v2238
      %v2700 = vunpack.c.l.b16 %v2239
      %v2701 = vunpack.c.l.b16 %v2240
      %v2702 = vunpack.c.l.b16 %v2241
      %v2703 = vunpack.c.l.b16 %v2242
      %v2704 = vunpack.c.l.b16 %v2243
      %v2705 = vunpack.c.l.b16 %v2244
      %v2706 = vunpack.c.l.b16 %v2245
      %v2707 = vunpack.c.l.b16 %v2246
      %v2708 = vunpack.c.l.b16 %v2247
      %v2709 = vunpack.c.l.b16 %v2248
      %v2710 = vunpack.c.l.b16 %v2249
      %v2711 = vunpack.c.l.b16 %v2250
      %v2712 = vunpack.c.l.b16 %v2251
      %v2713 = vunpack.c.l.b16 %v2252
      %v2714 = vunpack.c.l.b16 %v2253
      %v2715 = vunpack.c.l.b16 %v2254
      %v2716 = vunpack.c.l.b16 %v2255
      %v2717 = vunpack.c.l.b16 %v2256
      %v2718 = vunpack.c.l.b16 %v2257
      %v2719 = vunpack.c.l.b16 %v2258
      %v2720 = vunpack.c.l.b16 %v2259
      %v2721 = vunpack.c.l.b16 %v2260
      %v2722 = vpack.c.b16 %v2675, %v2674
      %v2723 = vpack.c.b16 %v2677, %v2676
      %v2724 = vpack.c.b16 %v2679, %v2678
      %v2725 = vpack.c.b16 %v2681, %v2680
      %v2726 = vpack.c.b16 %v2683, %v2682
      %v2727 = vpack.c.b16 %v2685, %v2684
      %v2728 = vpack.c.b16 %v2687, %v2686
      %v2729 = vpack.c.b16 %v2689, %v2688
      %v2730 = vpack.c.b16 %v2691, %v2690
      %v2731 = vpack.c.b16 %v2693, %v2692
      %v2732 = vpack.c.b16 %v2695, %v2694
      %v2733 = vpack.c.b16 %v2697, %v2696
      %v2734 = vpack.c.b16 %v2699, %v2698
      %v2735 = vpack.c.b16 %v2701, %v2700
      %v2736 = vpack.c.b16 %v2703, %v2702
      %v2737 = vpack.c.b16 %v2705, %v2704
      %v2738 = vpack.c.b16 %v2707, %v2706
      %v2739 = vpack.c.b16 %v2709, %v2708
      %v2740 = vpack.c.b16 %v2711, %v2710
      %v2741 = vpack.c.b16 %v2713, %v2712
      %v2742 = vpack.c.b16 %v2715, %v2714
      %v2743 = vpack.c.b16 %v2717, %v2716
      %v2744 = vpack.c.b16 %v2719, %v2718
      %v2745 = vpack.c.b16 %v2721, %v2720
      %2770 = vmatprep.subr.bf16.mxu0 0
      %2771 = vmatpush1.bf16.msra.mxu0 %v2722
      %2772 = vmatprep.subr.bf16.mxu0 0
      %2773 = vmatpush1.bf16.msra.mxu0 %v2723
      %2774 = vmatprep.subr.bf16.mxu0 0
      %2775 = vmatpush1.bf16.msra.mxu0 %v2724
      %2776 = vmatprep.subr.bf16.mxu0 0
      %2777 = vmatpush1.bf16.msra.mxu0 %v2725
      %2778 = vmatprep.subr.bf16.mxu0 0
      %2779 = vmatpush1.bf16.msra.mxu0 %v2726
      %2780 = vmatprep.subr.bf16.mxu0 0
      %2781 = vmatpush1.bf16.msra.mxu0 %v2727
      %2782 = vmatprep.subr.bf16.mxu0 0
      %2783 = vmatpush1.bf16.msra.mxu0 %v2728
      %2784 = vmatprep.subr.bf16.mxu0 0
      %2785 = vmatpush1.bf16.msra.mxu0 %v2729
      %2786 = vmatprep.subr.bf16.mxu0 0
      %2787 = vmatpush1.bf16.msra.mxu0 %v2730
      %2788 = vmatprep.subr.bf16.mxu0 0
      %2789 = vmatpush1.bf16.msra.mxu0 %v2731
      %2790 = vmatprep.subr.bf16.mxu0 0
      %2791 = vmatpush1.bf16.msra.mxu0 %v2732
      %2792 = vmatprep.subr.bf16.mxu0 0
      %2793 = vmatpush1.bf16.msra.mxu0 %v2733
      %2794 = vmatprep.subr.bf16.mxu0 0
      %2795 = vmatpush1.bf16.msra.mxu0 %v2734
      %2796 = vmatprep.subr.bf16.mxu0 0
      %2797 = vmatpush1.bf16.msra.mxu0 %v2735
      %2798 = vmatprep.subr.bf16.mxu0 0
      %2799 = vmatpush1.bf16.msra.mxu0 %v2736
      %2800 = vmatprep.subr.bf16.mxu0 0
      %2801 = vmatpush1.bf16.msra.mxu0 %v2737
      %2802 = vmatprep.mubr.bf16.mxu0 %v2525
      %2803 = vmatmul.mubr.bf16.gmra.mrb[0].mxu0 %v2523
      %v2804 = vpop.f32.mrb[0].mxu0
      %v2805 = vadd.f32 0.0, %v2804
      %v2806 = vpop.f32.mrb[0].mxu0
      %v2807 = vpop.f32.mrb[0].mxu0
      %v2808 = vadd.f32 0.0, %v2807
      %v2809 = vpop.f32.mrb[0].mxu0
      %2810 = vmatprep.mubr.bf16.mxu0 %v2592
      %2811 = vmatmul.mubr.bf16.gmra.mrb[0].mxu0 %v2590
      %v2812 = vpop.f32.mrb[0].mxu0
      %v2813 = vadd.f32 0.0, %v2812
      %v2814 = vpop.f32.mrb[0].mxu0
      %v2815 = vpop.f32.mrb[0].mxu0
      %v2816 = vadd.f32 0.0, %v2815
      %v2817 = vpop.f32.mrb[0].mxu0
      %2818 = vmatprep.mubr.bf16.mxu0 %v2615
      %2819 = vmatmul.mubr.bf16.gmra.mrb[0].mxu0 %v2608
      %v2820 = vpop.f32.mrb[0].mxu0
      %v2821 = vadd.f32 0.0, %v2820
      %v2822 = vpop.f32.mrb[0].mxu0
      %v2823 = vpop.f32.mrb[0].mxu0
      %v2824 = vpop.f32.mrb[0].mxu0
      %2825 = vdwg.mxu0
      %2826 = vmatprep.subr.bf16.mxu0 0
      %2827 = vmatpush1.bf16.msra.mxu0 %v2738
      %2828 = vmatprep.subr.bf16.mxu0 0
      %2829 = vmatpush1.bf16.msra.mxu0 %v2739
      %2830 = vmatprep.subr.bf16.mxu0 0
      %2831 = vmatpush1.bf16.msra.mxu0 %v2740
      %2832 = vmatprep.subr.bf16.mxu0 0
      %2833 = vmatpush1.bf16.msra.mxu0 %v2741
      %2834 = vmatprep.subr.bf16.mxu0 0
      %2835 = vmatpush1.bf16.msra.mxu0 %v2742
      %2836 = vmatprep.subr.bf16.mxu0 0
      %2837 = vmatpush1.bf16.msra.mxu0 %v2743
      %2838 = vmatprep.subr.bf16.mxu0 0
      %2839 = vmatpush1.bf16.msra.mxu0 %v2744
      %2840 = vmatprep.subr.bf16.mxu0 0
      %2841 = vmatpush1.bf16.msra.mxu0 %v2745
      %2842 = vmatprep.subr.bf16.mxu0 0
      %2843 = vmatpush1.bf16.msra.mxu0 0
      %2844 = vmatprep.subr.bf16.mxu0 0
      %2845 = vmatpush1.bf16.msra.mxu0 0
      %2846 = vmatprep.subr.bf16.mxu0 0
      %2847 = vmatpush1.bf16.msra.mxu0 0
      %2848 = vmatprep.subr.bf16.mxu0 0
      %2849 = vmatpush1.bf16.msra.mxu0 0
      %2850 = vmatprep.subr.bf16.mxu0 0
      %2851 = vmatpush1.bf16.msra.mxu0 0
      %2852 = vmatprep.subr.bf16.mxu0 0
      %2853 = vmatpush1.bf16.msra.mxu0 0
      %2854 = vmatprep.subr.bf16.mxu0 0
      %2855 = vmatpush1.bf16.msra.mxu0 0
      %2856 = vmatprep.subr.bf16.mxu0 0
      %2857 = vmatpush1.bf16.msra.mxu0 0
      %2858 = vmatprep.mubr.bf16.mxu0 0
      %2859 = vmatmul.mubr.bf16.gmra.mrb[0].mxu0 %v2524
      %v2860 = vpop.f32.mrb[0].mxu0
      %v2861 = vadd.f32 %v2805, %v2860
      %v2862 = vpop.f32.mrb[0].mxu0
      %v2863 = vpop.f32.mrb[0].mxu0
      %v2864 = vadd.f32 %v2808, %v2863
      %v2865 = vpop.f32.mrb[0].mxu0
      %2866 = vmatprep.mubr.bf16.mxu0 0
      %2867 = vmatmul.mubr.bf16.gmra.mrb[0].mxu0 %v2591
      %v2868 = vpop.f32.mrb[0].mxu0
      %v2869 = vadd.f32 %v2813, %v2868
      %v2870 = vpop.f32.mrb[0].mxu0
      %v2871 = vpop.f32.mrb[0].mxu0
      %v2872 = vadd.f32 %v2816, %v2871
      %v2873 = vpop.f32.mrb[0].mxu0
      %2874 = vmatprep.mubr.bf16.mxu0 0
      %2875 = vmatmul.mubr.bf16.gmra.mrb[0].mxu0 %v2616
      %v2876 = vpop.f32.mrb[0].mxu0
      %v2877 = vadd.f32 %v2821, %v2876
      %v2878 = vpop.f32.mrb[0].mxu0
      %v2879 = vpop.f32.mrb[0].mxu0
      %v2880 = vpop.f32.mrb[0].mxu0
      %2881 = vdwg.mxu0
      %v2882 = vadd.f32 %v2101, %v2861
      %v2883 = vadd.f32 %v2102, %v2864
      %v2884 = vadd.f32 %v2103, %v2869
      %v2885 = vadd.f32 %v2104, %v2872
      %v2886 = vadd.f32 %v2105, %v2877
      %p2887 = scmp.lt.s32.totalorder %s25, 2
      // Predicated region
      $region41: #{downscale_forward.2} parent=35 // pred_check
        %p2888 = pneg %p2887
      $region42: #{downscale_forward.2} parent=35 // pred_check_branch
        %2890 = sbr.rel (%p2888) target = $region44
      $region43: #{downscale_forward.2} parent=35 // pred_region
        %2891 = vst [vmem:[#allocation2] sm:$0xff] %v2882
        %2892 = vst [vmem:[#allocation2 + $0x8] sm:$0xff] %v2883
        %2893 = vst [vmem:[#allocation2 + $0x10] sm:$0xff] %v2884
        %2894 = vst [vmem:[#allocation2 + $0x18] sm:$0xff] %v2885
        %2895 = vst [vmem:[#allocation2 + $0x20] sm:$0xf] %v2886
      $region44: #{downscale_forward.2} parent=35 // pred_fallthru
        _
      %p2896 = scmp.eq.s32.totalorder %s25, 2
      // Predicated region
      $region45: #{downscale_forward.2} parent=35 // pred_check
        %p2897 = pneg %p2896
      $region46: #{downscale_forward.2} parent=35 // pred_check_branch
        %2899 = sbr.rel (%p2897) target = $region48
      $region47: #{downscale_forward.2} parent=35 // pred_region
        %v2905 = vcombine.high %v2882, %v2882
        %v2907 = vunpack.c.l.s4 1983009808
        %v2908 = vunpack.c.0.s8 %v2907
        %v2909 = vlaneseq
        %v2910 = vshrl.u32 %v2909, 7
        %v2911 = vsub.s32 %v2908, %v2910
        %v2912 = vrot.slane %v2882, %v2911
        %v2914 = vunpack.c.l.s4 1983009808
        %v2915 = vunpack.c.0.s8 %v2914
        %v2916 = vlaneseq
        %v2917 = vshrl.u32 %v2916, 7
        %v2918 = vsub.s32 %v2915, %v2917
        %v2919 = vrot.slane %v2905, %v2918
        %v2920 = vcombine.high %v2912, %v2912
        %v2921 = vcombine.high %v2919, %v2919
        %v2922 = vcombine.high %v2883, %v2883
        %v2924 = vunpack.c.l.s4 1983009808
        %v2925 = vunpack.c.0.s8 %v2924
        %v2926 = vlaneseq
        %v2927 = vshrl.u32 %v2926, 7
        %v2928 = vsub.s32 %v2925, %v2927
        %v2929 = vrot.slane %v2883, %v2928
        %v2931 = vunpack.c.l.s4 1983009808
        %v2932 = vunpack.c.0.s8 %v2931
        %v2933 = vlaneseq
        %v2934 = vshrl.u32 %v2933, 7
        %v2935 = vsub.s32 %v2932, %v2934
        %v2936 = vrot.slane %v2922, %v2935
        %v2937 = vcombine.high %v2929, %v2929
        %v2938 = vcombine.high %v2936, %v2936
        %v2939 = vcombine.high %v2884, %v2884
        %v2941 = vunpack.c.l.s4 1983009808
        %v2942 = vunpack.c.0.s8 %v2941
        %v2943 = vlaneseq
        %v2944 = vshrl.u32 %v2943, 7
        %v2945 = vsub.s32 %v2942, %v2944
        %v2946 = vrot.slane %v2884, %v2945
        %v2948 = vunpack.c.l.s4 1983009808
        %v2949 = vunpack.c.0.s8 %v2948
        %v2950 = vlaneseq
        %v2951 = vshrl.u32 %v2950, 7
        %v2952 = vsub.s32 %v2949, %v2951
        %v2953 = vrot.slane %v2939, %v2952
        %v2954 = vcombine.high %v2946, %v2946
        %v2955 = vcombine.high %v2953, %v2953
        %v2956 = vcombine.high %v2885, %v2885
        %v2958 = vunpack.c.l.s4 1983009808
        %v2959 = vunpack.c.0.s8 %v2958
        %v2960 = vlaneseq
        %v2961 = vshrl.u32 %v2960, 7
        %v2962 = vsub.s32 %v2959, %v2961
        %v2963 = vrot.slane %v2885, %v2962
        %v2965 = vunpack.c.l.s4 1983009808
        %v2966 = vunpack.c.0.s8 %v2965
        %v2967 = vlaneseq
        %v2968 = vshrl.u32 %v2967, 7
        %v2969 = vsub.s32 %v2966, %v2968
        %v2970 = vrot.slane %v2956, %v2969
        %v2971 = vcombine.high %v2963, %v2963
        %v2972 = vcombine.high %v2970, %v2970
        %v2974 = vunpack.c.l.s4 1983009808
        %v2975 = vunpack.c.0.s8 %v2974
        %v2976 = vlaneseq
        %v2977 = vshrl.u32 %v2976, 7
        %v2978 = vsub.s32 %v2975, %v2977
        %v2979 = vrot.slane %v2886, %v2978
        %v2980 = vcombine.high %v2979, %v2979
        %v2981 = vcombine.low %v2912, %v2920
        %v2983 = vunpack.c.l.s4 1983009808
        %v2984 = vunpack.c.0.s8 %v2983
        %v2985 = vlaneseq
        %v2986 = vshrl.u32 %v2985, 7
        %v2987 = vsub.s32 %v2984, %v2986
        %v2988 = vrot.slane %v2981, %v2987
        %v2990 = vunpack.c.l.s4 1983009808
        %v2991 = vunpack.c.0.s8 %v2990
        %v2992 = vlaneseq
        %v2993 = vshrl.u32 %v2992, 7
        %v2994 = vsub.s32 %v2991, %v2993
        %v2995 = vrot.slane %v2919, %v2994
        %v2996 = vcombine.low %v2988, %v2995
        %v2997 = vcombine.low %v2921, %v2929
        %v2999 = vunpack.c.l.s4 1983009808
        %v3000 = vunpack.c.0.s8 %v2999
        %v3001 = vlaneseq
        %v3002 = vshrl.u32 %v3001, 7
        %v3003 = vsub.s32 %v3000, %v3002
        %v3004 = vrot.slane %v2997, %v3003
        %v3006 = vunpack.c.l.s4 1983009808
        %v3007 = vunpack.c.0.s8 %v3006
        %v3008 = vlaneseq
        %v3009 = vshrl.u32 %v3008, 7
        %v3010 = vsub.s32 %v3007, %v3009
        %v3011 = vrot.slane %v2937, %v3010
        %v3012 = vcombine.low %v3004, %v3011
        %v3013 = vcombine.low %v2936, %v2938
        %v3015 = vunpack.c.l.s4 1983009808
        %v3016 = vunpack.c.0.s8 %v3015
        %v3017 = vlaneseq
        %v3018 = vshrl.u32 %v3017, 7
        %v3019 = vsub.s32 %v3016, %v3018
        %v3020 = vrot.slane %v3013, %v3019
        %v3022 = vunpack.c.l.s4 1983009808
        %v3023 = vunpack.c.0.s8 %v3022
        %v3024 = vlaneseq
        %v3025 = vshrl.u32 %v3024, 7
        %v3026 = vsub.s32 %v3023, %v3025
        %v3027 = vrot.slane %v2946, %v3026
        %v3028 = vcombine.low %v3020, %v3027
        %v3029 = vcombine.low %v2954, %v2953
        %v3031 = vunpack.c.l.s4 1983009808
        %v3032 = vunpack.c.0.s8 %v3031
        %v3033 = vlaneseq
        %v3034 = vshrl.u32 %v3033, 7
        %v3035 = vsub.s32 %v3032, %v3034
        %v3036 = vrot.slane %v3029, %v3035
        %v3038 = vunpack.c.l.s4 1983009808
        %v3039 = vunpack.c.0.s8 %v3038
        %v3040 = vlaneseq
        %v3041 = vshrl.u32 %v3040, 7
        %v3042 = vsub.s32 %v3039, %v3041
        %v3043 = vrot.slane %v2955, %v3042
        %v3044 = vcombine.low %v3036, %v3043
        %v3045 = vcombine.low %v2963, %v2971
        %v3047 = vunpack.c.l.s4 1983009808
        %v3048 = vunpack.c.0.s8 %v3047
        %v3049 = vlaneseq
        %v3050 = vshrl.u32 %v3049, 7
        %v3051 = vsub.s32 %v3048, %v3050
        %v3052 = vrot.slane %v3045, %v3051
        %v3054 = vunpack.c.l.s4 1983009808
        %v3055 = vunpack.c.0.s8 %v3054
        %v3056 = vlaneseq
        %v3057 = vshrl.u32 %v3056, 7
        %v3058 = vsub.s32 %v3055, %v3057
        %v3059 = vrot.slane %v2970, %v3058
        %v3060 = vcombine.low %v3052, %v3059
        %v3061 = vcombine.low %v2972, %v2979
        %v3063 = vunpack.c.l.s4 1983009808
        %v3064 = vunpack.c.0.s8 %v3063
        %v3065 = vlaneseq
        %v3066 = vshrl.u32 %v3065, 7
        %v3067 = vsub.s32 %v3064, %v3066
        %v3068 = vrot.slane %v3061, %v3067
        %v3070 = vunpack.c.l.s4 1983009808
        %v3071 = vunpack.c.0.s8 %v3070
        %v3072 = vlaneseq
        %v3073 = vshrl.u32 %v3072, 7
        %v3074 = vsub.s32 %v3071, %v3073
        %v3075 = vrot.slane %v2980, %v3074
        %v3076 = vcombine.low %v3068, %v3075
        %v3083 = vpack.c.bf16 %v2996, %v2996
        %v3084 = vpack.c.bf16 %v3012, %v3012
        %v3085 = vpack.c.bf16 %v3028, %v3028
        %v3086 = vpack.c.bf16 %v3044, %v3044
        %v3087 = vpack.c.bf16 %v3060, %v3060
        %v3088 = vpack.c.bf16 %v3076, %v3076
        %3089 = vst [vmem:[%s359] sm:$0x7] %v3083
        %3090 = vst [vmem:[%s359 + $0x4] sm:$0x7] %v3084
        %3091 = vst [vmem:[%s359 + $0x8] sm:$0x7] %v3085
        %3092 = vst [vmem:[%s359 + $0xc] sm:$0x7] %v3086
        %3093 = vst [vmem:[%s359 + $0x10] sm:$0x7] %v3087
        %3094 = vst [vmem:[%s359 + $0x14] sm:$0x7] %v3088
        %v3095 = vadd.f32 %v2882, %v2883
        %v3096 = vadd.f32 %v3095, %v2884
        %v3097 = vadd.f32 %v3096, %v2885
        %vm3098 = vcmask 1043456
        %v3099 = vsel %vm3098, %v2886, 0.0
        %v3100 = vadd.f32 %v3097, %v3099
        %v3101 = vrot.slane %v3100, 4
        %v3102 = vadd.f32 %v3100, %v3101
        %v3103 = vrot.slane %v3102, 2
        %v3104 = vadd.f32 %v3102, %v3103
        %v3105 = vrot.slane %v3104, 1
        %v3106 = vadd.f32 %v3104, %v3105
        %3107 = vst [vmem:[%s366] sm:$0x1] %v3106
        %v3108 = vmul.f32 %v2882, %v2882
        %v3109 = vmul.f32 %v2883, %v2883
        %v3110 = vmul.f32 %v2884, %v2884
        %v3111 = vmul.f32 %v2885, %v2885
        %v3112 = vmul.f32 %v2886, %v2886
        %v3113 = vadd.f32 %v3108, %v3109
        %v3114 = vadd.f32 %v3113, %v3110
        %v3115 = vadd.f32 %v3114, %v3111
        %v3116 = vsel %vm3098, %v3112, 0.0
        %v3117 = vadd.f32 %v3115, %v3116
        %v3118 = vrot.slane %v3117, 4
        %v3119 = vadd.f32 %v3117, %v3118
        %v3120 = vrot.slane %v3119, 2
        %v3121 = vadd.f32 %v3119, %v3120
        %v3122 = vrot.slane %v3121, 1
        %v3123 = vadd.f32 %v3121, %v3122
        %3124 = vst [vmem:[%s373] sm:$0x1] %v3123
      $region48: #{downscale_forward.2} parent=35 // pred_fallthru
        _
      %p3125 = scmp.lt.s32.totalorder %s23, 1
      %s3126 = scalar_select %p3125, %s23, 1
      %p3127 = scmp.lt.s32.totalorder %s24, 7
      %s3128 = scalar_select %p3127, %s24, 7
      %s3129 = smul.addr %s3128, 6
      %s3130 = smul.addr %s3126, 48
      %s3131 = sadd.s32 %s3129, %s3130
      %s3132 = smul.addr %s3131, 4
      %s3133 = scalar_lea.vmem %s4, %s3132
      %p3134 = scmp.lt.s32.totalorder %s23, 1
      %s3135 = scalar_select %p3134, %s23, 1
      %p3136 = scmp.lt.s32.totalorder %s24, 7
      %s3137 = scalar_select %p3136, %s24, 7
      %s3138 = smul.addr %s3135, 8
      %s3139 = sadd.s32 %s3137, %s3138
      %s3140 = scalar_lea.vmem %s5, %s3139
      %p3141 = scmp.lt.s32.totalorder %s23, 1
      %s3142 = scalar_select %p3141, %s23, 1
      %p3143 = scmp.lt.s32.totalorder %s24, 7
      %s3144 = scalar_select %p3143, %s24, 7
      %s3145 = smul.addr %s3142, 8
      %s3146 = sadd.s32 %s3144, %s3145
      %s3147 = scalar_lea.vmem %s6, %s3146
      // Predicated region
      $region49: #{downscale_forward.2} parent=35 // pred_check
        %p3148 = pneg %p160
      $region50: #{downscale_forward.2} parent=35 // pred_check_branch
        %3150 = sbr.rel (%p3148) target = $region52
      $region51: #{downscale_forward.2} parent=35 // pred_region
        _
      $region52: #{downscale_forward.2} parent=35 // pred_fallthru
        _
      // Predicated region
      $region53: #{downscale_forward.2} parent=35 // pred_check
        %p3151 = pneg %p188
      $region54: #{downscale_forward.2} parent=35 // pred_check_branch
        %3153 = sbr.rel (%p3151) target = $region56
      $region55: #{downscale_forward.2} parent=35 // pred_region
        _
      $region56: #{downscale_forward.2} parent=35 // pred_fallthru
        _
      // Predicated region
      $region57: #{downscale_forward.2} parent=35 // pred_check
        %p3154 = pneg %p216
      $region58: #{downscale_forward.2} parent=35 // pred_check_branch
        %3156 = sbr.rel (%p3154) target = $region60
      $region59: #{downscale_forward.2} parent=35 // pred_region
        _
      $region60: #{downscale_forward.2} parent=35 // pred_fallthru
        _
    $region36: #{downscale_forward.2} parent=5 // pred_fallthru
      _
    %p3157 = scmp.le.s32.totalorder 2, %s13
    // Predicated region
    $region61: #{downscale_forward.2} parent=5 // pred_check
      %p3158 = pneg %p3157
    $region62: #{downscale_forward.2} parent=5 // pred_check_branch
      %3160 = sbr.rel (%p3158) target = $region64
    $region63: #{downscale_forward.2} parent=5 // pred_region
      %s3161 = ssub.s32 %s13, 2
      // Predicated region
      $region65: #{downscale_forward.2} parent=63 // pred_check
        %p3162 = pneg %p166
      $region66: #{downscale_forward.2} parent=63 // pred_check_branch
        %3164 = sbr.rel (%p3162) target = $region68
      $region67: #{downscale_forward.2} parent=63 // pred_region
        %p3165 = scmp.lt.s32.totalorder %s26, 1
        %s3166 = scalar_select %p3165, %s26, 1
        %p3167 = scmp.lt.s32.totalorder %s27, 7
        %s3168 = scalar_select %p3167, %s27, 7
        %s3169 = smul.addr %s3168, 6
        %s3170 = smul.addr %s3166, 48
        %s3171 = sadd.s32 %s3169, %s3170
        %s3172 = smul.addr %s3171, 4
        %s3173 = scalar_lea.vmem %s4, %s3172
      $region68: #{downscale_forward.2} parent=63 // pred_fallthru
        _
      // Predicated region
      $region69: #{downscale_forward.2} parent=63 // pred_check
        %p3174 = pneg %p194
      $region70: #{downscale_forward.2} parent=63 // pred_check_branch
        %3176 = sbr.rel (%p3174) target = $region72
      $region71: #{downscale_forward.2} parent=63 // pred_region
        %p3177 = scmp.lt.s32.totalorder %s26, 1
        %s3178 = scalar_select %p3177, %s26, 1
        %p3179 = scmp.lt.s32.totalorder %s27, 7
        %s3180 = scalar_select %p3179, %s27, 7
        %s3181 = smul.addr %s3178, 8
        %s3182 = sadd.s32 %s3180, %s3181
        %s3183 = scalar_lea.vmem %s5, %s3182
      $region72: #{downscale_forward.2} parent=63 // pred_fallthru
        _
      // Predicated region
      $region73: #{downscale_forward.2} parent=63 // pred_check
        %p3184 = pneg %p222
      $region74: #{downscale_forward.2} parent=63 // pred_check_branch
        %3186 = sbr.rel (%p3184) target = $region76
      $region75: #{downscale_forward.2} parent=63 // pred_region
        %p3187 = scmp.lt.s32.totalorder %s26, 1
        %s3188 = scalar_select %p3187, %s26, 1
        %p3189 = scmp.lt.s32.totalorder %s27, 7
        %s3190 = scalar_select %p3189, %s27, 7
        %s3191 = smul.addr %s3188, 8
        %s3192 = sadd.s32 %s3190, %s3191
        %s3193 = scalar_lea.vmem %s6, %s3192
      $region76: #{downscale_forward.2} parent=63 // pred_fallthru
        _
    $region64: #{downscale_forward.2} parent=5 // pred_fallthru
      _
  $region6: #{downscale_forward.2} parent=0 // loop_footer
    %s17 = sadd.s32 1, %s13
  $region7: #{downscale_forward.2} parent=0 // loop_footer_branch
    %12 = sbr.rel target = $region3
  $region8: #{downscale_forward.2} parent=0 // loop_exit
    _

// kernel: downscale_forward.3
$region0: #{downscale_forward.3}
  #allocation0 [shape = 'u32[]', space=smem, size = 0x4, offset = 0x4, fixed_abs, tag = 'smem constant byte address 0x4 - core index']
  #allocation1 [shape = 'u32[144,128]{1,0:T(1,128)}', space=vmem, size = 0x12000, scoped, tag = 'internal scratch']
  %s0 = inlined_call_operand.vmem [shape: f32[1,128], index: 0, kind: input, shape index: {}]
  %s1 = inlined_call_operand.vmem [shape: f32[1,128], index: 1, kind: input, shape index: {}]
  %s2 = inlined_call_operand.vmem [shape: bf16[1024,128], index: 2, kind: input, shape index: {}]
  %s3 = inlined_call_operand.vmem [shape: bf16[128,128], index: 3, kind: input, shape index: {}]
  %s4 = inlined_call_operand.vmem [shape: bf16[1024,128], index: 4, kind: output, shape index: {0}]
  %s5 = inlined_call_operand.vmem [shape: f32[1,1,128], index: 5, kind: output, shape index: {1}]
  %s6 = inlined_call_operand.vmem [shape: f32[1,1,128], index: 6, kind: output, shape index: {2}]
  %7 = xla_tuple %s4, %s5, %s6
  %s8 = sld [smem:[#allocation0]]
  $region50: #{downscale_forward.3} parent=0
    _
  %s10 = ssub.s32 1, %s8
  %s11 = scalar_select 0, %s10, %s8
  // Predicated region
  $region2: #{downscale_forward.3} parent=0 // pred_check
    _
  $region3: #{downscale_forward.3} parent=0 // pred_check_branch
    %13 = sbr.rel (0) target = $region5
  $region4: #{downscale_forward.3} parent=0 // pred_region
    _
  $region5: #{downscale_forward.3} parent=0 // pred_fallthru
    _
  // Predicated region
  $region6: #{downscale_forward.3} parent=0 // pred_check
    _
  $region7: #{downscale_forward.3} parent=0 // pred_check_branch
    %15 = sbr.rel (0) target = $region9
  $region8: #{downscale_forward.3} parent=0 // pred_region
    _
  $region9: #{downscale_forward.3} parent=0 // pred_fallthru
    _
  // Predicated region
  $region10: #{downscale_forward.3} parent=0 // pred_check
    _
  $region11: #{downscale_forward.3} parent=0 // pred_check_branch
    %17 = sbr.rel (0) target = $region13
  $region12: #{downscale_forward.3} parent=0 // pred_region
    _
  $region13: #{downscale_forward.3} parent=0 // pred_fallthru
    _
  // Predicated region
  $region14: #{downscale_forward.3} parent=0 // pred_check
    _
  $region15: #{downscale_forward.3} parent=0 // pred_check_branch
    %19 = sbr.rel (0) target = $region17
  $region16: #{downscale_forward.3} parent=0 // pred_region
    _
  $region17: #{downscale_forward.3} parent=0 // pred_fallthru
    _
  %v21 = vld [vmem:[%s2] sm:$0xf]
  %v22 = vld [vmem:[%s2 + $0x4] sm:$0xf]
  %v23 = vld [vmem:[%s2 + $0x8] sm:$0xf]
  %v24 = vld [vmem:[%s2 + $0xc] sm:$0xf]
  %v25 = vld [vmem:[%s2 + $0x10] sm:$0xf]
  %v26 = vld [vmem:[%s2 + $0x14] sm:$0xf]
  %v27 = vld [vmem:[%s2 + $0x18] sm:$0xf]
  %v28 = vld [vmem:[%s2 + $0x1c] sm:$0xf]
  %v29 = vld [vmem:[%s2 + $0x20] sm:$0xf]
  %v30 = vld [vmem:[%s2 + $0x24] sm:$0xf]
  %v31 = vld [vmem:[%s2 + $0x28] sm:$0xf]
  %v32 = vld [vmem:[%s2 + $0x2c] sm:$0xf]
  %v33 = vld [vmem:[%s2 + $0x30] sm:$0xf]
  %v34 = vld [vmem:[%s2 + $0x34] sm:$0xf]
  %v35 = vld [vmem:[%s2 + $0x38] sm:$0xf]
  %v36 = vld [vmem:[%s2 + $0x3c] sm:$0xf]
  %v37 = vld [vmem:[%s2 + $0x40] sm:$0xf]
  %v38 = vld [vmem:[%s2 + $0x44] sm:$0xf]
  %v39 = vld [vmem:[%s2 + $0x48] sm:$0xf]
  %v40 = vld [vmem:[%s2 + $0x4c] sm:$0xf]
  %v41 = vld [vmem:[%s2 + $0x50] sm:$0xf]
  %v42 = vld [vmem:[%s2 + $0x54] sm:$0xf]
  %v43 = vld [vmem:[%s2 + $0x58] sm:$0xf]
  %v44 = vld [vmem:[%s2 + $0x5c] sm:$0xf]
  %v45 = vld [vmem:[%s2 + $0x60] sm:$0xf]
  %v46 = vld [vmem:[%s2 + $0x64] sm:$0xf]
  %v47 = vld [vmem:[%s2 + $0x68] sm:$0xf]
  %v48 = vld [vmem:[%s2 + $0x6c] sm:$0xf]
  %v49 = vld [vmem:[%s2 + $0x70] sm:$0xf]
  %v50 = vld [vmem:[%s2 + $0x74] sm:$0xf]
  %v51 = vld [vmem:[%s2 + $0x78] sm:$0xf]
  %v52 = vld [vmem:[%s2 + $0x7c] sm:$0xf]
  %v53 = vld [vmem:[%s2 + $0x80] sm:$0xf]
  %v54 = vld [vmem:[%s2 + $0x84] sm:$0xf]
  %v55 = vld [vmem:[%s2 + $0x88] sm:$0xf]
  %v56 = vld [vmem:[%s2 + $0x8c] sm:$0xf]
  %v57 = vld [vmem:[%s2 + $0x90] sm:$0xf]
  %v58 = vld [vmem:[%s2 + $0x94] sm:$0xf]
  %v59 = vld [vmem:[%s2 + $0x98] sm:$0xf]
  %v60 = vld [vmem:[%s2 + $0x9c] sm:$0xf]
  %v61 = vld [vmem:[%s2 + $0xa0] sm:$0xf]
  %v62 = vld [vmem:[%s2 + $0xa4] sm:$0xf]
  %v63 = vld [vmem:[%s2 + $0xa8] sm:$0xf]
  %v64 = vld [vmem:[%s2 + $0xac] sm:$0xf]
  %v65 = vld [vmem:[%s2 + $0xb0] sm:$0xf]
  %v66 = vld [vmem:[%s2 + $0xb4] sm:$0xf]
  %v67 = vld [vmem:[%s2 + $0xb8] sm:$0xf]
  %v68 = vld [vmem:[%s2 + $0xbc] sm:$0xf]
  %v69 = vld [vmem:[%s2 + $0xc0] sm:$0xf]
  %v70 = vld [vmem:[%s2 + $0xc4] sm:$0xf]
  %v71 = vld [vmem:[%s2 + $0xc8] sm:$0xf]
  %v72 = vld [vmem:[%s2 + $0xcc] sm:$0xf]
  %v73 = vld [vmem:[%s2 + $0xd0] sm:$0xf]
  %v74 = vld [vmem:[%s2 + $0xd4] sm:$0xf]
  %v75 = vld [vmem:[%s2 + $0xd8] sm:$0xf]
  %v76 = vld [vmem:[%s2 + $0xdc] sm:$0xf]
  %v77 = vld [vmem:[%s2 + $0xe0] sm:$0xf]
  %v78 = vld [vmem:[%s2 + $0xe4] sm:$0xf]
  %v79 = vld [vmem:[%s2 + $0xe8] sm:$0xf]
  %v80 = vld [vmem:[%s2 + $0xec] sm:$0xf]
  %v81 = vld [vmem:[%s2 + $0xf0] sm:$0xf]
  %v82 = vld [vmem:[%s2 + $0xf4] sm:$0xf]
  %v83 = vld [vmem:[%s2 + $0xf8] sm:$0xf]
  %v84 = vld [vmem:[%s2 + $0xfc] sm:$0xf]
  %v85 = vld [vmem:[%s2 + $0x100] sm:$0xf]
  %v86 = vld [vmem:[%s2 + $0x104] sm:$0xf]
  %v87 = vld [vmem:[%s2 + $0x108] sm:$0xf]
  %v88 = vld [vmem:[%s2 + $0x10c] sm:$0xf]
  %v89 = vld [vmem:[%s2 + $0x110] sm:$0xf]
  %v90 = vld [vmem:[%s2 + $0x114] sm:$0xf]
  %v91 = vld [vmem:[%s2 + $0x118] sm:$0xf]
  %v92 = vld [vmem:[%s2 + $0x11c] sm:$0xf]
  %v93 = vld [vmem:[%s2 + $0x120] sm:$0xf]
  %v94 = vld [vmem:[%s2 + $0x124] sm:$0xf]
  %v95 = vld [vmem:[%s2 + $0x128] sm:$0xf]
  %v96 = vld [vmem:[%s2 + $0x12c] sm:$0xf]
  %v97 = vld [vmem:[%s2 + $0x130] sm:$0xf]
  %v98 = vld [vmem:[%s2 + $0x134] sm:$0xf]
  %v99 = vld [vmem:[%s2 + $0x138] sm:$0xf]
  %v100 = vld [vmem:[%s2 + $0x13c] sm:$0xf]
  %v101 = vld [vmem:[%s2 + $0x140] sm:$0xf]
  %v102 = vld [vmem:[%s2 + $0x144] sm:$0xf]
  %v103 = vld [vmem:[%s2 + $0x148] sm:$0xf]
  %v104 = vld [vmem:[%s2 + $0x14c] sm:$0xf]
  %v105 = vld [vmem:[%s2 + $0x150] sm:$0xf]
  %v106 = vld [vmem:[%s2 + $0x154] sm:$0xf]
  %v107 = vld [vmem:[%s2 + $0x158] sm:$0xf]
  %v108 = vld [vmem:[%s2 + $0x15c] sm:$0xf]
  %v109 = vld [vmem:[%s2 + $0x160] sm:$0xf]
  %v110 = vld [vmem:[%s2 + $0x164] sm:$0xf]
  %v111 = vld [vmem:[%s2 + $0x168] sm:$0xf]
  %v112 = vld [vmem:[%s2 + $0x16c] sm:$0xf]
  %v113 = vld [vmem:[%s2 + $0x170] sm:$0xf]
  %v114 = vld [vmem:[%s2 + $0x174] sm:$0xf]
  %v115 = vld [vmem:[%s2 + $0x178] sm:$0xf]
  %v116 = vld [vmem:[%s2 + $0x17c] sm:$0xf]
  %v117 = vld [vmem:[%s2 + $0x180] sm:$0xf]
  %v118 = vld [vmem:[%s2 + $0x184] sm:$0xf]
  %v119 = vld [vmem:[%s2 + $0x188] sm:$0xf]
  %v120 = vld [vmem:[%s2 + $0x18c] sm:$0xf]
  %v121 = vld [vmem:[%s2 + $0x190] sm:$0xf]
  %v122 = vld [vmem:[%s2 + $0x194] sm:$0xf]
  %v123 = vld [vmem:[%s2 + $0x198] sm:$0xf]
  %v124 = vld [vmem:[%s2 + $0x19c] sm:$0xf]
  %v125 = vld [vmem:[%s2 + $0x1a0] sm:$0xf]
  %v126 = vld [vmem:[%s2 + $0x1a4] sm:$0xf]
  %v127 = vld [vmem:[%s2 + $0x1a8] sm:$0xf]
  %v128 = vld [vmem:[%s2 + $0x1ac] sm:$0xf]
  %v129 = vld [vmem:[%s2 + $0x1b0] sm:$0xf]
  %v130 = vld [vmem:[%s2 + $0x1b4] sm:$0xf]
  %v131 = vld [vmem:[%s2 + $0x1b8] sm:$0xf]
  %v132 = vld [vmem:[%s2 + $0x1bc] sm:$0xf]
  %v133 = vld [vmem:[%s2 + $0x1c0] sm:$0xf]
  %v134 = vld [vmem:[%s2 + $0x1c4] sm:$0xf]
  %v135 = vld [vmem:[%s2 + $0x1c8] sm:$0xf]
  %v136 = vld [vmem:[%s2 + $0x1cc] sm:$0xf]
  %v137 = vld [vmem:[%s2 + $0x1d0] sm:$0xf]
  %v138 = vld [vmem:[%s2 + $0x1d4] sm:$0xf]
  %v139 = vld [vmem:[%s2 + $0x1d8] sm:$0xf]
  %v140 = vld [vmem:[%s2 + $0x1dc] sm:$0xf]
  %v141 = vld [vmem:[%s2 + $0x1e0] sm:$0xf]
  %v142 = vld [vmem:[%s2 + $0x1e4] sm:$0xf]
  %v143 = vld [vmem:[%s2 + $0x1e8] sm:$0xf]
  %v144 = vld [vmem:[%s2 + $0x1ec] sm:$0xf]
  %v145 = vld [vmem:[%s2 + $0x1f0] sm:$0xf]
  %v146 = vld [vmem:[%s2 + $0x1f4] sm:$0xf]
  %v147 = vld [vmem:[%s2 + $0x1f8] sm:$0xf]
  %v148 = vld [vmem:[%s2 + $0x1fc] sm:$0xf]
  %v149 = vunpack.c.l.bf16 %v21
  %v150 = vunpack.c.l.bf16 %v22
  %v151 = vunpack.c.l.bf16 %v23
  %v152 = vunpack.c.l.bf16 %v24
  %v153 = vunpack.c.l.bf16 %v25
  %v154 = vunpack.c.l.bf16 %v26
  %v155 = vunpack.c.l.bf16 %v27
  %v156 = vunpack.c.l.bf16 %v28
  %v157 = vunpack.c.l.bf16 %v29
  %v158 = vunpack.c.l.bf16 %v30
  %v159 = vunpack.c.l.bf16 %v31
  %v160 = vunpack.c.l.bf16 %v32
  %v161 = vunpack.c.l.bf16 %v33
  %v162 = vunpack.c.l.bf16 %v34
  %v163 = vunpack.c.l.bf16 %v35
  %v164 = vunpack.c.l.bf16 %v36
  %v165 = vunpack.c.l.bf16 %v37
  %v166 = vunpack.c.l.bf16 %v38
  %v167 = vunpack.c.l.bf16 %v39
  %v168 = vunpack.c.l.bf16 %v40
  %v169 = vunpack.c.l.bf16 %v41
  %v170 = vunpack.c.l.bf16 %v42
  %v171 = vunpack.c.l.bf16 %v43
  %v172 = vunpack.c.l.bf16 %v44
  %v173 = vunpack.c.l.bf16 %v45
  %v174 = vunpack.c.l.bf16 %v46
  %v175 = vunpack.c.l.bf16 %v47
  %v176 = vunpack.c.l.bf16 %v48
  %v177 = vunpack.c.l.bf16 %v49
  %v178 = vunpack.c.l.bf16 %v50
  %v179 = vunpack.c.l.bf16 %v51
  %v180 = vunpack.c.l.bf16 %v52
  %v181 = vunpack.c.l.bf16 %v53
  %v182 = vunpack.c.l.bf16 %v54
  %v183 = vunpack.c.l.bf16 %v55
  %v184 = vunpack.c.l.bf16 %v56
  %v185 = vunpack.c.l.bf16 %v57
  %v186 = vunpack.c.l.bf16 %v58
  %v187 = vunpack.c.l.bf16 %v59
  %v188 = vunpack.c.l.bf16 %v60
  %v189 = vunpack.c.l.bf16 %v61
  %v190 = vunpack.c.l.bf16 %v62
  %v191 = vunpack.c.l.bf16 %v63
  %v192 = vunpack.c.l.bf16 %v64
  %v193 = vunpack.c.l.bf16 %v65
  %v194 = vunpack.c.l.bf16 %v66
  %v195 = vunpack.c.l.bf16 %v67
  %v196 = vunpack.c.l.bf16 %v68
  %v197 = vunpack.c.l.bf16 %v69
  %v198 = vunpack.c.l.bf16 %v70
  %v199 = vunpack.c.l.bf16 %v71
  %v200 = vunpack.c.l.bf16 %v72
  %v201 = vunpack.c.l.bf16 %v73
  %v202 = vunpack.c.l.bf16 %v74
  %v203 = vunpack.c.l.bf16 %v75
  %v204 = vunpack.c.l.bf16 %v76
  %v205 = vunpack.c.l.bf16 %v77
  %v206 = vunpack.c.l.bf16 %v78
  %v207 = vunpack.c.l.bf16 %v79
  %v208 = vunpack.c.l.bf16 %v80
  %v209 = vunpack.c.l.bf16 %v81
  %v210 = vunpack.c.l.bf16 %v82
  %v211 = vunpack.c.l.bf16 %v83
  %v212 = vunpack.c.l.bf16 %v84
  %v213 = vunpack.c.l.bf16 %v85
  %v214 = vunpack.c.l.bf16 %v86
  %v215 = vunpack.c.l.bf16 %v87
  %v216 = vunpack.c.l.bf16 %v88
  %v217 = vunpack.c.l.bf16 %v89
  %v218 = vunpack.c.l.bf16 %v90
  %v219 = vunpack.c.l.bf16 %v91
  %v220 = vunpack.c.l.bf16 %v92
  %v221 = vunpack.c.l.bf16 %v93
  %v222 = vunpack.c.l.bf16 %v94
  %v223 = vunpack.c.l.bf16 %v95
  %v224 = vunpack.c.l.bf16 %v96
  %v225 = vunpack.c.l.bf16 %v97
  %v226 = vunpack.c.l.bf16 %v98
  %v227 = vunpack.c.l.bf16 %v99
  %v228 = vunpack.c.l.bf16 %v100
  %v229 = vunpack.c.l.bf16 %v101
  %v230 = vunpack.c.l.bf16 %v102
  %v231 = vunpack.c.l.bf16 %v103
  %v232 = vunpack.c.l.bf16 %v104
  %v233 = vunpack.c.l.bf16 %v105
  %v234 = vunpack.c.l.bf16 %v106
  %v235 = vunpack.c.l.bf16 %v107
  %v236 = vunpack.c.l.bf16 %v108
  %v237 = vunpack.c.l.bf16 %v109
  %v238 = vunpack.c.l.bf16 %v110
  %v239 = vunpack.c.l.bf16 %v111
  %v240 = vunpack.c.l.bf16 %v112
  %v241 = vunpack.c.l.bf16 %v113
  %v242 = vunpack.c.l.bf16 %v114
  %v243 = vunpack.c.l.bf16 %v115
  %v244 = vunpack.c.l.bf16 %v116
  %v245 = vunpack.c.l.bf16 %v117
  %v246 = vunpack.c.l.bf16 %v118
  %v247 = vunpack.c.l.bf16 %v119
  %v248 = vunpack.c.l.bf16 %v120
  %v249 = vunpack.c.l.bf16 %v121
  %v250 = vunpack.c.l.bf16 %v122
  %v251 = vunpack.c.l.bf16 %v123
  %v252 = vunpack.c.l.bf16 %v124
  %v253 = vunpack.c.l.bf16 %v125
  %v254 = vunpack.c.l.bf16 %v126
  %v255 = vunpack.c.l.bf16 %v127
  %v256 = vunpack.c.l.bf16 %v128
  %v257 = vunpack.c.l.bf16 %v129
  %v258 = vunpack.c.l.bf16 %v130
  %v259 = vunpack.c.l.bf16 %v131
  %v260 = vunpack.c.l.bf16 %v132
  %v261 = vunpack.c.l.bf16 %v133
  %v262 = vunpack.c.l.bf16 %v134
  %v263 = vunpack.c.l.bf16 %v135
  %v264 = vunpack.c.l.bf16 %v136
  %v265 = vunpack.c.l.bf16 %v137
  %v266 = vunpack.c.l.bf16 %v138
  %v267 = vunpack.c.l.bf16 %v139
  %v268 = vunpack.c.l.bf16 %v140
  %v269 = vunpack.c.l.bf16 %v141
  %v270 = vunpack.c.l.bf16 %v142
  %v271 = vunpack.c.l.bf16 %v143
  %v272 = vunpack.c.l.bf16 %v144
  %v273 = vunpack.c.l.bf16 %v145
  %v274 = vunpack.c.l.bf16 %v146
  %v275 = vunpack.c.l.bf16 %v147
  %v276 = vunpack.c.l.bf16 %v148
  %v277 = vld [vmem:[%s0] sm:$0x1]
  %v279 = vlaneseq
  %v280 = vshrl.u32 %v279, 7
  %v281 = vsub.s32 0, %v280
  %v282 = vrot.slane %v277, %v281
  %v284 = vmul.f32 %v149, %v282
  %v285 = vmul.f32 %v150, %v282
  %v286 = vmul.f32 %v151, %v282
  %v287 = vmul.f32 %v152, %v282
  %v288 = vmul.f32 %v153, %v282
  %v289 = vmul.f32 %v154, %v282
  %v290 = vmul.f32 %v155, %v282
  %v291 = vmul.f32 %v156, %v282
  %v292 = vmul.f32 %v157, %v282
  %v293 = vmul.f32 %v158, %v282
  %v294 = vmul.f32 %v159, %v282
  %v295 = vmul.f32 %v160, %v282
  %v296 = vmul.f32 %v161, %v282
  %v297 = vmul.f32 %v162, %v282
  %v298 = vmul.f32 %v163, %v282
  %v299 = vmul.f32 %v164, %v282
  %v300 = vmul.f32 %v165, %v282
  %v301 = vmul.f32 %v166, %v282
  %v302 = vmul.f32 %v167, %v282
  %v303 = vmul.f32 %v168, %v282
  %v304 = vmul.f32 %v169, %v282
  %v305 = vmul.f32 %v170, %v282
  %v306 = vmul.f32 %v171, %v282
  %v307 = vmul.f32 %v172, %v282
  %v308 = vmul.f32 %v173, %v282
  %v309 = vmul.f32 %v174, %v282
  %v310 = vmul.f32 %v175, %v282
  %v311 = vmul.f32 %v176, %v282
  %v312 = vmul.f32 %v177, %v282
  %v313 = vmul.f32 %v178, %v282
  %v314 = vmul.f32 %v179, %v282
  %v315 = vmul.f32 %v180, %v282
  %v316 = vmul.f32 %v181, %v282
  %v317 = vmul.f32 %v182, %v282
  %v318 = vmul.f32 %v183, %v282
  %v319 = vmul.f32 %v184, %v282
  %v320 = vmul.f32 %v185, %v282
  %v321 = vmul.f32 %v186, %v282
  %v322 = vmul.f32 %v187, %v282
  %v323 = vmul.f32 %v188, %v282
  %v324 = vmul.f32 %v189, %v282
  %v325 = vmul.f32 %v190, %v282
  %v326 = vmul.f32 %v191, %v282
  %v327 = vmul.f32 %v192, %v282
  %v328 = vmul.f32 %v193, %v282
  %v329 = vmul.f32 %v194, %v282
  %v330 = vmul.f32 %v195, %v282
  %v331 = vmul.f32 %v196, %v282
  %v332 = vmul.f32 %v197, %v282
  %v333 = vmul.f32 %v198, %v282
  %v334 = vmul.f32 %v199, %v282
  %v335 = vmul.f32 %v200, %v282
  %v336 = vmul.f32 %v201, %v282
  %v337 = vmul.f32 %v202, %v282
  %v338 = vmul.f32 %v203, %v282
  %v339 = vmul.f32 %v204, %v282
  %v340 = vmul.f32 %v205, %v282
  %v341 = vmul.f32 %v206, %v282
  %v342 = vmul.f32 %v207, %v282
  %v343 = vmul.f32 %v208, %v282
  %v344 = vmul.f32 %v209, %v282
  %v345 = vmul.f32 %v210, %v282
  %v346 = vmul.f32 %v211, %v282
  %v347 = vmul.f32 %v212, %v282
  %v348 = vmul.f32 %v213, %v282
  %v349 = vmul.f32 %v214, %v282
  %v350 = vmul.f32 %v215, %v282
  %v351 = vmul.f32 %v216, %v282
  %v352 = vmul.f32 %v217, %v282
  %v353 = vmul.f32 %v218, %v282
  %v354 = vmul.f32 %v219, %v282
  %v355 = vmul.f32 %v220, %v282
  %v356 = vmul.f32 %v221, %v282
  %v357 = vmul.f32 %v222, %v282
  %v358 = vmul.f32 %v223, %v282
  %v359 = vmul.f32 %v224, %v282
  %v360 = vmul.f32 %v225, %v282
  %v361 = vmul.f32 %v226, %v282
  %v362 = vmul.f32 %v227, %v282
  %v363 = vmul.f32 %v228, %v282
  %v364 = vmul.f32 %v229, %v282
  %v365 = vmul.f32 %v230, %v282
  %v366 = vmul.f32 %v231, %v282
  %v367 = vmul.f32 %v232, %v282
  %v368 = vmul.f32 %v233, %v282
  %v369 = vmul.f32 %v234, %v282
  %v370 = vmul.f32 %v235, %v282
  %v371 = vmul.f32 %v236, %v282
  %v372 = vmul.f32 %v237, %v282
  %v373 = vmul.f32 %v238, %v282
  %v374 = vmul.f32 %v239, %v282
  %v375 = vmul.f32 %v240, %v282
  %v376 = vmul.f32 %v241, %v282
  %v377 = vmul.f32 %v242, %v282
  %v378 = vmul.f32 %v243, %v282
  %v379 = vmul.f32 %v244, %v282
  %v380 = vmul.f32 %v245, %v282
  %v381 = vmul.f32 %v246, %v282
  %v382 = vmul.f32 %v247, %v282
  %v383 = vmul.f32 %v248, %v282
  %v384 = vmul.f32 %v249, %v282
  %v385 = vmul.f32 %v250, %v282
  %v386 = vmul.f32 %v251, %v282
  %v387 = vmul.f32 %v252, %v282
  %v388 = vmul.f32 %v253, %v282
  %v389 = vmul.f32 %v254, %v282
  %v390 = vmul.f32 %v255, %v282
  %v391 = vmul.f32 %v256, %v282
  %v392 = vmul.f32 %v257, %v282
  %v393 = vmul.f32 %v258, %v282
  %v394 = vmul.f32 %v259, %v282
  %v395 = vmul.f32 %v260, %v282
  %v396 = vmul.f32 %v261, %v282
  %v397 = vmul.f32 %v262, %v282
  %v398 = vmul.f32 %v263, %v282
  %v399 = vmul.f32 %v264, %v282
  %v400 = vmul.f32 %v265, %v282
  %v401 = vmul.f32 %v266, %v282
  %v402 = vmul.f32 %v267, %v282
  %v403 = vmul.f32 %v268, %v282
  %v404 = vmul.f32 %v269, %v282
  %v405 = vmul.f32 %v270, %v282
  %v406 = vmul.f32 %v271, %v282
  %v407 = vmul.f32 %v272, %v282
  %v408 = vmul.f32 %v273, %v282
  %v409 = vmul.f32 %v274, %v282
  %v410 = vmul.f32 %v275, %v282
  %v411 = vmul.f32 %v276, %v282
  %v412 = vld [vmem:[%s1] sm:$0x1]
  %v414 = vlaneseq
  %v415 = vshrl.u32 %v414, 7
  %v416 = vsub.s32 0, %v415
  %v417 = vrot.slane %v412, %v416
  %v419 = vadd.f32 %v284, %v417
  %v420 = vadd.f32 %v285, %v417
  %v421 = vadd.f32 %v286, %v417
  %v422 = vadd.f32 %v287, %v417
  %v423 = vadd.f32 %v288, %v417
  %v424 = vadd.f32 %v289, %v417
  %v425 = vadd.f32 %v290, %v417
  %v426 = vadd.f32 %v291, %v417
  %v427 = vadd.f32 %v292, %v417
  %v428 = vadd.f32 %v293, %v417
  %v429 = vadd.f32 %v294, %v417
  %v430 = vadd.f32 %v295, %v417
  %v431 = vadd.f32 %v296, %v417
  %v432 = vadd.f32 %v297, %v417
  %v433 = vadd.f32 %v298, %v417
  %v434 = vadd.f32 %v299, %v417
  %v435 = vadd.f32 %v300, %v417
  %v436 = vadd.f32 %v301, %v417
  %v437 = vadd.f32 %v302, %v417
  %v438 = vadd.f32 %v303, %v417
  %v439 = vadd.f32 %v304, %v417
  %v440 = vadd.f32 %v305, %v417
  %v441 = vadd.f32 %v306, %v417
  %v442 = vadd.f32 %v307, %v417
  %v443 = vadd.f32 %v308, %v417
  %v444 = vadd.f32 %v309, %v417
  %v445 = vadd.f32 %v310, %v417
  %v446 = vadd.f32 %v311, %v417
  %v447 = vadd.f32 %v312, %v417
  %v448 = vadd.f32 %v313, %v417
  %v449 = vadd.f32 %v314, %v417
  %v450 = vadd.f32 %v315, %v417
  %v451 = vadd.f32 %v316, %v417
  %v452 = vadd.f32 %v317, %v417
  %v453 = vadd.f32 %v318, %v417
  %v454 = vadd.f32 %v319, %v417
  %v455 = vadd.f32 %v320, %v417
  %v456 = vadd.f32 %v321, %v417
  %v457 = vadd.f32 %v322, %v417
  %v458 = vadd.f32 %v323, %v417
  %v459 = vadd.f32 %v324, %v417
  %v460 = vadd.f32 %v325, %v417
  %v461 = vadd.f32 %v326, %v417
  %v462 = vadd.f32 %v327, %v417
  %v463 = vadd.f32 %v328, %v417
  %v464 = vadd.f32 %v329, %v417
  %v465 = vadd.f32 %v330, %v417
  %v466 = vadd.f32 %v331, %v417
  %v467 = vadd.f32 %v332, %v417
  %v468 = vadd.f32 %v333, %v417
  %v469 = vadd.f32 %v334, %v417
  %v470 = vadd.f32 %v335, %v417
  %v471 = vadd.f32 %v336, %v417
  %v472 = vadd.f32 %v337, %v417
  %v473 = vadd.f32 %v338, %v417
  %v474 = vadd.f32 %v339, %v417
  %v475 = vadd.f32 %v340, %v417
  %v476 = vadd.f32 %v341, %v417
  %v477 = vadd.f32 %v342, %v417
  %v478 = vadd.f32 %v343, %v417
  %v479 = vadd.f32 %v344, %v417
  %v480 = vadd.f32 %v345, %v417
  %v481 = vadd.f32 %v346, %v417
  %v482 = vadd.f32 %v347, %v417
  %v483 = vadd.f32 %v348, %v417
  %v484 = vadd.f32 %v349, %v417
  %v485 = vadd.f32 %v350, %v417
  %v486 = vadd.f32 %v351, %v417
  %v487 = vadd.f32 %v352, %v417
  %v488 = vadd.f32 %v353, %v417
  %v489 = vadd.f32 %v354, %v417
  %v490 = vadd.f32 %v355, %v417
  %v491 = vadd.f32 %v356, %v417
  %v492 = vadd.f32 %v357, %v417
  %v493 = vadd.f32 %v358, %v417
  %v494 = vadd.f32 %v359, %v417
  %v495 = vadd.f32 %v360, %v417
  %v496 = vadd.f32 %v361, %v417
  %v497 = vadd.f32 %v362, %v417
  %v498 = vadd.f32 %v363, %v417
  %v499 = vadd.f32 %v364, %v417
  %v500 = vadd.f32 %v365, %v417
  %v501 = vadd.f32 %v366, %v417
  %v502 = vadd.f32 %v367, %v417
  %v503 = vadd.f32 %v368, %v417
  %v504 = vadd.f32 %v369, %v417
  %v505 = vadd.f32 %v370, %v417
  %v506 = vadd.f32 %v371, %v417
  %v507 = vadd.f32 %v372, %v417
  %v508 = vadd.f32 %v373, %v417
  %v509 = vadd.f32 %v374, %v417
  %v510 = vadd.f32 %v375, %v417
  %v511 = vadd.f32 %v376, %v417
  %v512 = vadd.f32 %v377, %v417
  %v513 = vadd.f32 %v378, %v417
  %v514 = vadd.f32 %v379, %v417
  %v515 = vadd.f32 %v380, %v417
  %v516 = vadd.f32 %v381, %v417
  %v517 = vadd.f32 %v382, %v417
  %v518 = vadd.f32 %v383, %v417
  %v519 = vadd.f32 %v384, %v417
  %v520 = vadd.f32 %v385, %v417
  %v521 = vadd.f32 %v386, %v417
  %v522 = vadd.f32 %v387, %v417
  %v523 = vadd.f32 %v388, %v417
  %v524 = vadd.f32 %v389, %v417
  %v525 = vadd.f32 %v390, %v417
  %v526 = vadd.f32 %v391, %v417
  %v527 = vadd.f32 %v392, %v417
  %v528 = vadd.f32 %v393, %v417
  %v529 = vadd.f32 %v394, %v417
  %v530 = vadd.f32 %v395, %v417
  %v531 = vadd.f32 %v396, %v417
  %v532 = vadd.f32 %v397, %v417
  %v533 = vadd.f32 %v398, %v417
  %v534 = vadd.f32 %v399, %v417
  %v535 = vadd.f32 %v400, %v417
  %v536 = vadd.f32 %v401, %v417
  %v537 = vadd.f32 %v402, %v417
  %v538 = vadd.f32 %v403, %v417
  %v539 = vadd.f32 %v404, %v417
  %v540 = vadd.f32 %v405, %v417
  %v541 = vadd.f32 %v406, %v417
  %v542 = vadd.f32 %v407, %v417
  %v543 = vadd.f32 %v408, %v417
  %v544 = vadd.f32 %v409, %v417
  %v545 = vadd.f32 %v410, %v417
  %v546 = vadd.f32 %v411, %v417
  %v547 = vmax.f32 %v419, 0.0
  %v548 = vmax.f32 %v420, 0.0
  %v549 = vmax.f32 %v421, 0.0
  %v550 = vmax.f32 %v422, 0.0
  %v551 = vmax.f32 %v423, 0.0
  %v552 = vmax.f32 %v424, 0.0
  %v553 = vmax.f32 %v425, 0.0
  %v554 = vmax.f32 %v426, 0.0
  %v555 = vmax.f32 %v427, 0.0
  %v556 = vmax.f32 %v428, 0.0
  %v557 = vmax.f32 %v429, 0.0
  %v558 = vmax.f32 %v430, 0.0
  %v559 = vmax.f32 %v431, 0.0
  %v560 = vmax.f32 %v432, 0.0
  %v561 = vmax.f32 %v433, 0.0
  %v562 = vmax.f32 %v434, 0.0
  %v563 = vmax.f32 %v435, 0.0
  %v564 = vmax.f32 %v436, 0.0
  %v565 = vmax.f32 %v437, 0.0
  %v566 = vmax.f32 %v438, 0.0
  %v567 = vmax.f32 %v439, 0.0
  %v568 = vmax.f32 %v440, 0.0
  %v569 = vmax.f32 %v441, 0.0
  %v570 = vmax.f32 %v442, 0.0
  %v571 = vmax.f32 %v443, 0.0
  %v572 = vmax.f32 %v444, 0.0
  %v573 = vmax.f32 %v445, 0.0
  %v574 = vmax.f32 %v446, 0.0
  %v575 = vmax.f32 %v447, 0.0
  %v576 = vmax.f32 %v448, 0.0
  %v577 = vmax.f32 %v449, 0.0
  %v578 = vmax.f32 %v450, 0.0
  %v579 = vmax.f32 %v451, 0.0
  %v580 = vmax.f32 %v452, 0.0
  %v581 = vmax.f32 %v453, 0.0
  %v582 = vmax.f32 %v454, 0.0
  %v583 = vmax.f32 %v455, 0.0
  %v584 = vmax.f32 %v456, 0.0
  %v585 = vmax.f32 %v457, 0.0
  %v586 = vmax.f32 %v458, 0.0
  %v587 = vmax.f32 %v459, 0.0
  %v588 = vmax.f32 %v460, 0.0
  %v589 = vmax.f32 %v461, 0.0
  %v590 = vmax.f32 %v462, 0.0
  %v591 = vmax.f32 %v463, 0.0
  %v592 = vmax.f32 %v464, 0.0
  %v593 = vmax.f32 %v465, 0.0
  %v594 = vmax.f32 %v466, 0.0
  %v595 = vmax.f32 %v467, 0.0
  %v596 = vmax.f32 %v468, 0.0
  %v597 = vmax.f32 %v469, 0.0
  %v598 = vmax.f32 %v470, 0.0
  %v599 = vmax.f32 %v471, 0.0
  %v600 = vmax.f32 %v472, 0.0
  %v601 = vmax.f32 %v473, 0.0
  %v602 = vmax.f32 %v474, 0.0
  %v603 = vmax.f32 %v475, 0.0
  %v604 = vmax.f32 %v476, 0.0
  %v605 = vmax.f32 %v477, 0.0
  %v606 = vmax.f32 %v478, 0.0
  %v607 = vmax.f32 %v479, 0.0
  %v608 = vmax.f32 %v480, 0.0
  %v609 = vmax.f32 %v481, 0.0
  %v610 = vmax.f32 %v482, 0.0
  %v611 = vmax.f32 %v483, 0.0
  %v612 = vmax.f32 %v484, 0.0
  %v613 = vmax.f32 %v485, 0.0
  %v614 = vmax.f32 %v486, 0.0
  %v615 = vmax.f32 %v487, 0.0
  %v616 = vmax.f32 %v488, 0.0
  %v617 = vmax.f32 %v489, 0.0
  %v618 = vmax.f32 %v490, 0.0
  %v619 = vmax.f32 %v491, 0.0
  %v620 = vmax.f32 %v492, 0.0
  %v621 = vmax.f32 %v493, 0.0
  %v622 = vmax.f32 %v494, 0.0
  %v623 = vmax.f32 %v495, 0.0
  %v624 = vmax.f32 %v496, 0.0
  %v625 = vmax.f32 %v497, 0.0
  %v626 = vmax.f32 %v498, 0.0
  %v627 = vmax.f32 %v499, 0.0
  %v628 = vmax.f32 %v500, 0.0
  %v629 = vmax.f32 %v501, 0.0
  %v630 = vmax.f32 %v502, 0.0
  %v631 = vmax.f32 %v503, 0.0
  %v632 = vmax.f32 %v504, 0.0
  %v633 = vmax.f32 %v505, 0.0
  %v634 = vmax.f32 %v506, 0.0
  %v635 = vmax.f32 %v507, 0.0
  %v636 = vmax.f32 %v508, 0.0
  %v637 = vmax.f32 %v509, 0.0
  %v638 = vmax.f32 %v510, 0.0
  %v639 = vmax.f32 %v511, 0.0
  %v640 = vmax.f32 %v512, 0.0
  %v641 = vmax.f32 %v513, 0.0
  %v642 = vmax.f32 %v514, 0.0
  %v643 = vmax.f32 %v515, 0.0
  %v644 = vmax.f32 %v516, 0.0
  %v645 = vmax.f32 %v517, 0.0
  %v646 = vmax.f32 %v518, 0.0
  %v647 = vmax.f32 %v519, 0.0
  %v648 = vmax.f32 %v520, 0.0
  %v649 = vmax.f32 %v521, 0.0
  %v650 = vmax.f32 %v522, 0.0
  %v651 = vmax.f32 %v523, 0.0
  %v652 = vmax.f32 %v524, 0.0
  %v653 = vmax.f32 %v525, 0.0
  %v654 = vmax.f32 %v526, 0.0
  %v655 = vmax.f32 %v527, 0.0
  %v656 = vmax.f32 %v528, 0.0
  %v657 = vmax.f32 %v529, 0.0
  %v658 = vmax.f32 %v530, 0.0
  %v659 = vmax.f32 %v531, 0.0
  %v660 = vmax.f32 %v532, 0.0
  %v661 = vmax.f32 %v533, 0.0
  %v662 = vmax.f32 %v534, 0.0
  %v663 = vmax.f32 %v535, 0.0
  %v664 = vmax.f32 %v536, 0.0
  %v665 = vmax.f32 %v537, 0.0
  %v666 = vmax.f32 %v538, 0.0
  %v667 = vmax.f32 %v539, 0.0
  %v668 = vmax.f32 %v540, 0.0
  %v669 = vmax.f32 %v541, 0.0
  %v670 = vmax.f32 %v542, 0.0
  %v671 = vmax.f32 %v543, 0.0
  %v672 = vmax.f32 %v544, 0.0
  %v673 = vmax.f32 %v545, 0.0
  %v674 = vmax.f32 %v546, 0.0
  %v675 = vpack.c.bf16 %v548, %v547
  %v676 = vpack.c.bf16 %v550, %v549
  %v677 = vpack.c.bf16 %v552, %v551
  %v678 = vpack.c.bf16 %v554, %v553
  %v679 = vpack.c.bf16 %v556, %v555
  %v680 = vpack.c.bf16 %v558, %v557
  %v681 = vpack.c.bf16 %v560, %v559
  %v682 = vpack.c.bf16 %v562, %v561
  %v683 = vpack.c.bf16 %v564, %v563
  %v684 = vpack.c.bf16 %v566, %v565
  %v685 = vpack.c.bf16 %v568, %v567
  %v686 = vpack.c.bf16 %v570, %v569
  %v687 = vpack.c.bf16 %v572, %v571
  %v688 = vpack.c.bf16 %v574, %v573
  %v689 = vpack.c.bf16 %v576, %v575
  %v690 = vpack.c.bf16 %v578, %v577
  %v691 = vpack.c.bf16 %v580, %v579
  %v692 = vpack.c.bf16 %v582, %v581
  %v693 = vpack.c.bf16 %v584, %v583
  %v694 = vpack.c.bf16 %v586, %v585
  %v695 = vpack.c.bf16 %v588, %v587
  %v696 = vpack.c.bf16 %v590, %v589
  %v697 = vpack.c.bf16 %v592, %v591
  %v698 = vpack.c.bf16 %v594, %v593
  %v699 = vpack.c.bf16 %v596, %v595
  %v700 = vpack.c.bf16 %v598, %v597
  %v701 = vpack.c.bf16 %v600, %v599
  %v702 = vpack.c.bf16 %v602, %v601
  %v703 = vpack.c.bf16 %v604, %v603
  %v704 = vpack.c.bf16 %v606, %v605
  %v705 = vpack.c.bf16 %v608, %v607
  %v706 = vpack.c.bf16 %v610, %v609
  %v707 = vpack.c.bf16 %v612, %v611
  %v708 = vpack.c.bf16 %v614, %v613
  %v709 = vpack.c.bf16 %v616, %v615
  %v710 = vpack.c.bf16 %v618, %v617
  %v711 = vpack.c.bf16 %v620, %v619
  %v712 = vpack.c.bf16 %v622, %v621
  %v713 = vpack.c.bf16 %v624, %v623
  %v714 = vpack.c.bf16 %v626, %v625
  %v715 = vpack.c.bf16 %v628, %v627
  %v716 = vpack.c.bf16 %v630, %v629
  %v717 = vpack.c.bf16 %v632, %v631
  %v718 = vpack.c.bf16 %v634, %v633
  %v719 = vpack.c.bf16 %v636, %v635
  %v720 = vpack.c.bf16 %v638, %v637
  %v721 = vpack.c.bf16 %v640, %v639
  %v722 = vpack.c.bf16 %v642, %v641
  %v723 = vpack.c.bf16 %v644, %v643
  %v724 = vpack.c.bf16 %v646, %v645
  %v725 = vpack.c.bf16 %v648, %v647
  %v726 = vpack.c.bf16 %v650, %v649
  %v727 = vpack.c.bf16 %v652, %v651
  %v728 = vpack.c.bf16 %v654, %v653
  %v729 = vpack.c.bf16 %v656, %v655
  %v730 = vpack.c.bf16 %v658, %v657
  %v731 = vpack.c.bf16 %v660, %v659
  %v732 = vpack.c.bf16 %v662, %v661
  %v733 = vpack.c.bf16 %v664, %v663
  %v734 = vpack.c.bf16 %v666, %v665
  %v735 = vpack.c.bf16 %v668, %v667
  %v736 = vpack.c.bf16 %v670, %v669
  %v737 = vpack.c.bf16 %v672, %v671
  %v738 = vpack.c.bf16 %v674, %v673
  %v739 = vld [vmem:[%s3] sm:$0xf]
  %v740 = vld [vmem:[%s3 + $0x4] sm:$0xf]
  %v741 = vld [vmem:[%s3 + $0x8] sm:$0xf]
  %v742 = vld [vmem:[%s3 + $0xc] sm:$0xf]
  %v743 = vld [vmem:[%s3 + $0x10] sm:$0xf]
  %v744 = vld [vmem:[%s3 + $0x14] sm:$0xf]
  %v745 = vld [vmem:[%s3 + $0x18] sm:$0xf]
  %v746 = vld [vmem:[%s3 + $0x1c] sm:$0xf]
  %v747 = vld [vmem:[%s3 + $0x20] sm:$0xf]
  %v748 = vld [vmem:[%s3 + $0x24] sm:$0xf]
  %v749 = vld [vmem:[%s3 + $0x28] sm:$0xf]
  %v750 = vld [vmem:[%s3 + $0x2c] sm:$0xf]
  %v751 = vld [vmem:[%s3 + $0x30] sm:$0xf]
  %v752 = vld [vmem:[%s3 + $0x34] sm:$0xf]
  %v753 = vld [vmem:[%s3 + $0x38] sm:$0xf]
  %v754 = vld [vmem:[%s3 + $0x3c] sm:$0xf]
  %v771 = vunpack.c.l.b16 %v739
  %v772 = vunpack.c.l.b16 %v740
  %v773 = vunpack.c.l.b16 %v741
  %v774 = vunpack.c.l.b16 %v742
  %v775 = vunpack.c.l.b16 %v743
  %v776 = vunpack.c.l.b16 %v744
  %v777 = vunpack.c.l.b16 %v745
  %v778 = vunpack.c.l.b16 %v746
  %v779 = vunpack.c.l.b16 %v747
  %v780 = vunpack.c.l.b16 %v748
  %v781 = vunpack.c.l.b16 %v749
  %v782 = vunpack.c.l.b16 %v750
  %v783 = vunpack.c.l.b16 %v751
  %v784 = vunpack.c.l.b16 %v752
  %v785 = vunpack.c.l.b16 %v753
  %v786 = vunpack.c.l.b16 %v754
  %v787 = vpack.c.b16 %v772, %v771
  %v788 = vpack.c.b16 %v774, %v773
  %v789 = vpack.c.b16 %v776, %v775
  %v790 = vpack.c.b16 %v778, %v777
  %v791 = vpack.c.b16 %v780, %v779
  %v792 = vpack.c.b16 %v782, %v781
  %v793 = vpack.c.b16 %v784, %v783
  %v794 = vpack.c.b16 %v786, %v785
  %803 = vmatprep.subr.bf16.mxu0 0
  %804 = vmatpush1.bf16.msra.mxu0 %v787
  %805 = vmatprep.subr.bf16.mxu0 0
  %806 = vmatpush1.bf16.msra.mxu0 %v788
  %807 = vmatprep.subr.bf16.mxu0 0
  %808 = vmatpush1.bf16.msra.mxu0 %v789
  %809 = vmatprep.subr.bf16.mxu0 0
  %810 = vmatpush1.bf16.msra.mxu0 %v790
  %811 = vmatprep.subr.bf16.mxu0 0
  %812 = vmatpush1.bf16.msra.mxu0 %v791
  %813 = vmatprep.subr.bf16.mxu0 0
  %814 = vmatpush1.bf16.msra.mxu0 %v792
  %815 = vmatprep.subr.bf16.mxu0 0
  %816 = vmatpush1.bf16.msra.mxu0 %v793
  %817 = vmatprep.subr.bf16.mxu0 0
  %818 = vmatpush1.bf16.msra.mxu0 %v794
  %819 = vmatprep.subr.bf16.mxu0 0
  %820 = vmatpush1.bf16.msra.mxu0 0
  %821 = vmatprep.subr.bf16.mxu0 0
  %822 = vmatpush1.bf16.msra.mxu0 0
  %823 = vmatprep.subr.bf16.mxu0 0
  %824 = vmatpush1.bf16.msra.mxu0 0
  %825 = vmatprep.subr.bf16.mxu0 0
  %826 = vmatpush1.bf16.msra.mxu0 0
  %827 = vmatprep.subr.bf16.mxu0 0
  %828 = vmatpush1.bf16.msra.mxu0 0
  %829 = vmatprep.subr.bf16.mxu0 0
  %830 = vmatpush1.bf16.msra.mxu0 0
  %831 = vmatprep.subr.bf16.mxu0 0
  %832 = vmatpush1.bf16.msra.mxu0 0
  %833 = vmatprep.subr.bf16.mxu0 0
  %834 = vmatpush1.bf16.msra.mxu0 0
  %835 = vmatprep.mubr.bf16.mxu0 0
  %836 = vmatmul.mubr.bf16.gmra.mrb[0].mxu0 %v675
  %v837 = vpop.f32.mrb[0].mxu0
  %v838 = vadd.f32 0.0, %v837
  %v839 = vpop.f32.mrb[0].mxu0
  %v840 = vpop.f32.mrb[0].mxu0
  %v841 = vadd.f32 0.0, %v840
  %v842 = vpop.f32.mrb[0].mxu0
  %843 = vmatprep.mubr.bf16.mxu0 0
  %844 = vmatmul.mubr.bf16.gmra.mrb[0].mxu0 %v676
  %v845 = vpop.f32.mrb[0].mxu0
  %v846 = vadd.f32 0.0, %v845
  %v847 = vpop.f32.mrb[0].mxu0
  %v848 = vpop.f32.mrb[0].mxu0
  %v849 = vadd.f32 0.0, %v848
  %v850 = vpop.f32.mrb[0].mxu0
  %851 = vmatprep.mubr.bf16.mxu0 0
  %852 = vmatmul.mubr.bf16.gmra.mrb[0].mxu0 %v677
  %v853 = vpop.f32.mrb[0].mxu0
  %v854 = vadd.f32 0.0, %v853
  %v855 = vpop.f32.mrb[0].mxu0
  %v856 = vpop.f32.mrb[0].mxu0
  %v857 = vadd.f32 0.0, %v856
  %v858 = vpop.f32.mrb[0].mxu0
  %859 = vmatprep.mubr.bf16.mxu0 0
  %860 = vmatmul.mubr.bf16.gmra.mrb[0].mxu0 %v678
  %v861 = vpop.f32.mrb[0].mxu0
  %v862 = vadd.f32 0.0, %v861
  %v863 = vpop.f32.mrb[0].mxu0
  %v864 = vpop.f32.mrb[0].mxu0
  %v865 = vadd.f32 0.0, %v864
  %v866 = vpop.f32.mrb[0].mxu0
  %867 = vmatprep.mubr.bf16.mxu0 0
  %868 = vmatmul.mubr.bf16.gmra.mrb[0].mxu0 %v679
  %v869 = vpop.f32.mrb[0].mxu0
  %v870 = vadd.f32 0.0, %v869
  %v871 = vpop.f32.mrb[0].mxu0
  %v872 = vpop.f32.mrb[0].mxu0
  %v873 = vadd.f32 0.0, %v872
  %v874 = vpop.f32.mrb[0].mxu0
  %875 = vmatprep.mubr.bf16.mxu0 0
  %876 = vmatmul.mubr.bf16.gmra.mrb[0].mxu0 %v680
  %v877 = vpop.f32.mrb[0].mxu0
  %v878 = vadd.f32 0.0, %v877
  %v879 = vpop.f32.mrb[0].mxu0
  %v880 = vpop.f32.mrb[0].mxu0
  %v881 = vadd.f32 0.0, %v880
  %v882 = vpop.f32.mrb[0].mxu0
  %883 = vmatprep.mubr.bf16.mxu0 0
  %884 = vmatmul.mubr.bf16.gmra.mrb[0].mxu0 %v681
  %v885 = vpop.f32.mrb[0].mxu0
  %v886 = vadd.f32 0.0, %v885
  %v887 = vpop.f32.mrb[0].mxu0
  %v888 = vpop.f32.mrb[0].mxu0
  %v889 = vadd.f32 0.0, %v888
  %v890 = vpop.f32.mrb[0].mxu0
  %891 = vmatprep.mubr.bf16.mxu0 0
  %892 = vmatmul.mubr.bf16.gmra.mrb[0].mxu0 %v682
  %v893 = vpop.f32.mrb[0].mxu0
  %v894 = vadd.f32 0.0, %v893
  %v895 = vpop.f32.mrb[0].mxu0
  %v896 = vpop.f32.mrb[0].mxu0
  %v897 = vadd.f32 0.0, %v896
  %v898 = vpop.f32.mrb[0].mxu0
  %899 = vmatprep.mubr.bf16.mxu0 0
  %900 = vmatmul.mubr.bf16.gmra.mrb[0].mxu0 %v683
  %v901 = vpop.f32.mrb[0].mxu0
  %v902 = vadd.f32 0.0, %v901
  %v903 = vpop.f32.mrb[0].mxu0
  %v904 = vpop.f32.mrb[0].mxu0
  %v905 = vadd.f32 0.0, %v904
  %v906 = vpop.f32.mrb[0].mxu0
  %907 = vmatprep.mubr.bf16.mxu0 0
  %908 = vmatmul.mubr.bf16.gmra.mrb[0].mxu0 %v684
  %v909 = vpop.f32.mrb[0].mxu0
  %v910 = vadd.f32 0.0, %v909
  %v911 = vpop.f32.mrb[0].mxu0
  %v912 = vpop.f32.mrb[0].mxu0
  %v913 = vadd.f32 0.0, %v912
  %v914 = vpop.f32.mrb[0].mxu0
  %915 = vmatprep.mubr.bf16.mxu0 0
  %916 = vmatmul.mubr.bf16.gmra.mrb[0].mxu0 %v685
  %v917 = vpop.f32.mrb[0].mxu0
  %v918 = vadd.f32 0.0, %v917
  %v919 = vpop.f32.mrb[0].mxu0
  %v920 = vpop.f32.mrb[0].mxu0
  %v921 = vadd.f32 0.0, %v920
  %v922 = vpop.f32.mrb[0].mxu0
  %923 = vmatprep.mubr.bf16.mxu0 0
  %924 = vmatmul.mubr.bf16.gmra.mrb[0].mxu0 %v686
  %v925 = vpop.f32.mrb[0].mxu0
  %v926 = vadd.f32 0.0, %v925
  %v927 = vpop.f32.mrb[0].mxu0
  %v928 = vpop.f32.mrb[0].mxu0
  %v929 = vadd.f32 0.0, %v928
  %v930 = vpop.f32.mrb[0].mxu0
  %931 = vmatprep.mubr.bf16.mxu0 0
  %932 = vmatmul.mubr.bf16.gmra.mrb[0].mxu0 %v687
  %v933 = vpop.f32.mrb[0].mxu0
  %v934 = vadd.f32 0.0, %v933
  %v935 = vpop.f32.mrb[0].mxu0
  %v936 = vpop.f32.mrb[0].mxu0
  %v937 = vadd.f32 0.0, %v936
  %v938 = vpop.f32.mrb[0].mxu0
  %939 = vmatprep.mubr.bf16.mxu0 0
  %940 = vmatmul.mubr.bf16.gmra.mrb[0].mxu0 %v688
  %v941 = vpop.f32.mrb[0].mxu0
  %v942 = vadd.f32 0.0, %v941
  %v943 = vpop.f32.mrb[0].mxu0
  %v944 = vpop.f32.mrb[0].mxu0
  %v945 = vadd.f32 0.0, %v944
  %v946 = vpop.f32.mrb[0].mxu0
  %947 = vmatprep.mubr.bf16.mxu0 0
  %948 = vmatmul.mubr.bf16.gmra.mrb[0].mxu0 %v689
  %v949 = vpop.f32.mrb[0].mxu0
  %v950 = vadd.f32 0.0, %v949
  %v951 = vpop.f32.mrb[0].mxu0
  %v952 = vpop.f32.mrb[0].mxu0
  %v953 = vadd.f32 0.0, %v952
  %v954 = vpop.f32.mrb[0].mxu0
  %955 = vmatprep.mubr.bf16.mxu0 0
  %956 = vmatmul.mubr.bf16.gmra.mrb[0].mxu0 %v690
  %v957 = vpop.f32.mrb[0].mxu0
  %v958 = vadd.f32 0.0, %v957
  %v959 = vpop.f32.mrb[0].mxu0
  %v960 = vpop.f32.mrb[0].mxu0
  %v961 = vadd.f32 0.0, %v960
  %v962 = vpop.f32.mrb[0].mxu0
  %963 = vmatprep.mubr.bf16.mxu0 0
  %964 = vmatmul.mubr.bf16.gmra.mrb[0].mxu0 %v691
  %v965 = vpop.f32.mrb[0].mxu0
  %v966 = vadd.f32 0.0, %v965
  %v967 = vpop.f32.mrb[0].mxu0
  %v968 = vpop.f32.mrb[0].mxu0
  %v969 = vadd.f32 0.0, %v968
  %v970 = vpop.f32.mrb[0].mxu0
  %971 = vmatprep.mubr.bf16.mxu0 0
  %972 = vmatmul.mubr.bf16.gmra.mrb[0].mxu0 %v692
  %v973 = vpop.f32.mrb[0].mxu0
  %v974 = vadd.f32 0.0, %v973
  %v975 = vpop.f32.mrb[0].mxu0
  %v976 = vpop.f32.mrb[0].mxu0
  %v977 = vadd.f32 0.0, %v976
  %v978 = vpop.f32.mrb[0].mxu0
  %979 = vmatprep.mubr.bf16.mxu0 0
  %980 = vmatmul.mubr.bf16.gmra.mrb[0].mxu0 %v693
  %v981 = vpop.f32.mrb[0].mxu0
  %v982 = vadd.f32 0.0, %v981
  %v983 = vpop.f32.mrb[0].mxu0
  %v984 = vpop.f32.mrb[0].mxu0
  %v985 = vadd.f32 0.0, %v984
  %v986 = vpop.f32.mrb[0].mxu0
  %987 = vmatprep.mubr.bf16.mxu0 0
  %988 = vmatmul.mubr.bf16.gmra.mrb[0].mxu0 %v694
  %v989 = vpop.f32.mrb[0].mxu0
  %v990 = vadd.f32 0.0, %v989
  %v991 = vpop.f32.mrb[0].mxu0
  %v992 = vpop.f32.mrb[0].mxu0
  %v993 = vadd.f32 0.0, %v992
  %v994 = vpop.f32.mrb[0].mxu0
  %995 = vmatprep.mubr.bf16.mxu0 0
  %996 = vmatmul.mubr.bf16.gmra.mrb[0].mxu0 %v695
  %v997 = vpop.f32.mrb[0].mxu0
  %v998 = vadd.f32 0.0, %v997
  %v999 = vpop.f32.mrb[0].mxu0
  %v1000 = vpop.f32.mrb[0].mxu0
  %v1001 = vadd.f32 0.0, %v1000
  %v1002 = vpop.f32.mrb[0].mxu0
  %1003 = vmatprep.mubr.bf16.mxu0 0
  %1004 = vmatmul.mubr.bf16.gmra.mrb[0].mxu0 %v696
  %v1005 = vpop.f32.mrb[0].mxu0
  %v1006 = vadd.f32 0.0, %v1005
  %v1007 = vpop.f32.mrb[0].mxu0
  %v1008 = vpop.f32.mrb[0].mxu0
  %v1009 = vadd.f32 0.0, %v1008
  %v1010 = vpop.f32.mrb[0].mxu0
  %1011 = vmatprep.mubr.bf16.mxu0 0
  %1012 = vmatmul.mubr.bf16.gmra.mrb[0].mxu0 %v697
  %v1013 = vpop.f32.mrb[0].mxu0
  %v1014 = vadd.f32 0.0, %v1013
  %v1015 = vpop.f32.mrb[0].mxu0
  %v1016 = vpop.f32.mrb[0].mxu0
  %v1017 = vadd.f32 0.0, %v1016
  %v1018 = vpop.f32.mrb[0].mxu0
  %1019 = vmatprep.mubr.bf16.mxu0 0
  %1020 = vmatmul.mubr.bf16.gmra.mrb[0].mxu0 %v698
  %v1021 = vpop.f32.mrb[0].mxu0
  %v1022 = vadd.f32 0.0, %v1021
  %v1023 = vpop.f32.mrb[0].mxu0
  %v1024 = vpop.f32.mrb[0].mxu0
  %v1025 = vadd.f32 0.0, %v1024
  %v1026 = vpop.f32.mrb[0].mxu0
  %1027 = vmatprep.mubr.bf16.mxu0 0
  %1028 = vmatmul.mubr.bf16.gmra.mrb[0].mxu0 %v699
  %v1029 = vpop.f32.mrb[0].mxu0
  %v1030 = vadd.f32 0.0, %v1029
  %v1031 = vpop.f32.mrb[0].mxu0
  %v1032 = vpop.f32.mrb[0].mxu0
  %v1033 = vadd.f32 0.0, %v1032
  %v1034 = vpop.f32.mrb[0].mxu0
  %1035 = vmatprep.mubr.bf16.mxu0 0
  %1036 = vmatmul.mubr.bf16.gmra.mrb[0].mxu0 %v700
  %v1037 = vpop.f32.mrb[0].mxu0
  %v1038 = vadd.f32 0.0, %v1037
  %v1039 = vpop.f32.mrb[0].mxu0
  %v1040 = vpop.f32.mrb[0].mxu0
  %v1041 = vadd.f32 0.0, %v1040
  %v1042 = vpop.f32.mrb[0].mxu0
  %1043 = vmatprep.mubr.bf16.mxu0 0
  %1044 = vmatmul.mubr.bf16.gmra.mrb[0].mxu0 %v701
  %v1045 = vpop.f32.mrb[0].mxu0
  %v1046 = vadd.f32 0.0, %v1045
  %v1047 = vpop.f32.mrb[0].mxu0
  %v1048 = vpop.f32.mrb[0].mxu0
  %v1049 = vadd.f32 0.0, %v1048
  %v1050 = vpop.f32.mrb[0].mxu0
  %1051 = vmatprep.mubr.bf16.mxu0 0
  %1052 = vmatmul.mubr.bf16.gmra.mrb[0].mxu0 %v702
  %v1053 = vpop.f32.mrb[0].mxu0
  %v1054 = vadd.f32 0.0, %v1053
  %v1055 = vpop.f32.mrb[0].mxu0
  %v1056 = vpop.f32.mrb[0].mxu0
  %v1057 = vadd.f32 0.0, %v1056
  %v1058 = vpop.f32.mrb[0].mxu0
  %1059 = vmatprep.mubr.bf16.mxu0 0
  %1060 = vmatmul.mubr.bf16.gmra.mrb[0].mxu0 %v703
  %v1061 = vpop.f32.mrb[0].mxu0
  %v1062 = vadd.f32 0.0, %v1061
  %v1063 = vpop.f32.mrb[0].mxu0
  %v1064 = vpop.f32.mrb[0].mxu0
  %v1065 = vadd.f32 0.0, %v1064
  %v1066 = vpop.f32.mrb[0].mxu0
  %1067 = vmatprep.mubr.bf16.mxu0 0
  %1068 = vmatmul.mubr.bf16.gmra.mrb[0].mxu0 %v704
  %v1069 = vpop.f32.mrb[0].mxu0
  %v1070 = vadd.f32 0.0, %v1069
  %v1071 = vpop.f32.mrb[0].mxu0
  %v1072 = vpop.f32.mrb[0].mxu0
  %v1073 = vadd.f32 0.0, %v1072
  %v1074 = vpop.f32.mrb[0].mxu0
  %1075 = vmatprep.mubr.bf16.mxu0 0
  %1076 = vmatmul.mubr.bf16.gmra.mrb[0].mxu0 %v705
  %v1077 = vpop.f32.mrb[0].mxu0
  %v1078 = vadd.f32 0.0, %v1077
  %v1079 = vpop.f32.mrb[0].mxu0
  %v1080 = vpop.f32.mrb[0].mxu0
  %v1081 = vadd.f32 0.0, %v1080
  %v1082 = vpop.f32.mrb[0].mxu0
  %1083 = vmatprep.mubr.bf16.mxu0 0
  %1084 = vmatmul.mubr.bf16.gmra.mrb[0].mxu0 %v706
  %v1085 = vpop.f32.mrb[0].mxu0
  %v1086 = vadd.f32 0.0, %v1085
  %v1087 = vpop.f32.mrb[0].mxu0
  %v1088 = vpop.f32.mrb[0].mxu0
  %v1089 = vadd.f32 0.0, %v1088
  %v1090 = vpop.f32.mrb[0].mxu0
  %1091 = vmatprep.mubr.bf16.mxu0 0
  %1092 = vmatmul.mubr.bf16.gmra.mrb[0].mxu0 %v707
  %v1093 = vpop.f32.mrb[0].mxu0
  %v1094 = vadd.f32 0.0, %v1093
  %v1095 = vpop.f32.mrb[0].mxu0
  %v1096 = vpop.f32.mrb[0].mxu0
  %v1097 = vadd.f32 0.0, %v1096
  %v1098 = vpop.f32.mrb[0].mxu0
  %1099 = vmatprep.mubr.bf16.mxu0 0
  %1100 = vmatmul.mubr.bf16.gmra.mrb[0].mxu0 %v708
  %v1101 = vpop.f32.mrb[0].mxu0
  %v1102 = vadd.f32 0.0, %v1101
  %v1103 = vpop.f32.mrb[0].mxu0
  %v1104 = vpop.f32.mrb[0].mxu0
  %v1105 = vadd.f32 0.0, %v1104
  %v1106 = vpop.f32.mrb[0].mxu0
  %1107 = vmatprep.mubr.bf16.mxu0 0
  %1108 = vmatmul.mubr.bf16.gmra.mrb[0].mxu0 %v709
  %v1109 = vpop.f32.mrb[0].mxu0
  %v1110 = vadd.f32 0.0, %v1109
  %v1111 = vpop.f32.mrb[0].mxu0
  %v1112 = vpop.f32.mrb[0].mxu0
  %v1113 = vadd.f32 0.0, %v1112
  %v1114 = vpop.f32.mrb[0].mxu0
  %1115 = vmatprep.mubr.bf16.mxu0 0
  %1116 = vmatmul.mubr.bf16.gmra.mrb[0].mxu0 %v710
  %v1117 = vpop.f32.mrb[0].mxu0
  %v1118 = vadd.f32 0.0, %v1117
  %v1119 = vpop.f32.mrb[0].mxu0
  %v1120 = vpop.f32.mrb[0].mxu0
  %v1121 = vadd.f32 0.0, %v1120
  %v1122 = vpop.f32.mrb[0].mxu0
  %1123 = vmatprep.mubr.bf16.mxu0 0
  %1124 = vmatmul.mubr.bf16.gmra.mrb[0].mxu0 %v711
  %v1125 = vpop.f32.mrb[0].mxu0
  %v1126 = vadd.f32 0.0, %v1125
  %v1127 = vpop.f32.mrb[0].mxu0
  %v1128 = vpop.f32.mrb[0].mxu0
  %v1129 = vadd.f32 0.0, %v1128
  %v1130 = vpop.f32.mrb[0].mxu0
  %1131 = vmatprep.mubr.bf16.mxu0 0
  %1132 = vmatmul.mubr.bf16.gmra.mrb[0].mxu0 %v712
  %v1133 = vpop.f32.mrb[0].mxu0
  %v1134 = vadd.f32 0.0, %v1133
  %v1135 = vpop.f32.mrb[0].mxu0
  %v1136 = vpop.f32.mrb[0].mxu0
  %v1137 = vadd.f32 0.0, %v1136
  %v1138 = vpop.f32.mrb[0].mxu0
  %1139 = vmatprep.mubr.bf16.mxu0 0
  %1140 = vmatmul.mubr.bf16.gmra.mrb[0].mxu0 %v713
  %v1141 = vpop.f32.mrb[0].mxu0
  %v1142 = vadd.f32 0.0, %v1141
  %v1143 = vpop.f32.mrb[0].mxu0
  %v1144 = vpop.f32.mrb[0].mxu0
  %v1145 = vadd.f32 0.0, %v1144
  %v1146 = vpop.f32.mrb[0].mxu0
  %1147 = vmatprep.mubr.bf16.mxu0 0
  %1148 = vmatmul.mubr.bf16.gmra.mrb[0].mxu0 %v714
  %v1149 = vpop.f32.mrb[0].mxu0
  %v1150 = vadd.f32 0.0, %v1149
  %v1151 = vpop.f32.mrb[0].mxu0
  %v1152 = vpop.f32.mrb[0].mxu0
  %v1153 = vadd.f32 0.0, %v1152
  %v1154 = vpop.f32.mrb[0].mxu0
  %1155 = vmatprep.mubr.bf16.mxu0 0
  %1156 = vmatmul.mubr.bf16.gmra.mrb[0].mxu0 %v715
  %v1157 = vpop.f32.mrb[0].mxu0
  %v1158 = vadd.f32 0.0, %v1157
  %v1159 = vpop.f32.mrb[0].mxu0
  %v1160 = vpop.f32.mrb[0].mxu0
  %v1161 = vadd.f32 0.0, %v1160
  %v1162 = vpop.f32.mrb[0].mxu0
  %1163 = vmatprep.mubr.bf16.mxu0 0
  %1164 = vmatmul.mubr.bf16.gmra.mrb[0].mxu0 %v716
  %v1165 = vpop.f32.mrb[0].mxu0
  %v1166 = vadd.f32 0.0, %v1165
  %v1167 = vpop.f32.mrb[0].mxu0
  %v1168 = vpop.f32.mrb[0].mxu0
  %v1169 = vadd.f32 0.0, %v1168
  %v1170 = vpop.f32.mrb[0].mxu0
  %1171 = vmatprep.mubr.bf16.mxu0 0
  %1172 = vmatmul.mubr.bf16.gmra.mrb[0].mxu0 %v717
  %v1173 = vpop.f32.mrb[0].mxu0
  %v1174 = vadd.f32 0.0, %v1173
  %v1175 = vpop.f32.mrb[0].mxu0
  %v1176 = vpop.f32.mrb[0].mxu0
  %v1177 = vadd.f32 0.0, %v1176
  %v1178 = vpop.f32.mrb[0].mxu0
  %1179 = vmatprep.mubr.bf16.mxu0 0
  %1180 = vmatmul.mubr.bf16.gmra.mrb[0].mxu0 %v718
  %v1181 = vpop.f32.mrb[0].mxu0
  %v1182 = vadd.f32 0.0, %v1181
  %v1183 = vpop.f32.mrb[0].mxu0
  %v1184 = vpop.f32.mrb[0].mxu0
  %v1185 = vadd.f32 0.0, %v1184
  %v1186 = vpop.f32.mrb[0].mxu0
  %1187 = vmatprep.mubr.bf16.mxu0 0
  %1188 = vmatmul.mubr.bf16.gmra.mrb[0].mxu0 %v719
  %v1189 = vpop.f32.mrb[0].mxu0
  %v1190 = vadd.f32 0.0, %v1189
  %v1191 = vpop.f32.mrb[0].mxu0
  %v1192 = vpop.f32.mrb[0].mxu0
  %v1193 = vadd.f32 0.0, %v1192
  %v1194 = vpop.f32.mrb[0].mxu0
  %1195 = vmatprep.mubr.bf16.mxu0 0
  %1196 = vmatmul.mubr.bf16.gmra.mrb[0].mxu0 %v720
  %v1197 = vpop.f32.mrb[0].mxu0
  %v1198 = vadd.f32 0.0, %v1197
  %v1199 = vpop.f32.mrb[0].mxu0
  %v1200 = vpop.f32.mrb[0].mxu0
  %v1201 = vadd.f32 0.0, %v1200
  %v1202 = vpop.f32.mrb[0].mxu0
  %1203 = vmatprep.mubr.bf16.mxu0 0
  %1204 = vmatmul.mubr.bf16.gmra.mrb[0].mxu0 %v721
  %v1205 = vpop.f32.mrb[0].mxu0
  %v1206 = vadd.f32 0.0, %v1205
  %v1207 = vpop.f32.mrb[0].mxu0
  %v1208 = vpop.f32.mrb[0].mxu0
  %v1209 = vadd.f32 0.0, %v1208
  %v1210 = vpop.f32.mrb[0].mxu0
  %1211 = vmatprep.mubr.bf16.mxu0 0
  %1212 = vmatmul.mubr.bf16.gmra.mrb[0].mxu0 %v722
  %v1213 = vpop.f32.mrb[0].mxu0
  %v1214 = vadd.f32 0.0, %v1213
  %v1215 = vpop.f32.mrb[0].mxu0
  %v1216 = vpop.f32.mrb[0].mxu0
  %v1217 = vadd.f32 0.0, %v1216
  %v1218 = vpop.f32.mrb[0].mxu0
  %1219 = vmatprep.mubr.bf16.mxu0 0
  %1220 = vmatmul.mubr.bf16.gmra.mrb[0].mxu0 %v723
  %v1221 = vpop.f32.mrb[0].mxu0
  %v1222 = vadd.f32 0.0, %v1221
  %v1223 = vpop.f32.mrb[0].mxu0
  %v1224 = vpop.f32.mrb[0].mxu0
  %v1225 = vadd.f32 0.0, %v1224
  %v1226 = vpop.f32.mrb[0].mxu0
  %1227 = vmatprep.mubr.bf16.mxu0 0
  %1228 = vmatmul.mubr.bf16.gmra.mrb[0].mxu0 %v724
  %v1229 = vpop.f32.mrb[0].mxu0
  %v1230 = vadd.f32 0.0, %v1229
  %v1231 = vpop.f32.mrb[0].mxu0
  %v1232 = vpop.f32.mrb[0].mxu0
  %v1233 = vadd.f32 0.0, %v1232
  %v1234 = vpop.f32.mrb[0].mxu0
  %1235 = vmatprep.mubr.bf16.mxu0 0
  %1236 = vmatmul.mubr.bf16.gmra.mrb[0].mxu0 %v725
  %v1237 = vpop.f32.mrb[0].mxu0
  %v1238 = vadd.f32 0.0, %v1237
  %v1239 = vpop.f32.mrb[0].mxu0
  %v1240 = vpop.f32.mrb[0].mxu0
  %v1241 = vadd.f32 0.0, %v1240
  %v1242 = vpop.f32.mrb[0].mxu0
  %1243 = vmatprep.mubr.bf16.mxu0 0
  %1244 = vmatmul.mubr.bf16.gmra.mrb[0].mxu0 %v726
  %v1245 = vpop.f32.mrb[0].mxu0
  %v1246 = vadd.f32 0.0, %v1245
  %v1247 = vpop.f32.mrb[0].mxu0
  %v1248 = vpop.f32.mrb[0].mxu0
  %v1249 = vadd.f32 0.0, %v1248
  %v1250 = vpop.f32.mrb[0].mxu0
  %1251 = vmatprep.mubr.bf16.mxu0 0
  %1252 = vmatmul.mubr.bf16.gmra.mrb[0].mxu0 %v727
  %v1253 = vpop.f32.mrb[0].mxu0
  %v1254 = vadd.f32 0.0, %v1253
  %v1255 = vpop.f32.mrb[0].mxu0
  %v1256 = vpop.f32.mrb[0].mxu0
  %v1257 = vadd.f32 0.0, %v1256
  %v1258 = vpop.f32.mrb[0].mxu0
  %1259 = vmatprep.mubr.bf16.mxu0 0
  %1260 = vmatmul.mubr.bf16.gmra.mrb[0].mxu0 %v728
  %v1261 = vpop.f32.mrb[0].mxu0
  %v1262 = vadd.f32 0.0, %v1261
  %v1263 = vpop.f32.mrb[0].mxu0
  %v1264 = vpop.f32.mrb[0].mxu0
  %v1265 = vadd.f32 0.0, %v1264
  %v1266 = vpop.f32.mrb[0].mxu0
  %1267 = vmatprep.mubr.bf16.mxu0 0
  %1268 = vmatmul.mubr.bf16.gmra.mrb[0].mxu0 %v729
  %v1269 = vpop.f32.mrb[0].mxu0
  %v1270 = vadd.f32 0.0, %v1269
  %v1271 = vpop.f32.mrb[0].mxu0
  %v1272 = vpop.f32.mrb[0].mxu0
  %v1273 = vadd.f32 0.0, %v1272
  %v1274 = vpop.f32.mrb[0].mxu0
  %1275 = vmatprep.mubr.bf16.mxu0 0
  %1276 = vmatmul.mubr.bf16.gmra.mrb[0].mxu0 %v730
  %v1277 = vpop.f32.mrb[0].mxu0
  %v1278 = vadd.f32 0.0, %v1277
  %v1279 = vpop.f32.mrb[0].mxu0
  %v1280 = vpop.f32.mrb[0].mxu0
  %v1281 = vadd.f32 0.0, %v1280
  %v1282 = vpop.f32.mrb[0].mxu0
  %1283 = vmatprep.mubr.bf16.mxu0 0
  %1284 = vmatmul.mubr.bf16.gmra.mrb[0].mxu0 %v731
  %v1285 = vpop.f32.mrb[0].mxu0
  %v1286 = vadd.f32 0.0, %v1285
  %v1287 = vpop.f32.mrb[0].mxu0
  %v1288 = vpop.f32.mrb[0].mxu0
  %v1289 = vadd.f32 0.0, %v1288
  %v1290 = vpop.f32.mrb[0].mxu0
  %1291 = vmatprep.mubr.bf16.mxu0 0
  %1292 = vmatmul.mubr.bf16.gmra.mrb[0].mxu0 %v732
  %v1293 = vpop.f32.mrb[0].mxu0
  %v1294 = vadd.f32 0.0, %v1293
  %v1295 = vpop.f32.mrb[0].mxu0
  %v1296 = vpop.f32.mrb[0].mxu0
  %v1297 = vadd.f32 0.0, %v1296
  %v1298 = vpop.f32.mrb[0].mxu0
  %1299 = vmatprep.mubr.bf16.mxu0 0
  %1300 = vmatmul.mubr.bf16.gmra.mrb[0].mxu0 %v733
  %v1301 = vpop.f32.mrb[0].mxu0
  %v1302 = vadd.f32 0.0, %v1301
  %v1303 = vpop.f32.mrb[0].mxu0
  %v1304 = vpop.f32.mrb[0].mxu0
  %v1305 = vadd.f32 0.0, %v1304
  %v1306 = vpop.f32.mrb[0].mxu0
  %1307 = vmatprep.mubr.bf16.mxu0 0
  %1308 = vmatmul.mubr.bf16.gmra.mrb[0].mxu0 %v734
  %v1309 = vpop.f32.mrb[0].mxu0
  %v1310 = vadd.f32 0.0, %v1309
  %v1311 = vpop.f32.mrb[0].mxu0
  %v1312 = vpop.f32.mrb[0].mxu0
  %v1313 = vadd.f32 0.0, %v1312
  %v1314 = vpop.f32.mrb[0].mxu0
  %1315 = vmatprep.mubr.bf16.mxu0 0
  %1316 = vmatmul.mubr.bf16.gmra.mrb[0].mxu0 %v735
  %v1317 = vpop.f32.mrb[0].mxu0
  %v1318 = vadd.f32 0.0, %v1317
  %v1319 = vpop.f32.mrb[0].mxu0
  %v1320 = vpop.f32.mrb[0].mxu0
  %v1321 = vadd.f32 0.0, %v1320
  %v1322 = vpop.f32.mrb[0].mxu0
  %1323 = vmatprep.mubr.bf16.mxu0 0
  %1324 = vmatmul.mubr.bf16.gmra.mrb[0].mxu0 %v736
  %v1325 = vpop.f32.mrb[0].mxu0
  %v1326 = vadd.f32 0.0, %v1325
  %v1327 = vpop.f32.mrb[0].mxu0
  %v1328 = vpop.f32.mrb[0].mxu0
  %v1329 = vadd.f32 0.0, %v1328
  %v1330 = vpop.f32.mrb[0].mxu0
  %1331 = vmatprep.mubr.bf16.mxu0 0
  %1332 = vmatmul.mubr.bf16.gmra.mrb[0].mxu0 %v737
  %v1333 = vpop.f32.mrb[0].mxu0
  %v1334 = vadd.f32 0.0, %v1333
  %v1335 = vpop.f32.mrb[0].mxu0
  %v1336 = vpop.f32.mrb[0].mxu0
  %v1337 = vadd.f32 0.0, %v1336
  %v1338 = vpop.f32.mrb[0].mxu0
  %1339 = vmatprep.mubr.bf16.mxu0 0
  %1340 = vmatmul.mubr.bf16.gmra.mrb[0].mxu0 %v738
  %v1341 = vpop.f32.mrb[0].mxu0
  %v1342 = vadd.f32 0.0, %v1341
  %v1343 = vpop.f32.mrb[0].mxu0
  %v1344 = vpop.f32.mrb[0].mxu0
  %v1345 = vadd.f32 0.0, %v1344
  %v1346 = vpop.f32.mrb[0].mxu0
  %1347 = vdwg.mxu0
  %v1348 = vpack.c.bf16 %v841, %v838
  %v1349 = vpack.c.bf16 %v849, %v846
  %v1350 = vpack.c.bf16 %v857, %v854
  %v1351 = vpack.c.bf16 %v865, %v862
  %v1352 = vpack.c.bf16 %v873, %v870
  %v1353 = vpack.c.bf16 %v881, %v878
  %v1354 = vpack.c.bf16 %v889, %v886
  %v1355 = vpack.c.bf16 %v897, %v894
  %v1356 = vpack.c.bf16 %v905, %v902
  %v1357 = vpack.c.bf16 %v913, %v910
  %v1358 = vpack.c.bf16 %v921, %v918
  %v1359 = vpack.c.bf16 %v929, %v926
  %v1360 = vpack.c.bf16 %v937, %v934
  %v1361 = vpack.c.bf16 %v945, %v942
  %v1362 = vpack.c.bf16 %v953, %v950
  %v1363 = vpack.c.bf16 %v961, %v958
  %v1364 = vpack.c.bf16 %v969, %v966
  %v1365 = vpack.c.bf16 %v977, %v974
  %v1366 = vpack.c.bf16 %v985, %v982
  %v1367 = vpack.c.bf16 %v993, %v990
  %v1368 = vpack.c.bf16 %v1001, %v998
  %v1369 = vpack.c.bf16 %v1009, %v1006
  %v1370 = vpack.c.bf16 %v1017, %v1014
  %v1371 = vpack.c.bf16 %v1025, %v1022
  %v1372 = vpack.c.bf16 %v1033, %v1030
  %v1373 = vpack.c.bf16 %v1041, %v1038
  %v1374 = vpack.c.bf16 %v1049, %v1046
  %v1375 = vpack.c.bf16 %v1057, %v1054
  %v1376 = vpack.c.bf16 %v1065, %v1062
  %v1377 = vpack.c.bf16 %v1073, %v1070
  %v1378 = vpack.c.bf16 %v1081, %v1078
  %v1379 = vpack.c.bf16 %v1089, %v1086
  %v1380 = vpack.c.bf16 %v1097, %v1094
  %v1381 = vpack.c.bf16 %v1105, %v1102
  %v1382 = vpack.c.bf16 %v1113, %v1110
  %v1383 = vpack.c.bf16 %v1121, %v1118
  %v1384 = vpack.c.bf16 %v1129, %v1126
  %v1385 = vpack.c.bf16 %v1137, %v1134
  %v1386 = vpack.c.bf16 %v1145, %v1142
  %v1387 = vpack.c.bf16 %v1153, %v1150
  %v1388 = vpack.c.bf16 %v1161, %v1158
  %v1389 = vpack.c.bf16 %v1169, %v1166
  %v1390 = vpack.c.bf16 %v1177, %v1174
  %v1391 = vpack.c.bf16 %v1185, %v1182
  %v1392 = vpack.c.bf16 %v1193, %v1190
  %v1393 = vpack.c.bf16 %v1201, %v1198
  %v1394 = vpack.c.bf16 %v1209, %v1206
  %v1395 = vpack.c.bf16 %v1217, %v1214
  %v1396 = vpack.c.bf16 %v1225, %v1222
  %v1397 = vpack.c.bf16 %v1233, %v1230
  %v1398 = vpack.c.bf16 %v1241, %v1238
  %v1399 = vpack.c.bf16 %v1249, %v1246
  %v1400 = vpack.c.bf16 %v1257, %v1254
  %v1401 = vpack.c.bf16 %v1265, %v1262
  %v1402 = vpack.c.bf16 %v1273, %v1270
  %v1403 = vpack.c.bf16 %v1281, %v1278
  %v1404 = vpack.c.bf16 %v1289, %v1286
  %v1405 = vpack.c.bf16 %v1297, %v1294
  %v1406 = vpack.c.bf16 %v1305, %v1302
  %v1407 = vpack.c.bf16 %v1313, %v1310
  %v1408 = vpack.c.bf16 %v1321, %v1318
  %v1409 = vpack.c.bf16 %v1329, %v1326
  %v1410 = vpack.c.bf16 %v1337, %v1334
  %v1411 = vpack.c.bf16 %v1345, %v1342
  %v1476 = vunpack.c.l.b16 %v1348
  %v1477 = vunpack.c.h.b16 %v1348
  %v1478 = vunpack.c.l.b16 %v1349
  %v1479 = vunpack.c.h.b16 %v1349
  %v1480 = vunpack.c.l.b16 %v1350
  %v1481 = vunpack.c.h.b16 %v1350
  %v1482 = vunpack.c.l.b16 %v1351
  %v1483 = vunpack.c.h.b16 %v1351
  %v1484 = vunpack.c.l.b16 %v1352
  %v1485 = vunpack.c.h.b16 %v1352
  %v1486 = vunpack.c.l.b16 %v1353
  %v1487 = vunpack.c.h.b16 %v1353
  %v1488 = vunpack.c.l.b16 %v1354
  %v1489 = vunpack.c.h.b16 %v1354
  %v1490 = vunpack.c.l.b16 %v1355
  %v1491 = vunpack.c.h.b16 %v1355
  %v1492 = vunpack.c.l.b16 %v1356
  %v1493 = vunpack.c.h.b16 %v1356
  %v1494 = vunpack.c.l.b16 %v1357
  %v1495 = vunpack.c.h.b16 %v1357
  %v1496 = vunpack.c.l.b16 %v1358
  %v1497 = vunpack.c.h.b16 %v1358
  %v1498 = vunpack.c.l.b16 %v1359
  %v1499 = vunpack.c.h.b16 %v1359
  %v1500 = vunpack.c.l.b16 %v1360
  %v1501 = vunpack.c.h.b16 %v1360
  %v1502 = vunpack.c.l.b16 %v1361
  %v1503 = vunpack.c.h.b16 %v1361
  %v1504 = vunpack.c.l.b16 %v1362
  %v1505 = vunpack.c.h.b16 %v1362
  %v1506 = vunpack.c.l.b16 %v1363
  %v1507 = vunpack.c.h.b16 %v1363
  %v1508 = vunpack.c.l.b16 %v1364
  %v1509 = vunpack.c.h.b16 %v1364
  %v1510 = vunpack.c.l.b16 %v1365
  %v1511 = vunpack.c.h.b16 %v1365
  %v1512 = vunpack.c.l.b16 %v1366
  %v1513 = vunpack.c.h.b16 %v1366
  %v1514 = vunpack.c.l.b16 %v1367
  %v1515 = vunpack.c.h.b16 %v1367
  %v1516 = vunpack.c.l.b16 %v1368
  %v1517 = vunpack.c.h.b16 %v1368
  %v1518 = vunpack.c.l.b16 %v1369
  %v1519 = vunpack.c.h.b16 %v1369
  %v1520 = vunpack.c.l.b16 %v1370
  %v1521 = vunpack.c.h.b16 %v1370
  %v1522 = vunpack.c.l.b16 %v1371
  %v1523 = vunpack.c.h.b16 %v1371
  %v1524 = vunpack.c.l.b16 %v1372
  %v1525 = vunpack.c.h.b16 %v1372
  %v1526 = vunpack.c.l.b16 %v1373
  %v1527 = vunpack.c.h.b16 %v1373
  %v1528 = vunpack.c.l.b16 %v1374
  %v1529 = vunpack.c.h.b16 %v1374
  %v1530 = vunpack.c.l.b16 %v1375
  %v1531 = vunpack.c.h.b16 %v1375
  %v1532 = vunpack.c.l.b16 %v1376
  %v1533 = vunpack.c.h.b16 %v1376
  %v1534 = vunpack.c.l.b16 %v1377
  %v1535 = vunpack.c.h.b16 %v1377
  %v1536 = vunpack.c.l.b16 %v1378
  %v1537 = vunpack.c.h.b16 %v1378
  %v1538 = vunpack.c.l.b16 %v1379
  %v1539 = vunpack.c.h.b16 %v1379
  %v1540 = vunpack.c.l.b16 %v1380
  %v1541 = vunpack.c.h.b16 %v1380
  %v1542 = vunpack.c.l.b16 %v1381
  %v1543 = vunpack.c.h.b16 %v1381
  %v1544 = vunpack.c.l.b16 %v1382
  %v1545 = vunpack.c.h.b16 %v1382
  %v1546 = vunpack.c.l.b16 %v1383
  %v1547 = vunpack.c.h.b16 %v1383
  %v1548 = vunpack.c.l.b16 %v1384
  %v1549 = vunpack.c.h.b16 %v1384
  %v1550 = vunpack.c.l.b16 %v1385
  %v1551 = vunpack.c.h.b16 %v1385
  %v1552 = vunpack.c.l.b16 %v1386
  %v1553 = vunpack.c.h.b16 %v1386
  %v1554 = vunpack.c.l.b16 %v1387
  %v1555 = vunpack.c.h.b16 %v1387
  %v1556 = vunpack.c.l.b16 %v1388
  %v1557 = vunpack.c.h.b16 %v1388
  %v1558 = vunpack.c.l.b16 %v1389
  %v1559 = vunpack.c.h.b16 %v1389
  %v1560 = vunpack.c.l.b16 %v1390
  %v1561 = vunpack.c.h.b16 %v1390
  %v1562 = vunpack.c.l.b16 %v1391
  %v1563 = vunpack.c.h.b16 %v1391
  %v1564 = vunpack.c.l.b16 %v1392
  %v1565 = vunpack.c.h.b16 %v1392
  %v1566 = vunpack.c.l.b16 %v1393
  %v1567 = vunpack.c.h.b16 %v1393
  %v1568 = vunpack.c.l.b16 %v1394
  %v1569 = vunpack.c.h.b16 %v1394
  %v1570 = vunpack.c.l.b16 %v1395
  %v1571 = vunpack.c.h.b16 %v1395
  %v1572 = vunpack.c.l.b16 %v1396
  %v1573 = vunpack.c.h.b16 %v1396
  %v1574 = vunpack.c.l.b16 %v1397
  %v1575 = vunpack.c.h.b16 %v1397
  %v1576 = vunpack.c.l.b16 %v1398
  %v1577 = vunpack.c.h.b16 %v1398
  %v1578 = vunpack.c.l.b16 %v1399
  %v1579 = vunpack.c.h.b16 %v1399
  %v1580 = vunpack.c.l.b16 %v1400
  %v1581 = vunpack.c.h.b16 %v1400
  %v1582 = vunpack.c.l.b16 %v1401
  %v1583 = vunpack.c.h.b16 %v1401
  %v1584 = vunpack.c.l.b16 %v1402
  %v1585 = vunpack.c.h.b16 %v1402
  %v1586 = vunpack.c.l.b16 %v1403
  %v1587 = vunpack.c.h.b16 %v1403
  %v1588 = vunpack.c.l.b16 %v1404
  %v1589 = vunpack.c.h.b16 %v1404
  %v1590 = vunpack.c.l.b16 %v1405
  %v1591 = vunpack.c.h.b16 %v1405
  %v1592 = vunpack.c.l.b16 %v1406
  %v1593 = vunpack.c.h.b16 %v1406
  %v1594 = vunpack.c.l.b16 %v1407
  %v1595 = vunpack.c.h.b16 %v1407
  %v1596 = vunpack.c.l.b16 %v1408
  %v1597 = vunpack.c.h.b16 %v1408
  %v1598 = vunpack.c.l.b16 %v1409
  %v1599 = vunpack.c.h.b16 %v1409
  %v1600 = vunpack.c.l.b16 %v1410
  %v1601 = vunpack.c.h.b16 %v1410
  %v1602 = vunpack.c.l.b16 %v1411
  %v1603 = vunpack.c.h.b16 %v1411
  %v1604 = vpack.c.b16 %v1476, %v1476
  %v1605 = vpack.c.b16 %v1477, %v1477
  %v1606 = vpack.c.b16 %v1478, %v1478
  %v1607 = vpack.c.b16 %v1479, %v1479
  %v1608 = vpack.c.b16 %v1480, %v1480
  %v1609 = vpack.c.b16 %v1481, %v1481
  %v1610 = vpack.c.b16 %v1482, %v1482
  %v1611 = vpack.c.b16 %v1483, %v1483
  %v1612 = vpack.c.b16 %v1484, %v1484
  %v1613 = vpack.c.b16 %v1485, %v1485
  %v1614 = vpack.c.b16 %v1486, %v1486
  %v1615 = vpack.c.b16 %v1487, %v1487
  %v1616 = vpack.c.b16 %v1488, %v1488
  %v1617 = vpack.c.b16 %v1489, %v1489
  %v1618 = vpack.c.b16 %v1490, %v1490
  %v1619 = vpack.c.b16 %v1491, %v1491
  %v1620 = vpack.c.b16 %v1492, %v1492
  %v1621 = vpack.c.b16 %v1493, %v1493
  %v1622 = vpack.c.b16 %v1494, %v1494
  %v1623 = vpack.c.b16 %v1495, %v1495
  %v1624 = vpack.c.b16 %v1496, %v1496
  %v1625 = vpack.c.b16 %v1497, %v1497
  %v1626 = vpack.c.b16 %v1498, %v1498
  %v1627 = vpack.c.b16 %v1499, %v1499
  %v1628 = vpack.c.b16 %v1500, %v1500
  %v1629 = vpack.c.b16 %v1501, %v1501
  %v1630 = vpack.c.b16 %v1502, %v1502
  %v1631 = vpack.c.b16 %v1503, %v1503
  %v1632 = vpack.c.b16 %v1504, %v1504
  %v1633 = vpack.c.b16 %v1505, %v1505
  %v1634 = vpack.c.b16 %v1506, %v1506
  %v1635 = vpack.c.b16 %v1507, %v1507
  %v1636 = vpack.c.b16 %v1508, %v1508
  %v1637 = vpack.c.b16 %v1509, %v1509
  %v1638 = vpack.c.b16 %v1510, %v1510
  %v1639 = vpack.c.b16 %v1511, %v1511
  %v1640 = vpack.c.b16 %v1512, %v1512
  %v1641 = vpack.c.b16 %v1513, %v1513
  %v1642 = vpack.c.b16 %v1514, %v1514
  %v1643 = vpack.c.b16 %v1515, %v1515
  %v1644 = vpack.c.b16 %v1516, %v1516
  %v1645 = vpack.c.b16 %v1517, %v1517
  %v1646 = vpack.c.b16 %v1518, %v1518
  %v1647 = vpack.c.b16 %v1519, %v1519
  %v1648 = vpack.c.b16 %v1520, %v1520
  %v1649 = vpack.c.b16 %v1521, %v1521
  %v1650 = vpack.c.b16 %v1522, %v1522
  %v1651 = vpack.c.b16 %v1523, %v1523
  %v1652 = vpack.c.b16 %v1524, %v1524
  %v1653 = vpack.c.b16 %v1525, %v1525
  %v1654 = vpack.c.b16 %v1526, %v1526
  %v1655 = vpack.c.b16 %v1527, %v1527
  %v1656 = vpack.c.b16 %v1528, %v1528
  %v1657 = vpack.c.b16 %v1529, %v1529
  %v1658 = vpack.c.b16 %v1530, %v1530
  %v1659 = vpack.c.b16 %v1531, %v1531
  %v1660 = vpack.c.b16 %v1532, %v1532
  %v1661 = vpack.c.b16 %v1533, %v1533
  %v1662 = vpack.c.b16 %v1534, %v1534
  %v1663 = vpack.c.b16 %v1535, %v1535
  %v1664 = vpack.c.b16 %v1536, %v1536
  %v1665 = vpack.c.b16 %v1537, %v1537
  %v1666 = vpack.c.b16 %v1538, %v1538
  %v1667 = vpack.c.b16 %v1539, %v1539
  %v1668 = vpack.c.b16 %v1540, %v1540
  %v1669 = vpack.c.b16 %v1541, %v1541
  %v1670 = vpack.c.b16 %v1542, %v1542
  %v1671 = vpack.c.b16 %v1543, %v1543
  %v1672 = vpack.c.b16 %v1544, %v1544
  %v1673 = vpack.c.b16 %v1545, %v1545
  %v1674 = vpack.c.b16 %v1546, %v1546
  %v1675 = vpack.c.b16 %v1547, %v1547
  %v1676 = vpack.c.b16 %v1548, %v1548
  %v1677 = vpack.c.b16 %v1549, %v1549
  %v1678 = vpack.c.b16 %v1550, %v1550
  %v1679 = vpack.c.b16 %v1551, %v1551
  %v1680 = vpack.c.b16 %v1552, %v1552
  %v1681 = vpack.c.b16 %v1553, %v1553
  %v1682 = vpack.c.b16 %v1554, %v1554
  %v1683 = vpack.c.b16 %v1555, %v1555
  %v1684 = vpack.c.b16 %v1556, %v1556
  %v1685 = vpack.c.b16 %v1557, %v1557
  %v1686 = vpack.c.b16 %v1558, %v1558
  %v1687 = vpack.c.b16 %v1559, %v1559
  %v1688 = vpack.c.b16 %v1560, %v1560
  %v1689 = vpack.c.b16 %v1561, %v1561
  %v1690 = vpack.c.b16 %v1562, %v1562
  %v1691 = vpack.c.b16 %v1563, %v1563
  %v1692 = vpack.c.b16 %v1564, %v1564
  %v1693 = vpack.c.b16 %v1565, %v1565
  %v1694 = vpack.c.b16 %v1566, %v1566
  %v1695 = vpack.c.b16 %v1567, %v1567
  %v1696 = vpack.c.b16 %v1568, %v1568
  %v1697 = vpack.c.b16 %v1569, %v1569
  %v1698 = vpack.c.b16 %v1570, %v1570
  %v1699 = vpack.c.b16 %v1571, %v1571
  %v1700 = vpack.c.b16 %v1572, %v1572
  %v1701 = vpack.c.b16 %v1573, %v1573
  %v1702 = vpack.c.b16 %v1574, %v1574
  %v1703 = vpack.c.b16 %v1575, %v1575
  %v1704 = vpack.c.b16 %v1576, %v1576
  %v1705 = vpack.c.b16 %v1577, %v1577
  %v1706 = vpack.c.b16 %v1578, %v1578
  %v1707 = vpack.c.b16 %v1579, %v1579
  %v1708 = vpack.c.b16 %v1580, %v1580
  %v1709 = vpack.c.b16 %v1581, %v1581
  %v1710 = vpack.c.b16 %v1582, %v1582
  %v1711 = vpack.c.b16 %v1583, %v1583
  %v1712 = vpack.c.b16 %v1584, %v1584
  %v1713 = vpack.c.b16 %v1585, %v1585
  %v1714 = vpack.c.b16 %v1586, %v1586
  %v1715 = vpack.c.b16 %v1587, %v1587
  %v1716 = vpack.c.b16 %v1588, %v1588
  %v1717 = vpack.c.b16 %v1589, %v1589
  %v1718 = vpack.c.b16 %v1590, %v1590
  %v1719 = vpack.c.b16 %v1591, %v1591
  %v1720 = vpack.c.b16 %v1592, %v1592
  %v1721 = vpack.c.b16 %v1593, %v1593
  %v1722 = vpack.c.b16 %v1594, %v1594
  %v1723 = vpack.c.b16 %v1595, %v1595
  %v1724 = vpack.c.b16 %v1596, %v1596
  %v1725 = vpack.c.b16 %v1597, %v1597
  %v1726 = vpack.c.b16 %v1598, %v1598
  %v1727 = vpack.c.b16 %v1599, %v1599
  %v1728 = vpack.c.b16 %v1600, %v1600
  %v1729 = vpack.c.b16 %v1601, %v1601
  %v1730 = vpack.c.b16 %v1602, %v1602
  %v1731 = vpack.c.b16 %v1603, %v1603
  %1860 = vst [vmem:[%s4] sm:$0xf] %v1604
  %1861 = vst [vmem:[%s4 + $0x4] sm:$0xf] %v1605
  %1862 = vst [vmem:[%s4 + $0x8] sm:$0xf] %v1606
  %1863 = vst [vmem:[%s4 + $0xc] sm:$0xf] %v1607
  %1864 = vst [vmem:[%s4 + $0x10] sm:$0xf] %v1608
  %1865 = vst [vmem:[%s4 + $0x14] sm:$0xf] %v1609
  %1866 = vst [vmem:[%s4 + $0x18] sm:$0xf] %v1610
  %1867 = vst [vmem:[%s4 + $0x1c] sm:$0xf] %v1611
  %1868 = vst [vmem:[%s4 + $0x20] sm:$0xf] %v1612
  %1869 = vst [vmem:[%s4 + $0x24] sm:$0xf] %v1613
  %1870 = vst [vmem:[%s4 + $0x28] sm:$0xf] %v1614
  %1871 = vst [vmem:[%s4 + $0x2c] sm:$0xf] %v1615
  %1872 = vst [vmem:[%s4 + $0x30] sm:$0xf] %v1616
  %1873 = vst [vmem:[%s4 + $0x34] sm:$0xf] %v1617
  %1874 = vst [vmem:[%s4 + $0x38] sm:$0xf] %v1618
  %1875 = vst [vmem:[%s4 + $0x3c] sm:$0xf] %v1619
  %1876 = vst [vmem:[%s4 + $0x40] sm:$0xf] %v1620
  %1877 = vst [vmem:[%s4 + $0x44] sm:$0xf] %v1621
  %1878 = vst [vmem:[%s4 + $0x48] sm:$0xf] %v1622
  %1879 = vst [vmem:[%s4 + $0x4c] sm:$0xf] %v1623
  %1880 = vst [vmem:[%s4 + $0x50] sm:$0xf] %v1624
  %1881 = vst [vmem:[%s4 + $0x54] sm:$0xf] %v1625
  %1882 = vst [vmem:[%s4 + $0x58] sm:$0xf] %v1626
  %1883 = vst [vmem:[%s4 + $0x5c] sm:$0xf] %v1627
  %1884 = vst [vmem:[%s4 + $0x60] sm:$0xf] %v1628
  %1885 = vst [vmem:[%s4 + $0x64] sm:$0xf] %v1629
  %1886 = vst [vmem:[%s4 + $0x68] sm:$0xf] %v1630
  %1887 = vst [vmem:[%s4 + $0x6c] sm:$0xf] %v1631
  %1888 = vst [vmem:[%s4 + $0x70] sm:$0xf] %v1632
  %1889 = vst [vmem:[%s4 + $0x74] sm:$0xf] %v1633
  %1890 = vst [vmem:[%s4 + $0x78] sm:$0xf] %v1634
  %1891 = vst [vmem:[%s4 + $0x7c] sm:$0xf] %v1635
  %1892 = vst [vmem:[%s4 + $0x80] sm:$0xf] %v1636
  %1893 = vst [vmem:[%s4 + $0x84] sm:$0xf] %v1637
  %1894 = vst [vmem:[%s4 + $0x88] sm:$0xf] %v1638
  %1895 = vst [vmem:[%s4 + $0x8c] sm:$0xf] %v1639
  %1896 = vst [vmem:[%s4 + $0x90] sm:$0xf] %v1640
  %1897 = vst [vmem:[%s4 + $0x94] sm:$0xf] %v1641
  %1898 = vst [vmem:[%s4 + $0x98] sm:$0xf] %v1642
  %1899 = vst [vmem:[%s4 + $0x9c] sm:$0xf] %v1643
  %1900 = vst [vmem:[%s4 + $0xa0] sm:$0xf] %v1644
  %1901 = vst [vmem:[%s4 + $0xa4] sm:$0xf] %v1645
  %1902 = vst [vmem:[%s4 + $0xa8] sm:$0xf] %v1646
  %1903 = vst [vmem:[%s4 + $0xac] sm:$0xf] %v1647
  %1904 = vst [vmem:[%s4 + $0xb0] sm:$0xf] %v1648
  %1905 = vst [vmem:[%s4 + $0xb4] sm:$0xf] %v1649
  %1906 = vst [vmem:[%s4 + $0xb8] sm:$0xf] %v1650
  %1907 = vst [vmem:[%s4 + $0xbc] sm:$0xf] %v1651
  %1908 = vst [vmem:[%s4 + $0xc0] sm:$0xf] %v1652
  %1909 = vst [vmem:[%s4 + $0xc4] sm:$0xf] %v1653
  %1910 = vst [vmem:[%s4 + $0xc8] sm:$0xf] %v1654
  %1911 = vst [vmem:[%s4 + $0xcc] sm:$0xf] %v1655
  %1912 = vst [vmem:[%s4 + $0xd0] sm:$0xf] %v1656
  %1913 = vst [vmem:[%s4 + $0xd4] sm:$0xf] %v1657
  %1914 = vst [vmem:[%s4 + $0xd8] sm:$0xf] %v1658
  %1915 = vst [vmem:[%s4 + $0xdc] sm:$0xf] %v1659
  %1916 = vst [vmem:[%s4 + $0xe0] sm:$0xf] %v1660
  %1917 = vst [vmem:[%s4 + $0xe4] sm:$0xf] %v1661
  %1918 = vst [vmem:[%s4 + $0xe8] sm:$0xf] %v1662
  %1919 = vst [vmem:[%s4 + $0xec] sm:$0xf] %v1663
  %1920 = vst [vmem:[%s4 + $0xf0] sm:$0xf] %v1664
  %1921 = vst [vmem:[%s4 + $0xf4] sm:$0xf] %v1665
  %1922 = vst [vmem:[%s4 + $0xf8] sm:$0xf] %v1666
  %1923 = vst [vmem:[%s4 + $0xfc] sm:$0xf] %v1667
  %1924 = vst [vmem:[%s4 + $0x100] sm:$0xf] %v1668
  %1925 = vst [vmem:[%s4 + $0x104] sm:$0xf] %v1669
  %1926 = vst [vmem:[%s4 + $0x108] sm:$0xf] %v1670
  %1927 = vst [vmem:[%s4 + $0x10c] sm:$0xf] %v1671
  %1928 = vst [vmem:[%s4 + $0x110] sm:$0xf] %v1672
  %1929 = vst [vmem:[%s4 + $0x114] sm:$0xf] %v1673
  %1930 = vst [vmem:[%s4 + $0x118] sm:$0xf] %v1674
  %1931 = vst [vmem:[%s4 + $0x11c] sm:$0xf] %v1675
  %1932 = vst [vmem:[%s4 + $0x120] sm:$0xf] %v1676
  %1933 = vst [vmem:[%s4 + $0x124] sm:$0xf] %v1677
  %1934 = vst [vmem:[%s4 + $0x128] sm:$0xf] %v1678
  %1935 = vst [vmem:[%s4 + $0x12c] sm:$0xf] %v1679
  %1936 = vst [vmem:[%s4 + $0x130] sm:$0xf] %v1680
  %1937 = vst [vmem:[%s4 + $0x134] sm:$0xf] %v1681
  %1938 = vst [vmem:[%s4 + $0x138] sm:$0xf] %v1682
  %1939 = vst [vmem:[%s4 + $0x13c] sm:$0xf] %v1683
  %1940 = vst [vmem:[%s4 + $0x140] sm:$0xf] %v1684
  %1941 = vst [vmem:[%s4 + $0x144] sm:$0xf] %v1685
  %1942 = vst [vmem:[%s4 + $0x148] sm:$0xf] %v1686
  %1943 = vst [vmem:[%s4 + $0x14c] sm:$0xf] %v1687
  %1944 = vst [vmem:[%s4 + $0x150] sm:$0xf] %v1688
  %1945 = vst [vmem:[%s4 + $0x154] sm:$0xf] %v1689
  %1946 = vst [vmem:[%s4 + $0x158] sm:$0xf] %v1690
  %1947 = vst [vmem:[%s4 + $0x15c] sm:$0xf] %v1691
  %1948 = vst [vmem:[%s4 + $0x160] sm:$0xf] %v1692
  %1949 = vst [vmem:[%s4 + $0x164] sm:$0xf] %v1693
  %1950 = vst [vmem:[%s4 + $0x168] sm:$0xf] %v1694
  %1951 = vst [vmem:[%s4 + $0x16c] sm:$0xf] %v1695
  %1952 = vst [vmem:[%s4 + $0x170] sm:$0xf] %v1696
  %1953 = vst [vmem:[%s4 + $0x174] sm:$0xf] %v1697
  %1954 = vst [vmem:[%s4 + $0x178] sm:$0xf] %v1698
  %1955 = vst [vmem:[%s4 + $0x17c] sm:$0xf] %v1699
  %1956 = vst [vmem:[%s4 + $0x180] sm:$0xf] %v1700
  %1957 = vst [vmem:[%s4 + $0x184] sm:$0xf] %v1701
  %1958 = vst [vmem:[%s4 + $0x188] sm:$0xf] %v1702
  %1959 = vst [vmem:[%s4 + $0x18c] sm:$0xf] %v1703
  %1960 = vst [vmem:[%s4 + $0x190] sm:$0xf] %v1704
  %1961 = vst [vmem:[%s4 + $0x194] sm:$0xf] %v1705
  %1962 = vst [vmem:[%s4 + $0x198] sm:$0xf] %v1706
  %1963 = vst [vmem:[%s4 + $0x19c] sm:$0xf] %v1707
  %1964 = vst [vmem:[%s4 + $0x1a0] sm:$0xf] %v1708
  %1965 = vst [vmem:[%s4 + $0x1a4] sm:$0xf] %v1709
  %1966 = vst [vmem:[%s4 + $0x1a8] sm:$0xf] %v1710
  %1967 = vst [vmem:[%s4 + $0x1ac] sm:$0xf] %v1711
  %1968 = vst [vmem:[%s4 + $0x1b0] sm:$0xf] %v1712
  %1969 = vst [vmem:[%s4 + $0x1b4] sm:$0xf] %v1713
  %1970 = vst [vmem:[%s4 + $0x1b8] sm:$0xf] %v1714
  %1971 = vst [vmem:[%s4 + $0x1bc] sm:$0xf] %v1715
  %1972 = vst [vmem:[%s4 + $0x1c0] sm:$0xf] %v1716
  %1973 = vst [vmem:[%s4 + $0x1c4] sm:$0xf] %v1717
  %1974 = vst [vmem:[%s4 + $0x1c8] sm:$0xf] %v1718
  %1975 = vst [vmem:[%s4 + $0x1cc] sm:$0xf] %v1719
  %1976 = vst [vmem:[%s4 + $0x1d0] sm:$0xf] %v1720
  %1977 = vst [vmem:[%s4 + $0x1d4] sm:$0xf] %v1721
  %1978 = vst [vmem:[%s4 + $0x1d8] sm:$0xf] %v1722
  %1979 = vst [vmem:[%s4 + $0x1dc] sm:$0xf] %v1723
  %1980 = vst [vmem:[%s4 + $0x1e0] sm:$0xf] %v1724
  %1981 = vst [vmem:[%s4 + $0x1e4] sm:$0xf] %v1725
  %1982 = vst [vmem:[%s4 + $0x1e8] sm:$0xf] %v1726
  %1983 = vst [vmem:[%s4 + $0x1ec] sm:$0xf] %v1727
  %1984 = vst [vmem:[%s4 + $0x1f0] sm:$0xf] %v1728
  %1985 = vst [vmem:[%s4 + $0x1f4] sm:$0xf] %v1729
  %1986 = vst [vmem:[%s4 + $0x1f8] sm:$0xf] %v1730
  %1987 = vst [vmem:[%s4 + $0x1fc] sm:$0xf] %v1731
  %p1988 = scmp.ne.s32.totalorder 0, 0
  // Predicated region
  $region18: #{downscale_forward.3} parent=0 // pred_check
    %p1989 = pneg %p1988
  $region19: #{downscale_forward.3} parent=0 // pred_check_branch
    %1991 = sbr.rel (%p1989) target = $region21
  $region20: #{downscale_forward.3} parent=0 // pred_region
    %v1992 = vadd.f32 %v838, %v841
    %v1993 = vadd.f32 %v1992, %v846
    %v1994 = vadd.f32 %v1993, %v849
    %v1995 = vadd.f32 %v1994, %v854
    %v1996 = vadd.f32 %v1995, %v857
    %v1997 = vadd.f32 %v1996, %v862
    %v1998 = vadd.f32 %v1997, %v865
    %v1999 = vadd.f32 %v1998, %v870
    %v2000 = vadd.f32 %v1999, %v873
    %v2001 = vadd.f32 %v2000, %v878
    %v2002 = vadd.f32 %v2001, %v881
    %v2003 = vadd.f32 %v2002, %v886
    %v2004 = vadd.f32 %v2003, %v889
    %v2005 = vadd.f32 %v2004, %v894
    %v2006 = vadd.f32 %v2005, %v897
    %v2007 = vadd.f32 %v2006, %v902
    %v2008 = vadd.f32 %v2007, %v905
    %v2009 = vadd.f32 %v2008, %v910
    %v2010 = vadd.f32 %v2009, %v913
    %v2011 = vadd.f32 %v2010, %v918
    %v2012 = vadd.f32 %v2011, %v921
    %v2013 = vadd.f32 %v2012, %v926
    %v2014 = vadd.f32 %v2013, %v929
    %v2015 = vadd.f32 %v2014, %v934
    %v2016 = vadd.f32 %v2015, %v937
    %v2017 = vadd.f32 %v2016, %v942
    %v2018 = vadd.f32 %v2017, %v945
    %v2019 = vadd.f32 %v2018, %v950
    %v2020 = vadd.f32 %v2019, %v953
    %v2021 = vadd.f32 %v2020, %v958
    %v2022 = vadd.f32 %v2021, %v961
    %v2023 = vadd.f32 %v2022, %v966
    %v2024 = vadd.f32 %v2023, %v969
    %v2025 = vadd.f32 %v2024, %v974
    %v2026 = vadd.f32 %v2025, %v977
    %v2027 = vadd.f32 %v2026, %v982
    %v2028 = vadd.f32 %v2027, %v985
    %v2029 = vadd.f32 %v2028, %v990
    %v2030 = vadd.f32 %v2029, %v993
    %v2031 = vadd.f32 %v2030, %v998
    %v2032 = vadd.f32 %v2031, %v1001
    %v2033 = vadd.f32 %v2032, %v1006
    %v2034 = vadd.f32 %v2033, %v1009
    %v2035 = vadd.f32 %v2034, %v1014
    %v2036 = vadd.f32 %v2035, %v1017
    %v2037 = vadd.f32 %v2036, %v1022
    %v2038 = vadd.f32 %v2037, %v1025
    %v2039 = vadd.f32 %v2038, %v1030
    %v2040 = vadd.f32 %v2039, %v1033
    %v2041 = vadd.f32 %v2040, %v1038
    %v2042 = vadd.f32 %v2041, %v1041
    %v2043 = vadd.f32 %v2042, %v1046
    %v2044 = vadd.f32 %v2043, %v1049
    %v2045 = vadd.f32 %v2044, %v1054
    %v2046 = vadd.f32 %v2045, %v1057
    %v2047 = vadd.f32 %v2046, %v1062
    %v2048 = vadd.f32 %v2047, %v1065
    %v2049 = vadd.f32 %v2048, %v1070
    %v2050 = vadd.f32 %v2049, %v1073
    %v2051 = vadd.f32 %v2050, %v1078
    %v2052 = vadd.f32 %v2051, %v1081
    %v2053 = vadd.f32 %v2052, %v1086
    %v2054 = vadd.f32 %v2053, %v1089
    %v2055 = vadd.f32 %v2054, %v1094
    %v2056 = vadd.f32 %v2055, %v1097
    %v2057 = vadd.f32 %v2056, %v1102
    %v2058 = vadd.f32 %v2057, %v1105
    %v2059 = vadd.f32 %v2058, %v1110
    %v2060 = vadd.f32 %v2059, %v1113
    %v2061 = vadd.f32 %v2060, %v1118
    %v2062 = vadd.f32 %v2061, %v1121
    %v2063 = vadd.f32 %v2062, %v1126
    %v2064 = vadd.f32 %v2063, %v1129
    %v2065 = vadd.f32 %v2064, %v1134
    %v2066 = vadd.f32 %v2065, %v1137
    %v2067 = vadd.f32 %v2066, %v1142
    %v2068 = vadd.f32 %v2067, %v1145
    %v2069 = vadd.f32 %v2068, %v1150
    %v2070 = vadd.f32 %v2069, %v1153
    %v2071 = vadd.f32 %v2070, %v1158
    %v2072 = vadd.f32 %v2071, %v1161
    %v2073 = vadd.f32 %v2072, %v1166
    %v2074 = vadd.f32 %v2073, %v1169
    %v2075 = vadd.f32 %v2074, %v1174
    %v2076 = vadd.f32 %v2075, %v1177
    %v2077 = vadd.f32 %v2076, %v1182
    %v2078 = vadd.f32 %v2077, %v1185
    %v2079 = vadd.f32 %v2078, %v1190
    %v2080 = vadd.f32 %v2079, %v1193
    %v2081 = vadd.f32 %v2080, %v1198
    %v2082 = vadd.f32 %v2081, %v1201
    %v2083 = vadd.f32 %v2082, %v1206
    %v2084 = vadd.f32 %v2083, %v1209
    %v2085 = vadd.f32 %v2084, %v1214
    %v2086 = vadd.f32 %v2085, %v1217
    %v2087 = vadd.f32 %v2086, %v1222
    %v2088 = vadd.f32 %v2087, %v1225
    %v2089 = vadd.f32 %v2088, %v1230
    %v2090 = vadd.f32 %v2089, %v1233
    %v2091 = vadd.f32 %v2090, %v1238
    %v2092 = vadd.f32 %v2091, %v1241
    %v2093 = vadd.f32 %v2092, %v1246
    %v2094 = vadd.f32 %v2093, %v1249
    %v2095 = vadd.f32 %v2094, %v1254
    %v2096 = vadd.f32 %v2095, %v1257
    %v2097 = vadd.f32 %v2096, %v1262
    %v2098 = vadd.f32 %v2097, %v1265
    %v2099 = vadd.f32 %v2098, %v1270
    %v2100 = vadd.f32 %v2099, %v1273
    %v2101 = vadd.f32 %v2100, %v1278
    %v2102 = vadd.f32 %v2101, %v1281
    %v2103 = vadd.f32 %v2102, %v1286
    %v2104 = vadd.f32 %v2103, %v1289
    %v2105 = vadd.f32 %v2104, %v1294
    %v2106 = vadd.f32 %v2105, %v1297
    %v2107 = vadd.f32 %v2106, %v1302
    %v2108 = vadd.f32 %v2107, %v1305
    %v2109 = vadd.f32 %v2108, %v1310
    %v2110 = vadd.f32 %v2109, %v1313
    %v2111 = vadd.f32 %v2110, %v1318
    %v2112 = vadd.f32 %v2111, %v1321
    %v2113 = vadd.f32 %v2112, %v1326
    %v2114 = vadd.f32 %v2113, %v1329
    %v2115 = vadd.f32 %v2114, %v1334
    %v2116 = vadd.f32 %v2115, %v1337
    %v2117 = vadd.f32 %v2116, %v1342
    %v2118 = vadd.f32 %v2117, %v1345
    %v2119 = vrot.slane %v2118, 4
    %v2120 = vadd.f32 %v2118, %v2119
    %v2121 = vrot.slane %v2120, 2
    %v2122 = vadd.f32 %v2120, %v2121
    %v2123 = vrot.slane %v2122, 1
    %v2124 = vadd.f32 %v2122, %v2123
    %2125 = vst [vmem:[%s5] sm:$0x1] %v2124
    %v2126 = vmul.f32 %v838, %v838
    %v2127 = vmul.f32 %v841, %v841
    %v2128 = vmul.f32 %v846, %v846
    %v2129 = vmul.f32 %v849, %v849
    %v2130 = vmul.f32 %v854, %v854
    %v2131 = vmul.f32 %v857, %v857
    %v2132 = vmul.f32 %v862, %v862
    %v2133 = vmul.f32 %v865, %v865
    %v2134 = vmul.f32 %v870, %v870
    %v2135 = vmul.f32 %v873, %v873
    %v2136 = vmul.f32 %v878, %v878
    %v2137 = vmul.f32 %v881, %v881
    %v2138 = vmul.f32 %v886, %v886
    %v2139 = vmul.f32 %v889, %v889
    %v2140 = vmul.f32 %v894, %v894
    %v2141 = vmul.f32 %v897, %v897
    %v2142 = vmul.f32 %v902, %v902
    %v2143 = vmul.f32 %v905, %v905
    %v2144 = vmul.f32 %v910, %v910
    %v2145 = vmul.f32 %v913, %v913
    %v2146 = vmul.f32 %v918, %v918
    %v2147 = vmul.f32 %v921, %v921
    %v2148 = vmul.f32 %v926, %v926
    %v2149 = vmul.f32 %v929, %v929
    %v2150 = vmul.f32 %v934, %v934
    %v2151 = vmul.f32 %v937, %v937
    %v2152 = vmul.f32 %v942, %v942
    %v2153 = vmul.f32 %v945, %v945
    %v2154 = vmul.f32 %v950, %v950
    %v2155 = vmul.f32 %v953, %v953
    %v2156 = vmul.f32 %v958, %v958
    %v2157 = vmul.f32 %v961, %v961
    %v2158 = vmul.f32 %v966, %v966
    %v2159 = vmul.f32 %v969, %v969
    %v2160 = vmul.f32 %v974, %v974
    %v2161 = vmul.f32 %v977, %v977
    %v2162 = vmul.f32 %v982, %v982
    %v2163 = vmul.f32 %v985, %v985
    %v2164 = vmul.f32 %v990, %v990
    %v2165 = vmul.f32 %v993, %v993
    %v2166 = vmul.f32 %v998, %v998
    %v2167 = vmul.f32 %v1001, %v1001
    %v2168 = vmul.f32 %v1006, %v1006
    %v2169 = vmul.f32 %v1009, %v1009
    %v2170 = vmul.f32 %v1014, %v1014
    %v2171 = vmul.f32 %v1017, %v1017
    %v2172 = vmul.f32 %v1022, %v1022
    %v2173 = vmul.f32 %v1025, %v1025
    %v2174 = vmul.f32 %v1030, %v1030
    %v2175 = vmul.f32 %v1033, %v1033
    %v2176 = vmul.f32 %v1038, %v1038
    %v2177 = vmul.f32 %v1041, %v1041
    %v2178 = vmul.f32 %v1046, %v1046
    %v2179 = vmul.f32 %v1049, %v1049
    %v2180 = vmul.f32 %v1054, %v1054
    %v2181 = vmul.f32 %v1057, %v1057
    %v2182 = vmul.f32 %v1062, %v1062
    %v2183 = vmul.f32 %v1065, %v1065
    %v2184 = vmul.f32 %v1070, %v1070
    %v2185 = vmul.f32 %v1073, %v1073
    %v2186 = vmul.f32 %v1078, %v1078
    %v2187 = vmul.f32 %v1081, %v1081
    %v2188 = vmul.f32 %v1086, %v1086
    %v2189 = vmul.f32 %v1089, %v1089
    %v2190 = vmul.f32 %v1094, %v1094
    %v2191 = vmul.f32 %v1097, %v1097
    %v2192 = vmul.f32 %v1102, %v1102
    %v2193 = vmul.f32 %v1105, %v1105
    %v2194 = vmul.f32 %v1110, %v1110
    %v2195 = vmul.f32 %v1113, %v1113
    %v2196 = vmul.f32 %v1118, %v1118
    %v2197 = vmul.f32 %v1121, %v1121
    %v2198 = vmul.f32 %v1126, %v1126
    %v2199 = vmul.f32 %v1129, %v1129
    %v2200 = vmul.f32 %v1134, %v1134
    %v2201 = vmul.f32 %v1137, %v1137
    %v2202 = vmul.f32 %v1142, %v1142
    %v2203 = vmul.f32 %v1145, %v1145
    %v2204 = vmul.f32 %v1150, %v1150
    %v2205 = vmul.f32 %v1153, %v1153
    %v2206 = vmul.f32 %v1158, %v1158
    %v2207 = vmul.f32 %v1161, %v1161
    %v2208 = vmul.f32 %v1166, %v1166
    %v2209 = vmul.f32 %v1169, %v1169
    %v2210 = vmul.f32 %v1174, %v1174
    %v2211 = vmul.f32 %v1177, %v1177
    %v2212 = vmul.f32 %v1182, %v1182
    %v2213 = vmul.f32 %v1185, %v1185
    %v2214 = vmul.f32 %v1190, %v1190
    %v2215 = vmul.f32 %v1193, %v1193
    %v2216 = vmul.f32 %v1198, %v1198
    %v2217 = vmul.f32 %v1201, %v1201
    %v2218 = vmul.f32 %v1206, %v1206
    %v2219 = vmul.f32 %v1209, %v1209
    %v2220 = vmul.f32 %v1214, %v1214
    %v2221 = vmul.f32 %v1217, %v1217
    %v2222 = vmul.f32 %v1222, %v1222
    %v2223 = vmul.f32 %v1225, %v1225
    %v2224 = vmul.f32 %v1230, %v1230
    %v2225 = vmul.f32 %v1233, %v1233
    %v2226 = vmul.f32 %v1238, %v1238
    %v2227 = vmul.f32 %v1241, %v1241
    %v2228 = vmul.f32 %v1246, %v1246
    %v2229 = vmul.f32 %v1249, %v1249
    %v2230 = vmul.f32 %v1254, %v1254
    %v2231 = vmul.f32 %v1257, %v1257
    %v2232 = vmul.f32 %v1262, %v1262
    %v2233 = vmul.f32 %v1265, %v1265
    %v2234 = vmul.f32 %v1270, %v1270
    %v2235 = vmul.f32 %v1273, %v1273
    %v2236 = vmul.f32 %v1278, %v1278
    %v2237 = vmul.f32 %v1281, %v1281
    %v2238 = vmul.f32 %v1286, %v1286
    %v2239 = vmul.f32 %v1289, %v1289
    %v2240 = vmul.f32 %v1294, %v1294
    %v2241 = vmul.f32 %v1297, %v1297
    %v2242 = vmul.f32 %v1302, %v1302
    %v2243 = vmul.f32 %v1305, %v1305
    %v2244 = vmul.f32 %v1310, %v1310
    %v2245 = vmul.f32 %v1313, %v1313
    %v2246 = vmul.f32 %v1318, %v1318
    %v2247 = vmul.f32 %v1321, %v1321
    %v2248 = vmul.f32 %v1326, %v1326
    %v2249 = vmul.f32 %v1329, %v1329
    %v2250 = vmul.f32 %v1334, %v1334
    %v2251 = vmul.f32 %v1337, %v1337
    %v2252 = vmul.f32 %v1342, %v1342
    %v2253 = vmul.f32 %v1345, %v1345
    %v2254 = vadd.f32 %v2126, %v2127
    %v2255 = vadd.f32 %v2254, %v2128
    %v2256 = vadd.f32 %v2255, %v2129
    %v2257 = vadd.f32 %v2256, %v2130
    %v2258 = vadd.f32 %v2257, %v2131
    %v2259 = vadd.f32 %v2258, %v2132
    %v2260 = vadd.f32 %v2259, %v2133
    %v2261 = vadd.f32 %v2260, %v2134
    %v2262 = vadd.f32 %v2261, %v2135
    %v2263 = vadd.f32 %v2262, %v2136
    %v2264 = vadd.f32 %v2263, %v2137
    %v2265 = vadd.f32 %v2264, %v2138
    %v2266 = vadd.f32 %v2265, %v2139
    %v2267 = vadd.f32 %v2266, %v2140
    %v2268 = vadd.f32 %v2267, %v2141
    %v2269 = vadd.f32 %v2268, %v2142
    %v2270 = vadd.f32 %v2269, %v2143
    %v2271 = vadd.f32 %v2270, %v2144
    %v2272 = vadd.f32 %v2271, %v2145
    %v2273 = vadd.f32 %v2272, %v2146
    %v2274 = vadd.f32 %v2273, %v2147
    %v2275 = vadd.f32 %v2274, %v2148
    %v2276 = vadd.f32 %v2275, %v2149
    %v2277 = vadd.f32 %v2276, %v2150
    %v2278 = vadd.f32 %v2277, %v2151
    %v2279 = vadd.f32 %v2278, %v2152
    %v2280 = vadd.f32 %v2279, %v2153
    %v2281 = vadd.f32 %v2280, %v2154
    %v2282 = vadd.f32 %v2281, %v2155
    %v2283 = vadd.f32 %v2282, %v2156
    %v2284 = vadd.f32 %v2283, %v2157
    %v2285 = vadd.f32 %v2284, %v2158
    %v2286 = vadd.f32 %v2285, %v2159
    %v2287 = vadd.f32 %v2286, %v2160
    %v2288 = vadd.f32 %v2287, %v2161
    %v2289 = vadd.f32 %v2288, %v2162
    %v2290 = vadd.f32 %v2289, %v2163
    %v2291 = vadd.f32 %v2290, %v2164
    %v2292 = vadd.f32 %v2291, %v2165
    %v2293 = vadd.f32 %v2292, %v2166
    %v2294 = vadd.f32 %v2293, %v2167
    %v2295 = vadd.f32 %v2294, %v2168
    %v2296 = vadd.f32 %v2295, %v2169
    %v2297 = vadd.f32 %v2296, %v2170
    %v2298 = vadd.f32 %v2297, %v2171
    %v2299 = vadd.f32 %v2298, %v2172
    %v2300 = vadd.f32 %v2299, %v2173
    %v2301 = vadd.f32 %v2300, %v2174
    %v2302 = vadd.f32 %v2301, %v2175
    %v2303 = vadd.f32 %v2302, %v2176
    %v2304 = vadd.f32 %v2303, %v2177
    %v2305 = vadd.f32 %v2304, %v2178
    %v2306 = vadd.f32 %v2305, %v2179
    %v2307 = vadd.f32 %v2306, %v2180
    %v2308 = vadd.f32 %v2307, %v2181
    %v2309 = vadd.f32 %v2308, %v2182
    %v2310 = vadd.f32 %v2309, %v2183
    %v2311 = vadd.f32 %v2310, %v2184
    %v2312 = vadd.f32 %v2311, %v2185
    %v2313 = vadd.f32 %v2312, %v2186
    %v2314 = vadd.f32 %v2313, %v2187
    %v2315 = vadd.f32 %v2314, %v2188
    %v2316 = vadd.f32 %v2315, %v2189
    %v2317 = vadd.f32 %v2316, %v2190
    %v2318 = vadd.f32 %v2317, %v2191
    %v2319 = vadd.f32 %v2318, %v2192
    %v2320 = vadd.f32 %v2319, %v2193
    %v2321 = vadd.f32 %v2320, %v2194
    %v2322 = vadd.f32 %v2321, %v2195
    %v2323 = vadd.f32 %v2322, %v2196
    %v2324 = vadd.f32 %v2323, %v2197
    %v2325 = vadd.f32 %v2324, %v2198
    %v2326 = vadd.f32 %v2325, %v2199
    %v2327 = vadd.f32 %v2326, %v2200
    %v2328 = vadd.f32 %v2327, %v2201
    %v2329 = vadd.f32 %v2328, %v2202
    %v2330 = vadd.f32 %v2329, %v2203
    %v2331 = vadd.f32 %v2330, %v2204
    %v2332 = vadd.f32 %v2331, %v2205
    %v2333 = vadd.f32 %v2332, %v2206
    %v2334 = vadd.f32 %v2333, %v2207
    %v2335 = vadd.f32 %v2334, %v2208
    %v2336 = vadd.f32 %v2335, %v2209
    %v2337 = vadd.f32 %v2336, %v2210
    %v2338 = vadd.f32 %v2337, %v2211
    %v2339 = vadd.f32 %v2338, %v2212
    %v2340 = vadd.f32 %v2339, %v2213
    %v2341 = vadd.f32 %v2340, %v2214
    %v2342 = vadd.f32 %v2341, %v2215
    %v2343 = vadd.f32 %v2342, %v2216
    %v2344 = vadd.f32 %v2343, %v2217
    %v2345 = vadd.f32 %v2344, %v2218
    %v2346 = vadd.f32 %v2345, %v2219
    %v2347 = vadd.f32 %v2346, %v2220
    %v2348 = vadd.f32 %v2347, %v2221
    %v2349 = vadd.f32 %v2348, %v2222
    %v2350 = vadd.f32 %v2349, %v2223
    %v2351 = vadd.f32 %v2350, %v2224
    %v2352 = vadd.f32 %v2351, %v2225
    %v2353 = vadd.f32 %v2352, %v2226
    %v2354 = vadd.f32 %v2353, %v2227
    %v2355 = vadd.f32 %v2354, %v2228
    %v2356 = vadd.f32 %v2355, %v2229
    %v2357 = vadd.f32 %v2356, %v2230
    %v2358 = vadd.f32 %v2357, %v2231
    %v2359 = vadd.f32 %v2358, %v2232
    %v2360 = vadd.f32 %v2359, %v2233
    %v2361 = vadd.f32 %v2360, %v2234
    %v2362 = vadd.f32 %v2361, %v2235
    %v2363 = vadd.f32 %v2362, %v2236
    %v2364 = vadd.f32 %v2363, %v2237
    %v2365 = vadd.f32 %v2364, %v2238
    %v2366 = vadd.f32 %v2365, %v2239
    %v2367 = vadd.f32 %v2366, %v2240
    %v2368 = vadd.f32 %v2367, %v2241
    %v2369 = vadd.f32 %v2368, %v2242
    %v2370 = vadd.f32 %v2369, %v2243
    %v2371 = vadd.f32 %v2370, %v2244
    %v2372 = vadd.f32 %v2371, %v2245
    %v2373 = vadd.f32 %v2372, %v2246
    %v2374 = vadd.f32 %v2373, %v2247
    %v2375 = vadd.f32 %v2374, %v2248
    %v2376 = vadd.f32 %v2375, %v2249
    %v2377 = vadd.f32 %v2376, %v2250
    %v2378 = vadd.f32 %v2377, %v2251
    %v2379 = vadd.f32 %v2378, %v2252
    %v2380 = vadd.f32 %v2379, %v2253
    %v2381 = vrot.slane %v2380, 4
    %v2382 = vadd.f32 %v2380, %v2381
    %v2383 = vrot.slane %v2382, 2
    %v2384 = vadd.f32 %v2382, %v2383
    %v2385 = vrot.slane %v2384, 1
    %v2386 = vadd.f32 %v2384, %v2385
    %2387 = vst [vmem:[%s6] sm:$0x1] %v2386
  $region21: #{downscale_forward.3} parent=0 // pred_fallthru
    _
  %p2388 = scmp.eq.s32.totalorder 0, 0
  // Predicated region
  $region22: #{downscale_forward.3} parent=0 // pred_check
    %p2389 = pneg %p2388
  $region23: #{downscale_forward.3} parent=0 // pred_check_branch
    %2391 = sbr.rel (%p2389) target = $region25
  $region24: #{downscale_forward.3} parent=0 // pred_region
    %s2392 = smul.u32 0, 1024
    %v2393 = vlaneseq
    %v2394 = vshrl.u32 %v2393, 7
    %v2395 = vadd.s32 %v2394, 8
    %v2396 = vadd.s32 %v2394, 16
    %v2397 = vadd.s32 %v2394, 24
    %v2398 = vadd.s32 %v2394, 32
    %v2399 = vadd.s32 %v2394, 40
    %v2400 = vadd.s32 %v2394, 48
    %v2401 = vadd.s32 %v2394, 56
    %v2402 = vadd.s32 %v2394, 64
    %v2403 = vadd.s32 %v2394, 72
    %v2404 = vadd.s32 %v2394, 80
    %v2405 = vadd.s32 %v2394, 88
    %v2406 = vadd.s32 %v2394, 96
    %v2407 = vadd.s32 %v2394, 104
    %v2408 = vadd.s32 %v2394, 112
    %v2409 = vadd.s32 %v2394, 120
    %v2410 = vadd.s32 %v2394, 128
    %v2411 = vadd.s32 %v2394, 136
    %v2412 = vadd.s32 %v2394, 144
    %v2413 = vadd.s32 %v2394, 152
    %v2414 = vadd.s32 %v2394, 160
    %v2415 = vadd.s32 %v2394, 168
    %v2416 = vadd.s32 %v2394, 176
    %v2417 = vadd.s32 %v2394, 184
    %v2418 = vadd.s32 %v2394, 192
    %v2419 = vadd.s32 %v2394, 200
    %v2420 = vadd.s32 %v2394, 208
    %v2421 = vadd.s32 %v2394, 216
    %v2422 = vadd.s32 %v2394, 224
    %v2423 = vadd.s32 %v2394, 232
    %v2424 = vadd.s32 %v2394, 240
    %v2425 = vadd.s32 %v2394, 248
    %v2426 = vadd.s32 %v2394, 256
    %v2427 = vadd.s32 %v2394, 264
    %v2428 = vadd.s32 %v2394, 272
    %v2429 = vadd.s32 %v2394, 280
    %v2430 = vadd.s32 %v2394, 288
    %v2431 = vadd.s32 %v2394, 296
    %v2432 = vadd.s32 %v2394, 304
    %v2433 = vadd.s32 %v2394, 312
    %v2434 = vadd.s32 %v2394, 320
    %v2435 = vadd.s32 %v2394, 328
    %v2436 = vadd.s32 %v2394, 336
    %v2437 = vadd.s32 %v2394, 344
    %v2438 = vadd.s32 %v2394, 352
    %v2439 = vadd.s32 %v2394, 360
    %v2440 = vadd.s32 %v2394, 368
    %v2441 = vadd.s32 %v2394, 376
    %v2442 = vadd.s32 %v2394, 384
    %v2443 = vadd.s32 %v2394, 392
    %v2444 = vadd.s32 %v2394, 400
    %v2445 = vadd.s32 %v2394, 408
    %v2446 = vadd.s32 %v2394, 416
    %v2447 = vadd.s32 %v2394, 424
    %v2448 = vadd.s32 %v2394, 432
    %v2449 = vadd.s32 %v2394, 440
    %v2450 = vadd.s32 %v2394, 448
    %v2451 = vadd.s32 %v2394, 456
    %v2452 = vadd.s32 %v2394, 464
    %v2453 = vadd.s32 %v2394, 472
    %v2454 = vadd.s32 %v2394, 480
    %v2455 = vadd.s32 %v2394, 488
    %v2456 = vadd.s32 %v2394, 496
    %v2457 = vadd.s32 %v2394, 504
    %v2458 = vadd.s32 %v2394, 512
    %v2459 = vadd.s32 %v2394, 520
    %v2460 = vadd.s32 %v2394, 528
    %v2461 = vadd.s32 %v2394, 536
    %v2462 = vadd.s32 %v2394, 544
    %v2463 = vadd.s32 %v2394, 552
    %v2464 = vadd.s32 %v2394, 560
    %v2465 = vadd.s32 %v2394, 568
    %v2466 = vadd.s32 %v2394, 576
    %v2467 = vadd.s32 %v2394, 584
    %v2468 = vadd.s32 %v2394, 592
    %v2469 = vadd.s32 %v2394, 600
    %v2470 = vadd.s32 %v2394, 608
    %v2471 = vadd.s32 %v2394, 616
    %v2472 = vadd.s32 %v2394, 624
    %v2473 = vadd.s32 %v2394, 632
    %v2474 = vadd.s32 %v2394, 640
    %v2475 = vadd.s32 %v2394, 648
    %v2476 = vadd.s32 %v2394, 656
    %v2477 = vadd.s32 %v2394, 664
    %v2478 = vadd.s32 %v2394, 672
    %v2479 = vadd.s32 %v2394, 680
    %v2480 = vadd.s32 %v2394, 688
    %v2481 = vadd.s32 %v2394, 696
    %v2482 = vadd.s32 %v2394, 704
    %v2483 = vadd.s32 %v2394, 712
    %v2484 = vadd.s32 %v2394, 720
    %v2485 = vadd.s32 %v2394, 728
    %v2486 = vadd.s32 %v2394, 736
    %v2487 = vadd.s32 %v2394, 744
    %v2488 = vadd.s32 %v2394, 752
    %v2489 = vadd.s32 %v2394, 760
    %v2490 = vadd.s32 %v2394, 768
    %v2491 = vadd.s32 %v2394, 776
    %v2492 = vadd.s32 %v2394, 784
    %v2493 = vadd.s32 %v2394, 792
    %v2494 = vadd.s32 %v2394, 800
    %v2495 = vadd.s32 %v2394, 808
    %v2496 = vadd.s32 %v2394, 816
    %v2497 = vadd.s32 %v2394, 824
    %v2498 = vadd.s32 %v2394, 832
    %v2499 = vadd.s32 %v2394, 840
    %v2500 = vadd.s32 %v2394, 848
    %v2501 = vadd.s32 %v2394, 856
    %v2502 = vadd.s32 %v2394, 864
    %v2503 = vadd.s32 %v2394, 872
    %v2504 = vadd.s32 %v2394, 880
    %v2505 = vadd.s32 %v2394, 888
    %v2506 = vadd.s32 %v2394, 896
    %v2507 = vadd.s32 %v2394, 904
    %v2508 = vadd.s32 %v2394, 912
    %v2509 = vadd.s32 %v2394, 920
    %v2510 = vadd.s32 %v2394, 928
    %v2511 = vadd.s32 %v2394, 936
    %v2512 = vadd.s32 %v2394, 944
    %v2513 = vadd.s32 %v2394, 952
    %v2514 = vadd.s32 %v2394, 960
    %v2515 = vadd.s32 %v2394, 968
    %v2516 = vadd.s32 %v2394, 976
    %v2517 = vadd.s32 %v2394, 984
    %v2518 = vadd.s32 %v2394, 992
    %v2519 = vadd.s32 %v2394, 1000
    %v2520 = vadd.s32 %v2394, 1008
    %v2521 = vadd.s32 %v2394, 1016
    %v2522 = vstv %s2392
    %v2523 = vadd.s32 %v2522, %v2394
    %v2524 = vadd.s32 %v2522, %v2395
    %v2525 = vadd.s32 %v2522, %v2396
    %v2526 = vadd.s32 %v2522, %v2397
    %v2527 = vadd.s32 %v2522, %v2398
    %v2528 = vadd.s32 %v2522, %v2399
    %v2529 = vadd.s32 %v2522, %v2400
    %v2530 = vadd.s32 %v2522, %v2401
    %v2531 = vadd.s32 %v2522, %v2402
    %v2532 = vadd.s32 %v2522, %v2403
    %v2533 = vadd.s32 %v2522, %v2404
    %v2534 = vadd.s32 %v2522, %v2405
    %v2535 = vadd.s32 %v2522, %v2406
    %v2536 = vadd.s32 %v2522, %v2407
    %v2537 = vadd.s32 %v2522, %v2408
    %v2538 = vadd.s32 %v2522, %v2409
    %v2539 = vadd.s32 %v2522, %v2410
    %v2540 = vadd.s32 %v2522, %v2411
    %v2541 = vadd.s32 %v2522, %v2412
    %v2542 = vadd.s32 %v2522, %v2413
    %v2543 = vadd.s32 %v2522, %v2414
    %v2544 = vadd.s32 %v2522, %v2415
    %v2545 = vadd.s32 %v2522, %v2416
    %v2546 = vadd.s32 %v2522, %v2417
    %v2547 = vadd.s32 %v2522, %v2418
    %v2548 = vadd.s32 %v2522, %v2419
    %v2549 = vadd.s32 %v2522, %v2420
    %v2550 = vadd.s32 %v2522, %v2421
    %v2551 = vadd.s32 %v2522, %v2422
    %v2552 = vadd.s32 %v2522, %v2423
    %v2553 = vadd.s32 %v2522, %v2424
    %v2554 = vadd.s32 %v2522, %v2425
    %v2555 = vadd.s32 %v2522, %v2426
    %v2556 = vadd.s32 %v2522, %v2427
    %v2557 = vadd.s32 %v2522, %v2428
    %v2558 = vadd.s32 %v2522, %v2429
    %v2559 = vadd.s32 %v2522, %v2430
    %v2560 = vadd.s32 %v2522, %v2431
    %v2561 = vadd.s32 %v2522, %v2432
    %v2562 = vadd.s32 %v2522, %v2433
    %v2563 = vadd.s32 %v2522, %v2434
    %v2564 = vadd.s32 %v2522, %v2435
    %v2565 = vadd.s32 %v2522, %v2436
    %v2566 = vadd.s32 %v2522, %v2437
    %v2567 = vadd.s32 %v2522, %v2438
    %v2568 = vadd.s32 %v2522, %v2439
    %v2569 = vadd.s32 %v2522, %v2440
    %v2570 = vadd.s32 %v2522, %v2441
    %v2571 = vadd.s32 %v2522, %v2442
    %v2572 = vadd.s32 %v2522, %v2443
    %v2573 = vadd.s32 %v2522, %v2444
    %v2574 = vadd.s32 %v2522, %v2445
    %v2575 = vadd.s32 %v2522, %v2446
    %v2576 = vadd.s32 %v2522, %v2447
    %v2577 = vadd.s32 %v2522, %v2448
    %v2578 = vadd.s32 %v2522, %v2449
    %v2579 = vadd.s32 %v2522, %v2450
    %v2580 = vadd.s32 %v2522, %v2451
    %v2581 = vadd.s32 %v2522, %v2452
    %v2582 = vadd.s32 %v2522, %v2453
    %v2583 = vadd.s32 %v2522, %v2454
    %v2584 = vadd.s32 %v2522, %v2455
    %v2585 = vadd.s32 %v2522, %v2456
    %v2586 = vadd.s32 %v2522, %v2457
    %v2587 = vadd.s32 %v2522, %v2458
    %v2588 = vadd.s32 %v2522, %v2459
    %v2589 = vadd.s32 %v2522, %v2460
    %v2590 = vadd.s32 %v2522, %v2461
    %v2591 = vadd.s32 %v2522, %v2462
    %v2592 = vadd.s32 %v2522, %v2463
    %v2593 = vadd.s32 %v2522, %v2464
    %v2594 = vadd.s32 %v2522, %v2465
    %v2595 = vadd.s32 %v2522, %v2466
    %v2596 = vadd.s32 %v2522, %v2467
    %v2597 = vadd.s32 %v2522, %v2468
    %v2598 = vadd.s32 %v2522, %v2469
    %v2599 = vadd.s32 %v2522, %v2470
    %v2600 = vadd.s32 %v2522, %v2471
    %v2601 = vadd.s32 %v2522, %v2472
    %v2602 = vadd.s32 %v2522, %v2473
    %v2603 = vadd.s32 %v2522, %v2474
    %v2604 = vadd.s32 %v2522, %v2475
    %v2605 = vadd.s32 %v2522, %v2476
    %v2606 = vadd.s32 %v2522, %v2477
    %v2607 = vadd.s32 %v2522, %v2478
    %v2608 = vadd.s32 %v2522, %v2479
    %v2609 = vadd.s32 %v2522, %v2480
    %v2610 = vadd.s32 %v2522, %v2481
    %v2611 = vadd.s32 %v2522, %v2482
    %v2612 = vadd.s32 %v2522, %v2483
    %v2613 = vadd.s32 %v2522, %v2484
    %v2614 = vadd.s32 %v2522, %v2485
    %v2615 = vadd.s32 %v2522, %v2486
    %v2616 = vadd.s32 %v2522, %v2487
    %v2617 = vadd.s32 %v2522, %v2488
    %v2618 = vadd.s32 %v2522, %v2489
    %v2619 = vadd.s32 %v2522, %v2490
    %v2620 = vadd.s32 %v2522, %v2491
    %v2621 = vadd.s32 %v2522, %v2492
    %v2622 = vadd.s32 %v2522, %v2493
    %v2623 = vadd.s32 %v2522, %v2494
    %v2624 = vadd.s32 %v2522, %v2495
    %v2625 = vadd.s32 %v2522, %v2496
    %v2626 = vadd.s32 %v2522, %v2497
    %v2627 = vadd.s32 %v2522, %v2498
    %v2628 = vadd.s32 %v2522, %v2499
    %v2629 = vadd.s32 %v2522, %v2500
    %v2630 = vadd.s32 %v2522, %v2501
    %v2631 = vadd.s32 %v2522, %v2502
    %v2632 = vadd.s32 %v2522, %v2503
    %v2633 = vadd.s32 %v2522, %v2504
    %v2634 = vadd.s32 %v2522, %v2505
    %v2635 = vadd.s32 %v2522, %v2506
    %v2636 = vadd.s32 %v2522, %v2507
    %v2637 = vadd.s32 %v2522, %v2508
    %v2638 = vadd.s32 %v2522, %v2509
    %v2639 = vadd.s32 %v2522, %v2510
    %v2640 = vadd.s32 %v2522, %v2511
    %v2641 = vadd.s32 %v2522, %v2512
    %v2642 = vadd.s32 %v2522, %v2513
    %v2643 = vadd.s32 %v2522, %v2514
    %v2644 = vadd.s32 %v2522, %v2515
    %v2645 = vadd.s32 %v2522, %v2516
    %v2646 = vadd.s32 %v2522, %v2517
    %v2647 = vadd.s32 %v2522, %v2518
    %v2648 = vadd.s32 %v2522, %v2519
    %v2649 = vadd.s32 %v2522, %v2520
    %v2650 = vadd.s32 %v2522, %v2521
    %vm2651 = vcmp.lt.s32.totalorder %v2523, 576
    %vm2652 = vcmp.lt.s32.totalorder %v2524, 576
    %vm2653 = vcmp.lt.s32.totalorder %v2525, 576
    %vm2654 = vcmp.lt.s32.totalorder %v2526, 576
    %vm2655 = vcmp.lt.s32.totalorder %v2527, 576
    %vm2656 = vcmp.lt.s32.totalorder %v2528, 576
    %vm2657 = vcmp.lt.s32.totalorder %v2529, 576
    %vm2658 = vcmp.lt.s32.totalorder %v2530, 576
    %vm2659 = vcmp.lt.s32.totalorder %v2531, 576
    %vm2660 = vcmp.lt.s32.totalorder %v2532, 576
    %vm2661 = vcmp.lt.s32.totalorder %v2533, 576
    %vm2662 = vcmp.lt.s32.totalorder %v2534, 576
    %vm2663 = vcmp.lt.s32.totalorder %v2535, 576
    %vm2664 = vcmp.lt.s32.totalorder %v2536, 576
    %vm2665 = vcmp.lt.s32.totalorder %v2537, 576
    %vm2666 = vcmp.lt.s32.totalorder %v2538, 576
    %vm2667 = vcmp.lt.s32.totalorder %v2539, 576
    %vm2668 = vcmp.lt.s32.totalorder %v2540, 576
    %vm2669 = vcmp.lt.s32.totalorder %v2541, 576
    %vm2670 = vcmp.lt.s32.totalorder %v2542, 576
    %vm2671 = vcmp.lt.s32.totalorder %v2543, 576
    %vm2672 = vcmp.lt.s32.totalorder %v2544, 576
    %vm2673 = vcmp.lt.s32.totalorder %v2545, 576
    %vm2674 = vcmp.lt.s32.totalorder %v2546, 576
    %vm2675 = vcmp.lt.s32.totalorder %v2547, 576
    %vm2676 = vcmp.lt.s32.totalorder %v2548, 576
    %vm2677 = vcmp.lt.s32.totalorder %v2549, 576
    %vm2678 = vcmp.lt.s32.totalorder %v2550, 576
    %vm2679 = vcmp.lt.s32.totalorder %v2551, 576
    %vm2680 = vcmp.lt.s32.totalorder %v2552, 576
    %vm2681 = vcmp.lt.s32.totalorder %v2553, 576
    %vm2682 = vcmp.lt.s32.totalorder %v2554, 576
    %vm2683 = vcmp.lt.s32.totalorder %v2555, 576
    %vm2684 = vcmp.lt.s32.totalorder %v2556, 576
    %vm2685 = vcmp.lt.s32.totalorder %v2557, 576
    %vm2686 = vcmp.lt.s32.totalorder %v2558, 576
    %vm2687 = vcmp.lt.s32.totalorder %v2559, 576
    %vm2688 = vcmp.lt.s32.totalorder %v2560, 576
    %vm2689 = vcmp.lt.s32.totalorder %v2561, 576
    %vm2690 = vcmp.lt.s32.totalorder %v2562, 576
    %vm2691 = vcmp.lt.s32.totalorder %v2563, 576
    %vm2692 = vcmp.lt.s32.totalorder %v2564, 576
    %vm2693 = vcmp.lt.s32.totalorder %v2565, 576
    %vm2694 = vcmp.lt.s32.totalorder %v2566, 576
    %vm2695 = vcmp.lt.s32.totalorder %v2567, 576
    %vm2696 = vcmp.lt.s32.totalorder %v2568, 576
    %vm2697 = vcmp.lt.s32.totalorder %v2569, 576
    %vm2698 = vcmp.lt.s32.totalorder %v2570, 576
    %vm2699 = vcmp.lt.s32.totalorder %v2571, 576
    %vm2700 = vcmp.lt.s32.totalorder %v2572, 576
    %vm2701 = vcmp.lt.s32.totalorder %v2573, 576
    %vm2702 = vcmp.lt.s32.totalorder %v2574, 576
    %vm2703 = vcmp.lt.s32.totalorder %v2575, 576
    %vm2704 = vcmp.lt.s32.totalorder %v2576, 576
    %vm2705 = vcmp.lt.s32.totalorder %v2577, 576
    %vm2706 = vcmp.lt.s32.totalorder %v2578, 576
    %vm2707 = vcmp.lt.s32.totalorder %v2579, 576
    %vm2708 = vcmp.lt.s32.totalorder %v2580, 576
    %vm2709 = vcmp.lt.s32.totalorder %v2581, 576
    %vm2710 = vcmp.lt.s32.totalorder %v2582, 576
    %vm2711 = vcmp.lt.s32.totalorder %v2583, 576
    %vm2712 = vcmp.lt.s32.totalorder %v2584, 576
    %vm2713 = vcmp.lt.s32.totalorder %v2585, 576
    %vm2714 = vcmp.lt.s32.totalorder %v2586, 576
    %vm2715 = vcmp.lt.s32.totalorder %v2587, 576
    %vm2716 = vcmp.lt.s32.totalorder %v2588, 576
    %vm2717 = vcmp.lt.s32.totalorder %v2589, 576
    %vm2718 = vcmp.lt.s32.totalorder %v2590, 576
    %vm2719 = vcmp.lt.s32.totalorder %v2591, 576
    %vm2720 = vcmp.lt.s32.totalorder %v2592, 576
    %vm2721 = vcmp.lt.s32.totalorder %v2593, 576
    %vm2722 = vcmp.lt.s32.totalorder %v2594, 576
    %vm2723 = vcmp.lt.s32.totalorder %v2595, 576
    %vm2724 = vcmp.lt.s32.totalorder %v2596, 576
    %vm2725 = vcmp.lt.s32.totalorder %v2597, 576
    %vm2726 = vcmp.lt.s32.totalorder %v2598, 576
    %vm2727 = vcmp.lt.s32.totalorder %v2599, 576
    %vm2728 = vcmp.lt.s32.totalorder %v2600, 576
    %vm2729 = vcmp.lt.s32.totalorder %v2601, 576
    %vm2730 = vcmp.lt.s32.totalorder %v2602, 576
    %vm2731 = vcmp.lt.s32.totalorder %v2603, 576
    %vm2732 = vcmp.lt.s32.totalorder %v2604, 576
    %vm2733 = vcmp.lt.s32.totalorder %v2605, 576
    %vm2734 = vcmp.lt.s32.totalorder %v2606, 576
    %vm2735 = vcmp.lt.s32.totalorder %v2607, 576
    %vm2736 = vcmp.lt.s32.totalorder %v2608, 576
    %vm2737 = vcmp.lt.s32.totalorder %v2609, 576
    %vm2738 = vcmp.lt.s32.totalorder %v2610, 576
    %vm2739 = vcmp.lt.s32.totalorder %v2611, 576
    %vm2740 = vcmp.lt.s32.totalorder %v2612, 576
    %vm2741 = vcmp.lt.s32.totalorder %v2613, 576
    %vm2742 = vcmp.lt.s32.totalorder %v2614, 576
    %vm2743 = vcmp.lt.s32.totalorder %v2615, 576
    %vm2744 = vcmp.lt.s32.totalorder %v2616, 576
    %vm2745 = vcmp.lt.s32.totalorder %v2617, 576
    %vm2746 = vcmp.lt.s32.totalorder %v2618, 576
    %vm2747 = vcmp.lt.s32.totalorder %v2619, 576
    %vm2748 = vcmp.lt.s32.totalorder %v2620, 576
    %vm2749 = vcmp.lt.s32.totalorder %v2621, 576
    %vm2750 = vcmp.lt.s32.totalorder %v2622, 576
    %vm2751 = vcmp.lt.s32.totalorder %v2623, 576
    %vm2752 = vcmp.lt.s32.totalorder %v2624, 576
    %vm2753 = vcmp.lt.s32.totalorder %v2625, 576
    %vm2754 = vcmp.lt.s32.totalorder %v2626, 576
    %vm2755 = vcmp.lt.s32.totalorder %v2627, 576
    %vm2756 = vcmp.lt.s32.totalorder %v2628, 576
    %vm2757 = vcmp.lt.s32.totalorder %v2629, 576
    %vm2758 = vcmp.lt.s32.totalorder %v2630, 576
    %vm2759 = vcmp.lt.s32.totalorder %v2631, 576
    %vm2760 = vcmp.lt.s32.totalorder %v2632, 576
    %vm2761 = vcmp.lt.s32.totalorder %v2633, 576
    %vm2762 = vcmp.lt.s32.totalorder %v2634, 576
    %vm2763 = vcmp.lt.s32.totalorder %v2635, 576
    %vm2764 = vcmp.lt.s32.totalorder %v2636, 576
    %vm2765 = vcmp.lt.s32.totalorder %v2637, 576
    %vm2766 = vcmp.lt.s32.totalorder %v2638, 576
    %vm2767 = vcmp.lt.s32.totalorder %v2639, 576
    %vm2768 = vcmp.lt.s32.totalorder %v2640, 576
    %vm2769 = vcmp.lt.s32.totalorder %v2641, 576
    %vm2770 = vcmp.lt.s32.totalorder %v2642, 576
    %vm2771 = vcmp.lt.s32.totalorder %v2643, 576
    %vm2772 = vcmp.lt.s32.totalorder %v2644, 576
    %vm2773 = vcmp.lt.s32.totalorder %v2645, 576
    %vm2774 = vcmp.lt.s32.totalorder %v2646, 576
    %vm2775 = vcmp.lt.s32.totalorder %v2647, 576
    %vm2776 = vcmp.lt.s32.totalorder %v2648, 576
    %vm2777 = vcmp.lt.s32.totalorder %v2649, 576
    %vm2778 = vcmp.lt.s32.totalorder %v2650, 576
    %v2779 = vsel %vm2651, 1, 0
    %v2780 = vsel %vm2652, 1, 0
    %v2781 = vsel %vm2653, 1, 0
    %v2782 = vsel %vm2654, 1, 0
    %v2783 = vsel %vm2655, 1, 0
    %v2784 = vsel %vm2656, 1, 0
    %v2785 = vsel %vm2657, 1, 0
    %v2786 = vsel %vm2658, 1, 0
    %v2787 = vsel %vm2659, 1, 0
    %v2788 = vsel %vm2660, 1, 0
    %v2789 = vsel %vm2661, 1, 0
    %v2790 = vsel %vm2662, 1, 0
    %v2791 = vsel %vm2663, 1, 0
    %v2792 = vsel %vm2664, 1, 0
    %v2793 = vsel %vm2665, 1, 0
    %v2794 = vsel %vm2666, 1, 0
    %v2795 = vsel %vm2667, 1, 0
    %v2796 = vsel %vm2668, 1, 0
    %v2797 = vsel %vm2669, 1, 0
    %v2798 = vsel %vm2670, 1, 0
    %v2799 = vsel %vm2671, 1, 0
    %v2800 = vsel %vm2672, 1, 0
    %v2801 = vsel %vm2673, 1, 0
    %v2802 = vsel %vm2674, 1, 0
    %v2803 = vsel %vm2675, 1, 0
    %v2804 = vsel %vm2676, 1, 0
    %v2805 = vsel %vm2677, 1, 0
    %v2806 = vsel %vm2678, 1, 0
    %v2807 = vsel %vm2679, 1, 0
    %v2808 = vsel %vm2680, 1, 0
    %v2809 = vsel %vm2681, 1, 0
    %v2810 = vsel %vm2682, 1, 0
    %v2811 = vsel %vm2683, 1, 0
    %v2812 = vsel %vm2684, 1, 0
    %v2813 = vsel %vm2685, 1, 0
    %v2814 = vsel %vm2686, 1, 0
    %v2815 = vsel %vm2687, 1, 0
    %v2816 = vsel %vm2688, 1, 0
    %v2817 = vsel %vm2689, 1, 0
    %v2818 = vsel %vm2690, 1, 0
    %v2819 = vsel %vm2691, 1, 0
    %v2820 = vsel %vm2692, 1, 0
    %v2821 = vsel %vm2693, 1, 0
    %v2822 = vsel %vm2694, 1, 0
    %v2823 = vsel %vm2695, 1, 0
    %v2824 = vsel %vm2696, 1, 0
    %v2825 = vsel %vm2697, 1, 0
    %v2826 = vsel %vm2698, 1, 0
    %v2827 = vsel %vm2699, 1, 0
    %v2828 = vsel %vm2700, 1, 0
    %v2829 = vsel %vm2701, 1, 0
    %v2830 = vsel %vm2702, 1, 0
    %v2831 = vsel %vm2703, 1, 0
    %v2832 = vsel %vm2704, 1, 0
    %v2833 = vsel %vm2705, 1, 0
    %v2834 = vsel %vm2706, 1, 0
    %v2835 = vsel %vm2707, 1, 0
    %v2836 = vsel %vm2708, 1, 0
    %v2837 = vsel %vm2709, 1, 0
    %v2838 = vsel %vm2710, 1, 0
    %v2839 = vsel %vm2711, 1, 0
    %v2840 = vsel %vm2712, 1, 0
    %v2841 = vsel %vm2713, 1, 0
    %v2842 = vsel %vm2714, 1, 0
    %v2843 = vsel %vm2715, 1, 0
    %v2844 = vsel %vm2716, 1, 0
    %v2845 = vsel %vm2717, 1, 0
    %v2846 = vsel %vm2718, 1, 0
    %v2847 = vsel %vm2719, 1, 0
    %v2848 = vsel %vm2720, 1, 0
    %v2849 = vsel %vm2721, 1, 0
    %v2850 = vsel %vm2722, 1, 0
    %v2851 = vsel %vm2723, 1, 0
    %v2852 = vsel %vm2724, 1, 0
    %v2853 = vsel %vm2725, 1, 0
    %v2854 = vsel %vm2726, 1, 0
    %v2855 = vsel %vm2727, 1, 0
    %v2856 = vsel %vm2728, 1, 0
    %v2857 = vsel %vm2729, 1, 0
    %v2858 = vsel %vm2730, 1, 0
    %v2859 = vsel %vm2731, 1, 0
    %v2860 = vsel %vm2732, 1, 0
    %v2861 = vsel %vm2733, 1, 0
    %v2862 = vsel %vm2734, 1, 0
    %v2863 = vsel %vm2735, 1, 0
    %v2864 = vsel %vm2736, 1, 0
    %v2865 = vsel %vm2737, 1, 0
    %v2866 = vsel %vm2738, 1, 0
    %v2867 = vsel %vm2739, 1, 0
    %v2868 = vsel %vm2740, 1, 0
    %v2869 = vsel %vm2741, 1, 0
    %v2870 = vsel %vm2742, 1, 0
    %v2871 = vsel %vm2743, 1, 0
    %v2872 = vsel %vm2744, 1, 0
    %v2873 = vsel %vm2745, 1, 0
    %v2874 = vsel %vm2746, 1, 0
    %v2875 = vsel %vm2747, 1, 0
    %v2876 = vsel %vm2748, 1, 0
    %v2877 = vsel %vm2749, 1, 0
    %v2878 = vsel %vm2750, 1, 0
    %v2879 = vsel %vm2751, 1, 0
    %v2880 = vsel %vm2752, 1, 0
    %v2881 = vsel %vm2753, 1, 0
    %v2882 = vsel %vm2754, 1, 0
    %v2883 = vsel %vm2755, 1, 0
    %v2884 = vsel %vm2756, 1, 0
    %v2885 = vsel %vm2757, 1, 0
    %v2886 = vsel %vm2758, 1, 0
    %v2887 = vsel %vm2759, 1, 0
    %v2888 = vsel %vm2760, 1, 0
    %v2889 = vsel %vm2761, 1, 0
    %v2890 = vsel %vm2762, 1, 0
    %v2891 = vsel %vm2763, 1, 0
    %v2892 = vsel %vm2764, 1, 0
    %v2893 = vsel %vm2765, 1, 0
    %v2894 = vsel %vm2766, 1, 0
    %v2895 = vsel %vm2767, 1, 0
    %v2896 = vsel %vm2768, 1, 0
    %v2897 = vsel %vm2769, 1, 0
    %v2898 = vsel %vm2770, 1, 0
    %v2899 = vsel %vm2771, 1, 0
    %v2900 = vsel %vm2772, 1, 0
    %v2901 = vsel %vm2773, 1, 0
    %v2902 = vsel %vm2774, 1, 0
    %v2903 = vsel %vm2775, 1, 0
    %v2904 = vsel %vm2776, 1, 0
    %v2905 = vsel %vm2777, 1, 0
    %v2906 = vsel %vm2778, 1, 0
    %vm2907 = vcmp.eq.s32.totalorder %v2779, 1
    %vm2908 = vcmp.eq.s32.totalorder %v2780, 1
    %vm2909 = vcmp.eq.s32.totalorder %v2781, 1
    %vm2910 = vcmp.eq.s32.totalorder %v2782, 1
    %vm2911 = vcmp.eq.s32.totalorder %v2783, 1
    %vm2912 = vcmp.eq.s32.totalorder %v2784, 1
    %vm2913 = vcmp.eq.s32.totalorder %v2785, 1
    %vm2914 = vcmp.eq.s32.totalorder %v2786, 1
    %vm2915 = vcmp.eq.s32.totalorder %v2787, 1
    %vm2916 = vcmp.eq.s32.totalorder %v2788, 1
    %vm2917 = vcmp.eq.s32.totalorder %v2789, 1
    %vm2918 = vcmp.eq.s32.totalorder %v2790, 1
    %vm2919 = vcmp.eq.s32.totalorder %v2791, 1
    %vm2920 = vcmp.eq.s32.totalorder %v2792, 1
    %vm2921 = vcmp.eq.s32.totalorder %v2793, 1
    %vm2922 = vcmp.eq.s32.totalorder %v2794, 1
    %vm2923 = vcmp.eq.s32.totalorder %v2795, 1
    %vm2924 = vcmp.eq.s32.totalorder %v2796, 1
    %vm2925 = vcmp.eq.s32.totalorder %v2797, 1
    %vm2926 = vcmp.eq.s32.totalorder %v2798, 1
    %vm2927 = vcmp.eq.s32.totalorder %v2799, 1
    %vm2928 = vcmp.eq.s32.totalorder %v2800, 1
    %vm2929 = vcmp.eq.s32.totalorder %v2801, 1
    %vm2930 = vcmp.eq.s32.totalorder %v2802, 1
    %vm2931 = vcmp.eq.s32.totalorder %v2803, 1
    %vm2932 = vcmp.eq.s32.totalorder %v2804, 1
    %vm2933 = vcmp.eq.s32.totalorder %v2805, 1
    %vm2934 = vcmp.eq.s32.totalorder %v2806, 1
    %vm2935 = vcmp.eq.s32.totalorder %v2807, 1
    %vm2936 = vcmp.eq.s32.totalorder %v2808, 1
    %vm2937 = vcmp.eq.s32.totalorder %v2809, 1
    %vm2938 = vcmp.eq.s32.totalorder %v2810, 1
    %vm2939 = vcmp.eq.s32.totalorder %v2811, 1
    %vm2940 = vcmp.eq.s32.totalorder %v2812, 1
    %vm2941 = vcmp.eq.s32.totalorder %v2813, 1
    %vm2942 = vcmp.eq.s32.totalorder %v2814, 1
    %vm2943 = vcmp.eq.s32.totalorder %v2815, 1
    %vm2944 = vcmp.eq.s32.totalorder %v2816, 1
    %vm2945 = vcmp.eq.s32.totalorder %v2817, 1
    %vm2946 = vcmp.eq.s32.totalorder %v2818, 1
    %vm2947 = vcmp.eq.s32.totalorder %v2819, 1
    %vm2948 = vcmp.eq.s32.totalorder %v2820, 1
    %vm2949 = vcmp.eq.s32.totalorder %v2821, 1
    %vm2950 = vcmp.eq.s32.totalorder %v2822, 1
    %vm2951 = vcmp.eq.s32.totalorder %v2823, 1
    %vm2952 = vcmp.eq.s32.totalorder %v2824, 1
    %vm2953 = vcmp.eq.s32.totalorder %v2825, 1
    %vm2954 = vcmp.eq.s32.totalorder %v2826, 1
    %vm2955 = vcmp.eq.s32.totalorder %v2827, 1
    %vm2956 = vcmp.eq.s32.totalorder %v2828, 1
    %vm2957 = vcmp.eq.s32.totalorder %v2829, 1
    %vm2958 = vcmp.eq.s32.totalorder %v2830, 1
    %vm2959 = vcmp.eq.s32.totalorder %v2831, 1
    %vm2960 = vcmp.eq.s32.totalorder %v2832, 1
    %vm2961 = vcmp.eq.s32.totalorder %v2833, 1
    %vm2962 = vcmp.eq.s32.totalorder %v2834, 1
    %vm2963 = vcmp.eq.s32.totalorder %v2835, 1
    %vm2964 = vcmp.eq.s32.totalorder %v2836, 1
    %vm2965 = vcmp.eq.s32.totalorder %v2837, 1
    %vm2966 = vcmp.eq.s32.totalorder %v2838, 1
    %vm2967 = vcmp.eq.s32.totalorder %v2839, 1
    %vm2968 = vcmp.eq.s32.totalorder %v2840, 1
    %vm2969 = vcmp.eq.s32.totalorder %v2841, 1
    %vm2970 = vcmp.eq.s32.totalorder %v2842, 1
    %vm2971 = vcmp.eq.s32.totalorder %v2843, 1
    %vm2972 = vcmp.eq.s32.totalorder %v2844, 1
    %vm2973 = vcmp.eq.s32.totalorder %v2845, 1
    %vm2974 = vcmp.eq.s32.totalorder %v2846, 1
    %vm2975 = vcmp.eq.s32.totalorder %v2847, 1
    %vm2976 = vcmp.eq.s32.totalorder %v2848, 1
    %vm2977 = vcmp.eq.s32.totalorder %v2849, 1
    %vm2978 = vcmp.eq.s32.totalorder %v2850, 1
    %vm2979 = vcmp.eq.s32.totalorder %v2851, 1
    %vm2980 = vcmp.eq.s32.totalorder %v2852, 1
    %vm2981 = vcmp.eq.s32.totalorder %v2853, 1
    %vm2982 = vcmp.eq.s32.totalorder %v2854, 1
    %vm2983 = vcmp.eq.s32.totalorder %v2855, 1
    %vm2984 = vcmp.eq.s32.totalorder %v2856, 1
    %vm2985 = vcmp.eq.s32.totalorder %v2857, 1
    %vm2986 = vcmp.eq.s32.totalorder %v2858, 1
    %vm2987 = vcmp.eq.s32.totalorder %v2859, 1
    %vm2988 = vcmp.eq.s32.totalorder %v2860, 1
    %vm2989 = vcmp.eq.s32.totalorder %v2861, 1
    %vm2990 = vcmp.eq.s32.totalorder %v2862, 1
    %vm2991 = vcmp.eq.s32.totalorder %v2863, 1
    %vm2992 = vcmp.eq.s32.totalorder %v2864, 1
    %vm2993 = vcmp.eq.s32.totalorder %v2865, 1
    %vm2994 = vcmp.eq.s32.totalorder %v2866, 1
    %vm2995 = vcmp.eq.s32.totalorder %v2867, 1
    %vm2996 = vcmp.eq.s32.totalorder %v2868, 1
    %vm2997 = vcmp.eq.s32.totalorder %v2869, 1
    %vm2998 = vcmp.eq.s32.totalorder %v2870, 1
    %vm2999 = vcmp.eq.s32.totalorder %v2871, 1
    %vm3000 = vcmp.eq.s32.totalorder %v2872, 1
    %vm3001 = vcmp.eq.s32.totalorder %v2873, 1
    %vm3002 = vcmp.eq.s32.totalorder %v2874, 1
    %vm3003 = vcmp.eq.s32.totalorder %v2875, 1
    %vm3004 = vcmp.eq.s32.totalorder %v2876, 1
    %vm3005 = vcmp.eq.s32.totalorder %v2877, 1
    %vm3006 = vcmp.eq.s32.totalorder %v2878, 1
    %vm3007 = vcmp.eq.s32.totalorder %v2879, 1
    %vm3008 = vcmp.eq.s32.totalorder %v2880, 1
    %vm3009 = vcmp.eq.s32.totalorder %v2881, 1
    %vm3010 = vcmp.eq.s32.totalorder %v2882, 1
    %vm3011 = vcmp.eq.s32.totalorder %v2883, 1
    %vm3012 = vcmp.eq.s32.totalorder %v2884, 1
    %vm3013 = vcmp.eq.s32.totalorder %v2885, 1
    %vm3014 = vcmp.eq.s32.totalorder %v2886, 1
    %vm3015 = vcmp.eq.s32.totalorder %v2887, 1
    %vm3016 = vcmp.eq.s32.totalorder %v2888, 1
    %vm3017 = vcmp.eq.s32.totalorder %v2889, 1
    %vm3018 = vcmp.eq.s32.totalorder %v2890, 1
    %vm3019 = vcmp.eq.s32.totalorder %v2891, 1
    %vm3020 = vcmp.eq.s32.totalorder %v2892, 1
    %vm3021 = vcmp.eq.s32.totalorder %v2893, 1
    %vm3022 = vcmp.eq.s32.totalorder %v2894, 1
    %vm3023 = vcmp.eq.s32.totalorder %v2895, 1
    %vm3024 = vcmp.eq.s32.totalorder %v2896, 1
    %vm3025 = vcmp.eq.s32.totalorder %v2897, 1
    %vm3026 = vcmp.eq.s32.totalorder %v2898, 1
    %vm3027 = vcmp.eq.s32.totalorder %v2899, 1
    %vm3028 = vcmp.eq.s32.totalorder %v2900, 1
    %vm3029 = vcmp.eq.s32.totalorder %v2901, 1
    %vm3030 = vcmp.eq.s32.totalorder %v2902, 1
    %vm3031 = vcmp.eq.s32.totalorder %v2903, 1
    %vm3032 = vcmp.eq.s32.totalorder %v2904, 1
    %vm3033 = vcmp.eq.s32.totalorder %v2905, 1
    %vm3034 = vcmp.eq.s32.totalorder %v2906, 1
    %v3035 = vsel %vm2907, %v838, 0.0
    %v3036 = vsel %vm2908, %v841, 0.0
    %v3037 = vsel %vm2909, %v846, 0.0
    %v3038 = vsel %vm2910, %v849, 0.0
    %v3039 = vsel %vm2911, %v854, 0.0
    %v3040 = vsel %vm2912, %v857, 0.0
    %v3041 = vsel %vm2913, %v862, 0.0
    %v3042 = vsel %vm2914, %v865, 0.0
    %v3043 = vsel %vm2915, %v870, 0.0
    %v3044 = vsel %vm2916, %v873, 0.0
    %v3045 = vsel %vm2917, %v878, 0.0
    %v3046 = vsel %vm2918, %v881, 0.0
    %v3047 = vsel %vm2919, %v886, 0.0
    %v3048 = vsel %vm2920, %v889, 0.0
    %v3049 = vsel %vm2921, %v894, 0.0
    %v3050 = vsel %vm2922, %v897, 0.0
    %v3051 = vsel %vm2923, %v902, 0.0
    %v3052 = vsel %vm2924, %v905, 0.0
    %v3053 = vsel %vm2925, %v910, 0.0
    %v3054 = vsel %vm2926, %v913, 0.0
    %v3055 = vsel %vm2927, %v918, 0.0
    %v3056 = vsel %vm2928, %v921, 0.0
    %v3057 = vsel %vm2929, %v926, 0.0
    %v3058 = vsel %vm2930, %v929, 0.0
    %v3059 = vsel %vm2931, %v934, 0.0
    %v3060 = vsel %vm2932, %v937, 0.0
    %v3061 = vsel %vm2933, %v942, 0.0
    %v3062 = vsel %vm2934, %v945, 0.0
    %v3063 = vsel %vm2935, %v950, 0.0
    %v3064 = vsel %vm2936, %v953, 0.0
    %v3065 = vsel %vm2937, %v958, 0.0
    %v3066 = vsel %vm2938, %v961, 0.0
    %v3067 = vsel %vm2939, %v966, 0.0
    %v3068 = vsel %vm2940, %v969, 0.0
    %v3069 = vsel %vm2941, %v974, 0.0
    %v3070 = vsel %vm2942, %v977, 0.0
    %v3071 = vsel %vm2943, %v982, 0.0
    %v3072 = vsel %vm2944, %v985, 0.0
    %v3073 = vsel %vm2945, %v990, 0.0
    %v3074 = vsel %vm2946, %v993, 0.0
    %v3075 = vsel %vm2947, %v998, 0.0
    %v3076 = vsel %vm2948, %v1001, 0.0
    %v3077 = vsel %vm2949, %v1006, 0.0
    %v3078 = vsel %vm2950, %v1009, 0.0
    %v3079 = vsel %vm2951, %v1014, 0.0
    %v3080 = vsel %vm2952, %v1017, 0.0
    %v3081 = vsel %vm2953, %v1022, 0.0
    %v3082 = vsel %vm2954, %v1025, 0.0
    %v3083 = vsel %vm2955, %v1030, 0.0
    %v3084 = vsel %vm2956, %v1033, 0.0
    %v3085 = vsel %vm2957, %v1038, 0.0
    %v3086 = vsel %vm2958, %v1041, 0.0
    %v3087 = vsel %vm2959, %v1046, 0.0
    %v3088 = vsel %vm2960, %v1049, 0.0
    %v3089 = vsel %vm2961, %v1054, 0.0
    %v3090 = vsel %vm2962, %v1057, 0.0
    %v3091 = vsel %vm2963, %v1062, 0.0
    %v3092 = vsel %vm2964, %v1065, 0.0
    %v3093 = vsel %vm2965, %v1070, 0.0
    %v3094 = vsel %vm2966, %v1073, 0.0
    %v3095 = vsel %vm2967, %v1078, 0.0
    %v3096 = vsel %vm2968, %v1081, 0.0
    %v3097 = vsel %vm2969, %v1086, 0.0
    %v3098 = vsel %vm2970, %v1089, 0.0
    %v3099 = vsel %vm2971, %v1094, 0.0
    %v3100 = vsel %vm2972, %v1097, 0.0
    %v3101 = vsel %vm2973, %v1102, 0.0
    %v3102 = vsel %vm2974, %v1105, 0.0
    %v3103 = vsel %vm2975, %v1110, 0.0
    %v3104 = vsel %vm2976, %v1113, 0.0
    %v3105 = vsel %vm2977, %v1118, 0.0
    %v3106 = vsel %vm2978, %v1121, 0.0
    %v3107 = vsel %vm2979, %v1126, 0.0
    %v3108 = vsel %vm2980, %v1129, 0.0
    %v3109 = vsel %vm2981, %v1134, 0.0
    %v3110 = vsel %vm2982, %v1137, 0.0
    %v3111 = vsel %vm2983, %v1142, 0.0
    %v3112 = vsel %vm2984, %v1145, 0.0
    %v3113 = vsel %vm2985, %v1150, 0.0
    %v3114 = vsel %vm2986, %v1153, 0.0
    %v3115 = vsel %vm2987, %v1158, 0.0
    %v3116 = vsel %vm2988, %v1161, 0.0
    %v3117 = vsel %vm2989, %v1166, 0.0
    %v3118 = vsel %vm2990, %v1169, 0.0
    %v3119 = vsel %vm2991, %v1174, 0.0
    %v3120 = vsel %vm2992, %v1177, 0.0
    %v3121 = vsel %vm2993, %v1182, 0.0
    %v3122 = vsel %vm2994, %v1185, 0.0
    %v3123 = vsel %vm2995, %v1190, 0.0
    %v3124 = vsel %vm2996, %v1193, 0.0
    %v3125 = vsel %vm2997, %v1198, 0.0
    %v3126 = vsel %vm2998, %v1201, 0.0
    %v3127 = vsel %vm2999, %v1206, 0.0
    %v3128 = vsel %vm3000, %v1209, 0.0
    %v3129 = vsel %vm3001, %v1214, 0.0
    %v3130 = vsel %vm3002, %v1217, 0.0
    %v3131 = vsel %vm3003, %v1222, 0.0
    %v3132 = vsel %vm3004, %v1225, 0.0
    %v3133 = vsel %vm3005, %v1230, 0.0
    %v3134 = vsel %vm3006, %v1233, 0.0
    %v3135 = vsel %vm3007, %v1238, 0.0
    %v3136 = vsel %vm3008, %v1241, 0.0
    %v3137 = vsel %vm3009, %v1246, 0.0
    %v3138 = vsel %vm3010, %v1249, 0.0
    %v3139 = vsel %vm3011, %v1254, 0.0
    %v3140 = vsel %vm3012, %v1257, 0.0
    %v3141 = vsel %vm3013, %v1262, 0.0
    %v3142 = vsel %vm3014, %v1265, 0.0
    %v3143 = vsel %vm3015, %v1270, 0.0
    %v3144 = vsel %vm3016, %v1273, 0.0
    %v3145 = vsel %vm3017, %v1278, 0.0
    %v3146 = vsel %vm3018, %v1281, 0.0
    %v3147 = vsel %vm3019, %v1286, 0.0
    %v3148 = vsel %vm3020, %v1289, 0.0
    %v3149 = vsel %vm3021, %v1294, 0.0
    %v3150 = vsel %vm3022, %v1297, 0.0
    %v3151 = vsel %vm3023, %v1302, 0.0
    %v3152 = vsel %vm3024, %v1305, 0.0
    %v3153 = vsel %vm3025, %v1310, 0.0
    %v3154 = vsel %vm3026, %v1313, 0.0
    %v3155 = vsel %vm3027, %v1318, 0.0
    %v3156 = vsel %vm3028, %v1321, 0.0
    %v3157 = vsel %vm3029, %v1326, 0.0
    %v3158 = vsel %vm3030, %v1329, 0.0
    %v3159 = vsel %vm3031, %v1334, 0.0
    %v3160 = vsel %vm3032, %v1337, 0.0
    %v3161 = vsel %vm3033, %v1342, 0.0
    %v3162 = vsel %vm3034, %v1345, 0.0
    %v3163 = vadd.f32 %v3035, %v3036
    %v3164 = vadd.f32 %v3163, %v3037
    %v3165 = vadd.f32 %v3164, %v3038
    %v3166 = vadd.f32 %v3165, %v3039
    %v3167 = vadd.f32 %v3166, %v3040
    %v3168 = vadd.f32 %v3167, %v3041
    %v3169 = vadd.f32 %v3168, %v3042
    %v3170 = vadd.f32 %v3169, %v3043
    %v3171 = vadd.f32 %v3170, %v3044
    %v3172 = vadd.f32 %v3171, %v3045
    %v3173 = vadd.f32 %v3172, %v3046
    %v3174 = vadd.f32 %v3173, %v3047
    %v3175 = vadd.f32 %v3174, %v3048
    %v3176 = vadd.f32 %v3175, %v3049
    %v3177 = vadd.f32 %v3176, %v3050
    %v3178 = vadd.f32 %v3177, %v3051
    %v3179 = vadd.f32 %v3178, %v3052
    %v3180 = vadd.f32 %v3179, %v3053
    %v3181 = vadd.f32 %v3180, %v3054
    %v3182 = vadd.f32 %v3181, %v3055
    %v3183 = vadd.f32 %v3182, %v3056
    %v3184 = vadd.f32 %v3183, %v3057
    %v3185 = vadd.f32 %v3184, %v3058
    %v3186 = vadd.f32 %v3185, %v3059
    %v3187 = vadd.f32 %v3186, %v3060
    %v3188 = vadd.f32 %v3187, %v3061
    %v3189 = vadd.f32 %v3188, %v3062
    %v3190 = vadd.f32 %v3189, %v3063
    %v3191 = vadd.f32 %v3190, %v3064
    %v3192 = vadd.f32 %v3191, %v3065
    %v3193 = vadd.f32 %v3192, %v3066
    %v3194 = vadd.f32 %v3193, %v3067
    %v3195 = vadd.f32 %v3194, %v3068
    %v3196 = vadd.f32 %v3195, %v3069
    %v3197 = vadd.f32 %v3196, %v3070
    %v3198 = vadd.f32 %v3197, %v3071
    %v3199 = vadd.f32 %v3198, %v3072
    %v3200 = vadd.f32 %v3199, %v3073
    %v3201 = vadd.f32 %v3200, %v3074
    %v3202 = vadd.f32 %v3201, %v3075
    %v3203 = vadd.f32 %v3202, %v3076
    %v3204 = vadd.f32 %v3203, %v3077
    %v3205 = vadd.f32 %v3204, %v3078
    %v3206 = vadd.f32 %v3205, %v3079
    %v3207 = vadd.f32 %v3206, %v3080
    %v3208 = vadd.f32 %v3207, %v3081
    %v3209 = vadd.f32 %v3208, %v3082
    %v3210 = vadd.f32 %v3209, %v3083
    %v3211 = vadd.f32 %v3210, %v3084
    %v3212 = vadd.f32 %v3211, %v3085
    %v3213 = vadd.f32 %v3212, %v3086
    %v3214 = vadd.f32 %v3213, %v3087
    %v3215 = vadd.f32 %v3214, %v3088
    %v3216 = vadd.f32 %v3215, %v3089
    %v3217 = vadd.f32 %v3216, %v3090
    %v3218 = vadd.f32 %v3217, %v3091
    %v3219 = vadd.f32 %v3218, %v3092
    %v3220 = vadd.f32 %v3219, %v3093
    %v3221 = vadd.f32 %v3220, %v3094
    %v3222 = vadd.f32 %v3221, %v3095
    %v3223 = vadd.f32 %v3222, %v3096
    %v3224 = vadd.f32 %v3223, %v3097
    %v3225 = vadd.f32 %v3224, %v3098
    %v3226 = vadd.f32 %v3225, %v3099
    %v3227 = vadd.f32 %v3226, %v3100
    %v3228 = vadd.f32 %v3227, %v3101
    %v3229 = vadd.f32 %v3228, %v3102
    %v3230 = vadd.f32 %v3229, %v3103
    %v3231 = vadd.f32 %v3230, %v3104
    %v3232 = vadd.f32 %v3231, %v3105
    %v3233 = vadd.f32 %v3232, %v3106
    %v3234 = vadd.f32 %v3233, %v3107
    %v3235 = vadd.f32 %v3234, %v3108
    %v3236 = vadd.f32 %v3235, %v3109
    %v3237 = vadd.f32 %v3236, %v3110
    %v3238 = vadd.f32 %v3237, %v3111
    %v3239 = vadd.f32 %v3238, %v3112
    %v3240 = vadd.f32 %v3239, %v3113
    %v3241 = vadd.f32 %v3240, %v3114
    %v3242 = vadd.f32 %v3241, %v3115
    %v3243 = vadd.f32 %v3242, %v3116
    %v3244 = vadd.f32 %v3243, %v3117
    %v3245 = vadd.f32 %v3244, %v3118
    %v3246 = vadd.f32 %v3245, %v3119
    %v3247 = vadd.f32 %v3246, %v3120
    %v3248 = vadd.f32 %v3247, %v3121
    %v3249 = vadd.f32 %v3248, %v3122
    %v3250 = vadd.f32 %v3249, %v3123
    %v3251 = vadd.f32 %v3250, %v3124
    %v3252 = vadd.f32 %v3251, %v3125
    %v3253 = vadd.f32 %v3252, %v3126
    %v3254 = vadd.f32 %v3253, %v3127
    %v3255 = vadd.f32 %v3254, %v3128
    %v3256 = vadd.f32 %v3255, %v3129
    %v3257 = vadd.f32 %v3256, %v3130
    %v3258 = vadd.f32 %v3257, %v3131
    %v3259 = vadd.f32 %v3258, %v3132
    %v3260 = vadd.f32 %v3259, %v3133
    %v3261 = vadd.f32 %v3260, %v3134
    %v3262 = vadd.f32 %v3261, %v3135
    %v3263 = vadd.f32 %v3262, %v3136
    %v3264 = vadd.f32 %v3263, %v3137
    %v3265 = vadd.f32 %v3264, %v3138
    %v3266 = vadd.f32 %v3265, %v3139
    %v3267 = vadd.f32 %v3266, %v3140
    %v3268 = vadd.f32 %v3267, %v3141
    %v3269 = vadd.f32 %v3268, %v3142
    %v3270 = vadd.f32 %v3269, %v3143
    %v3271 = vadd.f32 %v3270, %v3144
    %v3272 = vadd.f32 %v3271, %v3145
    %v3273 = vadd.f32 %v3272, %v3146
    %v3274 = vadd.f32 %v3273, %v3147
    %v3275 = vadd.f32 %v3274, %v3148
    %v3276 = vadd.f32 %v3275, %v3149
    %v3277 = vadd.f32 %v3276, %v3150
    %v3278 = vadd.f32 %v3277, %v3151
    %v3279 = vadd.f32 %v3278, %v3152
    %v3280 = vadd.f32 %v3279, %v3153
    %v3281 = vadd.f32 %v3280, %v3154
    %v3282 = vadd.f32 %v3281, %v3155
    %v3283 = vadd.f32 %v3282, %v3156
    %v3284 = vadd.f32 %v3283, %v3157
    %v3285 = vadd.f32 %v3284, %v3158
    %v3286 = vadd.f32 %v3285, %v3159
    %v3287 = vadd.f32 %v3286, %v3160
    %v3288 = vadd.f32 %v3287, %v3161
    %v3289 = vadd.f32 %v3288, %v3162
    %v3290 = vrot.slane %v3289, 4
    %v3291 = vadd.f32 %v3289, %v3290
    %v3292 = vrot.slane %v3291, 2
    %v3293 = vadd.f32 %v3291, %v3292
    %v3294 = vrot.slane %v3293, 1
    %v3295 = vadd.f32 %v3293, %v3294
    %3296 = vst [vmem:[%s5] sm:$0x1] %v3295
    %v3297 = vmul.f32 %v3035, %v3035
    %v3298 = vmul.f32 %v3036, %v3036
    %v3299 = vmul.f32 %v3037, %v3037
    %v3300 = vmul.f32 %v3038, %v3038
    %v3301 = vmul.f32 %v3039, %v3039
    %v3302 = vmul.f32 %v3040, %v3040
    %v3303 = vmul.f32 %v3041, %v3041
    %v3304 = vmul.f32 %v3042, %v3042
    %v3305 = vmul.f32 %v3043, %v3043
    %v3306 = vmul.f32 %v3044, %v3044
    %v3307 = vmul.f32 %v3045, %v3045
    %v3308 = vmul.f32 %v3046, %v3046
    %v3309 = vmul.f32 %v3047, %v3047
    %v3310 = vmul.f32 %v3048, %v3048
    %v3311 = vmul.f32 %v3049, %v3049
    %v3312 = vmul.f32 %v3050, %v3050
    %v3313 = vmul.f32 %v3051, %v3051
    %v3314 = vmul.f32 %v3052, %v3052
    %v3315 = vmul.f32 %v3053, %v3053
    %v3316 = vmul.f32 %v3054, %v3054
    %v3317 = vmul.f32 %v3055, %v3055
    %v3318 = vmul.f32 %v3056, %v3056
    %v3319 = vmul.f32 %v3057, %v3057
    %v3320 = vmul.f32 %v3058, %v3058
    %v3321 = vmul.f32 %v3059, %v3059
    %v3322 = vmul.f32 %v3060, %v3060
    %v3323 = vmul.f32 %v3061, %v3061
    %v3324 = vmul.f32 %v3062, %v3062
    %v3325 = vmul.f32 %v3063, %v3063
    %v3326 = vmul.f32 %v3064, %v3064
    %v3327 = vmul.f32 %v3065, %v3065
    %v3328 = vmul.f32 %v3066, %v3066
    %v3329 = vmul.f32 %v3067, %v3067
    %v3330 = vmul.f32 %v3068, %v3068
    %v3331 = vmul.f32 %v3069, %v3069
    %v3332 = vmul.f32 %v3070, %v3070
    %v3333 = vmul.f32 %v3071, %v3071
    %v3334 = vmul.f32 %v3072, %v3072
    %v3335 = vmul.f32 %v3073, %v3073
    %v3336 = vmul.f32 %v3074, %v3074
    %v3337 = vmul.f32 %v3075, %v3075
    %v3338 = vmul.f32 %v3076, %v3076
    %v3339 = vmul.f32 %v3077, %v3077
    %v3340 = vmul.f32 %v3078, %v3078
    %v3341 = vmul.f32 %v3079, %v3079
    %v3342 = vmul.f32 %v3080, %v3080
    %v3343 = vmul.f32 %v3081, %v3081
    %v3344 = vmul.f32 %v3082, %v3082
    %v3345 = vmul.f32 %v3083, %v3083
    %v3346 = vmul.f32 %v3084, %v3084
    %v3347 = vmul.f32 %v3085, %v3085
    %v3348 = vmul.f32 %v3086, %v3086
    %v3349 = vmul.f32 %v3087, %v3087
    %v3350 = vmul.f32 %v3088, %v3088
    %v3351 = vmul.f32 %v3089, %v3089
    %v3352 = vmul.f32 %v3090, %v3090
    %v3353 = vmul.f32 %v3091, %v3091
    %v3354 = vmul.f32 %v3092, %v3092
    %v3355 = vmul.f32 %v3093, %v3093
    %v3356 = vmul.f32 %v3094, %v3094
    %v3357 = vmul.f32 %v3095, %v3095
    %v3358 = vmul.f32 %v3096, %v3096
    %v3359 = vmul.f32 %v3097, %v3097
    %v3360 = vmul.f32 %v3098, %v3098
    %v3361 = vmul.f32 %v3099, %v3099
    %v3362 = vmul.f32 %v3100, %v3100
    %v3363 = vmul.f32 %v3101, %v3101
    %v3364 = vmul.f32 %v3102, %v3102
    %v3365 = vmul.f32 %v3103, %v3103
    %v3366 = vmul.f32 %v3104, %v3104
    %v3367 = vmul.f32 %v3105, %v3105
    %v3368 = vmul.f32 %v3106, %v3106
    %v3369 = vmul.f32 %v3107, %v3107
    %v3370 = vmul.f32 %v3108, %v3108
    %v3371 = vmul.f32 %v3109, %v3109
    %v3372 = vmul.f32 %v3110, %v3110
    %v3373 = vmul.f32 %v3111, %v3111
    %v3374 = vmul.f32 %v3112, %v3112
    %v3375 = vmul.f32 %v3113, %v3113
    %v3376 = vmul.f32 %v3114, %v3114
    %v3377 = vmul.f32 %v3115, %v3115
    %v3378 = vmul.f32 %v3116, %v3116
    %v3379 = vmul.f32 %v3117, %v3117
    %v3380 = vmul.f32 %v3118, %v3118
    %v3381 = vmul.f32 %v3119, %v3119
    %v3382 = vmul.f32 %v3120, %v3120
    %v3383 = vmul.f32 %v3121, %v3121
    %v3384 = vmul.f32 %v3122, %v3122
    %v3385 = vmul.f32 %v3123, %v3123
    %v3386 = vmul.f32 %v3124, %v3124
    %v3387 = vmul.f32 %v3125, %v3125
    %v3388 = vmul.f32 %v3126, %v3126
    %v3389 = vmul.f32 %v3127, %v3127
    %v3390 = vmul.f32 %v3128, %v3128
    %v3391 = vmul.f32 %v3129, %v3129
    %v3392 = vmul.f32 %v3130, %v3130
    %v3393 = vmul.f32 %v3131, %v3131
    %v3394 = vmul.f32 %v3132, %v3132
    %v3395 = vmul.f32 %v3133, %v3133
    %v3396 = vmul.f32 %v3134, %v3134
    %v3397 = vmul.f32 %v3135, %v3135
    %v3398 = vmul.f32 %v3136, %v3136
    %v3399 = vmul.f32 %v3137, %v3137
    %v3400 = vmul.f32 %v3138, %v3138
    %v3401 = vmul.f32 %v3139, %v3139
    %v3402 = vmul.f32 %v3140, %v3140
    %v3403 = vmul.f32 %v3141, %v3141
    %v3404 = vmul.f32 %v3142, %v3142
    %v3405 = vmul.f32 %v3143, %v3143
    %v3406 = vmul.f32 %v3144, %v3144
    %v3407 = vmul.f32 %v3145, %v3145
    %v3408 = vmul.f32 %v3146, %v3146
    %v3409 = vmul.f32 %v3147, %v3147
    %v3410 = vmul.f32 %v3148, %v3148
    %v3411 = vmul.f32 %v3149, %v3149
    %v3412 = vmul.f32 %v3150, %v3150
    %v3413 = vmul.f32 %v3151, %v3151
    %v3414 = vmul.f32 %v3152, %v3152
    %v3415 = vmul.f32 %v3153, %v3153
    %v3416 = vmul.f32 %v3154, %v3154
    %v3417 = vmul.f32 %v3155, %v3155
    %v3418 = vmul.f32 %v3156, %v3156
    %v3419 = vmul.f32 %v3157, %v3157
    %v3420 = vmul.f32 %v3158, %v3158
    %v3421 = vmul.f32 %v3159, %v3159
    %v3422 = vmul.f32 %v3160, %v3160
    %v3423 = vmul.f32 %v3161, %v3161
    %v3424 = vmul.f32 %v3162, %v3162
    %v3425 = vadd.f32 %v3297, %v3298
    %v3426 = vadd.f32 %v3425, %v3299
    %v3427 = vadd.f32 %v3426, %v3300
    %v3428 = vadd.f32 %v3427, %v3301
    %v3429 = vadd.f32 %v3428, %v3302
    %v3430 = vadd.f32 %v3429, %v3303
    %v3431 = vadd.f32 %v3430, %v3304
    %v3432 = vadd.f32 %v3431, %v3305
    %v3433 = vadd.f32 %v3432, %v3306
    %v3434 = vadd.f32 %v3433, %v3307
    %v3435 = vadd.f32 %v3434, %v3308
    %v3436 = vadd.f32 %v3435, %v3309
    %v3437 = vadd.f32 %v3436, %v3310
    %v3438 = vadd.f32 %v3437, %v3311
    %v3439 = vadd.f32 %v3438, %v3312
    %v3440 = vadd.f32 %v3439, %v3313
    %v3441 = vadd.f32 %v3440, %v3314
    %v3442 = vadd.f32 %v3441, %v3315
    %v3443 = vadd.f32 %v3442, %v3316
    %v3444 = vadd.f32 %v3443, %v3317
    %v3445 = vadd.f32 %v3444, %v3318
    %v3446 = vadd.f32 %v3445, %v3319
    %v3447 = vadd.f32 %v3446, %v3320
    %v3448 = vadd.f32 %v3447, %v3321
    %v3449 = vadd.f32 %v3448, %v3322
    %v3450 = vadd.f32 %v3449, %v3323
    %v3451 = vadd.f32 %v3450, %v3324
    %v3452 = vadd.f32 %v3451, %v3325
    %v3453 = vadd.f32 %v3452, %v3326
    %v3454 = vadd.f32 %v3453, %v3327
    %v3455 = vadd.f32 %v3454, %v3328
    %v3456 = vadd.f32 %v3455, %v3329
    %v3457 = vadd.f32 %v3456, %v3330
    %v3458 = vadd.f32 %v3457, %v3331
    %v3459 = vadd.f32 %v3458, %v3332
    %v3460 = vadd.f32 %v3459, %v3333
    %v3461 = vadd.f32 %v3460, %v3334
    %v3462 = vadd.f32 %v3461, %v3335
    %v3463 = vadd.f32 %v3462, %v3336
    %v3464 = vadd.f32 %v3463, %v3337
    %v3465 = vadd.f32 %v3464, %v3338
    %v3466 = vadd.f32 %v3465, %v3339
    %v3467 = vadd.f32 %v3466, %v3340
    %v3468 = vadd.f32 %v3467, %v3341
    %v3469 = vadd.f32 %v3468, %v3342
    %v3470 = vadd.f32 %v3469, %v3343
    %v3471 = vadd.f32 %v3470, %v3344
    %v3472 = vadd.f32 %v3471, %v3345
    %v3473 = vadd.f32 %v3472, %v3346
    %v3474 = vadd.f32 %v3473, %v3347
    %v3475 = vadd.f32 %v3474, %v3348
    %v3476 = vadd.f32 %v3475, %v3349
    %v3477 = vadd.f32 %v3476, %v3350
    %v3478 = vadd.f32 %v3477, %v3351
    %v3479 = vadd.f32 %v3478, %v3352
    %v3480 = vadd.f32 %v3479, %v3353
    %v3481 = vadd.f32 %v3480, %v3354
    %v3482 = vadd.f32 %v3481, %v3355
    %v3483 = vadd.f32 %v3482, %v3356
    %v3484 = vadd.f32 %v3483, %v3357
    %v3485 = vadd.f32 %v3484, %v3358
    %v3486 = vadd.f32 %v3485, %v3359
    %v3487 = vadd.f32 %v3486, %v3360
    %v3488 = vadd.f32 %v3487, %v3361
    %v3489 = vadd.f32 %v3488, %v3362
    %v3490 = vadd.f32 %v3489, %v3363
    %v3491 = vadd.f32 %v3490, %v3364
    %v3492 = vadd.f32 %v3491, %v3365
    %v3493 = vadd.f32 %v3492, %v3366
    %v3494 = vadd.f32 %v3493, %v3367
    %v3495 = vadd.f32 %v3494, %v3368
    %v3496 = vadd.f32 %v3495, %v3369
    %v3497 = vadd.f32 %v3496, %v3370
    %v3498 = vadd.f32 %v3497, %v3371
    %v3499 = vadd.f32 %v3498, %v3372
    %v3500 = vadd.f32 %v3499, %v3373
    %v3501 = vadd.f32 %v3500, %v3374
    %v3502 = vadd.f32 %v3501, %v3375
    %v3503 = vadd.f32 %v3502, %v3376
    %v3504 = vadd.f32 %v3503, %v3377
    %v3505 = vadd.f32 %v3504, %v3378
    %v3506 = vadd.f32 %v3505, %v3379
    %v3507 = vadd.f32 %v3506, %v3380
    %v3508 = vadd.f32 %v3507, %v3381
    %v3509 = vadd.f32 %v3508, %v3382
    %v3510 = vadd.f32 %v3509, %v3383
    %v3511 = vadd.f32 %v3510, %v3384
    %v3512 = vadd.f32 %v3511, %v3385
    %v3513 = vadd.f32 %v3512, %v3386
    %v3514 = vadd.f32 %v3513, %v3387
    %v3515 = vadd.f32 %v3514, %v3388
    %v3516 = vadd.f32 %v3515, %v3389
    %v3517 = vadd.f32 %v3516, %v3390
    %v3518 = vadd.f32 %v3517, %v3391
    %v3519 = vadd.f32 %v3518, %v3392
    %v3520 = vadd.f32 %v3519, %v3393
    %v3521 = vadd.f32 %v3520, %v3394
    %v3522 = vadd.f32 %v3521, %v3395
    %v3523 = vadd.f32 %v3522, %v3396
    %v3524 = vadd.f32 %v3523, %v3397
    %v3525 = vadd.f32 %v3524, %v3398
    %v3526 = vadd.f32 %v3525, %v3399
    %v3527 = vadd.f32 %v3526, %v3400
    %v3528 = vadd.f32 %v3527, %v3401
    %v3529 = vadd.f32 %v3528, %v3402
    %v3530 = vadd.f32 %v3529, %v3403
    %v3531 = vadd.f32 %v3530, %v3404
    %v3532 = vadd.f32 %v3531, %v3405
    %v3533 = vadd.f32 %v3532, %v3406
    %v3534 = vadd.f32 %v3533, %v3407
    %v3535 = vadd.f32 %v3534, %v3408
    %v3536 = vadd.f32 %v3535, %v3409
    %v3537 = vadd.f32 %v3536, %v3410
    %v3538 = vadd.f32 %v3537, %v3411
    %v3539 = vadd.f32 %v3538, %v3412
    %v3540 = vadd.f32 %v3539, %v3413
    %v3541 = vadd.f32 %v3540, %v3414
    %v3542 = vadd.f32 %v3541, %v3415
    %v3543 = vadd.f32 %v3542, %v3416
    %v3544 = vadd.f32 %v3543, %v3417
    %v3545 = vadd.f32 %v3544, %v3418
    %v3546 = vadd.f32 %v3545, %v3419
    %v3547 = vadd.f32 %v3546, %v3420
    %v3548 = vadd.f32 %v3547, %v3421
    %v3549 = vadd.f32 %v3548, %v3422
    %v3550 = vadd.f32 %v3549, %v3423
    %v3551 = vadd.f32 %v3550, %v3424
    %v3552 = vrot.slane %v3551, 4
    %v3553 = vadd.f32 %v3551, %v3552
    %v3554 = vrot.slane %v3553, 2
    %v3555 = vadd.f32 %v3553, %v3554
    %v3556 = vrot.slane %v3555, 1
    %v3557 = vadd.f32 %v3555, %v3556
    %3558 = vst [vmem:[%s6] sm:$0x1] %v3557
  $region25: #{downscale_forward.3} parent=0 // pred_fallthru
    _
  // Predicated region
  $region26: #{downscale_forward.3} parent=0 // pred_check
    _
  $region27: #{downscale_forward.3} parent=0 // pred_check_branch
    %3560 = sbr.rel (0) target = $region29
  $region28: #{downscale_forward.3} parent=0 // pred_region
    _
  $region29: #{downscale_forward.3} parent=0 // pred_fallthru
    _
  // Predicated region
  $region30: #{downscale_forward.3} parent=0 // pred_check
    _
  $region31: #{downscale_forward.3} parent=0 // pred_check_branch
    %3562 = sbr.rel (0) target = $region33
  $region32: #{downscale_forward.3} parent=0 // pred_region
    _
  $region33: #{downscale_forward.3} parent=0 // pred_fallthru
    _
  // Predicated region
  $region34: #{downscale_forward.3} parent=0 // pred_check
    _
  $region35: #{downscale_forward.3} parent=0 // pred_check_branch
    %3564 = sbr.rel (0) target = $region37
  $region36: #{downscale_forward.3} parent=0 // pred_region
    _
  $region37: #{downscale_forward.3} parent=0 // pred_fallthru
    _
  // Predicated region
  $region38: #{downscale_forward.3} parent=0 // pred_check
    _
  $region39: #{downscale_forward.3} parent=0 // pred_check_branch
    %3566 = sbr.rel (0) target = $region41
  $region40: #{downscale_forward.3} parent=0 // pred_region
    _
  $region41: #{downscale_forward.3} parent=0 // pred_fallthru
    _
  // Predicated region
  $region42: #{downscale_forward.3} parent=0 // pred_check
    _
  $region43: #{downscale_forward.3} parent=0 // pred_check_branch
    %3568 = sbr.rel (0) target = $region45
  $region44: #{downscale_forward.3} parent=0 // pred_region
    _
  $region45: #{downscale_forward.3} parent=0 // pred_fallthru
    _
  // Predicated region
  $region46: #{downscale_forward.3} parent=0 // pred_check
    _
  $region47: #{downscale_forward.3} parent=0 // pred_check_branch
    %3570 = sbr.rel (0) target = $region49
  $region48: #{downscale_forward.3} parent=0 // pred_region
    _
  $region49: #{downscale_forward.3} parent=0 // pred_fallthru
    _

</llo_original>
